<compile_context>
chip_gen: v7x
topology: tpu7x:2x2x1
jax: 0.10.0
libtpu: 0.0.40
codegen_flags: <defaults>
</compile_context>

<pallas_src>
import functools

import jax
import jax.numpy as jnp
from jax.experimental import pallas as pl
from jax.experimental.pallas import tpu as pltpu


# ----------------------------------------------------------------------------
# Fused kernel: conv1..conv4 (+BN+PReLU) + soft-argmax2d + coordinate scaling
# ----------------------------------------------------------------------------
def _fused_forward_kernel(
    alpha_ref,                                   # SMEM (3,)  f32  PReLU alphas
    xpad_ref,                                    # VMEM (N, H+2, W+2, 256) f32
    w1_ref, w2_ref, w3_ref, w4_ref,              # VMEM (9, Cin, Cout) bf16
    s1_ref, t1_ref, s2_ref, t2_ref, s3_ref, t3_ref,  # VMEM (1, C) f32 BN affine
    b4_ref,                                      # VMEM (1, 2) f32 conv4 bias
    gx_ref, gy_ref,                              # VMEM (1, H*W, 2) f32 coord grids
    out_x_ref, out_y_ref,                        # VMEM (N, 2) f32 outputs
    act1_ref, act2_ref, act3_ref,                # VMEM scratch, zero-halo f32
    *, N, H, W, beta, inv_wm1, inv_hm1, img_scale,
):
    M = N * H * W
    HW = H * W

    # Zero the padded activation buffers once; layers only write the interior,
    # so the halo stays zero (implements padding=1 for every conv).
    act1_ref[...] = jnp.zeros_like(act1_ref)
    act2_ref[...] = jnp.zeros_like(act2_ref)
    act3_ref[...] = jnp.zeros_like(act3_ref)

    def conv3x3(src_ref, w_ref):
        """3x3 conv (stride 1, pad 1) as 9 shifted-window MXU matmuls."""
        cin = src_ref.shape[-1]
        cout = w_ref.shape[-1]
        acc = jnp.zeros((M, cout), jnp.float32)
        for t in range(9):                       # static unroll, 9 taps
            dy, dx = t // 3, t % 3
            win = src_ref[:, dy:dy + H, dx:dx + W, :]           # (N,H,W,Cin) f32
            lhs = win.reshape(M, cin).astype(jnp.bfloat16)      # bf16 MXU operand
            acc = acc + jnp.dot(lhs, w_ref[t],
                                preferred_element_type=jnp.float32)
        return acc                                              # (M, Cout) f32

    def bn_prelu_store(acc, s_ref, t_ref, alpha, dst_ref):
        y = acc * s_ref[...] + t_ref[...]        # BN affine (+ folded conv bias)
        y = jnp.where(y > 0.0, y, alpha * y)     # PReLU with scalar alpha
        cout = y.shape[-1]
        dst_ref[:, 1:H + 1, 1:W + 1, :] = y.reshape(N, H, W, cout)

    bn_prelu_store(conv3x3(xpad_ref, w1_ref), s1_ref, t1_ref, alpha_ref[0], act1_ref)
    bn_prelu_store(conv3x3(act1_ref, w2_ref), s2_ref, t2_ref, alpha_ref[1], act2_ref)
    bn_prelu_store(conv3x3(act2_ref, w3_ref), s3_ref, t3_ref, alpha_ref[2], act3_ref)

    # conv4 (no BN / no activation) fused with soft-argmax2d.
    heat = conv3x3(act3_ref, w4_ref) + b4_ref[...]              # (M, 2) f32
    z = heat.reshape(N, HW, 2) * beta                           # (N, HW, 2)
    m = jnp.max(z, axis=1, keepdims=True)
    e = jnp.exp(z - m)
    s = jnp.sum(e, axis=1, keepdims=True)
    p = e * pl.reciprocal(s, approx=True)                       # softmax probs

    ex = jnp.sum(p * gx_ref[...], axis=1)                       # (N, 2) expected x
    ey = jnp.sum(p * gy_ref[...], axis=1)                       # (N, 2) expected y
    out_x_ref[...] = ex * (inv_wm1 * img_scale)
    out_y_ref[...] = ey * (inv_hm1 * img_scale)


# ----------------------------------------------------------------------------
# Parameter init (mirrors PyTorch defaults) + one-time host-side packing
# ----------------------------------------------------------------------------
def init_params(key, in_channels=256):
    def conv_init(k, cout, cin):
        kw, kb = jax.random.split(k)
        fan_in = cin * 9
        bound = 1.0 / jnp.sqrt(jnp.float32(fan_in))
        w = jax.random.uniform(kw, (cout, cin, 3, 3), jnp.float32, -bound, bound)
        b = jax.random.uniform(kb, (cout,), jnp.float32, -bound, bound)
        return w, b

    def bn_init(c, eps=1e-5):
        gamma = jnp.ones((c,), jnp.float32)
        beta = jnp.zeros((c,), jnp.float32)
        running_mean = jnp.zeros((c,), jnp.float32)
        running_var = jnp.ones((c,), jnp.float32)
        scale = gamma / jnp.sqrt(running_var + eps)
        shift = beta - running_mean * scale
        return scale, shift

    ks = jax.random.split(key, 4)
    return {
        "conv1": conv_init(ks[0], 128, in_channels),
        "conv2": conv_init(ks[1], 64, 128),
        "conv3": conv_init(ks[2], 32, 64),
        "conv4": conv_init(ks[3], 2, 32),
        "bn1": bn_init(128),
        "bn2": bn_init(64),
        "bn3": bn_init(32),
        "prelu1": jnp.full((1,), 0.25, jnp.float32),
        "prelu2": jnp.full((1,), 0.25, jnp.float32),
        "prelu3": jnp.full((1,), 0.25, jnp.float32),
    }


def pack_params(params):
    """One-time repack (outside the jitted forward): (Cout,Cin,3,3) weights ->
    (9, Cin, Cout) bf16 tap slabs; conv bias folded into eval-mode BN affine."""
    def pack_w(w):
        cout, cin = w.shape[0], w.shape[1]
        return (jnp.transpose(w, (2, 3, 1, 0))           # (kh, kw, Cin, Cout)
                .reshape(9, cin, cout).astype(jnp.bfloat16))

    def fold(bias, bn):
        scale, shift = bn
        c = scale.shape[0]
        return (scale.reshape(1, c).astype(jnp.float32),
                (bias * scale + shift).reshape(1, c).astype(jnp.float32))

    packed = {}
    for i in (1, 2, 3):
        w, b = params[f"conv{i}"]
        packed[f"w{i}"] = pack_w(w)
        packed[f"s{i}"], packed[f"t{i}"] = fold(b, params[f"bn{i}"])
    w4, b4 = params["conv4"]
    packed["w4"] = pack_w(w4)
    packed["b4"] = b4.reshape(1, -1).astype(jnp.float32)
    packed["alpha"] = jnp.concatenate(
        [params["prelu1"], params["prelu2"], params["prelu3"]]).astype(jnp.float32)
    return packed


# ----------------------------------------------------------------------------
# Forward (matches PointGenModuleWViT.forward)
# ----------------------------------------------------------------------------
def point_gen_forward(packed, x_nchw, image_size=1024, beta=64.0):
    N, C, H, W = x_nchw.shape
    HW = H * W

    # NCHW -> NHWC and zero-pad the 3x3 halo once (tiny XLA glue).
    x = jnp.transpose(x_nchw, (0, 2, 3, 1)).astype(jnp.float32)
    xpad = jnp.pad(x, ((0, 0), (1, 1), (1, 1), (0, 0)))

    # Coordinate grids flattened as s = y*W + x (row-major), broadcast over
    # the 2 heat-map channels; constants under jit.
    ys = jnp.arange(H, dtype=jnp.float32)
    xs = jnp.arange(W, dtype=jnp.float32)
    gy2d, gx2d = jnp.meshgrid(ys, xs, indexing="ij")           # (H, W)
    gx = jnp.broadcast_to(gx2d.reshape(1, HW, 1), (1, HW, 2))
    gy = jnp.broadcast_to(gy2d.reshape(1, HW, 1), (1, HW, 2))

    kernel = functools.partial(
        _fused_forward_kernel,
        N=N, H=H, W=W, beta=float(beta),
        inv_wm1=1.0 / float(W - 1), inv_hm1=1.0 / float(H - 1),
        img_scale=float(image_size - 1),
    )

    vmem_spec = pl.BlockSpec(memory_space=pltpu.MemorySpace.VMEM)
    smem_spec = pl.BlockSpec(memory_space=pltpu.MemorySpace.SMEM)

    out_x, out_y = pl.pallas_call(
        kernel,
        out_shape=(jax.ShapeDtypeStruct((N, 2), jnp.float32),
                   jax.ShapeDtypeStruct((N, 2), jnp.float32)),
        in_specs=[smem_spec] + [vmem_spec] * 14,
        out_specs=(vmem_spec, vmem_spec),
        scratch_shapes=[
            pltpu.VMEM((N, H + 2, W + 2, 128), jnp.float32),
            pltpu.VMEM((N, H + 2, W + 2, 64), jnp.float32),
            pltpu.VMEM((N, H + 2, W + 2, 32), jnp.float32),
        ],
    )(
        packed["alpha"], xpad,
        packed["w1"], packed["w2"], packed["w3"], packed["w4"],
        packed["s1"], packed["t1"], packed["s2"], packed["t2"],
        packed["s3"], packed["t3"], packed["b4"],
        gx, gy,
    )

    # (N, C=2, 2) with [..., 0] = x, [..., 1] = y (already scaled by image_size-1).
    return jnp.stack([out_x, out_y], axis=-1)


if __name__ == "__main__":
    key = jax.random.PRNGKey(0)
    pkey, xkey = jax.random.split(key)

    IMAGE_SIZE = 1024
    N, CIN, H, W = 2, 256, 8, 8       # Cin=256 is fixed by the module's conv1

    params = init_params(pkey, in_channels=CIN)
    packed = pack_params(params)       # host-side, outside the jitted forward

    x = jax.random.normal(xkey, (N, CIN, H, W), jnp.float32)

    fwd = jax.jit(functools.partial(point_gen_forward, image_size=IMAGE_SIZE))
    coords = jax.block_until_ready(fwd(packed, x))

    assert coords.shape == (N, 2, 2), coords.shape
    assert coords.dtype == jnp.float32
    assert bool(jnp.all(jnp.isfinite(coords)))
    # soft-argmax coordinates lie in [0, image_size-1]; leave a little slack
    # for the approx-reciprocal softmax normalization and bf16 matmul inputs.
    assert bool(jnp.all(coords >= 0.0)) and bool(jnp.all(coords <= float(IMAGE_SIZE)))

    print("KERNEL_OK")
</pallas_src>

<mosaic_0001>
module attributes {stable_mosaic.version = 11 : i64} {
  func.func @_fused_forward_kernel(%arg0: memref<3xf32, #tpu.memory_space<smem>>, %arg1: memref<2x10x10x256xf32, #tpu.memory_space<vmem>>, %arg2: memref<9x256x128xbf16, #tpu.memory_space<vmem>>, %arg3: memref<9x128x64xbf16, #tpu.memory_space<vmem>>, %arg4: memref<9x64x32xbf16, #tpu.memory_space<vmem>>, %arg5: memref<9x32x2xbf16, #tpu.memory_space<vmem>>, %arg6: memref<1x128xf32, #tpu.memory_space<vmem>>, %arg7: memref<1x128xf32, #tpu.memory_space<vmem>>, %arg8: memref<1x64xf32, #tpu.memory_space<vmem>>, %arg9: memref<1x64xf32, #tpu.memory_space<vmem>>, %arg10: memref<1x32xf32, #tpu.memory_space<vmem>>, %arg11: memref<1x32xf32, #tpu.memory_space<vmem>>, %arg12: memref<1x2xf32, #tpu.memory_space<vmem>>, %arg13: memref<1x64x2xf32, #tpu.memory_space<vmem>>, %arg14: memref<1x64x2xf32, #tpu.memory_space<vmem>>, %arg15: memref<2x2xf32, #tpu.memory_space<vmem>>, %arg16: memref<2x2xf32, #tpu.memory_space<vmem>>, %arg17: memref<2x10x10x128xf32, #tpu.memory_space<vmem>>, %arg18: memref<2x10x10x64xf32, #tpu.memory_space<vmem>>, %arg19: memref<2x10x10x32xf32, #tpu.memory_space<vmem>>) attributes {dimension_semantics = [], scalar_prefetch = 0 : i64, scratch_operands = 3 : i64, tpu.core_type = #tpu.core_type<tc>} {
    %cst = arith.constant 0.000000e+00 : f32
    %0 = vector.broadcast %cst : f32 to vector<2x10x10x128xf32>
    %c0 = arith.constant 0 : index
    %c0_0 = arith.constant 0 : index
    %c0_1 = arith.constant 0 : index
    %c0_2 = arith.constant 0 : index
    %1 = vector.load %arg17[%c0, %c0_0, %c0_1, %c0_2] : memref<2x10x10x128xf32, #tpu.memory_space<vmem>>, vector<2x10x10x128xf32>
    tpu.vector_store %arg17[%c0, %c0_0, %c0_1, %c0_2], %0 {strides = array<i32>} : memref<2x10x10x128xf32, #tpu.memory_space<vmem>>, vector<2x10x10x128xf32>,
    %cst_3 = arith.constant 0.000000e+00 : f32
    %2 = vector.broadcast %cst_3 : f32 to vector<2x10x10x64xf32>
    %c0_4 = arith.constant 0 : index
    %c0_5 = arith.constant 0 : index
    %c0_6 = arith.constant 0 : index
    %c0_7 = arith.constant 0 : index
    %3 = vector.load %arg18[%c0_4, %c0_5, %c0_6, %c0_7] : memref<2x10x10x64xf32, #tpu.memory_space<vmem>>, vector<2x10x10x64xf32>
    tpu.vector_store %arg18[%c0_4, %c0_5, %c0_6, %c0_7], %2 {strides = array<i32>} : memref<2x10x10x64xf32, #tpu.memory_space<vmem>>, vector<2x10x10x64xf32>,
    %cst_8 = arith.constant 0.000000e+00 : f32
    %4 = vector.broadcast %cst_8 : f32 to vector<2x10x10x32xf32>
    %c0_9 = arith.constant 0 : index
    %c0_10 = arith.constant 0 : index
    %c0_11 = arith.constant 0 : index
    %c0_12 = arith.constant 0 : index
    %5 = vector.load %arg19[%c0_9, %c0_10, %c0_11, %c0_12] : memref<2x10x10x32xf32, #tpu.memory_space<vmem>>, vector<2x10x10x32xf32>
    tpu.vector_store %arg19[%c0_9, %c0_10, %c0_11, %c0_12], %4 {strides = array<i32>} : memref<2x10x10x32xf32, #tpu.memory_space<vmem>>, vector<2x10x10x32xf32>,
    %cst_13 = arith.constant 0.000000e+00 : f32
    %6 = vector.broadcast %cst_13 : f32 to vector<128x128xf32>
    %c0_14 = arith.constant 0 : index
    %c0_15 = arith.constant 0 : index
    %c0_16 = arith.constant 0 : index
    %c0_17 = arith.constant 0 : index
    %7 = vector.load %arg1[%c0_14, %c0_15, %c0_16, %c0_17] : memref<2x10x10x256xf32, #tpu.memory_space<vmem>>, vector<2x8x8x256xf32>
    %8 = vector.shape_cast %7 : vector<2x8x8x256xf32> to vector<128x256xf32>
    %9 = arith.truncf %8 : vector<128x256xf32> to vector<128x256xbf16>
    %c0_18 = arith.constant 0 : index
    %c0_19 = arith.constant 0 : index
    %c0_20 = arith.constant 0 : index
    %10 = vector.load %arg2[%c0_18, %c0_19, %c0_20] : memref<9x256x128xbf16, #tpu.memory_space<vmem>>, vector<1x256x128xbf16>
    %11 = vector.shape_cast %10 : vector<1x256x128xbf16> to vector<256x128xbf16>
    %cst_21 = arith.constant dense<0.000000e+00> : vector<128x128xf32>
    %12 = tpu.matmul %9, %11, %cst_21 {dimension_numbers = #tpu.dot_dimension_numbers<[1], [0], [0], [1], [0, 0, 1, 1], [], []>} : vector<128x256xbf16>, vector<256x128xbf16>, vector<128x128xf32> -> vector<128x128xf32>
    %13 = arith.addf %6, %12 : vector<128x128xf32>
    %c0_22 = arith.constant 0 : index
    %c0_23 = arith.constant 0 : index
    %c1 = arith.constant 1 : index
    %c0_24 = arith.constant 0 : index
    %14 = vector.load %arg1[%c0_22, %c0_23, %c1, %c0_24] : memref<2x10x10x256xf32, #tpu.memory_space<vmem>>, vector<2x8x8x256xf32>
    %15 = vector.shape_cast %14 : vector<2x8x8x256xf32> to vector<128x256xf32>
    %16 = arith.truncf %15 : vector<128x256xf32> to vector<128x256xbf16>
    %c1_25 = arith.constant 1 : index
    %c0_26 = arith.constant 0 : index
    %c0_27 = arith.constant 0 : index
    %17 = vector.load %arg2[%c1_25, %c0_26, %c0_27] : memref<9x256x128xbf16, #tpu.memory_space<vmem>>, vector<1x256x128xbf16>
    %18 = vector.shape_cast %17 : vector<1x256x128xbf16> to vector<256x128xbf16>
    %cst_28 = arith.constant dense<0.000000e+00> : vector<128x128xf32>
    %19 = tpu.matmul %16, %18, %cst_28 {dimension_numbers = #tpu.dot_dimension_numbers<[1], [0], [0], [1], [0, 0, 1, 1], [], []>} : vector<128x256xbf16>, vector<256x128xbf16>, vector<128x128xf32> -> vector<128x128xf32>
    %20 = arith.addf %13, %19 : vector<128x128xf32>
    %c0_29 = arith.constant 0 : index
    %c0_30 = arith.constant 0 : index
    %c2 = arith.constant 2 : index
    %c0_31 = arith.constant 0 : index
    %21 = vector.load %arg1[%c0_29, %c0_30, %c2, %c0_31] : memref<2x10x10x256xf32, #tpu.memory_space<vmem>>, vector<2x8x8x256xf32>
    %22 = vector.shape_cast %21 : vector<2x8x8x256xf32> to vector<128x256xf32>
    %23 = arith.truncf %22 : vector<128x256xf32> to vector<128x256xbf16>
    %c2_32 = arith.constant 2 : index
    %c0_33 = arith.constant 0 : index
    %c0_34 = arith.constant 0 : index
    %24 = vector.load %arg2[%c2_32, %c0_33, %c0_34] : memref<9x256x128xbf16, #tpu.memory_space<vmem>>, vector<1x256x128xbf16>
    %25 = vector.shape_cast %24 : vector<1x256x128xbf16> to vector<256x128xbf16>
    %cst_35 = arith.constant dense<0.000000e+00> : vector<128x128xf32>
    %26 = tpu.matmul %23, %25, %cst_35 {dimension_numbers = #tpu.dot_dimension_numbers<[1], [0], [0], [1], [0, 0, 1, 1], [], []>} : vector<128x256xbf16>, vector<256x128xbf16>, vector<128x128xf32> -> vector<128x128xf32>
    %27 = arith.addf %20, %26 : vector<128x128xf32>
    %c0_36 = arith.constant 0 : index
    %c1_37 = arith.constant 1 : index
    %c0_38 = arith.constant 0 : index
    %c0_39 = arith.constant 0 : index
    %28 = vector.load %arg1[%c0_36, %c1_37, %c0_38, %c0_39] : memref<2x10x10x256xf32, #tpu.memory_space<vmem>>, vector<2x8x8x256xf32>
    %29 = vector.shape_cast %28 : vector<2x8x8x256xf32> to vector<128x256xf32>
    %30 = arith.truncf %29 : vector<128x256xf32> to vector<128x256xbf16>
    %c3 = arith.constant 3 : index
    %c0_40 = arith.constant 0 : index
    %c0_41 = arith.constant 0 : index
    %31 = vector.load %arg2[%c3, %c0_40, %c0_41] : memref<9x256x128xbf16, #tpu.memory_space<vmem>>, vector<1x256x128xbf16>
    %32 = vector.shape_cast %31 : vector<1x256x128xbf16> to vector<256x128xbf16>
    %cst_42 = arith.constant dense<0.000000e+00> : vector<128x128xf32>
    %33 = tpu.matmul %30, %32, %cst_42 {dimension_numbers = #tpu.dot_dimension_numbers<[1], [0], [0], [1], [0, 0, 1, 1], [], []>} : vector<128x256xbf16>, vector<256x128xbf16>, vector<128x128xf32> -> vector<128x128xf32>
    %34 = arith.addf %27, %33 : vector<128x128xf32>
    %c0_43 = arith.constant 0 : index
    %c1_44 = arith.constant 1 : index
    %c1_45 = arith.constant 1 : index
    %c0_46 = arith.constant 0 : index
    %35 = vector.load %arg1[%c0_43, %c1_44, %c1_45, %c0_46] : memref<2x10x10x256xf32, #tpu.memory_space<vmem>>, vector<2x8x8x256xf32>
    %36 = vector.shape_cast %35 : vector<2x8x8x256xf32> to vector<128x256xf32>
    %37 = arith.truncf %36 : vector<128x256xf32> to vector<128x256xbf16>
    %c4 = arith.constant 4 : index
    %c0_47 = arith.constant 0 : index
    %c0_48 = arith.constant 0 : index
    %38 = vector.load %arg2[%c4, %c0_47, %c0_48] : memref<9x256x128xbf16, #tpu.memory_space<vmem>>, vector<1x256x128xbf16>
    %39 = vector.shape_cast %38 : vector<1x256x128xbf16> to vector<256x128xbf16>
    %cst_49 = arith.constant dense<0.000000e+00> : vector<128x128xf32>
    %40 = tpu.matmul %37, %39, %cst_49 {dimension_numbers = #tpu.dot_dimension_numbers<[1], [0], [0], [1], [0, 0, 1, 1], [], []>} : vector<128x256xbf16>, vector<256x128xbf16>, vector<128x128xf32> -> vector<128x128xf32>
    %41 = arith.addf %34, %40 : vector<128x128xf32>
    %c0_50 = arith.constant 0 : index
    %c1_51 = arith.constant 1 : index
    %c2_52 = arith.constant 2 : index
    %c0_53 = arith.constant 0 : index
    %42 = vector.load %arg1[%c0_50, %c1_51, %c2_52, %c0_53] : memref<2x10x10x256xf32, #tpu.memory_space<vmem>>, vector<2x8x8x256xf32>
    %43 = vector.shape_cast %42 : vector<2x8x8x256xf32> to vector<128x256xf32>
    %44 = arith.truncf %43 : vector<128x256xf32> to vector<128x256xbf16>
    %c5 = arith.constant 5 : index
    %c0_54 = arith.constant 0 : index
    %c0_55 = arith.constant 0 : index
    %45 = vector.load %arg2[%c5, %c0_54, %c0_55] : memref<9x256x128xbf16, #tpu.memory_space<vmem>>, vector<1x256x128xbf16>
    %46 = vector.shape_cast %45 : vector<1x256x128xbf16> to vector<256x128xbf16>
    %cst_56 = arith.constant dense<0.000000e+00> : vector<128x128xf32>
    %47 = tpu.matmul %44, %46, %cst_56 {dimension_numbers = #tpu.dot_dimension_numbers<[1], [0], [0], [1], [0, 0, 1, 1], [], []>} : vector<128x256xbf16>, vector<256x128xbf16>, vector<128x128xf32> -> vector<128x128xf32>
    %48 = arith.addf %41, %47 : vector<128x128xf32>
    %c0_57 = arith.constant 0 : index
    %c2_58 = arith.constant 2 : index
    %c0_59 = arith.constant 0 : index
    %c0_60 = arith.constant 0 : index
    %49 = vector.load %arg1[%c0_57, %c2_58, %c0_59, %c0_60] : memref<2x10x10x256xf32, #tpu.memory_space<vmem>>, vector<2x8x8x256xf32>
    %50 = vector.shape_cast %49 : vector<2x8x8x256xf32> to vector<128x256xf32>
    %51 = arith.truncf %50 : vector<128x256xf32> to vector<128x256xbf16>
    %c6 = arith.constant 6 : index
    %c0_61 = arith.constant 0 : index
    %c0_62 = arith.constant 0 : index
    %52 = vector.load %arg2[%c6, %c0_61, %c0_62] : memref<9x256x128xbf16, #tpu.memory_space<vmem>>, vector<1x256x128xbf16>
    %53 = vector.shape_cast %52 : vector<1x256x128xbf16> to vector<256x128xbf16>
    %cst_63 = arith.constant dense<0.000000e+00> : vector<128x128xf32>
    %54 = tpu.matmul %51, %53, %cst_63 {dimension_numbers = #tpu.dot_dimension_numbers<[1], [0], [0], [1], [0, 0, 1, 1], [], []>} : vector<128x256xbf16>, vector<256x128xbf16>, vector<128x128xf32> -> vector<128x128xf32>
    %55 = arith.addf %48, %54 : vector<128x128xf32>
    %c0_64 = arith.constant 0 : index
    %c2_65 = arith.constant 2 : index
    %c1_66 = arith.constant 1 : index
    %c0_67 = arith.constant 0 : index
    %56 = vector.load %arg1[%c0_64, %c2_65, %c1_66, %c0_67] : memref<2x10x10x256xf32, #tpu.memory_space<vmem>>, vector<2x8x8x256xf32>
    %57 = vector.shape_cast %56 : vector<2x8x8x256xf32> to vector<128x256xf32>
    %58 = arith.truncf %57 : vector<128x256xf32> to vector<128x256xbf16>
    %c7 = arith.constant 7 : index
    %c0_68 = arith.constant 0 : index
    %c0_69 = arith.constant 0 : index
    %59 = vector.load %arg2[%c7, %c0_68, %c0_69] : memref<9x256x128xbf16, #tpu.memory_space<vmem>>, vector<1x256x128xbf16>
    %60 = vector.shape_cast %59 : vector<1x256x128xbf16> to vector<256x128xbf16>
    %cst_70 = arith.constant dense<0.000000e+00> : vector<128x128xf32>
    %61 = tpu.matmul %58, %60, %cst_70 {dimension_numbers = #tpu.dot_dimension_numbers<[1], [0], [0], [1], [0, 0, 1, 1], [], []>} : vector<128x256xbf16>, vector<256x128xbf16>, vector<128x128xf32> -> vector<128x128xf32>
    %62 = arith.addf %55, %61 : vector<128x128xf32>
    %c0_71 = arith.constant 0 : index
    %c2_72 = arith.constant 2 : index
    %c2_73 = arith.constant 2 : index
    %c0_74 = arith.constant 0 : index
    %63 = vector.load %arg1[%c0_71, %c2_72, %c2_73, %c0_74] : memref<2x10x10x256xf32, #tpu.memory_space<vmem>>, vector<2x8x8x256xf32>
    %64 = vector.shape_cast %63 : vector<2x8x8x256xf32> to vector<128x256xf32>
    %65 = arith.truncf %64 : vector<128x256xf32> to vector<128x256xbf16>
    %c8 = arith.constant 8 : index
    %c0_75 = arith.constant 0 : index
    %c0_76 = arith.constant 0 : index
    %66 = vector.load %arg2[%c8, %c0_75, %c0_76] : memref<9x256x128xbf16, #tpu.memory_space<vmem>>, vector<1x256x128xbf16>
    %67 = vector.shape_cast %66 : vector<1x256x128xbf16> to vector<256x128xbf16>
    %cst_77 = arith.constant dense<0.000000e+00> : vector<128x128xf32>
    %68 = tpu.matmul %65, %67, %cst_77 {dimension_numbers = #tpu.dot_dimension_numbers<[1], [0], [0], [1], [0, 0, 1, 1], [], []>} : vector<128x256xbf16>, vector<256x128xbf16>, vector<128x128xf32> -> vector<128x128xf32>
    %69 = arith.addf %62, %68 : vector<128x128xf32>
    %c0_78 = arith.constant 0 : index
    %70 = memref.load %arg0[%c0_78] : memref<3xf32, #tpu.memory_space<smem>>
    %c0_79 = arith.constant 0 : index
    %c0_80 = arith.constant 0 : index
    %71 = vector.load %arg6[%c0_79, %c0_80] : memref<1x128xf32, #tpu.memory_space<vmem>>, vector<1x128xf32>
    %72 = vector.broadcast %71 : vector<1x128xf32> to vector<128x128xf32>
    %73 = arith.mulf %69, %72 : vector<128x128xf32>
    %c0_81 = arith.constant 0 : index
    %c0_82 = arith.constant 0 : index
    %74 = vector.load %arg7[%c0_81, %c0_82] : memref<1x128xf32, #tpu.memory_space<vmem>>, vector<1x128xf32>
    %75 = vector.broadcast %74 : vector<1x128xf32> to vector<128x128xf32>
    %76 = arith.addf %73, %75 : vector<128x128xf32>
    %cst_83 = arith.constant 0.000000e+00 : f32
    %77 = vector.broadcast %cst_83 : f32 to vector<128x128xf32>
    %78 = arith.cmpf ogt, %76, %77 : vector<128x128xf32>
    %79 = vector.broadcast %70 : f32 to vector<128x128xf32>
    %80 = arith.mulf %79, %76 : vector<128x128xf32>
    %81 = arith.select %78, %76, %80 : vector<128x128xi1>, vector<128x128xf32>
    %82 = vector.shape_cast %81 : vector<128x128xf32> to vector<2x8x8x128xf32>
    %c0_84 = arith.constant 0 : index
    %c1_85 = arith.constant 1 : index
    %c1_86 = arith.constant 1 : index
    %c0_87 = arith.constant 0 : index
    %83 = vector.load %arg17[%c0_84, %c1_85, %c1_86, %c0_87] : memref<2x10x10x128xf32, #tpu.memory_space<vmem>>, vector<2x8x8x128xf32>
    tpu.vector_store %arg17[%c0_84, %c1_85, %c1_86, %c0_87], %82 {strides = array<i32>} : memref<2x10x10x128xf32, #tpu.memory_space<vmem>>, vector<2x8x8x128xf32>,
    %cst_88 = arith.constant 0.000000e+00 : f32
    %84 = vector.broadcast %cst_88 : f32 to vector<128x64xf32>
    %c0_89 = arith.constant 0 : index
    %c0_90 = arith.constant 0 : index
    %c0_91 = arith.constant 0 : index
    %c0_92 = arith.constant 0 : index
    %85 = vector.load %arg17[%c0_89, %c0_90, %c0_91, %c0_92] : memref<2x10x10x128xf32, #tpu.memory_space<vmem>>, vector<2x8x8x128xf32>
    %86 = vector.shape_cast %85 : vector<2x8x8x128xf32> to vector<128x128xf32>
    %87 = arith.truncf %86 : vector<128x128xf32> to vector<128x128xbf16>
    %c0_93 = arith.constant 0 : index
    %c0_94 = arith.constant 0 : index
    %c0_95 = arith.constant 0 : index
    %88 = vector.load %arg3[%c0_93, %c0_94, %c0_95] : memref<9x128x64xbf16, #tpu.memory_space<vmem>>, vector<1x128x64xbf16>
    %89 = vector.shape_cast %88 : vector<1x128x64xbf16> to vector<128x64xbf16>
    %cst_96 = arith.constant dense<0.000000e+00> : vector<128x64xf32>
    %90 = tpu.matmul %87, %89, %cst_96 {dimension_numbers = #tpu.dot_dimension_numbers<[1], [0], [0], [1], [0, 0, 1, 1], [], []>} : vector<128x128xbf16>, vector<128x64xbf16>, vector<128x64xf32> -> vector<128x64xf32>
    %91 = arith.addf %84, %90 : vector<128x64xf32>
    %c0_97 = arith.constant 0 : index
    %c0_98 = arith.constant 0 : index
    %c1_99 = arith.constant 1 : index
    %c0_100 = arith.constant 0 : index
    %92 = vector.load %arg17[%c0_97, %c0_98, %c1_99, %c0_100] : memref<2x10x10x128xf32, #tpu.memory_space<vmem>>, vector<2x8x8x128xf32>
    %93 = vector.shape_cast %92 : vector<2x8x8x128xf32> to vector<128x128xf32>
    %94 = arith.truncf %93 : vector<128x128xf32> to vector<128x128xbf16>
    %c1_101 = arith.constant 1 : index
    %c0_102 = arith.constant 0 : index
    %c0_103 = arith.constant 0 : index
    %95 = vector.load %arg3[%c1_101, %c0_102, %c0_103] : memref<9x128x64xbf16, #tpu.memory_space<vmem>>, vector<1x128x64xbf16>
    %96 = vector.shape_cast %95 : vector<1x128x64xbf16> to vector<128x64xbf16>
    %cst_104 = arith.constant dense<0.000000e+00> : vector<128x64xf32>
    %97 = tpu.matmul %94, %96, %cst_104 {dimension_numbers = #tpu.dot_dimension_numbers<[1], [0], [0], [1], [0, 0, 1, 1], [], []>} : vector<128x128xbf16>, vector<128x64xbf16>, vector<128x64xf32> -> vector<128x64xf32>
    %98 = arith.addf %91, %97 : vector<128x64xf32>
    %c0_105 = arith.constant 0 : index
    %c0_106 = arith.constant 0 : index
    %c2_107 = arith.constant 2 : index
    %c0_108 = arith.constant 0 : index
    %99 = vector.load %arg17[%c0_105, %c0_106, %c2_107, %c0_108] : memref<2x10x10x128xf32, #tpu.memory_space<vmem>>, vector<2x8x8x128xf32>
    %100 = vector.shape_cast %99 : vector<2x8x8x128xf32> to vector<128x128xf32>
    %101 = arith.truncf %100 : vector<128x128xf32> to vector<128x128xbf16>
    %c2_109 = arith.constant 2 : index
    %c0_110 = arith.constant 0 : index
    %c0_111 = arith.constant 0 : index
    %102 = vector.load %arg3[%c2_109, %c0_110, %c0_111] : memref<9x128x64xbf16, #tpu.memory_space<vmem>>, vector<1x128x64xbf16>
    %103 = vector.shape_cast %102 : vector<1x128x64xbf16> to vector<128x64xbf16>
    %cst_112 = arith.constant dense<0.000000e+00> : vector<128x64xf32>
    %104 = tpu.matmul %101, %103, %cst_112 {dimension_numbers = #tpu.dot_dimension_numbers<[1], [0], [0], [1], [0, 0, 1, 1], [], []>} : vector<128x128xbf16>, vector<128x64xbf16>, vector<128x64xf32> -> vector<128x64xf32>
    %105 = arith.addf %98, %104 : vector<128x64xf32>
    %c0_113 = arith.constant 0 : index
    %c1_114 = arith.constant 1 : index
    %c0_115 = arith.constant 0 : index
    %c0_116 = arith.constant 0 : index
    %106 = vector.load %arg17[%c0_113, %c1_114, %c0_115, %c0_116] : memref<2x10x10x128xf32, #tpu.memory_space<vmem>>, vector<2x8x8x128xf32>
    %107 = vector.shape_cast %106 : vector<2x8x8x128xf32> to vector<128x128xf32>
    %108 = arith.truncf %107 : vector<128x128xf32> to vector<128x128xbf16>
    %c3_117 = arith.constant 3 : index
    %c0_118 = arith.constant 0 : index
    %c0_119 = arith.constant 0 : index
    %109 = vector.load %arg3[%c3_117, %c0_118, %c0_119] : memref<9x128x64xbf16, #tpu.memory_space<vmem>>, vector<1x128x64xbf16>
    %110 = vector.shape_cast %109 : vector<1x128x64xbf16> to vector<128x64xbf16>
    %cst_120 = arith.constant dense<0.000000e+00> : vector<128x64xf32>
    %111 = tpu.matmul %108, %110, %cst_120 {dimension_numbers = #tpu.dot_dimension_numbers<[1], [0], [0], [1], [0, 0, 1, 1], [], []>} : vector<128x128xbf16>, vector<128x64xbf16>, vector<128x64xf32> -> vector<128x64xf32>
    %112 = arith.addf %105, %111 : vector<128x64xf32>
    %c0_121 = arith.constant 0 : index
    %c1_122 = arith.constant 1 : index
    %c1_123 = arith.constant 1 : index
    %c0_124 = arith.constant 0 : index
    %113 = vector.load %arg17[%c0_121, %c1_122, %c1_123, %c0_124] : memref<2x10x10x128xf32, #tpu.memory_space<vmem>>, vector<2x8x8x128xf32>
    %114 = vector.shape_cast %113 : vector<2x8x8x128xf32> to vector<128x128xf32>
    %115 = arith.truncf %114 : vector<128x128xf32> to vector<128x128xbf16>
    %c4_125 = arith.constant 4 : index
    %c0_126 = arith.constant 0 : index
    %c0_127 = arith.constant 0 : index
    %116 = vector.load %arg3[%c4_125, %c0_126, %c0_127] : memref<9x128x64xbf16, #tpu.memory_space<vmem>>, vector<1x128x64xbf16>
    %117 = vector.shape_cast %116 : vector<1x128x64xbf16> to vector<128x64xbf16>
    %cst_128 = arith.constant dense<0.000000e+00> : vector<128x64xf32>
    %118 = tpu.matmul %115, %117, %cst_128 {dimension_numbers = #tpu.dot_dimension_numbers<[1], [0], [0], [1], [0, 0, 1, 1], [], []>} : vector<128x128xbf16>, vector<128x64xbf16>, vector<128x64xf32> -> vector<128x64xf32>
    %119 = arith.addf %112, %118 : vector<128x64xf32>
    %c0_129 = arith.constant 0 : index
    %c1_130 = arith.constant 1 : index
    %c2_131 = arith.constant 2 : index
    %c0_132 = arith.constant 0 : index
    %120 = vector.load %arg17[%c0_129, %c1_130, %c2_131, %c0_132] : memref<2x10x10x128xf32, #tpu.memory_space<vmem>>, vector<2x8x8x128xf32>
    %121 = vector.shape_cast %120 : vector<2x8x8x128xf32> to vector<128x128xf32>
    %122 = arith.truncf %121 : vector<128x128xf32> to vector<128x128xbf16>
    %c5_133 = arith.constant 5 : index
    %c0_134 = arith.constant 0 : index
    %c0_135 = arith.constant 0 : index
    %123 = vector.load %arg3[%c5_133, %c0_134, %c0_135] : memref<9x128x64xbf16, #tpu.memory_space<vmem>>, vector<1x128x64xbf16>
    %124 = vector.shape_cast %123 : vector<1x128x64xbf16> to vector<128x64xbf16>
    %cst_136 = arith.constant dense<0.000000e+00> : vector<128x64xf32>
    %125 = tpu.matmul %122, %124, %cst_136 {dimension_numbers = #tpu.dot_dimension_numbers<[1], [0], [0], [1], [0, 0, 1, 1], [], []>} : vector<128x128xbf16>, vector<128x64xbf16>, vector<128x64xf32> -> vector<128x64xf32>
    %126 = arith.addf %119, %125 : vector<128x64xf32>
    %c0_137 = arith.constant 0 : index
    %c2_138 = arith.constant 2 : index
    %c0_139 = arith.constant 0 : index
    %c0_140 = arith.constant 0 : index
    %127 = vector.load %arg17[%c0_137, %c2_138, %c0_139, %c0_140] : memref<2x10x10x128xf32, #tpu.memory_space<vmem>>, vector<2x8x8x128xf32>
    %128 = vector.shape_cast %127 : vector<2x8x8x128xf32> to vector<128x128xf32>
    %129 = arith.truncf %128 : vector<128x128xf32> to vector<128x128xbf16>
    %c6_141 = arith.constant 6 : index
    %c0_142 = arith.constant 0 : index
    %c0_143 = arith.constant 0 : index
    %130 = vector.load %arg3[%c6_141, %c0_142, %c0_143] : memref<9x128x64xbf16, #tpu.memory_space<vmem>>, vector<1x128x64xbf16>
    %131 = vector.shape_cast %130 : vector<1x128x64xbf16> to vector<128x64xbf16>
    %cst_144 = arith.constant dense<0.000000e+00> : vector<128x64xf32>
    %132 = tpu.matmul %129, %131, %cst_144 {dimension_numbers = #tpu.dot_dimension_numbers<[1], [0], [0], [1], [0, 0, 1, 1], [], []>} : vector<128x128xbf16>, vector<128x64xbf16>, vector<128x64xf32> -> vector<128x64xf32>
    %133 = arith.addf %126, %132 : vector<128x64xf32>
    %c0_145 = arith.constant 0 : index
    %c2_146 = arith.constant 2 : index
    %c1_147 = arith.constant 1 : index
    %c0_148 = arith.constant 0 : index
    %134 = vector.load %arg17[%c0_145, %c2_146, %c1_147, %c0_148] : memref<2x10x10x128xf32, #tpu.memory_space<vmem>>, vector<2x8x8x128xf32>
    %135 = vector.shape_cast %134 : vector<2x8x8x128xf32> to vector<128x128xf32>
    %136 = arith.truncf %135 : vector<128x128xf32> to vector<128x128xbf16>
    %c7_149 = arith.constant 7 : index
    %c0_150 = arith.constant 0 : index
    %c0_151 = arith.constant 0 : index
    %137 = vector.load %arg3[%c7_149, %c0_150, %c0_151] : memref<9x128x64xbf16, #tpu.memory_space<vmem>>, vector<1x128x64xbf16>
    %138 = vector.shape_cast %137 : vector<1x128x64xbf16> to vector<128x64xbf16>
    %cst_152 = arith.constant dense<0.000000e+00> : vector<128x64xf32>
    %139 = tpu.matmul %136, %138, %cst_152 {dimension_numbers = #tpu.dot_dimension_numbers<[1], [0], [0], [1], [0, 0, 1, 1], [], []>} : vector<128x128xbf16>, vector<128x64xbf16>, vector<128x64xf32> -> vector<128x64xf32>
    %140 = arith.addf %133, %139 : vector<128x64xf32>
    %c0_153 = arith.constant 0 : index
    %c2_154 = arith.constant 2 : index
    %c2_155 = arith.constant 2 : index
    %c0_156 = arith.constant 0 : index
    %141 = vector.load %arg17[%c0_153, %c2_154, %c2_155, %c0_156] : memref<2x10x10x128xf32, #tpu.memory_space<vmem>>, vector<2x8x8x128xf32>
    %142 = vector.shape_cast %141 : vector<2x8x8x128xf32> to vector<128x128xf32>
    %143 = arith.truncf %142 : vector<128x128xf32> to vector<128x128xbf16>
    %c8_157 = arith.constant 8 : index
    %c0_158 = arith.constant 0 : index
    %c0_159 = arith.constant 0 : index
    %144 = vector.load %arg3[%c8_157, %c0_158, %c0_159] : memref<9x128x64xbf16, #tpu.memory_space<vmem>>, vector<1x128x64xbf16>
    %145 = vector.shape_cast %144 : vector<1x128x64xbf16> to vector<128x64xbf16>
    %cst_160 = arith.constant dense<0.000000e+00> : vector<128x64xf32>
    %146 = tpu.matmul %143, %145, %cst_160 {dimension_numbers = #tpu.dot_dimension_numbers<[1], [0], [0], [1], [0, 0, 1, 1], [], []>} : vector<128x128xbf16>, vector<128x64xbf16>, vector<128x64xf32> -> vector<128x64xf32>
    %147 = arith.addf %140, %146 : vector<128x64xf32>
    %c1_161 = arith.constant 1 : index
    %148 = memref.load %arg0[%c1_161] : memref<3xf32, #tpu.memory_space<smem>>
    %c0_162 = arith.constant 0 : index
    %c0_163 = arith.constant 0 : index
    %149 = vector.load %arg8[%c0_162, %c0_163] : memref<1x64xf32, #tpu.memory_space<vmem>>, vector<1x64xf32>
    %150 = vector.broadcast %149 : vector<1x64xf32> to vector<128x64xf32>
    %151 = arith.mulf %147, %150 : vector<128x64xf32>
    %c0_164 = arith.constant 0 : index
    %c0_165 = arith.constant 0 : index
    %152 = vector.load %arg9[%c0_164, %c0_165] : memref<1x64xf32, #tpu.memory_space<vmem>>, vector<1x64xf32>
    %153 = vector.broadcast %152 : vector<1x64xf32> to vector<128x64xf32>
    %154 = arith.addf %151, %153 : vector<128x64xf32>
    %cst_166 = arith.constant 0.000000e+00 : f32
    %155 = vector.broadcast %cst_166 : f32 to vector<128x64xf32>
    %156 = arith.cmpf ogt, %154, %155 : vector<128x64xf32>
    %157 = vector.broadcast %148 : f32 to vector<128x64xf32>
    %158 = arith.mulf %157, %154 : vector<128x64xf32>
    %159 = arith.select %156, %154, %158 : vector<128x64xi1>, vector<128x64xf32>
    %160 = vector.shape_cast %159 : vector<128x64xf32> to vector<2x8x8x64xf32>
    %c0_167 = arith.constant 0 : index
    %c1_168 = arith.constant 1 : index
    %c1_169 = arith.constant 1 : index
    %c0_170 = arith.constant 0 : index
    %161 = vector.load %arg18[%c0_167, %c1_168, %c1_169, %c0_170] : memref<2x10x10x64xf32, #tpu.memory_space<vmem>>, vector<2x8x8x64xf32>
    tpu.vector_store %arg18[%c0_167, %c1_168, %c1_169, %c0_170], %160 {strides = array<i32>} : memref<2x10x10x64xf32, #tpu.memory_space<vmem>>, vector<2x8x8x64xf32>,
    %cst_171 = arith.constant 0.000000e+00 : f32
    %162 = vector.broadcast %cst_171 : f32 to vector<128x32xf32>
    %c0_172 = arith.constant 0 : index
    %c0_173 = arith.constant 0 : index
    %c0_174 = arith.constant 0 : index
    %c0_175 = arith.constant 0 : index
    %163 = vector.load %arg18[%c0_172, %c0_173, %c0_174, %c0_175] : memref<2x10x10x64xf32, #tpu.memory_space<vmem>>, vector<2x8x8x64xf32>
    %164 = vector.shape_cast %163 : vector<2x8x8x64xf32> to vector<128x64xf32>
    %165 = arith.truncf %164 : vector<128x64xf32> to vector<128x64xbf16>
    %c0_176 = arith.constant 0 : index
    %c0_177 = arith.constant 0 : index
    %c0_178 = arith.constant 0 : index
    %166 = vector.load %arg4[%c0_176, %c0_177, %c0_178] : memref<9x64x32xbf16, #tpu.memory_space<vmem>>, vector<1x64x32xbf16>
    %167 = vector.shape_cast %166 : vector<1x64x32xbf16> to vector<64x32xbf16>
    %cst_179 = arith.constant dense<0.000000e+00> : vector<128x32xf32>
    %168 = tpu.matmul %165, %167, %cst_179 {dimension_numbers = #tpu.dot_dimension_numbers<[1], [0], [0], [1], [0, 0, 1, 1], [], []>} : vector<128x64xbf16>, vector<64x32xbf16>, vector<128x32xf32> -> vector<128x32xf32>
    %169 = arith.addf %162, %168 : vector<128x32xf32>
    %c0_180 = arith.constant 0 : index
    %c0_181 = arith.constant 0 : index
    %c1_182 = arith.constant 1 : index
    %c0_183 = arith.constant 0 : index
    %170 = vector.load %arg18[%c0_180, %c0_181, %c1_182, %c0_183] : memref<2x10x10x64xf32, #tpu.memory_space<vmem>>, vector<2x8x8x64xf32>
    %171 = vector.shape_cast %170 : vector<2x8x8x64xf32> to vector<128x64xf32>
    %172 = arith.truncf %171 : vector<128x64xf32> to vector<128x64xbf16>
    %c1_184 = arith.constant 1 : index
    %c0_185 = arith.constant 0 : index
    %c0_186 = arith.constant 0 : index
    %173 = vector.load %arg4[%c1_184, %c0_185, %c0_186] : memref<9x64x32xbf16, #tpu.memory_space<vmem>>, vector<1x64x32xbf16>
    %174 = vector.shape_cast %173 : vector<1x64x32xbf16> to vector<64x32xbf16>
    %cst_187 = arith.constant dense<0.000000e+00> : vector<128x32xf32>
    %175 = tpu.matmul %172, %174, %cst_187 {dimension_numbers = #tpu.dot_dimension_numbers<[1], [0], [0], [1], [0, 0, 1, 1], [], []>} : vector<128x64xbf16>, vector<64x32xbf16>, vector<128x32xf32> -> vector<128x32xf32>
    %176 = arith.addf %169, %175 : vector<128x32xf32>
    %c0_188 = arith.constant 0 : index
    %c0_189 = arith.constant 0 : index
    %c2_190 = arith.constant 2 : index
    %c0_191 = arith.constant 0 : index
    %177 = vector.load %arg18[%c0_188, %c0_189, %c2_190, %c0_191] : memref<2x10x10x64xf32, #tpu.memory_space<vmem>>, vector<2x8x8x64xf32>
    %178 = vector.shape_cast %177 : vector<2x8x8x64xf32> to vector<128x64xf32>
    %179 = arith.truncf %178 : vector<128x64xf32> to vector<128x64xbf16>
    %c2_192 = arith.constant 2 : index
    %c0_193 = arith.constant 0 : index
    %c0_194 = arith.constant 0 : index
    %180 = vector.load %arg4[%c2_192, %c0_193, %c0_194] : memref<9x64x32xbf16, #tpu.memory_space<vmem>>, vector<1x64x32xbf16>
    %181 = vector.shape_cast %180 : vector<1x64x32xbf16> to vector<64x32xbf16>
    %cst_195 = arith.constant dense<0.000000e+00> : vector<128x32xf32>
    %182 = tpu.matmul %179, %181, %cst_195 {dimension_numbers = #tpu.dot_dimension_numbers<[1], [0], [0], [1], [0, 0, 1, 1], [], []>} : vector<128x64xbf16>, vector<64x32xbf16>, vector<128x32xf32> -> vector<128x32xf32>
    %183 = arith.addf %176, %182 : vector<128x32xf32>
    %c0_196 = arith.constant 0 : index
    %c1_197 = arith.constant 1 : index
    %c0_198 = arith.constant 0 : index
    %c0_199 = arith.constant 0 : index
    %184 = vector.load %arg18[%c0_196, %c1_197, %c0_198, %c0_199] : memref<2x10x10x64xf32, #tpu.memory_space<vmem>>, vector<2x8x8x64xf32>
    %185 = vector.shape_cast %184 : vector<2x8x8x64xf32> to vector<128x64xf32>
    %186 = arith.truncf %185 : vector<128x64xf32> to vector<128x64xbf16>
    %c3_200 = arith.constant 3 : index
    %c0_201 = arith.constant 0 : index
    %c0_202 = arith.constant 0 : index
    %187 = vector.load %arg4[%c3_200, %c0_201, %c0_202] : memref<9x64x32xbf16, #tpu.memory_space<vmem>>, vector<1x64x32xbf16>
    %188 = vector.shape_cast %187 : vector<1x64x32xbf16> to vector<64x32xbf16>
    %cst_203 = arith.constant dense<0.000000e+00> : vector<128x32xf32>
    %189 = tpu.matmul %186, %188, %cst_203 {dimension_numbers = #tpu.dot_dimension_numbers<[1], [0], [0], [1], [0, 0, 1, 1], [], []>} : vector<128x64xbf16>, vector<64x32xbf16>, vector<128x32xf32> -> vector<128x32xf32>
    %190 = arith.addf %183, %189 : vector<128x32xf32>
    %c0_204 = arith.constant 0 : index
    %c1_205 = arith.constant 1 : index
    %c1_206 = arith.constant 1 : index
    %c0_207 = arith.constant 0 : index
    %191 = vector.load %arg18[%c0_204, %c1_205, %c1_206, %c0_207] : memref<2x10x10x64xf32, #tpu.memory_space<vmem>>, vector<2x8x8x64xf32>
    %192 = vector.shape_cast %191 : vector<2x8x8x64xf32> to vector<128x64xf32>
    %193 = arith.truncf %192 : vector<128x64xf32> to vector<128x64xbf16>
    %c4_208 = arith.constant 4 : index
    %c0_209 = arith.constant 0 : index
    %c0_210 = arith.constant 0 : index
    %194 = vector.load %arg4[%c4_208, %c0_209, %c0_210] : memref<9x64x32xbf16, #tpu.memory_space<vmem>>, vector<1x64x32xbf16>
    %195 = vector.shape_cast %194 : vector<1x64x32xbf16> to vector<64x32xbf16>
    %cst_211 = arith.constant dense<0.000000e+00> : vector<128x32xf32>
    %196 = tpu.matmul %193, %195, %cst_211 {dimension_numbers = #tpu.dot_dimension_numbers<[1], [0], [0], [1], [0, 0, 1, 1], [], []>} : vector<128x64xbf16>, vector<64x32xbf16>, vector<128x32xf32> -> vector<128x32xf32>
    %197 = arith.addf %190, %196 : vector<128x32xf32>
    %c0_212 = arith.constant 0 : index
    %c1_213 = arith.constant 1 : index
    %c2_214 = arith.constant 2 : index
    %c0_215 = arith.constant 0 : index
    %198 = vector.load %arg18[%c0_212, %c1_213, %c2_214, %c0_215] : memref<2x10x10x64xf32, #tpu.memory_space<vmem>>, vector<2x8x8x64xf32>
    %199 = vector.shape_cast %198 : vector<2x8x8x64xf32> to vector<128x64xf32>
    %200 = arith.truncf %199 : vector<128x64xf32> to vector<128x64xbf16>
    %c5_216 = arith.constant 5 : index
    %c0_217 = arith.constant 0 : index
    %c0_218 = arith.constant 0 : index
    %201 = vector.load %arg4[%c5_216, %c0_217, %c0_218] : memref<9x64x32xbf16, #tpu.memory_space<vmem>>, vector<1x64x32xbf16>
    %202 = vector.shape_cast %201 : vector<1x64x32xbf16> to vector<64x32xbf16>
    %cst_219 = arith.constant dense<0.000000e+00> : vector<128x32xf32>
    %203 = tpu.matmul %200, %202, %cst_219 {dimension_numbers = #tpu.dot_dimension_numbers<[1], [0], [0], [1], [0, 0, 1, 1], [], []>} : vector<128x64xbf16>, vector<64x32xbf16>, vector<128x32xf32> -> vector<128x32xf32>
    %204 = arith.addf %197, %203 : vector<128x32xf32>
    %c0_220 = arith.constant 0 : index
    %c2_221 = arith.constant 2 : index
    %c0_222 = arith.constant 0 : index
    %c0_223 = arith.constant 0 : index
    %205 = vector.load %arg18[%c0_220, %c2_221, %c0_222, %c0_223] : memref<2x10x10x64xf32, #tpu.memory_space<vmem>>, vector<2x8x8x64xf32>
    %206 = vector.shape_cast %205 : vector<2x8x8x64xf32> to vector<128x64xf32>
    %207 = arith.truncf %206 : vector<128x64xf32> to vector<128x64xbf16>
    %c6_224 = arith.constant 6 : index
    %c0_225 = arith.constant 0 : index
    %c0_226 = arith.constant 0 : index
    %208 = vector.load %arg4[%c6_224, %c0_225, %c0_226] : memref<9x64x32xbf16, #tpu.memory_space<vmem>>, vector<1x64x32xbf16>
    %209 = vector.shape_cast %208 : vector<1x64x32xbf16> to vector<64x32xbf16>
    %cst_227 = arith.constant dense<0.000000e+00> : vector<128x32xf32>
    %210 = tpu.matmul %207, %209, %cst_227 {dimension_numbers = #tpu.dot_dimension_numbers<[1], [0], [0], [1], [0, 0, 1, 1], [], []>} : vector<128x64xbf16>, vector<64x32xbf16>, vector<128x32xf32> -> vector<128x32xf32>
    %211 = arith.addf %204, %210 : vector<128x32xf32>
    %c0_228 = arith.constant 0 : index
    %c2_229 = arith.constant 2 : index
    %c1_230 = arith.constant 1 : index
    %c0_231 = arith.constant 0 : index
    %212 = vector.load %arg18[%c0_228, %c2_229, %c1_230, %c0_231] : memref<2x10x10x64xf32, #tpu.memory_space<vmem>>, vector<2x8x8x64xf32>
    %213 = vector.shape_cast %212 : vector<2x8x8x64xf32> to vector<128x64xf32>
    %214 = arith.truncf %213 : vector<128x64xf32> to vector<128x64xbf16>
    %c7_232 = arith.constant 7 : index
    %c0_233 = arith.constant 0 : index
    %c0_234 = arith.constant 0 : index
    %215 = vector.load %arg4[%c7_232, %c0_233, %c0_234] : memref<9x64x32xbf16, #tpu.memory_space<vmem>>, vector<1x64x32xbf16>
    %216 = vector.shape_cast %215 : vector<1x64x32xbf16> to vector<64x32xbf16>
    %cst_235 = arith.constant dense<0.000000e+00> : vector<128x32xf32>
    %217 = tpu.matmul %214, %216, %cst_235 {dimension_numbers = #tpu.dot_dimension_numbers<[1], [0], [0], [1], [0, 0, 1, 1], [], []>} : vector<128x64xbf16>, vector<64x32xbf16>, vector<128x32xf32> -> vector<128x32xf32>
    %218 = arith.addf %211, %217 : vector<128x32xf32>
    %c0_236 = arith.constant 0 : index
    %c2_237 = arith.constant 2 : index
    %c2_238 = arith.constant 2 : index
    %c0_239 = arith.constant 0 : index
    %219 = vector.load %arg18[%c0_236, %c2_237, %c2_238, %c0_239] : memref<2x10x10x64xf32, #tpu.memory_space<vmem>>, vector<2x8x8x64xf32>
    %220 = vector.shape_cast %219 : vector<2x8x8x64xf32> to vector<128x64xf32>
    %221 = arith.truncf %220 : vector<128x64xf32> to vector<128x64xbf16>
    %c8_240 = arith.constant 8 : index
    %c0_241 = arith.constant 0 : index
    %c0_242 = arith.constant 0 : index
    %222 = vector.load %arg4[%c8_240, %c0_241, %c0_242] : memref<9x64x32xbf16, #tpu.memory_space<vmem>>, vector<1x64x32xbf16>
    %223 = vector.shape_cast %222 : vector<1x64x32xbf16> to vector<64x32xbf16>
    %cst_243 = arith.constant dense<0.000000e+00> : vector<128x32xf32>
    %224 = tpu.matmul %221, %223, %cst_243 {dimension_numbers = #tpu.dot_dimension_numbers<[1], [0], [0], [1], [0, 0, 1, 1], [], []>} : vector<128x64xbf16>, vector<64x32xbf16>, vector<128x32xf32> -> vector<128x32xf32>
    %225 = arith.addf %218, %224 : vector<128x32xf32>
    %c2_244 = arith.constant 2 : index
    %226 = memref.load %arg0[%c2_244] : memref<3xf32, #tpu.memory_space<smem>>
    %c0_245 = arith.constant 0 : index
    %c0_246 = arith.constant 0 : index
    %227 = vector.load %arg10[%c0_245, %c0_246] : memref<1x32xf32, #tpu.memory_space<vmem>>, vector<1x32xf32>
    %228 = vector.broadcast %227 : vector<1x32xf32> to vector<128x32xf32>
    %229 = arith.mulf %225, %228 : vector<128x32xf32>
    %c0_247 = arith.constant 0 : index
    %c0_248 = arith.constant 0 : index
    %230 = vector.load %arg11[%c0_247, %c0_248] : memref<1x32xf32, #tpu.memory_space<vmem>>, vector<1x32xf32>
    %231 = vector.broadcast %230 : vector<1x32xf32> to vector<128x32xf32>
    %232 = arith.addf %229, %231 : vector<128x32xf32>
    %cst_249 = arith.constant 0.000000e+00 : f32
    %233 = vector.broadcast %cst_249 : f32 to vector<128x32xf32>
    %234 = arith.cmpf ogt, %232, %233 : vector<128x32xf32>
    %235 = vector.broadcast %226 : f32 to vector<128x32xf32>
    %236 = arith.mulf %235, %232 : vector<128x32xf32>
    %237 = arith.select %234, %232, %236 : vector<128x32xi1>, vector<128x32xf32>
    %238 = vector.shape_cast %237 : vector<128x32xf32> to vector<2x8x8x32xf32>
    %c0_250 = arith.constant 0 : index
    %c1_251 = arith.constant 1 : index
    %c1_252 = arith.constant 1 : index
    %c0_253 = arith.constant 0 : index
    %239 = vector.load %arg19[%c0_250, %c1_251, %c1_252, %c0_253] : memref<2x10x10x32xf32, #tpu.memory_space<vmem>>, vector<2x8x8x32xf32>
    tpu.vector_store %arg19[%c0_250, %c1_251, %c1_252, %c0_253], %238 {strides = array<i32>} : memref<2x10x10x32xf32, #tpu.memory_space<vmem>>, vector<2x8x8x32xf32>,
    %cst_254 = arith.constant 0.000000e+00 : f32
    %240 = vector.broadcast %cst_254 : f32 to vector<128x2xf32>
    %c0_255 = arith.constant 0 : index
    %c0_256 = arith.constant 0 : index
    %c0_257 = arith.constant 0 : index
    %c0_258 = arith.constant 0 : index
    %241 = vector.load %arg19[%c0_255, %c0_256, %c0_257, %c0_258] : memref<2x10x10x32xf32, #tpu.memory_space<vmem>>, vector<2x8x8x32xf32>
    %242 = vector.shape_cast %241 : vector<2x8x8x32xf32> to vector<128x32xf32>
    %243 = arith.truncf %242 : vector<128x32xf32> to vector<128x32xbf16>
    %c0_259 = arith.constant 0 : index
    %c0_260 = arith.constant 0 : index
    %c0_261 = arith.constant 0 : index
    %244 = vector.load %arg5[%c0_259, %c0_260, %c0_261] : memref<9x32x2xbf16, #tpu.memory_space<vmem>>, vector<1x32x2xbf16>
    %245 = vector.shape_cast %244 : vector<1x32x2xbf16> to vector<32x2xbf16>
    %cst_262 = arith.constant dense<0.000000e+00> : vector<128x2xf32>
    %246 = tpu.matmul %243, %245, %cst_262 {dimension_numbers = #tpu.dot_dimension_numbers<[1], [0], [0], [1], [0, 0, 1, 1], [], []>} : vector<128x32xbf16>, vector<32x2xbf16>, vector<128x2xf32> -> vector<128x2xf32>
    %247 = arith.addf %240, %246 : vector<128x2xf32>
    %c0_263 = arith.constant 0 : index
    %c0_264 = arith.constant 0 : index
    %c1_265 = arith.constant 1 : index
    %c0_266 = arith.constant 0 : index
    %248 = vector.load %arg19[%c0_263, %c0_264, %c1_265, %c0_266] : memref<2x10x10x32xf32, #tpu.memory_space<vmem>>, vector<2x8x8x32xf32>
    %249 = vector.shape_cast %248 : vector<2x8x8x32xf32> to vector<128x32xf32>
    %250 = arith.truncf %249 : vector<128x32xf32> to vector<128x32xbf16>
    %c1_267 = arith.constant 1 : index
    %c0_268 = arith.constant 0 : index
    %c0_269 = arith.constant 0 : index
    %251 = vector.load %arg5[%c1_267, %c0_268, %c0_269] : memref<9x32x2xbf16, #tpu.memory_space<vmem>>, vector<1x32x2xbf16>
    %252 = vector.shape_cast %251 : vector<1x32x2xbf16> to vector<32x2xbf16>
    %cst_270 = arith.constant dense<0.000000e+00> : vector<128x2xf32>
    %253 = tpu.matmul %250, %252, %cst_270 {dimension_numbers = #tpu.dot_dimension_numbers<[1], [0], [0], [1], [0, 0, 1, 1], [], []>} : vector<128x32xbf16>, vector<32x2xbf16>, vector<128x2xf32> -> vector<128x2xf32>
    %254 = arith.addf %247, %253 : vector<128x2xf32>
    %c0_271 = arith.constant 0 : index
    %c0_272 = arith.constant 0 : index
    %c2_273 = arith.constant 2 : index
    %c0_274 = arith.constant 0 : index
    %255 = vector.load %arg19[%c0_271, %c0_272, %c2_273, %c0_274] : memref<2x10x10x32xf32, #tpu.memory_space<vmem>>, vector<2x8x8x32xf32>
    %256 = vector.shape_cast %255 : vector<2x8x8x32xf32> to vector<128x32xf32>
    %257 = arith.truncf %256 : vector<128x32xf32> to vector<128x32xbf16>
    %c2_275 = arith.constant 2 : index
    %c0_276 = arith.constant 0 : index
    %c0_277 = arith.constant 0 : index
    %258 = vector.load %arg5[%c2_275, %c0_276, %c0_277] : memref<9x32x2xbf16, #tpu.memory_space<vmem>>, vector<1x32x2xbf16>
    %259 = vector.shape_cast %258 : vector<1x32x2xbf16> to vector<32x2xbf16>
    %cst_278 = arith.constant dense<0.000000e+00> : vector<128x2xf32>
    %260 = tpu.matmul %257, %259, %cst_278 {dimension_numbers = #tpu.dot_dimension_numbers<[1], [0], [0], [1], [0, 0, 1, 1], [], []>} : vector<128x32xbf16>, vector<32x2xbf16>, vector<128x2xf32> -> vector<128x2xf32>
    %261 = arith.addf %254, %260 : vector<128x2xf32>
    %c0_279 = arith.constant 0 : index
    %c1_280 = arith.constant 1 : index
    %c0_281 = arith.constant 0 : index
    %c0_282 = arith.constant 0 : index
    %262 = vector.load %arg19[%c0_279, %c1_280, %c0_281, %c0_282] : memref<2x10x10x32xf32, #tpu.memory_space<vmem>>, vector<2x8x8x32xf32>
    %263 = vector.shape_cast %262 : vector<2x8x8x32xf32> to vector<128x32xf32>
    %264 = arith.truncf %263 : vector<128x32xf32> to vector<128x32xbf16>
    %c3_283 = arith.constant 3 : index
    %c0_284 = arith.constant 0 : index
    %c0_285 = arith.constant 0 : index
    %265 = vector.load %arg5[%c3_283, %c0_284, %c0_285] : memref<9x32x2xbf16, #tpu.memory_space<vmem>>, vector<1x32x2xbf16>
    %266 = vector.shape_cast %265 : vector<1x32x2xbf16> to vector<32x2xbf16>
    %cst_286 = arith.constant dense<0.000000e+00> : vector<128x2xf32>
    %267 = tpu.matmul %264, %266, %cst_286 {dimension_numbers = #tpu.dot_dimension_numbers<[1], [0], [0], [1], [0, 0, 1, 1], [], []>} : vector<128x32xbf16>, vector<32x2xbf16>, vector<128x2xf32> -> vector<128x2xf32>
    %268 = arith.addf %261, %267 : vector<128x2xf32>
    %c0_287 = arith.constant 0 : index
    %c1_288 = arith.constant 1 : index
    %c1_289 = arith.constant 1 : index
    %c0_290 = arith.constant 0 : index
    %269 = vector.load %arg19[%c0_287, %c1_288, %c1_289, %c0_290] : memref<2x10x10x32xf32, #tpu.memory_space<vmem>>, vector<2x8x8x32xf32>
    %270 = vector.shape_cast %269 : vector<2x8x8x32xf32> to vector<128x32xf32>
    %271 = arith.truncf %270 : vector<128x32xf32> to vector<128x32xbf16>
    %c4_291 = arith.constant 4 : index
    %c0_292 = arith.constant 0 : index
    %c0_293 = arith.constant 0 : index
    %272 = vector.load %arg5[%c4_291, %c0_292, %c0_293] : memref<9x32x2xbf16, #tpu.memory_space<vmem>>, vector<1x32x2xbf16>
    %273 = vector.shape_cast %272 : vector<1x32x2xbf16> to vector<32x2xbf16>
    %cst_294 = arith.constant dense<0.000000e+00> : vector<128x2xf32>
    %274 = tpu.matmul %271, %273, %cst_294 {dimension_numbers = #tpu.dot_dimension_numbers<[1], [0], [0], [1], [0, 0, 1, 1], [], []>} : vector<128x32xbf16>, vector<32x2xbf16>, vector<128x2xf32> -> vector<128x2xf32>
    %275 = arith.addf %268, %274 : vector<128x2xf32>
    %c0_295 = arith.constant 0 : index
    %c1_296 = arith.constant 1 : index
    %c2_297 = arith.constant 2 : index
    %c0_298 = arith.constant 0 : index
    %276 = vector.load %arg19[%c0_295, %c1_296, %c2_297, %c0_298] : memref<2x10x10x32xf32, #tpu.memory_space<vmem>>, vector<2x8x8x32xf32>
    %277 = vector.shape_cast %276 : vector<2x8x8x32xf32> to vector<128x32xf32>
    %278 = arith.truncf %277 : vector<128x32xf32> to vector<128x32xbf16>
    %c5_299 = arith.constant 5 : index
    %c0_300 = arith.constant 0 : index
    %c0_301 = arith.constant 0 : index
    %279 = vector.load %arg5[%c5_299, %c0_300, %c0_301] : memref<9x32x2xbf16, #tpu.memory_space<vmem>>, vector<1x32x2xbf16>
    %280 = vector.shape_cast %279 : vector<1x32x2xbf16> to vector<32x2xbf16>
    %cst_302 = arith.constant dense<0.000000e+00> : vector<128x2xf32>
    %281 = tpu.matmul %278, %280, %cst_302 {dimension_numbers = #tpu.dot_dimension_numbers<[1], [0], [0], [1], [0, 0, 1, 1], [], []>} : vector<128x32xbf16>, vector<32x2xbf16>, vector<128x2xf32> -> vector<128x2xf32>
    %282 = arith.addf %275, %281 : vector<128x2xf32>
    %c0_303 = arith.constant 0 : index
    %c2_304 = arith.constant 2 : index
    %c0_305 = arith.constant 0 : index
    %c0_306 = arith.constant 0 : index
    %283 = vector.load %arg19[%c0_303, %c2_304, %c0_305, %c0_306] : memref<2x10x10x32xf32, #tpu.memory_space<vmem>>, vector<2x8x8x32xf32>
    %284 = vector.shape_cast %283 : vector<2x8x8x32xf32> to vector<128x32xf32>
    %285 = arith.truncf %284 : vector<128x32xf32> to vector<128x32xbf16>
    %c6_307 = arith.constant 6 : index
    %c0_308 = arith.constant 0 : index
    %c0_309 = arith.constant 0 : index
    %286 = vector.load %arg5[%c6_307, %c0_308, %c0_309] : memref<9x32x2xbf16, #tpu.memory_space<vmem>>, vector<1x32x2xbf16>
    %287 = vector.shape_cast %286 : vector<1x32x2xbf16> to vector<32x2xbf16>
    %cst_310 = arith.constant dense<0.000000e+00> : vector<128x2xf32>
    %288 = tpu.matmul %285, %287, %cst_310 {dimension_numbers = #tpu.dot_dimension_numbers<[1], [0], [0], [1], [0, 0, 1, 1], [], []>} : vector<128x32xbf16>, vector<32x2xbf16>, vector<128x2xf32> -> vector<128x2xf32>
    %289 = arith.addf %282, %288 : vector<128x2xf32>
    %c0_311 = arith.constant 0 : index
    %c2_312 = arith.constant 2 : index
    %c1_313 = arith.constant 1 : index
    %c0_314 = arith.constant 0 : index
    %290 = vector.load %arg19[%c0_311, %c2_312, %c1_313, %c0_314] : memref<2x10x10x32xf32, #tpu.memory_space<vmem>>, vector<2x8x8x32xf32>
    %291 = vector.shape_cast %290 : vector<2x8x8x32xf32> to vector<128x32xf32>
    %292 = arith.truncf %291 : vector<128x32xf32> to vector<128x32xbf16>
    %c7_315 = arith.constant 7 : index
    %c0_316 = arith.constant 0 : index
    %c0_317 = arith.constant 0 : index
    %293 = vector.load %arg5[%c7_315, %c0_316, %c0_317] : memref<9x32x2xbf16, #tpu.memory_space<vmem>>, vector<1x32x2xbf16>
    %294 = vector.shape_cast %293 : vector<1x32x2xbf16> to vector<32x2xbf16>
    %cst_318 = arith.constant dense<0.000000e+00> : vector<128x2xf32>
    %295 = tpu.matmul %292, %294, %cst_318 {dimension_numbers = #tpu.dot_dimension_numbers<[1], [0], [0], [1], [0, 0, 1, 1], [], []>} : vector<128x32xbf16>, vector<32x2xbf16>, vector<128x2xf32> -> vector<128x2xf32>
    %296 = arith.addf %289, %295 : vector<128x2xf32>
    %c0_319 = arith.constant 0 : index
    %c2_320 = arith.constant 2 : index
    %c2_321 = arith.constant 2 : index
    %c0_322 = arith.constant 0 : index
    %297 = vector.load %arg19[%c0_319, %c2_320, %c2_321, %c0_322] : memref<2x10x10x32xf32, #tpu.memory_space<vmem>>, vector<2x8x8x32xf32>
    %298 = vector.shape_cast %297 : vector<2x8x8x32xf32> to vector<128x32xf32>
    %299 = arith.truncf %298 : vector<128x32xf32> to vector<128x32xbf16>
    %c8_323 = arith.constant 8 : index
    %c0_324 = arith.constant 0 : index
    %c0_325 = arith.constant 0 : index
    %300 = vector.load %arg5[%c8_323, %c0_324, %c0_325] : memref<9x32x2xbf16, #tpu.memory_space<vmem>>, vector<1x32x2xbf16>
    %301 = vector.shape_cast %300 : vector<1x32x2xbf16> to vector<32x2xbf16>
    %cst_326 = arith.constant dense<0.000000e+00> : vector<128x2xf32>
    %302 = tpu.matmul %299, %301, %cst_326 {dimension_numbers = #tpu.dot_dimension_numbers<[1], [0], [0], [1], [0, 0, 1, 1], [], []>} : vector<128x32xbf16>, vector<32x2xbf16>, vector<128x2xf32> -> vector<128x2xf32>
    %303 = arith.addf %296, %302 : vector<128x2xf32>
    %c0_327 = arith.constant 0 : index
    %c0_328 = arith.constant 0 : index
    %304 = vector.load %arg12[%c0_327, %c0_328] : memref<1x2xf32, #tpu.memory_space<vmem>>, vector<1x2xf32>
    %305 = vector.broadcast %304 : vector<1x2xf32> to vector<128x2xf32>
    %306 = arith.addf %303, %305 : vector<128x2xf32>
    %307 = vector.shape_cast %306 : vector<128x2xf32> to vector<2x64x2xf32>
    %cst_329 = arith.constant 6.400000e+01 : f32
    %308 = vector.broadcast %cst_329 : f32 to vector<2x64x2xf32>
    %309 = arith.mulf %307, %308 : vector<2x64x2xf32>
    %cst_330 = arith.constant dense<0xFF800000> : vector<2x2xf32>
    %310 = vector.multi_reduction <maximumf>, %309, %cst_330 [1] : vector<2x64x2xf32> to vector<2x2xf32>
    %311 = vector.shape_cast %310 : vector<2x2xf32> to vector<2x1x2xf32>
    %312 = vector.broadcast %311 : vector<2x1x2xf32> to vector<2x64x2xf32>
    %313 = arith.subf %309, %312 : vector<2x64x2xf32>
    %314 = math.exp %313 : vector<2x64x2xf32>
    %cst_331 = arith.constant dense<0.000000e+00> : vector<2x2xf32>
    %315 = vector.multi_reduction <add>, %314, %cst_331 [1] : vector<2x64x2xf32> to vector<2x2xf32>
    %316 = vector.shape_cast %315 : vector<2x2xf32> to vector<2x1x2xf32>
    %317 = tpu.reciprocal %316 {approx = true} : vector<2x1x2xf32> -> vector<2x1x2xf32>
    %318 = vector.broadcast %317 : vector<2x1x2xf32> to vector<2x64x2xf32>
    %319 = arith.mulf %314, %318 : vector<2x64x2xf32>
    %c0_332 = arith.constant 0 : index
    %c0_333 = arith.constant 0 : index
    %c0_334 = arith.constant 0 : index
    %320 = vector.load %arg13[%c0_332, %c0_333, %c0_334] : memref<1x64x2xf32, #tpu.memory_space<vmem>>, vector<1x64x2xf32>
    %321 = vector.broadcast %320 : vector<1x64x2xf32> to vector<2x64x2xf32>
    %322 = arith.mulf %319, %321 : vector<2x64x2xf32>
    %cst_335 = arith.constant dense<0.000000e+00> : vector<2x2xf32>
    %323 = vector.multi_reduction <add>, %322, %cst_335 [1] : vector<2x64x2xf32> to vector<2x2xf32>
    %c0_336 = arith.constant 0 : index
    %c0_337 = arith.constant 0 : index
    %c0_338 = arith.constant 0 : index
    %324 = vector.load %arg14[%c0_336, %c0_337, %c0_338] : memref<1x64x2xf32, #tpu.memory_space<vmem>>, vector<1x64x2xf32>
    %325 = vector.broadcast %324 : vector<1x64x2xf32> to vector<2x64x2xf32>
    %326 = arith.mulf %319, %325 : vector<2x64x2xf32>
    %cst_339 = arith.constant dense<0.000000e+00> : vector<2x2xf32>
    %327 = vector.multi_reduction <add>, %326, %cst_339 [1] : vector<2x64x2xf32> to vector<2x2xf32>
    %cst_340 = arith.constant 146.142853 : f32
    %328 = vector.broadcast %cst_340 : f32 to vector<2x2xf32>
    %329 = arith.mulf %323, %328 : vector<2x2xf32>
    %c0_341 = arith.constant 0 : index
    %c0_342 = arith.constant 0 : index
    %330 = vector.load %arg15[%c0_341, %c0_342] : memref<2x2xf32, #tpu.memory_space<vmem>>, vector<2x2xf32>
    tpu.vector_store %arg15[%c0_341, %c0_342], %329 {strides = array<i32>} : memref<2x2xf32, #tpu.memory_space<vmem>>, vector<2x2xf32>,
    %cst_343 = arith.constant 146.142853 : f32
    %331 = vector.broadcast %cst_343 : f32 to vector<2x2xf32>
    %332 = arith.mulf %327, %331 : vector<2x2xf32>
    %c0_344 = arith.constant 0 : index
    %c0_345 = arith.constant 0 : index
    %333 = vector.load %arg16[%c0_344, %c0_345] : memref<2x2xf32, #tpu.memory_space<vmem>>, vector<2x2xf32>
    tpu.vector_store %arg16[%c0_344, %c0_345], %332 {strides = array<i32>} : memref<2x2xf32, #tpu.memory_space<vmem>>, vector<2x2xf32>,
    return
  }
}

</mosaic_0001>

<llo_original>
// kernel: point_gen_forward.1
$region0: #{point_gen_forward.1}
  #allocation0 [shape = 'u32[]', space=smem, size = 0x4, offset = 0x4, fixed_abs, tag = 'smem constant byte address 0x4 - core index']
  #allocation1 [shape = 'u32[144,128]{1,0:T(1,128)}', space=vmem, size = 0x12000, scoped, tag = 'internal scratch']
  #allocation2 [shape = 'f32[2,10,10,128]{3,2,1,0:T(8,128)}', space=vmem, size = 0x28000, scoped, tag = 'scratch operand']
  #allocation3 [shape = 'f32[2,10,10,64]{3,2,1,0:T(8,128)}', space=vmem, size = 0x28000, scoped, tag = 'scratch operand']
  #allocation4 [shape = 'f32[2,10,10,32]{3,2,1,0:T(8,128)}', space=vmem, size = 0x28000, scoped, tag = 'scratch operand']
  %s0 = inlined_call_operand.vmem [shape: f32[3], index: 0, kind: input, shape index: {}]
  %s1 = inlined_call_operand.vmem [shape: f32[2,10,10,256], index: 1, kind: input, shape index: {}]
  %s2 = inlined_call_operand.vmem [shape: bf16[9,256,128], index: 2, kind: input, shape index: {}]
  %s3 = inlined_call_operand.vmem [shape: bf16[9,128,64], index: 3, kind: input, shape index: {}]
  %s4 = inlined_call_operand.vmem [shape: bf16[9,64,32], index: 4, kind: input, shape index: {}]
  %s5 = inlined_call_operand.vmem [shape: bf16[9,32,2], index: 5, kind: input, shape index: {}]
  %s6 = inlined_call_operand.vmem [shape: f32[1,128], index: 6, kind: input, shape index: {}]
  %s7 = inlined_call_operand.vmem [shape: f32[1,128], index: 7, kind: input, shape index: {}]
  %s8 = inlined_call_operand.vmem [shape: f32[1,64], index: 8, kind: input, shape index: {}]
  %s9 = inlined_call_operand.vmem [shape: f32[1,64], index: 9, kind: input, shape index: {}]
  %s10 = inlined_call_operand.vmem [shape: f32[1,32], index: 10, kind: input, shape index: {}]
  %s11 = inlined_call_operand.vmem [shape: f32[1,32], index: 11, kind: input, shape index: {}]
  %s12 = inlined_call_operand.vmem [shape: f32[1,2], index: 12, kind: input, shape index: {}]
  %s13 = inlined_call_operand.vmem [shape: f32[1,64,2], index: 13, kind: input, shape index: {}]
  %s14 = inlined_call_operand.vmem [shape: f32[1,64,2], index: 14, kind: input, shape index: {}]
  %s15 = inlined_call_operand.vmem [shape: f32[2,2], index: 15, kind: output, shape index: {0}]
  %s16 = inlined_call_operand.vmem [shape: f32[2,2], index: 16, kind: output, shape index: {1}]
  %17 = xla_tuple %s15, %s16
  %s18 = sld [smem:[#allocation0]]
  $region82: #{point_gen_forward.1} parent=0
    _
  %s20 = ssub.s32 1, %s18
  %s21 = scalar_select 0, %s20, %s18
  $region1: #{point_gen_forward.1} parent=0
    #allocation5 [shape = 'u8[512]{0}', space=smem, size = 0x200, scoped, tag = 'input window, operand 0, single buffered']
    #allocation6 [shape = 's32[1]{0}', space=sflag, size = 0x4, scoped, tag = 'scoped memory for point_gen_forward.1']
    %22 = vsyncpa [#allocation6], 0
    // Predicated region
    $region2: #{point_gen_forward.1} parent=1 // pred_check
      _
    $region3: #{point_gen_forward.1} parent=1 // pred_check_branch
      %24 = sbr.rel (0) target = $region5
    $region4: #{point_gen_forward.1} parent=1 // pred_region
      %s26 = ssub.s32 16, 16
      %27 = vsyncadd [#allocation6], %s26
      %s29 = sshll.u32 %s0, 4
      %s30 = int_to_ptr.vmem [resolvable:$true] %s29
      %32 = dma.vmem_to_smem %s30, 16, [#allocation5], [#allocation6]
    $region5: #{point_gen_forward.1} parent=1 // pred_fallthru
      _
    // Predicated region
    $region6: #{point_gen_forward.1} parent=1 // pred_check
      _
    $region7: #{point_gen_forward.1} parent=1 // pred_check_branch
      %34 = sbr.rel (0) target = $region9
    $region8: #{point_gen_forward.1} parent=1 // pred_region
      _
    $region9: #{point_gen_forward.1} parent=1 // pred_fallthru
      _
    // Predicated region
    $region10: #{point_gen_forward.1} parent=1 // pred_check
      _
    $region11: #{point_gen_forward.1} parent=1 // pred_check_branch
      %36 = sbr.rel (0) target = $region13
    $region12: #{point_gen_forward.1} parent=1 // pred_region
      _
    $region13: #{point_gen_forward.1} parent=1 // pred_fallthru
      _
    // Predicated region
    $region14: #{point_gen_forward.1} parent=1 // pred_check
      _
    $region15: #{point_gen_forward.1} parent=1 // pred_check_branch
      %38 = sbr.rel (0) target = $region17
    $region16: #{point_gen_forward.1} parent=1 // pred_region
      _
    $region17: #{point_gen_forward.1} parent=1 // pred_fallthru
      _
    // Predicated region
    $region18: #{point_gen_forward.1} parent=1 // pred_check
      _
    $region19: #{point_gen_forward.1} parent=1 // pred_check_branch
      %40 = sbr.rel (0) target = $region21
    $region20: #{point_gen_forward.1} parent=1 // pred_region
      _
    $region21: #{point_gen_forward.1} parent=1 // pred_fallthru
      _
    // Predicated region
    $region22: #{point_gen_forward.1} parent=1 // pred_check
      _
    $region23: #{point_gen_forward.1} parent=1 // pred_check_branch
      %42 = sbr.rel (0) target = $region25
    $region24: #{point_gen_forward.1} parent=1 // pred_region
      _
    $region25: #{point_gen_forward.1} parent=1 // pred_fallthru
      _
    // Predicated region
    $region26: #{point_gen_forward.1} parent=1 // pred_check
      _
    $region27: #{point_gen_forward.1} parent=1 // pred_check_branch
      %44 = sbr.rel (0) target = $region29
    $region28: #{point_gen_forward.1} parent=1 // pred_region
      _
    $region29: #{point_gen_forward.1} parent=1 // pred_fallthru
      _
    // Predicated region
    $region30: #{point_gen_forward.1} parent=1 // pred_check
      _
    $region31: #{point_gen_forward.1} parent=1 // pred_check_branch
      %46 = sbr.rel (0) target = $region33
    $region32: #{point_gen_forward.1} parent=1 // pred_region
      _
    $region33: #{point_gen_forward.1} parent=1 // pred_fallthru
      _
    // Predicated region
    $region34: #{point_gen_forward.1} parent=1 // pred_check
      _
    $region35: #{point_gen_forward.1} parent=1 // pred_check_branch
      %48 = sbr.rel (0) target = $region37
    $region36: #{point_gen_forward.1} parent=1 // pred_region
      _
    $region37: #{point_gen_forward.1} parent=1 // pred_fallthru
      _
    // Predicated region
    $region38: #{point_gen_forward.1} parent=1 // pred_check
      _
    $region39: #{point_gen_forward.1} parent=1 // pred_check_branch
      %50 = sbr.rel (0) target = $region41
    $region40: #{point_gen_forward.1} parent=1 // pred_region
      _
    $region41: #{point_gen_forward.1} parent=1 // pred_fallthru
      _
    // Predicated region
    $region42: #{point_gen_forward.1} parent=1 // pred_check
      _
    $region43: #{point_gen_forward.1} parent=1 // pred_check_branch
      %52 = sbr.rel (0) target = $region45
    $region44: #{point_gen_forward.1} parent=1 // pred_region
      _
    $region45: #{point_gen_forward.1} parent=1 // pred_fallthru
      _
    // Predicated region
    $region46: #{point_gen_forward.1} parent=1 // pred_check
      _
    $region47: #{point_gen_forward.1} parent=1 // pred_check_branch
      %54 = sbr.rel (0) target = $region49
    $region48: #{point_gen_forward.1} parent=1 // pred_region
      _
    $region49: #{point_gen_forward.1} parent=1 // pred_fallthru
      _
    // Predicated region
    $region50: #{point_gen_forward.1} parent=1 // pred_check
      _
    $region51: #{point_gen_forward.1} parent=1 // pred_check_branch
      %56 = sbr.rel (0) target = $region53
    $region52: #{point_gen_forward.1} parent=1 // pred_region
      _
    $region53: #{point_gen_forward.1} parent=1 // pred_fallthru
      _
    // Predicated region
    $region54: #{point_gen_forward.1} parent=1 // pred_check
      _
    $region55: #{point_gen_forward.1} parent=1 // pred_check_branch
      %58 = sbr.rel (0) target = $region57
    $region56: #{point_gen_forward.1} parent=1 // pred_region
      _
    $region57: #{point_gen_forward.1} parent=1 // pred_fallthru
      _
    // Predicated region
    $region58: #{point_gen_forward.1} parent=1 // pred_check
      _
    $region59: #{point_gen_forward.1} parent=1 // pred_check_branch
      %60 = sbr.rel (0) target = $region61
    $region60: #{point_gen_forward.1} parent=1 // pred_region
      _
    $region61: #{point_gen_forward.1} parent=1 // pred_fallthru
      _
    // Predicated region
    $region62: #{point_gen_forward.1} parent=1 // pred_check
      _
    $region63: #{point_gen_forward.1} parent=1 // pred_check_branch
      %62 = sbr.rel (0) target = $region65
    $region64: #{point_gen_forward.1} parent=1 // pred_region
      %63 = dma.done [#allocation6], 16
    $region65: #{point_gen_forward.1} parent=1 // pred_fallthru
      _
    %64 = sfence
    %66 = vst [vmem:[#allocation2] sm:$0xff] 0.0
    %67 = vst [vmem:[#allocation2 + $0x8] sm:$0x3] 0.0
    %68 = vst [vmem:[#allocation2 + $0x10] sm:$0xff] 0.0
    %69 = vst [vmem:[#allocation2 + $0x18] sm:$0x3] 0.0
    %70 = vst [vmem:[#allocation2 + $0x20] sm:$0xff] 0.0
    %71 = vst [vmem:[#allocation2 + $0x28] sm:$0x3] 0.0
    %72 = vst [vmem:[#allocation2 + $0x30] sm:$0xff] 0.0
    %73 = vst [vmem:[#allocation2 + $0x38] sm:$0x3] 0.0
    %74 = vst [vmem:[#allocation2 + $0x40] sm:$0xff] 0.0
    %75 = vst [vmem:[#allocation2 + $0x48] sm:$0x3] 0.0
    %76 = vst [vmem:[#allocation2 + $0x50] sm:$0xff] 0.0
    %77 = vst [vmem:[#allocation2 + $0x58] sm:$0x3] 0.0
    %78 = vst [vmem:[#allocation2 + $0x60] sm:$0xff] 0.0
    %79 = vst [vmem:[#allocation2 + $0x68] sm:$0x3] 0.0
    %80 = vst [vmem:[#allocation2 + $0x70] sm:$0xff] 0.0
    %81 = vst [vmem:[#allocation2 + $0x78] sm:$0x3] 0.0
    %82 = vst [vmem:[#allocation2 + $0x80] sm:$0xff] 0.0
    %83 = vst [vmem:[#allocation2 + $0x88] sm:$0x3] 0.0
    %84 = vst [vmem:[#allocation2 + $0x90] sm:$0xff] 0.0
    %85 = vst [vmem:[#allocation2 + $0x98] sm:$0x3] 0.0
    %86 = vst [vmem:[#allocation2 + $0xa0] sm:$0xff] 0.0
    %87 = vst [vmem:[#allocation2 + $0xa8] sm:$0x3] 0.0
    %88 = vst [vmem:[#allocation2 + $0xb0] sm:$0xff] 0.0
    %89 = vst [vmem:[#allocation2 + $0xb8] sm:$0x3] 0.0
    %90 = vst [vmem:[#allocation2 + $0xc0] sm:$0xff] 0.0
    %91 = vst [vmem:[#allocation2 + $0xc8] sm:$0x3] 0.0
    %92 = vst [vmem:[#allocation2 + $0xd0] sm:$0xff] 0.0
    %93 = vst [vmem:[#allocation2 + $0xd8] sm:$0x3] 0.0
    %94 = vst [vmem:[#allocation2 + $0xe0] sm:$0xff] 0.0
    %95 = vst [vmem:[#allocation2 + $0xe8] sm:$0x3] 0.0
    %96 = vst [vmem:[#allocation2 + $0xf0] sm:$0xff] 0.0
    %97 = vst [vmem:[#allocation2 + $0xf8] sm:$0x3] 0.0
    %98 = vst [vmem:[#allocation2 + $0x100] sm:$0xff] 0.0
    %99 = vst [vmem:[#allocation2 + $0x108] sm:$0x3] 0.0
    %100 = vst [vmem:[#allocation2 + $0x110] sm:$0xff] 0.0
    %101 = vst [vmem:[#allocation2 + $0x118] sm:$0x3] 0.0
    %102 = vst [vmem:[#allocation2 + $0x120] sm:$0xff] 0.0
    %103 = vst [vmem:[#allocation2 + $0x128] sm:$0x3] 0.0
    %104 = vst [vmem:[#allocation2 + $0x130] sm:$0xff] 0.0
    %105 = vst [vmem:[#allocation2 + $0x138] sm:$0x3] 0.0
    %vm106 = vcmask 523264
    %107 = vst.msk [vmem:[#allocation3] sm:$0xff] %vm106, 0.0
    %vm108 = vcmask 517120
    %109 = vst.msk [vmem:[#allocation3 + $0x8] sm:$0x3] %vm108, 0.0
    %110 = vst.msk [vmem:[#allocation3 + $0x10] sm:$0xff] %vm106, 0.0
    %111 = vst.msk [vmem:[#allocation3 + $0x18] sm:$0x3] %vm108, 0.0
    %112 = vst.msk [vmem:[#allocation3 + $0x20] sm:$0xff] %vm106, 0.0
    %113 = vst.msk [vmem:[#allocation3 + $0x28] sm:$0x3] %vm108, 0.0
    %114 = vst.msk [vmem:[#allocation3 + $0x30] sm:$0xff] %vm106, 0.0
    %115 = vst.msk [vmem:[#allocation3 + $0x38] sm:$0x3] %vm108, 0.0
    %116 = vst.msk [vmem:[#allocation3 + $0x40] sm:$0xff] %vm106, 0.0
    %117 = vst.msk [vmem:[#allocation3 + $0x48] sm:$0x3] %vm108, 0.0
    %118 = vst.msk [vmem:[#allocation3 + $0x50] sm:$0xff] %vm106, 0.0
    %119 = vst.msk [vmem:[#allocation3 + $0x58] sm:$0x3] %vm108, 0.0
    %120 = vst.msk [vmem:[#allocation3 + $0x60] sm:$0xff] %vm106, 0.0
    %121 = vst.msk [vmem:[#allocation3 + $0x68] sm:$0x3] %vm108, 0.0
    %122 = vst.msk [vmem:[#allocation3 + $0x70] sm:$0xff] %vm106, 0.0
    %123 = vst.msk [vmem:[#allocation3 + $0x78] sm:$0x3] %vm108, 0.0
    %124 = vst.msk [vmem:[#allocation3 + $0x80] sm:$0xff] %vm106, 0.0
    %125 = vst.msk [vmem:[#allocation3 + $0x88] sm:$0x3] %vm108, 0.0
    %126 = vst.msk [vmem:[#allocation3 + $0x90] sm:$0xff] %vm106, 0.0
    %127 = vst.msk [vmem:[#allocation3 + $0x98] sm:$0x3] %vm108, 0.0
    %128 = vst.msk [vmem:[#allocation3 + $0xa0] sm:$0xff] %vm106, 0.0
    %129 = vst.msk [vmem:[#allocation3 + $0xa8] sm:$0x3] %vm108, 0.0
    %130 = vst.msk [vmem:[#allocation3 + $0xb0] sm:$0xff] %vm106, 0.0
    %131 = vst.msk [vmem:[#allocation3 + $0xb8] sm:$0x3] %vm108, 0.0
    %132 = vst.msk [vmem:[#allocation3 + $0xc0] sm:$0xff] %vm106, 0.0
    %133 = vst.msk [vmem:[#allocation3 + $0xc8] sm:$0x3] %vm108, 0.0
    %134 = vst.msk [vmem:[#allocation3 + $0xd0] sm:$0xff] %vm106, 0.0
    %135 = vst.msk [vmem:[#allocation3 + $0xd8] sm:$0x3] %vm108, 0.0
    %136 = vst.msk [vmem:[#allocation3 + $0xe0] sm:$0xff] %vm106, 0.0
    %137 = vst.msk [vmem:[#allocation3 + $0xe8] sm:$0x3] %vm108, 0.0
    %138 = vst.msk [vmem:[#allocation3 + $0xf0] sm:$0xff] %vm106, 0.0
    %139 = vst.msk [vmem:[#allocation3 + $0xf8] sm:$0x3] %vm108, 0.0
    %140 = vst.msk [vmem:[#allocation3 + $0x100] sm:$0xff] %vm106, 0.0
    %141 = vst.msk [vmem:[#allocation3 + $0x108] sm:$0x3] %vm108, 0.0
    %142 = vst.msk [vmem:[#allocation3 + $0x110] sm:$0xff] %vm106, 0.0
    %143 = vst.msk [vmem:[#allocation3 + $0x118] sm:$0x3] %vm108, 0.0
    %144 = vst.msk [vmem:[#allocation3 + $0x120] sm:$0xff] %vm106, 0.0
    %145 = vst.msk [vmem:[#allocation3 + $0x128] sm:$0x3] %vm108, 0.0
    %146 = vst.msk [vmem:[#allocation3 + $0x130] sm:$0xff] %vm106, 0.0
    %147 = vst.msk [vmem:[#allocation3 + $0x138] sm:$0x3] %vm108, 0.0
    %vm148 = vcmask 261120
    %149 = vst.msk [vmem:[#allocation4] sm:$0xff] %vm148, 0.0
    %vm150 = vcmask 254976
    %151 = vst.msk [vmem:[#allocation4 + $0x8] sm:$0x3] %vm150, 0.0
    %152 = vst.msk [vmem:[#allocation4 + $0x10] sm:$0xff] %vm148, 0.0
    %153 = vst.msk [vmem:[#allocation4 + $0x18] sm:$0x3] %vm150, 0.0
    %154 = vst.msk [vmem:[#allocation4 + $0x20] sm:$0xff] %vm148, 0.0
    %155 = vst.msk [vmem:[#allocation4 + $0x28] sm:$0x3] %vm150, 0.0
    %156 = vst.msk [vmem:[#allocation4 + $0x30] sm:$0xff] %vm148, 0.0
    %157 = vst.msk [vmem:[#allocation4 + $0x38] sm:$0x3] %vm150, 0.0
    %158 = vst.msk [vmem:[#allocation4 + $0x40] sm:$0xff] %vm148, 0.0
    %159 = vst.msk [vmem:[#allocation4 + $0x48] sm:$0x3] %vm150, 0.0
    %160 = vst.msk [vmem:[#allocation4 + $0x50] sm:$0xff] %vm148, 0.0
    %161 = vst.msk [vmem:[#allocation4 + $0x58] sm:$0x3] %vm150, 0.0
    %162 = vst.msk [vmem:[#allocation4 + $0x60] sm:$0xff] %vm148, 0.0
    %163 = vst.msk [vmem:[#allocation4 + $0x68] sm:$0x3] %vm150, 0.0
    %164 = vst.msk [vmem:[#allocation4 + $0x70] sm:$0xff] %vm148, 0.0
    %165 = vst.msk [vmem:[#allocation4 + $0x78] sm:$0x3] %vm150, 0.0
    %166 = vst.msk [vmem:[#allocation4 + $0x80] sm:$0xff] %vm148, 0.0
    %167 = vst.msk [vmem:[#allocation4 + $0x88] sm:$0x3] %vm150, 0.0
    %168 = vst.msk [vmem:[#allocation4 + $0x90] sm:$0xff] %vm148, 0.0
    %169 = vst.msk [vmem:[#allocation4 + $0x98] sm:$0x3] %vm150, 0.0
    %170 = vst.msk [vmem:[#allocation4 + $0xa0] sm:$0xff] %vm148, 0.0
    %171 = vst.msk [vmem:[#allocation4 + $0xa8] sm:$0x3] %vm150, 0.0
    %172 = vst.msk [vmem:[#allocation4 + $0xb0] sm:$0xff] %vm148, 0.0
    %173 = vst.msk [vmem:[#allocation4 + $0xb8] sm:$0x3] %vm150, 0.0
    %174 = vst.msk [vmem:[#allocation4 + $0xc0] sm:$0xff] %vm148, 0.0
    %175 = vst.msk [vmem:[#allocation4 + $0xc8] sm:$0x3] %vm150, 0.0
    %176 = vst.msk [vmem:[#allocation4 + $0xd0] sm:$0xff] %vm148, 0.0
    %177 = vst.msk [vmem:[#allocation4 + $0xd8] sm:$0x3] %vm150, 0.0
    %178 = vst.msk [vmem:[#allocation4 + $0xe0] sm:$0xff] %vm148, 0.0
    %179 = vst.msk [vmem:[#allocation4 + $0xe8] sm:$0x3] %vm150, 0.0
    %180 = vst.msk [vmem:[#allocation4 + $0xf0] sm:$0xff] %vm148, 0.0
    %181 = vst.msk [vmem:[#allocation4 + $0xf8] sm:$0x3] %vm150, 0.0
    %182 = vst.msk [vmem:[#allocation4 + $0x100] sm:$0xff] %vm148, 0.0
    %183 = vst.msk [vmem:[#allocation4 + $0x108] sm:$0x3] %vm150, 0.0
    %184 = vst.msk [vmem:[#allocation4 + $0x110] sm:$0xff] %vm148, 0.0
    %185 = vst.msk [vmem:[#allocation4 + $0x118] sm:$0x3] %vm150, 0.0
    %186 = vst.msk [vmem:[#allocation4 + $0x120] sm:$0xff] %vm148, 0.0
    %187 = vst.msk [vmem:[#allocation4 + $0x128] sm:$0x3] %vm150, 0.0
    %188 = vst.msk [vmem:[#allocation4 + $0x130] sm:$0xff] %vm148, 0.0
    %189 = vst.msk [vmem:[#allocation4 + $0x138] sm:$0x3] %vm150, 0.0
    %v190 = vld [vmem:[%s1] sm:$0xff]
    %v191 = vld [vmem:[%s1 + $0x8] sm:$0xff]
    %v192 = vld [vmem:[%s1 + $0x20] sm:$0xff]
    %v193 = vld [vmem:[%s1 + $0x28] sm:$0xff]
    %v194 = vld [vmem:[%s1 + $0x40] sm:$0xff]
    %v195 = vld [vmem:[%s1 + $0x48] sm:$0xff]
    %v196 = vld [vmem:[%s1 + $0x60] sm:$0xff]
    %v197 = vld [vmem:[%s1 + $0x68] sm:$0xff]
    %v198 = vld [vmem:[%s1 + $0x80] sm:$0xff]
    %v199 = vld [vmem:[%s1 + $0x88] sm:$0xff]
    %v200 = vld [vmem:[%s1 + $0xa0] sm:$0xff]
    %v201 = vld [vmem:[%s1 + $0xa8] sm:$0xff]
    %v202 = vld [vmem:[%s1 + $0xc0] sm:$0xff]
    %v203 = vld [vmem:[%s1 + $0xc8] sm:$0xff]
    %v204 = vld [vmem:[%s1 + $0xe0] sm:$0xff]
    %v205 = vld [vmem:[%s1 + $0xe8] sm:$0xff]
    %v206 = vld [vmem:[%s1 + $0x140] sm:$0xff]
    %v207 = vld [vmem:[%s1 + $0x148] sm:$0xff]
    %v208 = vld [vmem:[%s1 + $0x160] sm:$0xff]
    %v209 = vld [vmem:[%s1 + $0x168] sm:$0xff]
    %v210 = vld [vmem:[%s1 + $0x180] sm:$0xff]
    %v211 = vld [vmem:[%s1 + $0x188] sm:$0xff]
    %v212 = vld [vmem:[%s1 + $0x1a0] sm:$0xff]
    %v213 = vld [vmem:[%s1 + $0x1a8] sm:$0xff]
    %v214 = vld [vmem:[%s1 + $0x1c0] sm:$0xff]
    %v215 = vld [vmem:[%s1 + $0x1c8] sm:$0xff]
    %v216 = vld [vmem:[%s1 + $0x1e0] sm:$0xff]
    %v217 = vld [vmem:[%s1 + $0x1e8] sm:$0xff]
    %v218 = vld [vmem:[%s1 + $0x200] sm:$0xff]
    %v219 = vld [vmem:[%s1 + $0x208] sm:$0xff]
    %v220 = vld [vmem:[%s1 + $0x220] sm:$0xff]
    %v221 = vld [vmem:[%s1 + $0x228] sm:$0xff]
    %v222 = vpack.c.bf16 %v192, %v190
    %v223 = vpack.c.bf16 %v193, %v191
    %v224 = vpack.c.bf16 %v196, %v194
    %v225 = vpack.c.bf16 %v197, %v195
    %v226 = vpack.c.bf16 %v200, %v198
    %v227 = vpack.c.bf16 %v201, %v199
    %v228 = vpack.c.bf16 %v204, %v202
    %v229 = vpack.c.bf16 %v205, %v203
    %v230 = vpack.c.bf16 %v208, %v206
    %v231 = vpack.c.bf16 %v209, %v207
    %v232 = vpack.c.bf16 %v212, %v210
    %v233 = vpack.c.bf16 %v213, %v211
    %v234 = vpack.c.bf16 %v216, %v214
    %v235 = vpack.c.bf16 %v217, %v215
    %v236 = vpack.c.bf16 %v220, %v218
    %v237 = vpack.c.bf16 %v221, %v219
    %v238 = vld [vmem:[%s2] sm:$0xf]
    %v239 = vld [vmem:[%s2 + $0x4] sm:$0xf]
    %v240 = vld [vmem:[%s2 + $0x8] sm:$0xf]
    %v241 = vld [vmem:[%s2 + $0xc] sm:$0xf]
    %v242 = vld [vmem:[%s2 + $0x10] sm:$0xf]
    %v243 = vld [vmem:[%s2 + $0x14] sm:$0xf]
    %v244 = vld [vmem:[%s2 + $0x18] sm:$0xf]
    %v245 = vld [vmem:[%s2 + $0x1c] sm:$0xf]
    %v246 = vld [vmem:[%s2 + $0x20] sm:$0xf]
    %v247 = vld [vmem:[%s2 + $0x24] sm:$0xf]
    %v248 = vld [vmem:[%s2 + $0x28] sm:$0xf]
    %v249 = vld [vmem:[%s2 + $0x2c] sm:$0xf]
    %v250 = vld [vmem:[%s2 + $0x30] sm:$0xf]
    %v251 = vld [vmem:[%s2 + $0x34] sm:$0xf]
    %v252 = vld [vmem:[%s2 + $0x38] sm:$0xf]
    %v253 = vld [vmem:[%s2 + $0x3c] sm:$0xf]
    %v254 = vld [vmem:[%s2 + $0x40] sm:$0xf]
    %v255 = vld [vmem:[%s2 + $0x44] sm:$0xf]
    %v256 = vld [vmem:[%s2 + $0x48] sm:$0xf]
    %v257 = vld [vmem:[%s2 + $0x4c] sm:$0xf]
    %v258 = vld [vmem:[%s2 + $0x50] sm:$0xf]
    %v259 = vld [vmem:[%s2 + $0x54] sm:$0xf]
    %v260 = vld [vmem:[%s2 + $0x58] sm:$0xf]
    %v261 = vld [vmem:[%s2 + $0x5c] sm:$0xf]
    %v262 = vld [vmem:[%s2 + $0x60] sm:$0xf]
    %v263 = vld [vmem:[%s2 + $0x64] sm:$0xf]
    %v264 = vld [vmem:[%s2 + $0x68] sm:$0xf]
    %v265 = vld [vmem:[%s2 + $0x6c] sm:$0xf]
    %v266 = vld [vmem:[%s2 + $0x70] sm:$0xf]
    %v267 = vld [vmem:[%s2 + $0x74] sm:$0xf]
    %v268 = vld [vmem:[%s2 + $0x78] sm:$0xf]
    %v269 = vld [vmem:[%s2 + $0x7c] sm:$0xf]
    %v270 = vld [vmem:[%s1] sm:$0xfe]
    %v271 = vld [vmem:[%s1 + $0x8] sm:$0xfe]
    %v272 = vld [vmem:[%s1 + $0x10] sm:$0x1]
    %v273 = vld [vmem:[%s1 + $0x18] sm:$0x1]
    %v274 = vld [vmem:[%s1 + $0x20] sm:$0xfe]
    %v275 = vld [vmem:[%s1 + $0x28] sm:$0xfe]
    %v276 = vld [vmem:[%s1 + $0x30] sm:$0x1]
    %v277 = vld [vmem:[%s1 + $0x38] sm:$0x1]
    %v278 = vld [vmem:[%s1 + $0x40] sm:$0xfe]
    %v279 = vld [vmem:[%s1 + $0x48] sm:$0xfe]
    %v280 = vld [vmem:[%s1 + $0x50] sm:$0x1]
    %v281 = vld [vmem:[%s1 + $0x58] sm:$0x1]
    %v282 = vld [vmem:[%s1 + $0x60] sm:$0xfe]
    %v283 = vld [vmem:[%s1 + $0x68] sm:$0xfe]
    %v284 = vld [vmem:[%s1 + $0x70] sm:$0x1]
    %v285 = vld [vmem:[%s1 + $0x78] sm:$0x1]
    %v286 = vld [vmem:[%s1 + $0x80] sm:$0xfe]
    %v287 = vld [vmem:[%s1 + $0x88] sm:$0xfe]
    %v288 = vld [vmem:[%s1 + $0x90] sm:$0x1]
    %v289 = vld [vmem:[%s1 + $0x98] sm:$0x1]
    %v290 = vld [vmem:[%s1 + $0xa0] sm:$0xfe]
    %v291 = vld [vmem:[%s1 + $0xa8] sm:$0xfe]
    %v292 = vld [vmem:[%s1 + $0xb0] sm:$0x1]
    %v293 = vld [vmem:[%s1 + $0xb8] sm:$0x1]
    %v294 = vld [vmem:[%s1 + $0xc0] sm:$0xfe]
    %v295 = vld [vmem:[%s1 + $0xc8] sm:$0xfe]
    %v296 = vld [vmem:[%s1 + $0xd0] sm:$0x1]
    %v297 = vld [vmem:[%s1 + $0xd8] sm:$0x1]
    %v298 = vld [vmem:[%s1 + $0xe0] sm:$0xfe]
    %v299 = vld [vmem:[%s1 + $0xe8] sm:$0xfe]
    %v300 = vld [vmem:[%s1 + $0xf0] sm:$0x1]
    %v301 = vld [vmem:[%s1 + $0xf8] sm:$0x1]
    %v302 = vld [vmem:[%s1 + $0x140] sm:$0xfe]
    %v303 = vld [vmem:[%s1 + $0x148] sm:$0xfe]
    %v304 = vld [vmem:[%s1 + $0x150] sm:$0x1]
    %v305 = vld [vmem:[%s1 + $0x158] sm:$0x1]
    %v306 = vld [vmem:[%s1 + $0x160] sm:$0xfe]
    %v307 = vld [vmem:[%s1 + $0x168] sm:$0xfe]
    %v308 = vld [vmem:[%s1 + $0x170] sm:$0x1]
    %v309 = vld [vmem:[%s1 + $0x178] sm:$0x1]
    %v310 = vld [vmem:[%s1 + $0x180] sm:$0xfe]
    %v311 = vld [vmem:[%s1 + $0x188] sm:$0xfe]
    %v312 = vld [vmem:[%s1 + $0x190] sm:$0x1]
    %v313 = vld [vmem:[%s1 + $0x198] sm:$0x1]
    %v314 = vld [vmem:[%s1 + $0x1a0] sm:$0xfe]
    %v315 = vld [vmem:[%s1 + $0x1a8] sm:$0xfe]
    %v316 = vld [vmem:[%s1 + $0x1b0] sm:$0x1]
    %v317 = vld [vmem:[%s1 + $0x1b8] sm:$0x1]
    %v318 = vld [vmem:[%s1 + $0x1c0] sm:$0xfe]
    %v319 = vld [vmem:[%s1 + $0x1c8] sm:$0xfe]
    %v320 = vld [vmem:[%s1 + $0x1d0] sm:$0x1]
    %v321 = vld [vmem:[%s1 + $0x1d8] sm:$0x1]
    %v322 = vld [vmem:[%s1 + $0x1e0] sm:$0xfe]
    %v323 = vld [vmem:[%s1 + $0x1e8] sm:$0xfe]
    %v324 = vld [vmem:[%s1 + $0x1f0] sm:$0x1]
    %v325 = vld [vmem:[%s1 + $0x1f8] sm:$0x1]
    %v326 = vld [vmem:[%s1 + $0x200] sm:$0xfe]
    %v327 = vld [vmem:[%s1 + $0x208] sm:$0xfe]
    %v328 = vld [vmem:[%s1 + $0x210] sm:$0x1]
    %v329 = vld [vmem:[%s1 + $0x218] sm:$0x1]
    %v330 = vld [vmem:[%s1 + $0x220] sm:$0xfe]
    %v331 = vld [vmem:[%s1 + $0x228] sm:$0xfe]
    %v332 = vld [vmem:[%s1 + $0x230] sm:$0x1]
    %v333 = vld [vmem:[%s1 + $0x238] sm:$0x1]
    %vm398 = vcmask 1046528
    %v399 = vrot.slane %v270, 1
    %v400 = vrot.slane %v272, 1
    %v401 = vsel %vm398, %v399, %v400
    %v402 = vrot.slane %v271, 1
    %v403 = vrot.slane %v273, 1
    %v404 = vsel %vm398, %v402, %v403
    %v405 = vrot.slane %v274, 1
    %v406 = vrot.slane %v276, 1
    %v407 = vsel %vm398, %v405, %v406
    %v408 = vrot.slane %v275, 1
    %v409 = vrot.slane %v277, 1
    %v410 = vsel %vm398, %v408, %v409
    %v411 = vrot.slane %v278, 1
    %v412 = vrot.slane %v280, 1
    %v413 = vsel %vm398, %v411, %v412
    %v414 = vrot.slane %v279, 1
    %v415 = vrot.slane %v281, 1
    %v416 = vsel %vm398, %v414, %v415
    %v417 = vrot.slane %v282, 1
    %v418 = vrot.slane %v284, 1
    %v419 = vsel %vm398, %v417, %v418
    %v420 = vrot.slane %v283, 1
    %v421 = vrot.slane %v285, 1
    %v422 = vsel %vm398, %v420, %v421
    %v423 = vrot.slane %v286, 1
    %v424 = vrot.slane %v288, 1
    %v425 = vsel %vm398, %v423, %v424
    %v426 = vrot.slane %v287, 1
    %v427 = vrot.slane %v289, 1
    %v428 = vsel %vm398, %v426, %v427
    %v429 = vrot.slane %v290, 1
    %v430 = vrot.slane %v292, 1
    %v431 = vsel %vm398, %v429, %v430
    %v432 = vrot.slane %v291, 1
    %v433 = vrot.slane %v293, 1
    %v434 = vsel %vm398, %v432, %v433
    %v435 = vrot.slane %v294, 1
    %v436 = vrot.slane %v296, 1
    %v437 = vsel %vm398, %v435, %v436
    %v438 = vrot.slane %v295, 1
    %v439 = vrot.slane %v297, 1
    %v440 = vsel %vm398, %v438, %v439
    %v441 = vrot.slane %v298, 1
    %v442 = vrot.slane %v300, 1
    %v443 = vsel %vm398, %v441, %v442
    %v444 = vrot.slane %v299, 1
    %v445 = vrot.slane %v301, 1
    %v446 = vsel %vm398, %v444, %v445
    %v447 = vrot.slane %v302, 1
    %v448 = vrot.slane %v304, 1
    %v449 = vsel %vm398, %v447, %v448
    %v450 = vrot.slane %v303, 1
    %v451 = vrot.slane %v305, 1
    %v452 = vsel %vm398, %v450, %v451
    %v453 = vrot.slane %v306, 1
    %v454 = vrot.slane %v308, 1
    %v455 = vsel %vm398, %v453, %v454
    %v456 = vrot.slane %v307, 1
    %v457 = vrot.slane %v309, 1
    %v458 = vsel %vm398, %v456, %v457
    %v459 = vrot.slane %v310, 1
    %v460 = vrot.slane %v312, 1
    %v461 = vsel %vm398, %v459, %v460
    %v462 = vrot.slane %v311, 1
    %v463 = vrot.slane %v313, 1
    %v464 = vsel %vm398, %v462, %v463
    %v465 = vrot.slane %v314, 1
    %v466 = vrot.slane %v316, 1
    %v467 = vsel %vm398, %v465, %v466
    %v468 = vrot.slane %v315, 1
    %v469 = vrot.slane %v317, 1
    %v470 = vsel %vm398, %v468, %v469
    %v471 = vrot.slane %v318, 1
    %v472 = vrot.slane %v320, 1
    %v473 = vsel %vm398, %v471, %v472
    %v474 = vrot.slane %v319, 1
    %v475 = vrot.slane %v321, 1
    %v476 = vsel %vm398, %v474, %v475
    %v477 = vrot.slane %v322, 1
    %v478 = vrot.slane %v324, 1
    %v479 = vsel %vm398, %v477, %v478
    %v480 = vrot.slane %v323, 1
    %v481 = vrot.slane %v325, 1
    %v482 = vsel %vm398, %v480, %v481
    %v483 = vrot.slane %v326, 1
    %v484 = vrot.slane %v328, 1
    %v485 = vsel %vm398, %v483, %v484
    %v486 = vrot.slane %v327, 1
    %v487 = vrot.slane %v329, 1
    %v488 = vsel %vm398, %v486, %v487
    %v489 = vrot.slane %v330, 1
    %v490 = vrot.slane %v332, 1
    %v491 = vsel %vm398, %v489, %v490
    %v492 = vrot.slane %v331, 1
    %v493 = vrot.slane %v333, 1
    %v494 = vsel %vm398, %v492, %v493
    %v527 = vpack.c.bf16 %v407, %v401
    %v528 = vpack.c.bf16 %v410, %v404
    %v529 = vpack.c.bf16 %v419, %v413
    %v530 = vpack.c.bf16 %v422, %v416
    %v531 = vpack.c.bf16 %v431, %v425
    %v532 = vpack.c.bf16 %v434, %v428
    %v533 = vpack.c.bf16 %v443, %v437
    %v534 = vpack.c.bf16 %v446, %v440
    %v535 = vpack.c.bf16 %v455, %v449
    %v536 = vpack.c.bf16 %v458, %v452
    %v537 = vpack.c.bf16 %v467, %v461
    %v538 = vpack.c.bf16 %v470, %v464
    %v539 = vpack.c.bf16 %v479, %v473
    %v540 = vpack.c.bf16 %v482, %v476
    %v541 = vpack.c.bf16 %v491, %v485
    %v542 = vpack.c.bf16 %v494, %v488
    %s543 = scalar_lea.vmem %s2, 128
    %v544 = vld [vmem:[%s543] sm:$0xf]
    %v545 = vld [vmem:[%s543 + $0x4] sm:$0xf]
    %v546 = vld [vmem:[%s543 + $0x8] sm:$0xf]
    %v547 = vld [vmem:[%s543 + $0xc] sm:$0xf]
    %v548 = vld [vmem:[%s543 + $0x10] sm:$0xf]
    %v549 = vld [vmem:[%s543 + $0x14] sm:$0xf]
    %v550 = vld [vmem:[%s543 + $0x18] sm:$0xf]
    %v551 = vld [vmem:[%s543 + $0x1c] sm:$0xf]
    %v552 = vld [vmem:[%s543 + $0x20] sm:$0xf]
    %v553 = vld [vmem:[%s543 + $0x24] sm:$0xf]
    %v554 = vld [vmem:[%s543 + $0x28] sm:$0xf]
    %v555 = vld [vmem:[%s543 + $0x2c] sm:$0xf]
    %v556 = vld [vmem:[%s543 + $0x30] sm:$0xf]
    %v557 = vld [vmem:[%s543 + $0x34] sm:$0xf]
    %v558 = vld [vmem:[%s543 + $0x38] sm:$0xf]
    %v559 = vld [vmem:[%s543 + $0x3c] sm:$0xf]
    %v560 = vld [vmem:[%s543 + $0x40] sm:$0xf]
    %v561 = vld [vmem:[%s543 + $0x44] sm:$0xf]
    %v562 = vld [vmem:[%s543 + $0x48] sm:$0xf]
    %v563 = vld [vmem:[%s543 + $0x4c] sm:$0xf]
    %v564 = vld [vmem:[%s543 + $0x50] sm:$0xf]
    %v565 = vld [vmem:[%s543 + $0x54] sm:$0xf]
    %v566 = vld [vmem:[%s543 + $0x58] sm:$0xf]
    %v567 = vld [vmem:[%s543 + $0x5c] sm:$0xf]
    %v568 = vld [vmem:[%s543 + $0x60] sm:$0xf]
    %v569 = vld [vmem:[%s543 + $0x64] sm:$0xf]
    %v570 = vld [vmem:[%s543 + $0x68] sm:$0xf]
    %v571 = vld [vmem:[%s543 + $0x6c] sm:$0xf]
    %v572 = vld [vmem:[%s543 + $0x70] sm:$0xf]
    %v573 = vld [vmem:[%s543 + $0x74] sm:$0xf]
    %v574 = vld [vmem:[%s543 + $0x78] sm:$0xf]
    %v575 = vld [vmem:[%s543 + $0x7c] sm:$0xf]
    %v608 = vunpack.c.l.b16 %v544
    %v609 = vunpack.c.l.b16 %v545
    %v610 = vunpack.c.l.b16 %v546
    %v611 = vunpack.c.l.b16 %v547
    %v612 = vunpack.c.l.b16 %v548
    %v613 = vunpack.c.l.b16 %v549
    %v614 = vunpack.c.l.b16 %v550
    %v615 = vunpack.c.l.b16 %v551
    %v616 = vunpack.c.l.b16 %v552
    %v617 = vunpack.c.l.b16 %v553
    %v618 = vunpack.c.l.b16 %v554
    %v619 = vunpack.c.l.b16 %v555
    %v620 = vunpack.c.l.b16 %v556
    %v621 = vunpack.c.l.b16 %v557
    %v622 = vunpack.c.l.b16 %v558
    %v623 = vunpack.c.l.b16 %v559
    %v624 = vunpack.c.l.b16 %v560
    %v625 = vunpack.c.l.b16 %v561
    %v626 = vunpack.c.l.b16 %v562
    %v627 = vunpack.c.l.b16 %v563
    %v628 = vunpack.c.l.b16 %v564
    %v629 = vunpack.c.l.b16 %v565
    %v630 = vunpack.c.l.b16 %v566
    %v631 = vunpack.c.l.b16 %v567
    %v632 = vunpack.c.l.b16 %v568
    %v633 = vunpack.c.l.b16 %v569
    %v634 = vunpack.c.l.b16 %v570
    %v635 = vunpack.c.l.b16 %v571
    %v636 = vunpack.c.l.b16 %v572
    %v637 = vunpack.c.l.b16 %v573
    %v638 = vunpack.c.l.b16 %v574
    %v639 = vunpack.c.l.b16 %v575
    %v640 = vpack.c.b16 %v609, %v608
    %v641 = vpack.c.b16 %v611, %v610
    %v642 = vpack.c.b16 %v613, %v612
    %v643 = vpack.c.b16 %v615, %v614
    %v644 = vpack.c.b16 %v617, %v616
    %v645 = vpack.c.b16 %v619, %v618
    %v646 = vpack.c.b16 %v621, %v620
    %v647 = vpack.c.b16 %v623, %v622
    %v648 = vpack.c.b16 %v625, %v624
    %v649 = vpack.c.b16 %v627, %v626
    %v650 = vpack.c.b16 %v629, %v628
    %v651 = vpack.c.b16 %v631, %v630
    %v652 = vpack.c.b16 %v633, %v632
    %v653 = vpack.c.b16 %v635, %v634
    %v654 = vpack.c.b16 %v637, %v636
    %v655 = vpack.c.b16 %v639, %v638
    %672 = vmatprep.subr.bf16.mxu0 0
    %673 = vmatpush1.bf16.msra.mxu0 %v640
    %674 = vmatprep.subr.bf16.mxu0 0
    %675 = vmatpush1.bf16.msra.mxu0 %v641
    %676 = vmatprep.subr.bf16.mxu0 0
    %677 = vmatpush1.bf16.msra.mxu0 %v642
    %678 = vmatprep.subr.bf16.mxu0 0
    %679 = vmatpush1.bf16.msra.mxu0 %v643
    %680 = vmatprep.subr.bf16.mxu0 0
    %681 = vmatpush1.bf16.msra.mxu0 %v644
    %682 = vmatprep.subr.bf16.mxu0 0
    %683 = vmatpush1.bf16.msra.mxu0 %v645
    %684 = vmatprep.subr.bf16.mxu0 0
    %685 = vmatpush1.bf16.msra.mxu0 %v646
    %686 = vmatprep.subr.bf16.mxu0 0
    %687 = vmatpush1.bf16.msra.mxu0 %v647
    %688 = vmatprep.subr.bf16.mxu0 0
    %689 = vmatpush1.bf16.msra.mxu0 %v648
    %690 = vmatprep.subr.bf16.mxu0 0
    %691 = vmatpush1.bf16.msra.mxu0 %v649
    %692 = vmatprep.subr.bf16.mxu0 0
    %693 = vmatpush1.bf16.msra.mxu0 %v650
    %694 = vmatprep.subr.bf16.mxu0 0
    %695 = vmatpush1.bf16.msra.mxu0 %v651
    %696 = vmatprep.subr.bf16.mxu0 0
    %697 = vmatpush1.bf16.msra.mxu0 %v652
    %698 = vmatprep.subr.bf16.mxu0 0
    %699 = vmatpush1.bf16.msra.mxu0 %v653
    %700 = vmatprep.subr.bf16.mxu0 0
    %701 = vmatpush1.bf16.msra.mxu0 %v654
    %702 = vmatprep.subr.bf16.mxu0 0
    %703 = vmatpush1.bf16.msra.mxu0 %v655
    %704 = vmatprep.mubr.bf16.mxu0 %v528
    %705 = vmatmul.mubr.bf16.gmra.mrb[0].mxu0 %v527
    %v706 = vpop.f32.mrb[0].mxu0
    %v707 = vadd.f32 0.0, %v706
    %v708 = vpop.f32.mrb[0].mxu0
    %v709 = vpop.f32.mrb[0].mxu0
    %v710 = vadd.f32 0.0, %v709
    %v711 = vpop.f32.mrb[0].mxu0
    %712 = vmatprep.mubr.bf16.mxu0 %v530
    %713 = vmatmul.mubr.bf16.gmra.mrb[0].mxu0 %v529
    %v714 = vpop.f32.mrb[0].mxu0
    %v715 = vadd.f32 0.0, %v714
    %v716 = vpop.f32.mrb[0].mxu0
    %v717 = vpop.f32.mrb[0].mxu0
    %v718 = vadd.f32 0.0, %v717
    %v719 = vpop.f32.mrb[0].mxu0
    %720 = vmatprep.mubr.bf16.mxu0 %v532
    %721 = vmatmul.mubr.bf16.gmra.mrb[0].mxu0 %v531
    %v722 = vpop.f32.mrb[0].mxu0
    %v723 = vadd.f32 0.0, %v722
    %v724 = vpop.f32.mrb[0].mxu0
    %v725 = vpop.f32.mrb[0].mxu0
    %v726 = vadd.f32 0.0, %v725
    %v727 = vpop.f32.mrb[0].mxu0
    %728 = vmatprep.mubr.bf16.mxu0 %v534
    %729 = vmatmul.mubr.bf16.gmra.mrb[0].mxu0 %v533
    %v730 = vpop.f32.mrb[0].mxu0
    %v731 = vadd.f32 0.0, %v730
    %v732 = vpop.f32.mrb[0].mxu0
    %v733 = vpop.f32.mrb[0].mxu0
    %v734 = vadd.f32 0.0, %v733
    %v735 = vpop.f32.mrb[0].mxu0
    %736 = vmatprep.mubr.bf16.mxu0 %v536
    %737 = vmatmul.mubr.bf16.gmra.mrb[0].mxu0 %v535
    %v738 = vpop.f32.mrb[0].mxu0
    %v739 = vadd.f32 0.0, %v738
    %v740 = vpop.f32.mrb[0].mxu0
    %v741 = vpop.f32.mrb[0].mxu0
    %v742 = vadd.f32 0.0, %v741
    %v743 = vpop.f32.mrb[0].mxu0
    %744 = vmatprep.mubr.bf16.mxu0 %v538
    %745 = vmatmul.mubr.bf16.gmra.mrb[0].mxu0 %v537
    %v746 = vpop.f32.mrb[0].mxu0
    %v747 = vadd.f32 0.0, %v746
    %v748 = vpop.f32.mrb[0].mxu0
    %v749 = vpop.f32.mrb[0].mxu0
    %v750 = vadd.f32 0.0, %v749
    %v751 = vpop.f32.mrb[0].mxu0
    %752 = vmatprep.mubr.bf16.mxu0 %v540
    %753 = vmatmul.mubr.bf16.gmra.mrb[0].mxu0 %v539
    %v754 = vpop.f32.mrb[0].mxu0
    %v755 = vadd.f32 0.0, %v754
    %v756 = vpop.f32.mrb[0].mxu0
    %v757 = vpop.f32.mrb[0].mxu0
    %v758 = vadd.f32 0.0, %v757
    %v759 = vpop.f32.mrb[0].mxu0
    %760 = vmatprep.mubr.bf16.mxu0 %v542
    %761 = vmatmul.mubr.bf16.gmra.mrb[0].mxu0 %v541
    %v762 = vpop.f32.mrb[0].mxu0
    %v763 = vadd.f32 0.0, %v762
    %v764 = vpop.f32.mrb[0].mxu0
    %v765 = vpop.f32.mrb[0].mxu0
    %v766 = vadd.f32 0.0, %v765
    %v767 = vpop.f32.mrb[0].mxu0
    %768 = vdwg.mxu0
    %v801 = vunpack.c.l.b16 %v238
    %v802 = vunpack.c.l.b16 %v239
    %v803 = vunpack.c.l.b16 %v240
    %v804 = vunpack.c.l.b16 %v241
    %v805 = vunpack.c.l.b16 %v242
    %v806 = vunpack.c.l.b16 %v243
    %v807 = vunpack.c.l.b16 %v244
    %v808 = vunpack.c.l.b16 %v245
    %v809 = vunpack.c.l.b16 %v246
    %v810 = vunpack.c.l.b16 %v247
    %v811 = vunpack.c.l.b16 %v248
    %v812 = vunpack.c.l.b16 %v249
    %v813 = vunpack.c.l.b16 %v250
    %v814 = vunpack.c.l.b16 %v251
    %v815 = vunpack.c.l.b16 %v252
    %v816 = vunpack.c.l.b16 %v253
    %v817 = vunpack.c.l.b16 %v254
    %v818 = vunpack.c.l.b16 %v255
    %v819 = vunpack.c.l.b16 %v256
    %v820 = vunpack.c.l.b16 %v257
    %v821 = vunpack.c.l.b16 %v258
    %v822 = vunpack.c.l.b16 %v259
    %v823 = vunpack.c.l.b16 %v260
    %v824 = vunpack.c.l.b16 %v261
    %v825 = vunpack.c.l.b16 %v262
    %v826 = vunpack.c.l.b16 %v263
    %v827 = vunpack.c.l.b16 %v264
    %v828 = vunpack.c.l.b16 %v265
    %v829 = vunpack.c.l.b16 %v266
    %v830 = vunpack.c.l.b16 %v267
    %v831 = vunpack.c.l.b16 %v268
    %v832 = vunpack.c.l.b16 %v269
    %v833 = vpack.c.b16 %v802, %v801
    %v834 = vpack.c.b16 %v804, %v803
    %v835 = vpack.c.b16 %v806, %v805
    %v836 = vpack.c.b16 %v808, %v807
    %v837 = vpack.c.b16 %v810, %v809
    %v838 = vpack.c.b16 %v812, %v811
    %v839 = vpack.c.b16 %v814, %v813
    %v840 = vpack.c.b16 %v816, %v815
    %v841 = vpack.c.b16 %v818, %v817
    %v842 = vpack.c.b16 %v820, %v819
    %v843 = vpack.c.b16 %v822, %v821
    %v844 = vpack.c.b16 %v824, %v823
    %v845 = vpack.c.b16 %v826, %v825
    %v846 = vpack.c.b16 %v828, %v827
    %v847 = vpack.c.b16 %v830, %v829
    %v848 = vpack.c.b16 %v832, %v831
    %865 = vmatprep.subr.bf16.mxu0 0
    %866 = vmatpush1.bf16.msra.mxu0 %v833
    %867 = vmatprep.subr.bf16.mxu0 0
    %868 = vmatpush1.bf16.msra.mxu0 %v834
    %869 = vmatprep.subr.bf16.mxu0 0
    %870 = vmatpush1.bf16.msra.mxu0 %v835
    %871 = vmatprep.subr.bf16.mxu0 0
    %872 = vmatpush1.bf16.msra.mxu0 %v836
    %873 = vmatprep.subr.bf16.mxu0 0
    %874 = vmatpush1.bf16.msra.mxu0 %v837
    %875 = vmatprep.subr.bf16.mxu0 0
    %876 = vmatpush1.bf16.msra.mxu0 %v838
    %877 = vmatprep.subr.bf16.mxu0 0
    %878 = vmatpush1.bf16.msra.mxu0 %v839
    %879 = vmatprep.subr.bf16.mxu0 0
    %880 = vmatpush1.bf16.msra.mxu0 %v840
    %881 = vmatprep.subr.bf16.mxu0 0
    %882 = vmatpush1.bf16.msra.mxu0 %v841
    %883 = vmatprep.subr.bf16.mxu0 0
    %884 = vmatpush1.bf16.msra.mxu0 %v842
    %885 = vmatprep.subr.bf16.mxu0 0
    %886 = vmatpush1.bf16.msra.mxu0 %v843
    %887 = vmatprep.subr.bf16.mxu0 0
    %888 = vmatpush1.bf16.msra.mxu0 %v844
    %889 = vmatprep.subr.bf16.mxu0 0
    %890 = vmatpush1.bf16.msra.mxu0 %v845
    %891 = vmatprep.subr.bf16.mxu0 0
    %892 = vmatpush1.bf16.msra.mxu0 %v846
    %893 = vmatprep.subr.bf16.mxu0 0
    %894 = vmatpush1.bf16.msra.mxu0 %v847
    %895 = vmatprep.subr.bf16.mxu0 0
    %896 = vmatpush1.bf16.msra.mxu0 %v848
    %897 = vmatprep.mubr.bf16.mxu0 %v223
    %898 = vmatmul.mubr.bf16.gmra.mrb[0].mxu0 %v222
    %v899 = vpop.f32.mrb[0].mxu0
    %v900 = vadd.f32 %v707, %v899
    %v901 = vpop.f32.mrb[0].mxu0
    %v902 = vpop.f32.mrb[0].mxu0
    %v903 = vadd.f32 %v710, %v902
    %v904 = vpop.f32.mrb[0].mxu0
    %905 = vmatprep.mubr.bf16.mxu0 %v225
    %906 = vmatmul.mubr.bf16.gmra.mrb[0].mxu0 %v224
    %v907 = vpop.f32.mrb[0].mxu0
    %v908 = vadd.f32 %v715, %v907
    %v909 = vpop.f32.mrb[0].mxu0
    %v910 = vpop.f32.mrb[0].mxu0
    %v911 = vadd.f32 %v718, %v910
    %v912 = vpop.f32.mrb[0].mxu0
    %913 = vmatprep.mubr.bf16.mxu0 %v227
    %914 = vmatmul.mubr.bf16.gmra.mrb[0].mxu0 %v226
    %v915 = vpop.f32.mrb[0].mxu0
    %v916 = vadd.f32 %v723, %v915
    %v917 = vpop.f32.mrb[0].mxu0
    %v918 = vpop.f32.mrb[0].mxu0
    %v919 = vadd.f32 %v726, %v918
    %v920 = vpop.f32.mrb[0].mxu0
    %921 = vmatprep.mubr.bf16.mxu0 %v229
    %922 = vmatmul.mubr.bf16.gmra.mrb[0].mxu0 %v228
    %v923 = vpop.f32.mrb[0].mxu0
    %v924 = vadd.f32 %v731, %v923
    %v925 = vpop.f32.mrb[0].mxu0
    %v926 = vpop.f32.mrb[0].mxu0
    %v927 = vadd.f32 %v734, %v926
    %v928 = vpop.f32.mrb[0].mxu0
    %929 = vmatprep.mubr.bf16.mxu0 %v231
    %930 = vmatmul.mubr.bf16.gmra.mrb[0].mxu0 %v230
    %v931 = vpop.f32.mrb[0].mxu0
    %v932 = vadd.f32 %v739, %v931
    %v933 = vpop.f32.mrb[0].mxu0
    %v934 = vpop.f32.mrb[0].mxu0
    %v935 = vadd.f32 %v742, %v934
    %v936 = vpop.f32.mrb[0].mxu0
    %937 = vmatprep.mubr.bf16.mxu0 %v233
    %938 = vmatmul.mubr.bf16.gmra.mrb[0].mxu0 %v232
    %v939 = vpop.f32.mrb[0].mxu0
    %v940 = vadd.f32 %v747, %v939
    %v941 = vpop.f32.mrb[0].mxu0
    %v942 = vpop.f32.mrb[0].mxu0
    %v943 = vadd.f32 %v750, %v942
    %v944 = vpop.f32.mrb[0].mxu0
    %945 = vmatprep.mubr.bf16.mxu0 %v235
    %946 = vmatmul.mubr.bf16.gmra.mrb[0].mxu0 %v234
    %v947 = vpop.f32.mrb[0].mxu0
    %v948 = vadd.f32 %v755, %v947
    %v949 = vpop.f32.mrb[0].mxu0
    %v950 = vpop.f32.mrb[0].mxu0
    %v951 = vadd.f32 %v758, %v950
    %v952 = vpop.f32.mrb[0].mxu0
    %953 = vmatprep.mubr.bf16.mxu0 %v237
    %954 = vmatmul.mubr.bf16.gmra.mrb[0].mxu0 %v236
    %v955 = vpop.f32.mrb[0].mxu0
    %v956 = vadd.f32 %v763, %v955
    %v957 = vpop.f32.mrb[0].mxu0
    %v958 = vpop.f32.mrb[0].mxu0
    %v959 = vadd.f32 %v766, %v958
    %v960 = vpop.f32.mrb[0].mxu0
    %961 = vdwg.mxu0
    %v962 = vld [vmem:[%s1] sm:$0xfc]
    %v963 = vld [vmem:[%s1 + $0x8] sm:$0xfc]
    %v964 = vld [vmem:[%s1 + $0x10] sm:$0x3]
    %v965 = vld [vmem:[%s1 + $0x18] sm:$0x3]
    %v966 = vld [vmem:[%s1 + $0x20] sm:$0xfc]
    %v967 = vld [vmem:[%s1 + $0x28] sm:$0xfc]
    %v968 = vld [vmem:[%s1 + $0x30] sm:$0x3]
    %v969 = vld [vmem:[%s1 + $0x38] sm:$0x3]
    %v970 = vld [vmem:[%s1 + $0x40] sm:$0xfc]
    %v971 = vld [vmem:[%s1 + $0x48] sm:$0xfc]
    %v972 = vld [vmem:[%s1 + $0x50] sm:$0x3]
    %v973 = vld [vmem:[%s1 + $0x58] sm:$0x3]
    %v974 = vld [vmem:[%s1 + $0x60] sm:$0xfc]
    %v975 = vld [vmem:[%s1 + $0x68] sm:$0xfc]
    %v976 = vld [vmem:[%s1 + $0x70] sm:$0x3]
    %v977 = vld [vmem:[%s1 + $0x78] sm:$0x3]
    %v978 = vld [vmem:[%s1 + $0x80] sm:$0xfc]
    %v979 = vld [vmem:[%s1 + $0x88] sm:$0xfc]
    %v980 = vld [vmem:[%s1 + $0x90] sm:$0x3]
    %v981 = vld [vmem:[%s1 + $0x98] sm:$0x3]
    %v982 = vld [vmem:[%s1 + $0xa0] sm:$0xfc]
    %v983 = vld [vmem:[%s1 + $0xa8] sm:$0xfc]
    %v984 = vld [vmem:[%s1 + $0xb0] sm:$0x3]
    %v985 = vld [vmem:[%s1 + $0xb8] sm:$0x3]
    %v986 = vld [vmem:[%s1 + $0xc0] sm:$0xfc]
    %v987 = vld [vmem:[%s1 + $0xc8] sm:$0xfc]
    %v988 = vld [vmem:[%s1 + $0xd0] sm:$0x3]
    %v989 = vld [vmem:[%s1 + $0xd8] sm:$0x3]
    %v990 = vld [vmem:[%s1 + $0xe0] sm:$0xfc]
    %v991 = vld [vmem:[%s1 + $0xe8] sm:$0xfc]
    %v992 = vld [vmem:[%s1 + $0xf0] sm:$0x3]
    %v993 = vld [vmem:[%s1 + $0xf8] sm:$0x3]
    %v994 = vld [vmem:[%s1 + $0x140] sm:$0xfc]
    %v995 = vld [vmem:[%s1 + $0x148] sm:$0xfc]
    %v996 = vld [vmem:[%s1 + $0x150] sm:$0x3]
    %v997 = vld [vmem:[%s1 + $0x158] sm:$0x3]
    %v998 = vld [vmem:[%s1 + $0x160] sm:$0xfc]
    %v999 = vld [vmem:[%s1 + $0x168] sm:$0xfc]
    %v1000 = vld [vmem:[%s1 + $0x170] sm:$0x3]
    %v1001 = vld [vmem:[%s1 + $0x178] sm:$0x3]
    %v1002 = vld [vmem:[%s1 + $0x180] sm:$0xfc]
    %v1003 = vld [vmem:[%s1 + $0x188] sm:$0xfc]
    %v1004 = vld [vmem:[%s1 + $0x190] sm:$0x3]
    %v1005 = vld [vmem:[%s1 + $0x198] sm:$0x3]
    %v1006 = vld [vmem:[%s1 + $0x1a0] sm:$0xfc]
    %v1007 = vld [vmem:[%s1 + $0x1a8] sm:$0xfc]
    %v1008 = vld [vmem:[%s1 + $0x1b0] sm:$0x3]
    %v1009 = vld [vmem:[%s1 + $0x1b8] sm:$0x3]
    %v1010 = vld [vmem:[%s1 + $0x1c0] sm:$0xfc]
    %v1011 = vld [vmem:[%s1 + $0x1c8] sm:$0xfc]
    %v1012 = vld [vmem:[%s1 + $0x1d0] sm:$0x3]
    %v1013 = vld [vmem:[%s1 + $0x1d8] sm:$0x3]
    %v1014 = vld [vmem:[%s1 + $0x1e0] sm:$0xfc]
    %v1015 = vld [vmem:[%s1 + $0x1e8] sm:$0xfc]
    %v1016 = vld [vmem:[%s1 + $0x1f0] sm:$0x3]
    %v1017 = vld [vmem:[%s1 + $0x1f8] sm:$0x3]
    %v1018 = vld [vmem:[%s1 + $0x200] sm:$0xfc]
    %v1019 = vld [vmem:[%s1 + $0x208] sm:$0xfc]
    %v1020 = vld [vmem:[%s1 + $0x210] sm:$0x3]
    %v1021 = vld [vmem:[%s1 + $0x218] sm:$0x3]
    %v1022 = vld [vmem:[%s1 + $0x220] sm:$0xfc]
    %v1023 = vld [vmem:[%s1 + $0x228] sm:$0xfc]
    %v1024 = vld [vmem:[%s1 + $0x230] sm:$0x3]
    %v1025 = vld [vmem:[%s1 + $0x238] sm:$0x3]
    %vm1090 = vcmask 1045504
    %v1091 = vrot.slane %v962, 2
    %v1092 = vrot.slane %v964, 2
    %v1093 = vsel %vm1090, %v1091, %v1092
    %v1094 = vrot.slane %v963, 2
    %v1095 = vrot.slane %v965, 2
    %v1096 = vsel %vm1090, %v1094, %v1095
    %v1097 = vrot.slane %v966, 2
    %v1098 = vrot.slane %v968, 2
    %v1099 = vsel %vm1090, %v1097, %v1098
    %v1100 = vrot.slane %v967, 2
    %v1101 = vrot.slane %v969, 2
    %v1102 = vsel %vm1090, %v1100, %v1101
    %v1103 = vrot.slane %v970, 2
    %v1104 = vrot.slane %v972, 2
    %v1105 = vsel %vm1090, %v1103, %v1104
    %v1106 = vrot.slane %v971, 2
    %v1107 = vrot.slane %v973, 2
    %v1108 = vsel %vm1090, %v1106, %v1107
    %v1109 = vrot.slane %v974, 2
    %v1110 = vrot.slane %v976, 2
    %v1111 = vsel %vm1090, %v1109, %v1110
    %v1112 = vrot.slane %v975, 2
    %v1113 = vrot.slane %v977, 2
    %v1114 = vsel %vm1090, %v1112, %v1113
    %v1115 = vrot.slane %v978, 2
    %v1116 = vrot.slane %v980, 2
    %v1117 = vsel %vm1090, %v1115, %v1116
    %v1118 = vrot.slane %v979, 2
    %v1119 = vrot.slane %v981, 2
    %v1120 = vsel %vm1090, %v1118, %v1119
    %v1121 = vrot.slane %v982, 2
    %v1122 = vrot.slane %v984, 2
    %v1123 = vsel %vm1090, %v1121, %v1122
    %v1124 = vrot.slane %v983, 2
    %v1125 = vrot.slane %v985, 2
    %v1126 = vsel %vm1090, %v1124, %v1125
    %v1127 = vrot.slane %v986, 2
    %v1128 = vrot.slane %v988, 2
    %v1129 = vsel %vm1090, %v1127, %v1128
    %v1130 = vrot.slane %v987, 2
    %v1131 = vrot.slane %v989, 2
    %v1132 = vsel %vm1090, %v1130, %v1131
    %v1133 = vrot.slane %v990, 2
    %v1134 = vrot.slane %v992, 2
    %v1135 = vsel %vm1090, %v1133, %v1134
    %v1136 = vrot.slane %v991, 2
    %v1137 = vrot.slane %v993, 2
    %v1138 = vsel %vm1090, %v1136, %v1137
    %v1139 = vrot.slane %v994, 2
    %v1140 = vrot.slane %v996, 2
    %v1141 = vsel %vm1090, %v1139, %v1140
    %v1142 = vrot.slane %v995, 2
    %v1143 = vrot.slane %v997, 2
    %v1144 = vsel %vm1090, %v1142, %v1143
    %v1145 = vrot.slane %v998, 2
    %v1146 = vrot.slane %v1000, 2
    %v1147 = vsel %vm1090, %v1145, %v1146
    %v1148 = vrot.slane %v999, 2
    %v1149 = vrot.slane %v1001, 2
    %v1150 = vsel %vm1090, %v1148, %v1149
    %v1151 = vrot.slane %v1002, 2
    %v1152 = vrot.slane %v1004, 2
    %v1153 = vsel %vm1090, %v1151, %v1152
    %v1154 = vrot.slane %v1003, 2
    %v1155 = vrot.slane %v1005, 2
    %v1156 = vsel %vm1090, %v1154, %v1155
    %v1157 = vrot.slane %v1006, 2
    %v1158 = vrot.slane %v1008, 2
    %v1159 = vsel %vm1090, %v1157, %v1158
    %v1160 = vrot.slane %v1007, 2
    %v1161 = vrot.slane %v1009, 2
    %v1162 = vsel %vm1090, %v1160, %v1161
    %v1163 = vrot.slane %v1010, 2
    %v1164 = vrot.slane %v1012, 2
    %v1165 = vsel %vm1090, %v1163, %v1164
    %v1166 = vrot.slane %v1011, 2
    %v1167 = vrot.slane %v1013, 2
    %v1168 = vsel %vm1090, %v1166, %v1167
    %v1169 = vrot.slane %v1014, 2
    %v1170 = vrot.slane %v1016, 2
    %v1171 = vsel %vm1090, %v1169, %v1170
    %v1172 = vrot.slane %v1015, 2
    %v1173 = vrot.slane %v1017, 2
    %v1174 = vsel %vm1090, %v1172, %v1173
    %v1175 = vrot.slane %v1018, 2
    %v1176 = vrot.slane %v1020, 2
    %v1177 = vsel %vm1090, %v1175, %v1176
    %v1178 = vrot.slane %v1019, 2
    %v1179 = vrot.slane %v1021, 2
    %v1180 = vsel %vm1090, %v1178, %v1179
    %v1181 = vrot.slane %v1022, 2
    %v1182 = vrot.slane %v1024, 2
    %v1183 = vsel %vm1090, %v1181, %v1182
    %v1184 = vrot.slane %v1023, 2
    %v1185 = vrot.slane %v1025, 2
    %v1186 = vsel %vm1090, %v1184, %v1185
    %v1219 = vpack.c.bf16 %v1099, %v1093
    %v1220 = vpack.c.bf16 %v1102, %v1096
    %v1221 = vpack.c.bf16 %v1111, %v1105
    %v1222 = vpack.c.bf16 %v1114, %v1108
    %v1223 = vpack.c.bf16 %v1123, %v1117
    %v1224 = vpack.c.bf16 %v1126, %v1120
    %v1225 = vpack.c.bf16 %v1135, %v1129
    %v1226 = vpack.c.bf16 %v1138, %v1132
    %v1227 = vpack.c.bf16 %v1147, %v1141
    %v1228 = vpack.c.bf16 %v1150, %v1144
    %v1229 = vpack.c.bf16 %v1159, %v1153
    %v1230 = vpack.c.bf16 %v1162, %v1156
    %v1231 = vpack.c.bf16 %v1171, %v1165
    %v1232 = vpack.c.bf16 %v1174, %v1168
    %v1233 = vpack.c.bf16 %v1183, %v1177
    %v1234 = vpack.c.bf16 %v1186, %v1180
    %s1235 = scalar_lea.vmem %s2, 256
    %v1236 = vld [vmem:[%s1235] sm:$0xf]
    %v1237 = vld [vmem:[%s1235 + $0x4] sm:$0xf]
    %v1238 = vld [vmem:[%s1235 + $0x8] sm:$0xf]
    %v1239 = vld [vmem:[%s1235 + $0xc] sm:$0xf]
    %v1240 = vld [vmem:[%s1235 + $0x10] sm:$0xf]
    %v1241 = vld [vmem:[%s1235 + $0x14] sm:$0xf]
    %v1242 = vld [vmem:[%s1235 + $0x18] sm:$0xf]
    %v1243 = vld [vmem:[%s1235 + $0x1c] sm:$0xf]
    %v1244 = vld [vmem:[%s1235 + $0x20] sm:$0xf]
    %v1245 = vld [vmem:[%s1235 + $0x24] sm:$0xf]
    %v1246 = vld [vmem:[%s1235 + $0x28] sm:$0xf]
    %v1247 = vld [vmem:[%s1235 + $0x2c] sm:$0xf]
    %v1248 = vld [vmem:[%s1235 + $0x30] sm:$0xf]
    %v1249 = vld [vmem:[%s1235 + $0x34] sm:$0xf]
    %v1250 = vld [vmem:[%s1235 + $0x38] sm:$0xf]
    %v1251 = vld [vmem:[%s1235 + $0x3c] sm:$0xf]
    %v1252 = vld [vmem:[%s1235 + $0x40] sm:$0xf]
    %v1253 = vld [vmem:[%s1235 + $0x44] sm:$0xf]
    %v1254 = vld [vmem:[%s1235 + $0x48] sm:$0xf]
    %v1255 = vld [vmem:[%s1235 + $0x4c] sm:$0xf]
    %v1256 = vld [vmem:[%s1235 + $0x50] sm:$0xf]
    %v1257 = vld [vmem:[%s1235 + $0x54] sm:$0xf]
    %v1258 = vld [vmem:[%s1235 + $0x58] sm:$0xf]
    %v1259 = vld [vmem:[%s1235 + $0x5c] sm:$0xf]
    %v1260 = vld [vmem:[%s1235 + $0x60] sm:$0xf]
    %v1261 = vld [vmem:[%s1235 + $0x64] sm:$0xf]
    %v1262 = vld [vmem:[%s1235 + $0x68] sm:$0xf]
    %v1263 = vld [vmem:[%s1235 + $0x6c] sm:$0xf]
    %v1264 = vld [vmem:[%s1235 + $0x70] sm:$0xf]
    %v1265 = vld [vmem:[%s1235 + $0x74] sm:$0xf]
    %v1266 = vld [vmem:[%s1235 + $0x78] sm:$0xf]
    %v1267 = vld [vmem:[%s1235 + $0x7c] sm:$0xf]
    %v1300 = vunpack.c.l.b16 %v1236
    %v1301 = vunpack.c.l.b16 %v1237
    %v1302 = vunpack.c.l.b16 %v1238
    %v1303 = vunpack.c.l.b16 %v1239
    %v1304 = vunpack.c.l.b16 %v1240
    %v1305 = vunpack.c.l.b16 %v1241
    %v1306 = vunpack.c.l.b16 %v1242
    %v1307 = vunpack.c.l.b16 %v1243
    %v1308 = vunpack.c.l.b16 %v1244
    %v1309 = vunpack.c.l.b16 %v1245
    %v1310 = vunpack.c.l.b16 %v1246
    %v1311 = vunpack.c.l.b16 %v1247
    %v1312 = vunpack.c.l.b16 %v1248
    %v1313 = vunpack.c.l.b16 %v1249
    %v1314 = vunpack.c.l.b16 %v1250
    %v1315 = vunpack.c.l.b16 %v1251
    %v1316 = vunpack.c.l.b16 %v1252
    %v1317 = vunpack.c.l.b16 %v1253
    %v1318 = vunpack.c.l.b16 %v1254
    %v1319 = vunpack.c.l.b16 %v1255
    %v1320 = vunpack.c.l.b16 %v1256
    %v1321 = vunpack.c.l.b16 %v1257
    %v1322 = vunpack.c.l.b16 %v1258
    %v1323 = vunpack.c.l.b16 %v1259
    %v1324 = vunpack.c.l.b16 %v1260
    %v1325 = vunpack.c.l.b16 %v1261
    %v1326 = vunpack.c.l.b16 %v1262
    %v1327 = vunpack.c.l.b16 %v1263
    %v1328 = vunpack.c.l.b16 %v1264
    %v1329 = vunpack.c.l.b16 %v1265
    %v1330 = vunpack.c.l.b16 %v1266
    %v1331 = vunpack.c.l.b16 %v1267
    %v1332 = vpack.c.b16 %v1301, %v1300
    %v1333 = vpack.c.b16 %v1303, %v1302
    %v1334 = vpack.c.b16 %v1305, %v1304
    %v1335 = vpack.c.b16 %v1307, %v1306
    %v1336 = vpack.c.b16 %v1309, %v1308
    %v1337 = vpack.c.b16 %v1311, %v1310
    %v1338 = vpack.c.b16 %v1313, %v1312
    %v1339 = vpack.c.b16 %v1315, %v1314
    %v1340 = vpack.c.b16 %v1317, %v1316
    %v1341 = vpack.c.b16 %v1319, %v1318
    %v1342 = vpack.c.b16 %v1321, %v1320
    %v1343 = vpack.c.b16 %v1323, %v1322
    %v1344 = vpack.c.b16 %v1325, %v1324
    %v1345 = vpack.c.b16 %v1327, %v1326
    %v1346 = vpack.c.b16 %v1329, %v1328
    %v1347 = vpack.c.b16 %v1331, %v1330
    %1364 = vmatprep.subr.bf16.mxu0 0
    %1365 = vmatpush1.bf16.msra.mxu0 %v1332
    %1366 = vmatprep.subr.bf16.mxu0 0
    %1367 = vmatpush1.bf16.msra.mxu0 %v1333
    %1368 = vmatprep.subr.bf16.mxu0 0
    %1369 = vmatpush1.bf16.msra.mxu0 %v1334
    %1370 = vmatprep.subr.bf16.mxu0 0
    %1371 = vmatpush1.bf16.msra.mxu0 %v1335
    %1372 = vmatprep.subr.bf16.mxu0 0
    %1373 = vmatpush1.bf16.msra.mxu0 %v1336
    %1374 = vmatprep.subr.bf16.mxu0 0
    %1375 = vmatpush1.bf16.msra.mxu0 %v1337
    %1376 = vmatprep.subr.bf16.mxu0 0
    %1377 = vmatpush1.bf16.msra.mxu0 %v1338
    %1378 = vmatprep.subr.bf16.mxu0 0
    %1379 = vmatpush1.bf16.msra.mxu0 %v1339
    %1380 = vmatprep.subr.bf16.mxu0 0
    %1381 = vmatpush1.bf16.msra.mxu0 %v1340
    %1382 = vmatprep.subr.bf16.mxu0 0
    %1383 = vmatpush1.bf16.msra.mxu0 %v1341
    %1384 = vmatprep.subr.bf16.mxu0 0
    %1385 = vmatpush1.bf16.msra.mxu0 %v1342
    %1386 = vmatprep.subr.bf16.mxu0 0
    %1387 = vmatpush1.bf16.msra.mxu0 %v1343
    %1388 = vmatprep.subr.bf16.mxu0 0
    %1389 = vmatpush1.bf16.msra.mxu0 %v1344
    %1390 = vmatprep.subr.bf16.mxu0 0
    %1391 = vmatpush1.bf16.msra.mxu0 %v1345
    %1392 = vmatprep.subr.bf16.mxu0 0
    %1393 = vmatpush1.bf16.msra.mxu0 %v1346
    %1394 = vmatprep.subr.bf16.mxu0 0
    %1395 = vmatpush1.bf16.msra.mxu0 %v1347
    %1396 = vmatprep.mubr.bf16.mxu0 %v1220
    %1397 = vmatmul.mubr.bf16.gmra.mrb[0].mxu0 %v1219
    %v1398 = vpop.f32.mrb[0].mxu0
    %v1399 = vadd.f32 0.0, %v1398
    %v1400 = vpop.f32.mrb[0].mxu0
    %v1401 = vpop.f32.mrb[0].mxu0
    %v1402 = vadd.f32 0.0, %v1401
    %v1403 = vpop.f32.mrb[0].mxu0
    %1404 = vmatprep.mubr.bf16.mxu0 %v1222
    %1405 = vmatmul.mubr.bf16.gmra.mrb[0].mxu0 %v1221
    %v1406 = vpop.f32.mrb[0].mxu0
    %v1407 = vadd.f32 0.0, %v1406
    %v1408 = vpop.f32.mrb[0].mxu0
    %v1409 = vpop.f32.mrb[0].mxu0
    %v1410 = vadd.f32 0.0, %v1409
    %v1411 = vpop.f32.mrb[0].mxu0
    %1412 = vmatprep.mubr.bf16.mxu0 %v1224
    %1413 = vmatmul.mubr.bf16.gmra.mrb[0].mxu0 %v1223
    %v1414 = vpop.f32.mrb[0].mxu0
    %v1415 = vadd.f32 0.0, %v1414
    %v1416 = vpop.f32.mrb[0].mxu0
    %v1417 = vpop.f32.mrb[0].mxu0
    %v1418 = vadd.f32 0.0, %v1417
    %v1419 = vpop.f32.mrb[0].mxu0
    %1420 = vmatprep.mubr.bf16.mxu0 %v1226
    %1421 = vmatmul.mubr.bf16.gmra.mrb[0].mxu0 %v1225
    %v1422 = vpop.f32.mrb[0].mxu0
    %v1423 = vadd.f32 0.0, %v1422
    %v1424 = vpop.f32.mrb[0].mxu0
    %v1425 = vpop.f32.mrb[0].mxu0
    %v1426 = vadd.f32 0.0, %v1425
    %v1427 = vpop.f32.mrb[0].mxu0
    %1428 = vmatprep.mubr.bf16.mxu0 %v1228
    %1429 = vmatmul.mubr.bf16.gmra.mrb[0].mxu0 %v1227
    %v1430 = vpop.f32.mrb[0].mxu0
    %v1431 = vadd.f32 0.0, %v1430
    %v1432 = vpop.f32.mrb[0].mxu0
    %v1433 = vpop.f32.mrb[0].mxu0
    %v1434 = vadd.f32 0.0, %v1433
    %v1435 = vpop.f32.mrb[0].mxu0
    %1436 = vmatprep.mubr.bf16.mxu0 %v1230
    %1437 = vmatmul.mubr.bf16.gmra.mrb[0].mxu0 %v1229
    %v1438 = vpop.f32.mrb[0].mxu0
    %v1439 = vadd.f32 0.0, %v1438
    %v1440 = vpop.f32.mrb[0].mxu0
    %v1441 = vpop.f32.mrb[0].mxu0
    %v1442 = vadd.f32 0.0, %v1441
    %v1443 = vpop.f32.mrb[0].mxu0
    %1444 = vmatprep.mubr.bf16.mxu0 %v1232
    %1445 = vmatmul.mubr.bf16.gmra.mrb[0].mxu0 %v1231
    %v1446 = vpop.f32.mrb[0].mxu0
    %v1447 = vadd.f32 0.0, %v1446
    %v1448 = vpop.f32.mrb[0].mxu0
    %v1449 = vpop.f32.mrb[0].mxu0
    %v1450 = vadd.f32 0.0, %v1449
    %v1451 = vpop.f32.mrb[0].mxu0
    %1452 = vmatprep.mubr.bf16.mxu0 %v1234
    %1453 = vmatmul.mubr.bf16.gmra.mrb[0].mxu0 %v1233
    %v1454 = vpop.f32.mrb[0].mxu0
    %v1455 = vadd.f32 0.0, %v1454
    %v1456 = vpop.f32.mrb[0].mxu0
    %v1457 = vpop.f32.mrb[0].mxu0
    %v1458 = vadd.f32 0.0, %v1457
    %v1459 = vpop.f32.mrb[0].mxu0
    %1460 = vdwg.mxu0
    %v1461 = vadd.f32 %v900, %v1399
    %v1462 = vadd.f32 %v903, %v1402
    %v1463 = vadd.f32 %v908, %v1407
    %v1464 = vadd.f32 %v911, %v1410
    %v1465 = vadd.f32 %v916, %v1415
    %v1466 = vadd.f32 %v919, %v1418
    %v1467 = vadd.f32 %v924, %v1423
    %v1468 = vadd.f32 %v927, %v1426
    %v1469 = vadd.f32 %v932, %v1431
    %v1470 = vadd.f32 %v935, %v1434
    %v1471 = vadd.f32 %v940, %v1439
    %v1472 = vadd.f32 %v943, %v1442
    %v1473 = vadd.f32 %v948, %v1447
    %v1474 = vadd.f32 %v951, %v1450
    %v1475 = vadd.f32 %v956, %v1455
    %v1476 = vadd.f32 %v959, %v1458
    %s1477 = scalar_lea.vmem %s1, 32
    %v1478 = vld [vmem:[%s1477] sm:$0xff]
    %v1479 = vld [vmem:[%s1477 + $0x8] sm:$0xff]
    %v1480 = vld [vmem:[%s1477 + $0x20] sm:$0xff]
    %v1481 = vld [vmem:[%s1477 + $0x28] sm:$0xff]
    %v1482 = vld [vmem:[%s1477 + $0x40] sm:$0xff]
    %v1483 = vld [vmem:[%s1477 + $0x48] sm:$0xff]
    %v1484 = vld [vmem:[%s1477 + $0x60] sm:$0xff]
    %v1485 = vld [vmem:[%s1477 + $0x68] sm:$0xff]
    %v1486 = vld [vmem:[%s1477 + $0x80] sm:$0xff]
    %v1487 = vld [vmem:[%s1477 + $0x88] sm:$0xff]
    %v1488 = vld [vmem:[%s1477 + $0xa0] sm:$0xff]
    %v1489 = vld [vmem:[%s1477 + $0xa8] sm:$0xff]
    %v1490 = vld [vmem:[%s1477 + $0xc0] sm:$0xff]
    %v1491 = vld [vmem:[%s1477 + $0xc8] sm:$0xff]
    %v1492 = vld [vmem:[%s1477 + $0xe0] sm:$0xff]
    %v1493 = vld [vmem:[%s1477 + $0xe8] sm:$0xff]
    %v1494 = vld [vmem:[%s1477 + $0x140] sm:$0xff]
    %v1495 = vld [vmem:[%s1477 + $0x148] sm:$0xff]
    %v1496 = vld [vmem:[%s1477 + $0x160] sm:$0xff]
    %v1497 = vld [vmem:[%s1477 + $0x168] sm:$0xff]
    %v1498 = vld [vmem:[%s1477 + $0x180] sm:$0xff]
    %v1499 = vld [vmem:[%s1477 + $0x188] sm:$0xff]
    %v1500 = vld [vmem:[%s1477 + $0x1a0] sm:$0xff]
    %v1501 = vld [vmem:[%s1477 + $0x1a8] sm:$0xff]
    %v1502 = vld [vmem:[%s1477 + $0x1c0] sm:$0xff]
    %v1503 = vld [vmem:[%s1477 + $0x1c8] sm:$0xff]
    %v1504 = vld [vmem:[%s1477 + $0x1e0] sm:$0xff]
    %v1505 = vld [vmem:[%s1477 + $0x1e8] sm:$0xff]
    %v1506 = vld [vmem:[%s1477 + $0x200] sm:$0xff]
    %v1507 = vld [vmem:[%s1477 + $0x208] sm:$0xff]
    %v1508 = vld [vmem:[%s1477 + $0x220] sm:$0xff]
    %v1509 = vld [vmem:[%s1477 + $0x228] sm:$0xff]
    %v1510 = vpack.c.bf16 %v1480, %v1478
    %v1511 = vpack.c.bf16 %v1481, %v1479
    %v1512 = vpack.c.bf16 %v1484, %v1482
    %v1513 = vpack.c.bf16 %v1485, %v1483
    %v1514 = vpack.c.bf16 %v1488, %v1486
    %v1515 = vpack.c.bf16 %v1489, %v1487
    %v1516 = vpack.c.bf16 %v1492, %v1490
    %v1517 = vpack.c.bf16 %v1493, %v1491
    %v1518 = vpack.c.bf16 %v1496, %v1494
    %v1519 = vpack.c.bf16 %v1497, %v1495
    %v1520 = vpack.c.bf16 %v1500, %v1498
    %v1521 = vpack.c.bf16 %v1501, %v1499
    %v1522 = vpack.c.bf16 %v1504, %v1502
    %v1523 = vpack.c.bf16 %v1505, %v1503
    %v1524 = vpack.c.bf16 %v1508, %v1506
    %v1525 = vpack.c.bf16 %v1509, %v1507
    %s1526 = scalar_lea.vmem %s2, 384
    %v1527 = vld [vmem:[%s1526] sm:$0xf]
    %v1528 = vld [vmem:[%s1526 + $0x4] sm:$0xf]
    %v1529 = vld [vmem:[%s1526 + $0x8] sm:$0xf]
    %v1530 = vld [vmem:[%s1526 + $0xc] sm:$0xf]
    %v1531 = vld [vmem:[%s1526 + $0x10] sm:$0xf]
    %v1532 = vld [vmem:[%s1526 + $0x14] sm:$0xf]
    %v1533 = vld [vmem:[%s1526 + $0x18] sm:$0xf]
    %v1534 = vld [vmem:[%s1526 + $0x1c] sm:$0xf]
    %v1535 = vld [vmem:[%s1526 + $0x20] sm:$0xf]
    %v1536 = vld [vmem:[%s1526 + $0x24] sm:$0xf]
    %v1537 = vld [vmem:[%s1526 + $0x28] sm:$0xf]
    %v1538 = vld [vmem:[%s1526 + $0x2c] sm:$0xf]
    %v1539 = vld [vmem:[%s1526 + $0x30] sm:$0xf]
    %v1540 = vld [vmem:[%s1526 + $0x34] sm:$0xf]
    %v1541 = vld [vmem:[%s1526 + $0x38] sm:$0xf]
    %v1542 = vld [vmem:[%s1526 + $0x3c] sm:$0xf]
    %v1543 = vld [vmem:[%s1526 + $0x40] sm:$0xf]
    %v1544 = vld [vmem:[%s1526 + $0x44] sm:$0xf]
    %v1545 = vld [vmem:[%s1526 + $0x48] sm:$0xf]
    %v1546 = vld [vmem:[%s1526 + $0x4c] sm:$0xf]
    %v1547 = vld [vmem:[%s1526 + $0x50] sm:$0xf]
    %v1548 = vld [vmem:[%s1526 + $0x54] sm:$0xf]
    %v1549 = vld [vmem:[%s1526 + $0x58] sm:$0xf]
    %v1550 = vld [vmem:[%s1526 + $0x5c] sm:$0xf]
    %v1551 = vld [vmem:[%s1526 + $0x60] sm:$0xf]
    %v1552 = vld [vmem:[%s1526 + $0x64] sm:$0xf]
    %v1553 = vld [vmem:[%s1526 + $0x68] sm:$0xf]
    %v1554 = vld [vmem:[%s1526 + $0x6c] sm:$0xf]
    %v1555 = vld [vmem:[%s1526 + $0x70] sm:$0xf]
    %v1556 = vld [vmem:[%s1526 + $0x74] sm:$0xf]
    %v1557 = vld [vmem:[%s1526 + $0x78] sm:$0xf]
    %v1558 = vld [vmem:[%s1526 + $0x7c] sm:$0xf]
    %v1591 = vunpack.c.l.b16 %v1527
    %v1592 = vunpack.c.l.b16 %v1528
    %v1593 = vunpack.c.l.b16 %v1529
    %v1594 = vunpack.c.l.b16 %v1530
    %v1595 = vunpack.c.l.b16 %v1531
    %v1596 = vunpack.c.l.b16 %v1532
    %v1597 = vunpack.c.l.b16 %v1533
    %v1598 = vunpack.c.l.b16 %v1534
    %v1599 = vunpack.c.l.b16 %v1535
    %v1600 = vunpack.c.l.b16 %v1536
    %v1601 = vunpack.c.l.b16 %v1537
    %v1602 = vunpack.c.l.b16 %v1538
    %v1603 = vunpack.c.l.b16 %v1539
    %v1604 = vunpack.c.l.b16 %v1540
    %v1605 = vunpack.c.l.b16 %v1541
    %v1606 = vunpack.c.l.b16 %v1542
    %v1607 = vunpack.c.l.b16 %v1543
    %v1608 = vunpack.c.l.b16 %v1544
    %v1609 = vunpack.c.l.b16 %v1545
    %v1610 = vunpack.c.l.b16 %v1546
    %v1611 = vunpack.c.l.b16 %v1547
    %v1612 = vunpack.c.l.b16 %v1548
    %v1613 = vunpack.c.l.b16 %v1549
    %v1614 = vunpack.c.l.b16 %v1550
    %v1615 = vunpack.c.l.b16 %v1551
    %v1616 = vunpack.c.l.b16 %v1552
    %v1617 = vunpack.c.l.b16 %v1553
    %v1618 = vunpack.c.l.b16 %v1554
    %v1619 = vunpack.c.l.b16 %v1555
    %v1620 = vunpack.c.l.b16 %v1556
    %v1621 = vunpack.c.l.b16 %v1557
    %v1622 = vunpack.c.l.b16 %v1558
    %v1623 = vpack.c.b16 %v1592, %v1591
    %v1624 = vpack.c.b16 %v1594, %v1593
    %v1625 = vpack.c.b16 %v1596, %v1595
    %v1626 = vpack.c.b16 %v1598, %v1597
    %v1627 = vpack.c.b16 %v1600, %v1599
    %v1628 = vpack.c.b16 %v1602, %v1601
    %v1629 = vpack.c.b16 %v1604, %v1603
    %v1630 = vpack.c.b16 %v1606, %v1605
    %v1631 = vpack.c.b16 %v1608, %v1607
    %v1632 = vpack.c.b16 %v1610, %v1609
    %v1633 = vpack.c.b16 %v1612, %v1611
    %v1634 = vpack.c.b16 %v1614, %v1613
    %v1635 = vpack.c.b16 %v1616, %v1615
    %v1636 = vpack.c.b16 %v1618, %v1617
    %v1637 = vpack.c.b16 %v1620, %v1619
    %v1638 = vpack.c.b16 %v1622, %v1621
    %1655 = vmatprep.subr.bf16.mxu0 0
    %1656 = vmatpush1.bf16.msra.mxu0 %v1623
    %1657 = vmatprep.subr.bf16.mxu0 0
    %1658 = vmatpush1.bf16.msra.mxu0 %v1624
    %1659 = vmatprep.subr.bf16.mxu0 0
    %1660 = vmatpush1.bf16.msra.mxu0 %v1625
    %1661 = vmatprep.subr.bf16.mxu0 0
    %1662 = vmatpush1.bf16.msra.mxu0 %v1626
    %1663 = vmatprep.subr.bf16.mxu0 0
    %1664 = vmatpush1.bf16.msra.mxu0 %v1627
    %1665 = vmatprep.subr.bf16.mxu0 0
    %1666 = vmatpush1.bf16.msra.mxu0 %v1628
    %1667 = vmatprep.subr.bf16.mxu0 0
    %1668 = vmatpush1.bf16.msra.mxu0 %v1629
    %1669 = vmatprep.subr.bf16.mxu0 0
    %1670 = vmatpush1.bf16.msra.mxu0 %v1630
    %1671 = vmatprep.subr.bf16.mxu0 0
    %1672 = vmatpush1.bf16.msra.mxu0 %v1631
    %1673 = vmatprep.subr.bf16.mxu0 0
    %1674 = vmatpush1.bf16.msra.mxu0 %v1632
    %1675 = vmatprep.subr.bf16.mxu0 0
    %1676 = vmatpush1.bf16.msra.mxu0 %v1633
    %1677 = vmatprep.subr.bf16.mxu0 0
    %1678 = vmatpush1.bf16.msra.mxu0 %v1634
    %1679 = vmatprep.subr.bf16.mxu0 0
    %1680 = vmatpush1.bf16.msra.mxu0 %v1635
    %1681 = vmatprep.subr.bf16.mxu0 0
    %1682 = vmatpush1.bf16.msra.mxu0 %v1636
    %1683 = vmatprep.subr.bf16.mxu0 0
    %1684 = vmatpush1.bf16.msra.mxu0 %v1637
    %1685 = vmatprep.subr.bf16.mxu0 0
    %1686 = vmatpush1.bf16.msra.mxu0 %v1638
    %1687 = vmatprep.mubr.bf16.mxu0 %v1511
    %1688 = vmatmul.mubr.bf16.gmra.mrb[0].mxu0 %v1510
    %v1689 = vpop.f32.mrb[0].mxu0
    %v1690 = vadd.f32 0.0, %v1689
    %v1691 = vpop.f32.mrb[0].mxu0
    %v1692 = vpop.f32.mrb[0].mxu0
    %v1693 = vadd.f32 0.0, %v1692
    %v1694 = vpop.f32.mrb[0].mxu0
    %1695 = vmatprep.mubr.bf16.mxu0 %v1513
    %1696 = vmatmul.mubr.bf16.gmra.mrb[0].mxu0 %v1512
    %v1697 = vpop.f32.mrb[0].mxu0
    %v1698 = vadd.f32 0.0, %v1697
    %v1699 = vpop.f32.mrb[0].mxu0
    %v1700 = vpop.f32.mrb[0].mxu0
    %v1701 = vadd.f32 0.0, %v1700
    %v1702 = vpop.f32.mrb[0].mxu0
    %1703 = vmatprep.mubr.bf16.mxu0 %v1515
    %1704 = vmatmul.mubr.bf16.gmra.mrb[0].mxu0 %v1514
    %v1705 = vpop.f32.mrb[0].mxu0
    %v1706 = vadd.f32 0.0, %v1705
    %v1707 = vpop.f32.mrb[0].mxu0
    %v1708 = vpop.f32.mrb[0].mxu0
    %v1709 = vadd.f32 0.0, %v1708
    %v1710 = vpop.f32.mrb[0].mxu0
    %1711 = vmatprep.mubr.bf16.mxu0 %v1517
    %1712 = vmatmul.mubr.bf16.gmra.mrb[0].mxu0 %v1516
    %v1713 = vpop.f32.mrb[0].mxu0
    %v1714 = vadd.f32 0.0, %v1713
    %v1715 = vpop.f32.mrb[0].mxu0
    %v1716 = vpop.f32.mrb[0].mxu0
    %v1717 = vadd.f32 0.0, %v1716
    %v1718 = vpop.f32.mrb[0].mxu0
    %1719 = vmatprep.mubr.bf16.mxu0 %v1519
    %1720 = vmatmul.mubr.bf16.gmra.mrb[0].mxu0 %v1518
    %v1721 = vpop.f32.mrb[0].mxu0
    %v1722 = vadd.f32 0.0, %v1721
    %v1723 = vpop.f32.mrb[0].mxu0
    %v1724 = vpop.f32.mrb[0].mxu0
    %v1725 = vadd.f32 0.0, %v1724
    %v1726 = vpop.f32.mrb[0].mxu0
    %1727 = vmatprep.mubr.bf16.mxu0 %v1521
    %1728 = vmatmul.mubr.bf16.gmra.mrb[0].mxu0 %v1520
    %v1729 = vpop.f32.mrb[0].mxu0
    %v1730 = vadd.f32 0.0, %v1729
    %v1731 = vpop.f32.mrb[0].mxu0
    %v1732 = vpop.f32.mrb[0].mxu0
    %v1733 = vadd.f32 0.0, %v1732
    %v1734 = vpop.f32.mrb[0].mxu0
    %1735 = vmatprep.mubr.bf16.mxu0 %v1523
    %1736 = vmatmul.mubr.bf16.gmra.mrb[0].mxu0 %v1522
    %v1737 = vpop.f32.mrb[0].mxu0
    %v1738 = vadd.f32 0.0, %v1737
    %v1739 = vpop.f32.mrb[0].mxu0
    %v1740 = vpop.f32.mrb[0].mxu0
    %v1741 = vadd.f32 0.0, %v1740
    %v1742 = vpop.f32.mrb[0].mxu0
    %1743 = vmatprep.mubr.bf16.mxu0 %v1525
    %1744 = vmatmul.mubr.bf16.gmra.mrb[0].mxu0 %v1524
    %v1745 = vpop.f32.mrb[0].mxu0
    %v1746 = vadd.f32 0.0, %v1745
    %v1747 = vpop.f32.mrb[0].mxu0
    %v1748 = vpop.f32.mrb[0].mxu0
    %v1749 = vadd.f32 0.0, %v1748
    %v1750 = vpop.f32.mrb[0].mxu0
    %1751 = vdwg.mxu0
    %v1752 = vadd.f32 %v1461, %v1690
    %v1753 = vadd.f32 %v1462, %v1693
    %v1754 = vadd.f32 %v1463, %v1698
    %v1755 = vadd.f32 %v1464, %v1701
    %v1756 = vadd.f32 %v1465, %v1706
    %v1757 = vadd.f32 %v1466, %v1709
    %v1758 = vadd.f32 %v1467, %v1714
    %v1759 = vadd.f32 %v1468, %v1717
    %v1760 = vadd.f32 %v1469, %v1722
    %v1761 = vadd.f32 %v1470, %v1725
    %v1762 = vadd.f32 %v1471, %v1730
    %v1763 = vadd.f32 %v1472, %v1733
    %v1764 = vadd.f32 %v1473, %v1738
    %v1765 = vadd.f32 %v1474, %v1741
    %v1766 = vadd.f32 %v1475, %v1746
    %v1767 = vadd.f32 %v1476, %v1749
    %v1768 = vld [vmem:[%s1477] sm:$0xfe]
    %v1769 = vld [vmem:[%s1477 + $0x8] sm:$0xfe]
    %v1770 = vld [vmem:[%s1477 + $0x10] sm:$0x1]
    %v1771 = vld [vmem:[%s1477 + $0x18] sm:$0x1]
    %v1772 = vld [vmem:[%s1477 + $0x20] sm:$0xfe]
    %v1773 = vld [vmem:[%s1477 + $0x28] sm:$0xfe]
    %v1774 = vld [vmem:[%s1477 + $0x30] sm:$0x1]
    %v1775 = vld [vmem:[%s1477 + $0x38] sm:$0x1]
    %v1776 = vld [vmem:[%s1477 + $0x40] sm:$0xfe]
    %v1777 = vld [vmem:[%s1477 + $0x48] sm:$0xfe]
    %v1778 = vld [vmem:[%s1477 + $0x50] sm:$0x1]
    %v1779 = vld [vmem:[%s1477 + $0x58] sm:$0x1]
    %v1780 = vld [vmem:[%s1477 + $0x60] sm:$0xfe]
    %v1781 = vld [vmem:[%s1477 + $0x68] sm:$0xfe]
    %v1782 = vld [vmem:[%s1477 + $0x70] sm:$0x1]
    %v1783 = vld [vmem:[%s1477 + $0x78] sm:$0x1]
    %v1784 = vld [vmem:[%s1477 + $0x80] sm:$0xfe]
    %v1785 = vld [vmem:[%s1477 + $0x88] sm:$0xfe]
    %v1786 = vld [vmem:[%s1477 + $0x90] sm:$0x1]
    %v1787 = vld [vmem:[%s1477 + $0x98] sm:$0x1]
    %v1788 = vld [vmem:[%s1477 + $0xa0] sm:$0xfe]
    %v1789 = vld [vmem:[%s1477 + $0xa8] sm:$0xfe]
    %v1790 = vld [vmem:[%s1477 + $0xb0] sm:$0x1]
    %v1791 = vld [vmem:[%s1477 + $0xb8] sm:$0x1]
    %v1792 = vld [vmem:[%s1477 + $0xc0] sm:$0xfe]
    %v1793 = vld [vmem:[%s1477 + $0xc8] sm:$0xfe]
    %v1794 = vld [vmem:[%s1477 + $0xd0] sm:$0x1]
    %v1795 = vld [vmem:[%s1477 + $0xd8] sm:$0x1]
    %v1796 = vld [vmem:[%s1477 + $0xe0] sm:$0xfe]
    %v1797 = vld [vmem:[%s1477 + $0xe8] sm:$0xfe]
    %v1798 = vld [vmem:[%s1477 + $0xf0] sm:$0x1]
    %v1799 = vld [vmem:[%s1477 + $0xf8] sm:$0x1]
    %v1800 = vld [vmem:[%s1477 + $0x140] sm:$0xfe]
    %v1801 = vld [vmem:[%s1477 + $0x148] sm:$0xfe]
    %v1802 = vld [vmem:[%s1477 + $0x150] sm:$0x1]
    %v1803 = vld [vmem:[%s1477 + $0x158] sm:$0x1]
    %v1804 = vld [vmem:[%s1477 + $0x160] sm:$0xfe]
    %v1805 = vld [vmem:[%s1477 + $0x168] sm:$0xfe]
    %v1806 = vld [vmem:[%s1477 + $0x170] sm:$0x1]
    %v1807 = vld [vmem:[%s1477 + $0x178] sm:$0x1]
    %v1808 = vld [vmem:[%s1477 + $0x180] sm:$0xfe]
    %v1809 = vld [vmem:[%s1477 + $0x188] sm:$0xfe]
    %v1810 = vld [vmem:[%s1477 + $0x190] sm:$0x1]
    %v1811 = vld [vmem:[%s1477 + $0x198] sm:$0x1]
    %v1812 = vld [vmem:[%s1477 + $0x1a0] sm:$0xfe]
    %v1813 = vld [vmem:[%s1477 + $0x1a8] sm:$0xfe]
    %v1814 = vld [vmem:[%s1477 + $0x1b0] sm:$0x1]
    %v1815 = vld [vmem:[%s1477 + $0x1b8] sm:$0x1]
    %v1816 = vld [vmem:[%s1477 + $0x1c0] sm:$0xfe]
    %v1817 = vld [vmem:[%s1477 + $0x1c8] sm:$0xfe]
    %v1818 = vld [vmem:[%s1477 + $0x1d0] sm:$0x1]
    %v1819 = vld [vmem:[%s1477 + $0x1d8] sm:$0x1]
    %v1820 = vld [vmem:[%s1477 + $0x1e0] sm:$0xfe]
    %v1821 = vld [vmem:[%s1477 + $0x1e8] sm:$0xfe]
    %v1822 = vld [vmem:[%s1477 + $0x1f0] sm:$0x1]
    %v1823 = vld [vmem:[%s1477 + $0x1f8] sm:$0x1]
    %v1824 = vld [vmem:[%s1477 + $0x200] sm:$0xfe]
    %v1825 = vld [vmem:[%s1477 + $0x208] sm:$0xfe]
    %v1826 = vld [vmem:[%s1477 + $0x210] sm:$0x1]
    %v1827 = vld [vmem:[%s1477 + $0x218] sm:$0x1]
    %v1828 = vld [vmem:[%s1477 + $0x220] sm:$0xfe]
    %v1829 = vld [vmem:[%s1477 + $0x228] sm:$0xfe]
    %v1830 = vld [vmem:[%s1477 + $0x230] sm:$0x1]
    %v1831 = vld [vmem:[%s1477 + $0x238] sm:$0x1]
    %v1896 = vrot.slane %v1768, 1
    %v1897 = vrot.slane %v1770, 1
    %v1898 = vsel %vm398, %v1896, %v1897
    %v1899 = vrot.slane %v1769, 1
    %v1900 = vrot.slane %v1771, 1
    %v1901 = vsel %vm398, %v1899, %v1900
    %v1902 = vrot.slane %v1772, 1
    %v1903 = vrot.slane %v1774, 1
    %v1904 = vsel %vm398, %v1902, %v1903
    %v1905 = vrot.slane %v1773, 1
    %v1906 = vrot.slane %v1775, 1
    %v1907 = vsel %vm398, %v1905, %v1906
    %v1908 = vrot.slane %v1776, 1
    %v1909 = vrot.slane %v1778, 1
    %v1910 = vsel %vm398, %v1908, %v1909
    %v1911 = vrot.slane %v1777, 1
    %v1912 = vrot.slane %v1779, 1
    %v1913 = vsel %vm398, %v1911, %v1912
    %v1914 = vrot.slane %v1780, 1
    %v1915 = vrot.slane %v1782, 1
    %v1916 = vsel %vm398, %v1914, %v1915
    %v1917 = vrot.slane %v1781, 1
    %v1918 = vrot.slane %v1783, 1
    %v1919 = vsel %vm398, %v1917, %v1918
    %v1920 = vrot.slane %v1784, 1
    %v1921 = vrot.slane %v1786, 1
    %v1922 = vsel %vm398, %v1920, %v1921
    %v1923 = vrot.slane %v1785, 1
    %v1924 = vrot.slane %v1787, 1
    %v1925 = vsel %vm398, %v1923, %v1924
    %v1926 = vrot.slane %v1788, 1
    %v1927 = vrot.slane %v1790, 1
    %v1928 = vsel %vm398, %v1926, %v1927
    %v1929 = vrot.slane %v1789, 1
    %v1930 = vrot.slane %v1791, 1
    %v1931 = vsel %vm398, %v1929, %v1930
    %v1932 = vrot.slane %v1792, 1
    %v1933 = vrot.slane %v1794, 1
    %v1934 = vsel %vm398, %v1932, %v1933
    %v1935 = vrot.slane %v1793, 1
    %v1936 = vrot.slane %v1795, 1
    %v1937 = vsel %vm398, %v1935, %v1936
    %v1938 = vrot.slane %v1796, 1
    %v1939 = vrot.slane %v1798, 1
    %v1940 = vsel %vm398, %v1938, %v1939
    %v1941 = vrot.slane %v1797, 1
    %v1942 = vrot.slane %v1799, 1
    %v1943 = vsel %vm398, %v1941, %v1942
    %v1944 = vrot.slane %v1800, 1
    %v1945 = vrot.slane %v1802, 1
    %v1946 = vsel %vm398, %v1944, %v1945
    %v1947 = vrot.slane %v1801, 1
    %v1948 = vrot.slane %v1803, 1
    %v1949 = vsel %vm398, %v1947, %v1948
    %v1950 = vrot.slane %v1804, 1
    %v1951 = vrot.slane %v1806, 1
    %v1952 = vsel %vm398, %v1950, %v1951
    %v1953 = vrot.slane %v1805, 1
    %v1954 = vrot.slane %v1807, 1
    %v1955 = vsel %vm398, %v1953, %v1954
    %v1956 = vrot.slane %v1808, 1
    %v1957 = vrot.slane %v1810, 1
    %v1958 = vsel %vm398, %v1956, %v1957
    %v1959 = vrot.slane %v1809, 1
    %v1960 = vrot.slane %v1811, 1
    %v1961 = vsel %vm398, %v1959, %v1960
    %v1962 = vrot.slane %v1812, 1
    %v1963 = vrot.slane %v1814, 1
    %v1964 = vsel %vm398, %v1962, %v1963
    %v1965 = vrot.slane %v1813, 1
    %v1966 = vrot.slane %v1815, 1
    %v1967 = vsel %vm398, %v1965, %v1966
    %v1968 = vrot.slane %v1816, 1
    %v1969 = vrot.slane %v1818, 1
    %v1970 = vsel %vm398, %v1968, %v1969
    %v1971 = vrot.slane %v1817, 1
    %v1972 = vrot.slane %v1819, 1
    %v1973 = vsel %vm398, %v1971, %v1972
    %v1974 = vrot.slane %v1820, 1
    %v1975 = vrot.slane %v1822, 1
    %v1976 = vsel %vm398, %v1974, %v1975
    %v1977 = vrot.slane %v1821, 1
    %v1978 = vrot.slane %v1823, 1
    %v1979 = vsel %vm398, %v1977, %v1978
    %v1980 = vrot.slane %v1824, 1
    %v1981 = vrot.slane %v1826, 1
    %v1982 = vsel %vm398, %v1980, %v1981
    %v1983 = vrot.slane %v1825, 1
    %v1984 = vrot.slane %v1827, 1
    %v1985 = vsel %vm398, %v1983, %v1984
    %v1986 = vrot.slane %v1828, 1
    %v1987 = vrot.slane %v1830, 1
    %v1988 = vsel %vm398, %v1986, %v1987
    %v1989 = vrot.slane %v1829, 1
    %v1990 = vrot.slane %v1831, 1
    %v1991 = vsel %vm398, %v1989, %v1990
    %v2024 = vpack.c.bf16 %v1904, %v1898
    %v2025 = vpack.c.bf16 %v1907, %v1901
    %v2026 = vpack.c.bf16 %v1916, %v1910
    %v2027 = vpack.c.bf16 %v1919, %v1913
    %v2028 = vpack.c.bf16 %v1928, %v1922
    %v2029 = vpack.c.bf16 %v1931, %v1925
    %v2030 = vpack.c.bf16 %v1940, %v1934
    %v2031 = vpack.c.bf16 %v1943, %v1937
    %v2032 = vpack.c.bf16 %v1952, %v1946
    %v2033 = vpack.c.bf16 %v1955, %v1949
    %v2034 = vpack.c.bf16 %v1964, %v1958
    %v2035 = vpack.c.bf16 %v1967, %v1961
    %v2036 = vpack.c.bf16 %v1976, %v1970
    %v2037 = vpack.c.bf16 %v1979, %v1973
    %v2038 = vpack.c.bf16 %v1988, %v1982
    %v2039 = vpack.c.bf16 %v1991, %v1985
    %s2040 = scalar_lea.vmem %s2, 512
    %v2041 = vld [vmem:[%s2040] sm:$0xf]
    %v2042 = vld [vmem:[%s2040 + $0x4] sm:$0xf]
    %v2043 = vld [vmem:[%s2040 + $0x8] sm:$0xf]
    %v2044 = vld [vmem:[%s2040 + $0xc] sm:$0xf]
    %v2045 = vld [vmem:[%s2040 + $0x10] sm:$0xf]
    %v2046 = vld [vmem:[%s2040 + $0x14] sm:$0xf]
    %v2047 = vld [vmem:[%s2040 + $0x18] sm:$0xf]
    %v2048 = vld [vmem:[%s2040 + $0x1c] sm:$0xf]
    %v2049 = vld [vmem:[%s2040 + $0x20] sm:$0xf]
    %v2050 = vld [vmem:[%s2040 + $0x24] sm:$0xf]
    %v2051 = vld [vmem:[%s2040 + $0x28] sm:$0xf]
    %v2052 = vld [vmem:[%s2040 + $0x2c] sm:$0xf]
    %v2053 = vld [vmem:[%s2040 + $0x30] sm:$0xf]
    %v2054 = vld [vmem:[%s2040 + $0x34] sm:$0xf]
    %v2055 = vld [vmem:[%s2040 + $0x38] sm:$0xf]
    %v2056 = vld [vmem:[%s2040 + $0x3c] sm:$0xf]
    %v2057 = vld [vmem:[%s2040 + $0x40] sm:$0xf]
    %v2058 = vld [vmem:[%s2040 + $0x44] sm:$0xf]
    %v2059 = vld [vmem:[%s2040 + $0x48] sm:$0xf]
    %v2060 = vld [vmem:[%s2040 + $0x4c] sm:$0xf]
    %v2061 = vld [vmem:[%s2040 + $0x50] sm:$0xf]
    %v2062 = vld [vmem:[%s2040 + $0x54] sm:$0xf]
    %v2063 = vld [vmem:[%s2040 + $0x58] sm:$0xf]
    %v2064 = vld [vmem:[%s2040 + $0x5c] sm:$0xf]
    %v2065 = vld [vmem:[%s2040 + $0x60] sm:$0xf]
    %v2066 = vld [vmem:[%s2040 + $0x64] sm:$0xf]
    %v2067 = vld [vmem:[%s2040 + $0x68] sm:$0xf]
    %v2068 = vld [vmem:[%s2040 + $0x6c] sm:$0xf]
    %v2069 = vld [vmem:[%s2040 + $0x70] sm:$0xf]
    %v2070 = vld [vmem:[%s2040 + $0x74] sm:$0xf]
    %v2071 = vld [vmem:[%s2040 + $0x78] sm:$0xf]
    %v2072 = vld [vmem:[%s2040 + $0x7c] sm:$0xf]
    %v2105 = vunpack.c.l.b16 %v2041
    %v2106 = vunpack.c.l.b16 %v2042
    %v2107 = vunpack.c.l.b16 %v2043
    %v2108 = vunpack.c.l.b16 %v2044
    %v2109 = vunpack.c.l.b16 %v2045
    %v2110 = vunpack.c.l.b16 %v2046
    %v2111 = vunpack.c.l.b16 %v2047
    %v2112 = vunpack.c.l.b16 %v2048
    %v2113 = vunpack.c.l.b16 %v2049
    %v2114 = vunpack.c.l.b16 %v2050
    %v2115 = vunpack.c.l.b16 %v2051
    %v2116 = vunpack.c.l.b16 %v2052
    %v2117 = vunpack.c.l.b16 %v2053
    %v2118 = vunpack.c.l.b16 %v2054
    %v2119 = vunpack.c.l.b16 %v2055
    %v2120 = vunpack.c.l.b16 %v2056
    %v2121 = vunpack.c.l.b16 %v2057
    %v2122 = vunpack.c.l.b16 %v2058
    %v2123 = vunpack.c.l.b16 %v2059
    %v2124 = vunpack.c.l.b16 %v2060
    %v2125 = vunpack.c.l.b16 %v2061
    %v2126 = vunpack.c.l.b16 %v2062
    %v2127 = vunpack.c.l.b16 %v2063
    %v2128 = vunpack.c.l.b16 %v2064
    %v2129 = vunpack.c.l.b16 %v2065
    %v2130 = vunpack.c.l.b16 %v2066
    %v2131 = vunpack.c.l.b16 %v2067
    %v2132 = vunpack.c.l.b16 %v2068
    %v2133 = vunpack.c.l.b16 %v2069
    %v2134 = vunpack.c.l.b16 %v2070
    %v2135 = vunpack.c.l.b16 %v2071
    %v2136 = vunpack.c.l.b16 %v2072
    %v2137 = vpack.c.b16 %v2106, %v2105
    %v2138 = vpack.c.b16 %v2108, %v2107
    %v2139 = vpack.c.b16 %v2110, %v2109
    %v2140 = vpack.c.b16 %v2112, %v2111
    %v2141 = vpack.c.b16 %v2114, %v2113
    %v2142 = vpack.c.b16 %v2116, %v2115
    %v2143 = vpack.c.b16 %v2118, %v2117
    %v2144 = vpack.c.b16 %v2120, %v2119
    %v2145 = vpack.c.b16 %v2122, %v2121
    %v2146 = vpack.c.b16 %v2124, %v2123
    %v2147 = vpack.c.b16 %v2126, %v2125
    %v2148 = vpack.c.b16 %v2128, %v2127
    %v2149 = vpack.c.b16 %v2130, %v2129
    %v2150 = vpack.c.b16 %v2132, %v2131
    %v2151 = vpack.c.b16 %v2134, %v2133
    %v2152 = vpack.c.b16 %v2136, %v2135
    %2169 = vmatprep.subr.bf16.mxu0 0
    %2170 = vmatpush1.bf16.msra.mxu0 %v2137
    %2171 = vmatprep.subr.bf16.mxu0 0
    %2172 = vmatpush1.bf16.msra.mxu0 %v2138
    %2173 = vmatprep.subr.bf16.mxu0 0
    %2174 = vmatpush1.bf16.msra.mxu0 %v2139
    %2175 = vmatprep.subr.bf16.mxu0 0
    %2176 = vmatpush1.bf16.msra.mxu0 %v2140
    %2177 = vmatprep.subr.bf16.mxu0 0
    %2178 = vmatpush1.bf16.msra.mxu0 %v2141
    %2179 = vmatprep.subr.bf16.mxu0 0
    %2180 = vmatpush1.bf16.msra.mxu0 %v2142
    %2181 = vmatprep.subr.bf16.mxu0 0
    %2182 = vmatpush1.bf16.msra.mxu0 %v2143
    %2183 = vmatprep.subr.bf16.mxu0 0
    %2184 = vmatpush1.bf16.msra.mxu0 %v2144
    %2185 = vmatprep.subr.bf16.mxu0 0
    %2186 = vmatpush1.bf16.msra.mxu0 %v2145
    %2187 = vmatprep.subr.bf16.mxu0 0
    %2188 = vmatpush1.bf16.msra.mxu0 %v2146
    %2189 = vmatprep.subr.bf16.mxu0 0
    %2190 = vmatpush1.bf16.msra.mxu0 %v2147
    %2191 = vmatprep.subr.bf16.mxu0 0
    %2192 = vmatpush1.bf16.msra.mxu0 %v2148
    %2193 = vmatprep.subr.bf16.mxu0 0
    %2194 = vmatpush1.bf16.msra.mxu0 %v2149
    %2195 = vmatprep.subr.bf16.mxu0 0
    %2196 = vmatpush1.bf16.msra.mxu0 %v2150
    %2197 = vmatprep.subr.bf16.mxu0 0
    %2198 = vmatpush1.bf16.msra.mxu0 %v2151
    %2199 = vmatprep.subr.bf16.mxu0 0
    %2200 = vmatpush1.bf16.msra.mxu0 %v2152
    %2201 = vmatprep.mubr.bf16.mxu0 %v2025
    %2202 = vmatmul.mubr.bf16.gmra.mrb[0].mxu0 %v2024
    %v2203 = vpop.f32.mrb[0].mxu0
    %v2204 = vadd.f32 0.0, %v2203
    %v2205 = vpop.f32.mrb[0].mxu0
    %v2206 = vpop.f32.mrb[0].mxu0
    %v2207 = vadd.f32 0.0, %v2206
    %v2208 = vpop.f32.mrb[0].mxu0
    %2209 = vmatprep.mubr.bf16.mxu0 %v2027
    %2210 = vmatmul.mubr.bf16.gmra.mrb[0].mxu0 %v2026
    %v2211 = vpop.f32.mrb[0].mxu0
    %v2212 = vadd.f32 0.0, %v2211
    %v2213 = vpop.f32.mrb[0].mxu0
    %v2214 = vpop.f32.mrb[0].mxu0
    %v2215 = vadd.f32 0.0, %v2214
    %v2216 = vpop.f32.mrb[0].mxu0
    %2217 = vmatprep.mubr.bf16.mxu0 %v2029
    %2218 = vmatmul.mubr.bf16.gmra.mrb[0].mxu0 %v2028
    %v2219 = vpop.f32.mrb[0].mxu0
    %v2220 = vadd.f32 0.0, %v2219
    %v2221 = vpop.f32.mrb[0].mxu0
    %v2222 = vpop.f32.mrb[0].mxu0
    %v2223 = vadd.f32 0.0, %v2222
    %v2224 = vpop.f32.mrb[0].mxu0
    %2225 = vmatprep.mubr.bf16.mxu0 %v2031
    %2226 = vmatmul.mubr.bf16.gmra.mrb[0].mxu0 %v2030
    %v2227 = vpop.f32.mrb[0].mxu0
    %v2228 = vadd.f32 0.0, %v2227
    %v2229 = vpop.f32.mrb[0].mxu0
    %v2230 = vpop.f32.mrb[0].mxu0
    %v2231 = vadd.f32 0.0, %v2230
    %v2232 = vpop.f32.mrb[0].mxu0
    %2233 = vmatprep.mubr.bf16.mxu0 %v2033
    %2234 = vmatmul.mubr.bf16.gmra.mrb[0].mxu0 %v2032
    %v2235 = vpop.f32.mrb[0].mxu0
    %v2236 = vadd.f32 0.0, %v2235
    %v2237 = vpop.f32.mrb[0].mxu0
    %v2238 = vpop.f32.mrb[0].mxu0
    %v2239 = vadd.f32 0.0, %v2238
    %v2240 = vpop.f32.mrb[0].mxu0
    %2241 = vmatprep.mubr.bf16.mxu0 %v2035
    %2242 = vmatmul.mubr.bf16.gmra.mrb[0].mxu0 %v2034
    %v2243 = vpop.f32.mrb[0].mxu0
    %v2244 = vadd.f32 0.0, %v2243
    %v2245 = vpop.f32.mrb[0].mxu0
    %v2246 = vpop.f32.mrb[0].mxu0
    %v2247 = vadd.f32 0.0, %v2246
    %v2248 = vpop.f32.mrb[0].mxu0
    %2249 = vmatprep.mubr.bf16.mxu0 %v2037
    %2250 = vmatmul.mubr.bf16.gmra.mrb[0].mxu0 %v2036
    %v2251 = vpop.f32.mrb[0].mxu0
    %v2252 = vadd.f32 0.0, %v2251
    %v2253 = vpop.f32.mrb[0].mxu0
    %v2254 = vpop.f32.mrb[0].mxu0
    %v2255 = vadd.f32 0.0, %v2254
    %v2256 = vpop.f32.mrb[0].mxu0
    %2257 = vmatprep.mubr.bf16.mxu0 %v2039
    %2258 = vmatmul.mubr.bf16.gmra.mrb[0].mxu0 %v2038
    %v2259 = vpop.f32.mrb[0].mxu0
    %v2260 = vadd.f32 0.0, %v2259
    %v2261 = vpop.f32.mrb[0].mxu0
    %v2262 = vpop.f32.mrb[0].mxu0
    %v2263 = vadd.f32 0.0, %v2262
    %v2264 = vpop.f32.mrb[0].mxu0
    %2265 = vdwg.mxu0
    %v2266 = vadd.f32 %v1752, %v2204
    %v2267 = vadd.f32 %v1753, %v2207
    %v2268 = vadd.f32 %v1754, %v2212
    %v2269 = vadd.f32 %v1755, %v2215
    %v2270 = vadd.f32 %v1756, %v2220
    %v2271 = vadd.f32 %v1757, %v2223
    %v2272 = vadd.f32 %v1758, %v2228
    %v2273 = vadd.f32 %v1759, %v2231
    %v2274 = vadd.f32 %v1760, %v2236
    %v2275 = vadd.f32 %v1761, %v2239
    %v2276 = vadd.f32 %v1762, %v2244
    %v2277 = vadd.f32 %v1763, %v2247
    %v2278 = vadd.f32 %v1764, %v2252
    %v2279 = vadd.f32 %v1765, %v2255
    %v2280 = vadd.f32 %v1766, %v2260
    %v2281 = vadd.f32 %v1767, %v2263
    %v2282 = vld [vmem:[%s1477] sm:$0xfc]
    %v2283 = vld [vmem:[%s1477 + $0x8] sm:$0xfc]
    %v2284 = vld [vmem:[%s1477 + $0x10] sm:$0x3]
    %v2285 = vld [vmem:[%s1477 + $0x18] sm:$0x3]
    %v2286 = vld [vmem:[%s1477 + $0x20] sm:$0xfc]
    %v2287 = vld [vmem:[%s1477 + $0x28] sm:$0xfc]
    %v2288 = vld [vmem:[%s1477 + $0x30] sm:$0x3]
    %v2289 = vld [vmem:[%s1477 + $0x38] sm:$0x3]
    %v2290 = vld [vmem:[%s1477 + $0x40] sm:$0xfc]
    %v2291 = vld [vmem:[%s1477 + $0x48] sm:$0xfc]
    %v2292 = vld [vmem:[%s1477 + $0x50] sm:$0x3]
    %v2293 = vld [vmem:[%s1477 + $0x58] sm:$0x3]
    %v2294 = vld [vmem:[%s1477 + $0x60] sm:$0xfc]
    %v2295 = vld [vmem:[%s1477 + $0x68] sm:$0xfc]
    %v2296 = vld [vmem:[%s1477 + $0x70] sm:$0x3]
    %v2297 = vld [vmem:[%s1477 + $0x78] sm:$0x3]
    %v2298 = vld [vmem:[%s1477 + $0x80] sm:$0xfc]
    %v2299 = vld [vmem:[%s1477 + $0x88] sm:$0xfc]
    %v2300 = vld [vmem:[%s1477 + $0x90] sm:$0x3]
    %v2301 = vld [vmem:[%s1477 + $0x98] sm:$0x3]
    %v2302 = vld [vmem:[%s1477 + $0xa0] sm:$0xfc]
    %v2303 = vld [vmem:[%s1477 + $0xa8] sm:$0xfc]
    %v2304 = vld [vmem:[%s1477 + $0xb0] sm:$0x3]
    %v2305 = vld [vmem:[%s1477 + $0xb8] sm:$0x3]
    %v2306 = vld [vmem:[%s1477 + $0xc0] sm:$0xfc]
    %v2307 = vld [vmem:[%s1477 + $0xc8] sm:$0xfc]
    %v2308 = vld [vmem:[%s1477 + $0xd0] sm:$0x3]
    %v2309 = vld [vmem:[%s1477 + $0xd8] sm:$0x3]
    %v2310 = vld [vmem:[%s1477 + $0xe0] sm:$0xfc]
    %v2311 = vld [vmem:[%s1477 + $0xe8] sm:$0xfc]
    %v2312 = vld [vmem:[%s1477 + $0xf0] sm:$0x3]
    %v2313 = vld [vmem:[%s1477 + $0xf8] sm:$0x3]
    %v2314 = vld [vmem:[%s1477 + $0x140] sm:$0xfc]
    %v2315 = vld [vmem:[%s1477 + $0x148] sm:$0xfc]
    %v2316 = vld [vmem:[%s1477 + $0x150] sm:$0x3]
    %v2317 = vld [vmem:[%s1477 + $0x158] sm:$0x3]
    %v2318 = vld [vmem:[%s1477 + $0x160] sm:$0xfc]
    %v2319 = vld [vmem:[%s1477 + $0x168] sm:$0xfc]
    %v2320 = vld [vmem:[%s1477 + $0x170] sm:$0x3]
    %v2321 = vld [vmem:[%s1477 + $0x178] sm:$0x3]
    %v2322 = vld [vmem:[%s1477 + $0x180] sm:$0xfc]
    %v2323 = vld [vmem:[%s1477 + $0x188] sm:$0xfc]
    %v2324 = vld [vmem:[%s1477 + $0x190] sm:$0x3]
    %v2325 = vld [vmem:[%s1477 + $0x198] sm:$0x3]
    %v2326 = vld [vmem:[%s1477 + $0x1a0] sm:$0xfc]
    %v2327 = vld [vmem:[%s1477 + $0x1a8] sm:$0xfc]
    %v2328 = vld [vmem:[%s1477 + $0x1b0] sm:$0x3]
    %v2329 = vld [vmem:[%s1477 + $0x1b8] sm:$0x3]
    %v2330 = vld [vmem:[%s1477 + $0x1c0] sm:$0xfc]
    %v2331 = vld [vmem:[%s1477 + $0x1c8] sm:$0xfc]
    %v2332 = vld [vmem:[%s1477 + $0x1d0] sm:$0x3]
    %v2333 = vld [vmem:[%s1477 + $0x1d8] sm:$0x3]
    %v2334 = vld [vmem:[%s1477 + $0x1e0] sm:$0xfc]
    %v2335 = vld [vmem:[%s1477 + $0x1e8] sm:$0xfc]
    %v2336 = vld [vmem:[%s1477 + $0x1f0] sm:$0x3]
    %v2337 = vld [vmem:[%s1477 + $0x1f8] sm:$0x3]
    %v2338 = vld [vmem:[%s1477 + $0x200] sm:$0xfc]
    %v2339 = vld [vmem:[%s1477 + $0x208] sm:$0xfc]
    %v2340 = vld [vmem:[%s1477 + $0x210] sm:$0x3]
    %v2341 = vld [vmem:[%s1477 + $0x218] sm:$0x3]
    %v2342 = vld [vmem:[%s1477 + $0x220] sm:$0xfc]
    %v2343 = vld [vmem:[%s1477 + $0x228] sm:$0xfc]
    %v2344 = vld [vmem:[%s1477 + $0x230] sm:$0x3]
    %v2345 = vld [vmem:[%s1477 + $0x238] sm:$0x3]
    %v2410 = vrot.slane %v2282, 2
    %v2411 = vrot.slane %v2284, 2
    %v2412 = vsel %vm1090, %v2410, %v2411
    %v2413 = vrot.slane %v2283, 2
    %v2414 = vrot.slane %v2285, 2
    %v2415 = vsel %vm1090, %v2413, %v2414
    %v2416 = vrot.slane %v2286, 2
    %v2417 = vrot.slane %v2288, 2
    %v2418 = vsel %vm1090, %v2416, %v2417
    %v2419 = vrot.slane %v2287, 2
    %v2420 = vrot.slane %v2289, 2
    %v2421 = vsel %vm1090, %v2419, %v2420
    %v2422 = vrot.slane %v2290, 2
    %v2423 = vrot.slane %v2292, 2
    %v2424 = vsel %vm1090, %v2422, %v2423
    %v2425 = vrot.slane %v2291, 2
    %v2426 = vrot.slane %v2293, 2
    %v2427 = vsel %vm1090, %v2425, %v2426
    %v2428 = vrot.slane %v2294, 2
    %v2429 = vrot.slane %v2296, 2
    %v2430 = vsel %vm1090, %v2428, %v2429
    %v2431 = vrot.slane %v2295, 2
    %v2432 = vrot.slane %v2297, 2
    %v2433 = vsel %vm1090, %v2431, %v2432
    %v2434 = vrot.slane %v2298, 2
    %v2435 = vrot.slane %v2300, 2
    %v2436 = vsel %vm1090, %v2434, %v2435
    %v2437 = vrot.slane %v2299, 2
    %v2438 = vrot.slane %v2301, 2
    %v2439 = vsel %vm1090, %v2437, %v2438
    %v2440 = vrot.slane %v2302, 2
    %v2441 = vrot.slane %v2304, 2
    %v2442 = vsel %vm1090, %v2440, %v2441
    %v2443 = vrot.slane %v2303, 2
    %v2444 = vrot.slane %v2305, 2
    %v2445 = vsel %vm1090, %v2443, %v2444
    %v2446 = vrot.slane %v2306, 2
    %v2447 = vrot.slane %v2308, 2
    %v2448 = vsel %vm1090, %v2446, %v2447
    %v2449 = vrot.slane %v2307, 2
    %v2450 = vrot.slane %v2309, 2
    %v2451 = vsel %vm1090, %v2449, %v2450
    %v2452 = vrot.slane %v2310, 2
    %v2453 = vrot.slane %v2312, 2
    %v2454 = vsel %vm1090, %v2452, %v2453
    %v2455 = vrot.slane %v2311, 2
    %v2456 = vrot.slane %v2313, 2
    %v2457 = vsel %vm1090, %v2455, %v2456
    %v2458 = vrot.slane %v2314, 2
    %v2459 = vrot.slane %v2316, 2
    %v2460 = vsel %vm1090, %v2458, %v2459
    %v2461 = vrot.slane %v2315, 2
    %v2462 = vrot.slane %v2317, 2
    %v2463 = vsel %vm1090, %v2461, %v2462
    %v2464 = vrot.slane %v2318, 2
    %v2465 = vrot.slane %v2320, 2
    %v2466 = vsel %vm1090, %v2464, %v2465
    %v2467 = vrot.slane %v2319, 2
    %v2468 = vrot.slane %v2321, 2
    %v2469 = vsel %vm1090, %v2467, %v2468
    %v2470 = vrot.slane %v2322, 2
    %v2471 = vrot.slane %v2324, 2
    %v2472 = vsel %vm1090, %v2470, %v2471
    %v2473 = vrot.slane %v2323, 2
    %v2474 = vrot.slane %v2325, 2
    %v2475 = vsel %vm1090, %v2473, %v2474
    %v2476 = vrot.slane %v2326, 2
    %v2477 = vrot.slane %v2328, 2
    %v2478 = vsel %vm1090, %v2476, %v2477
    %v2479 = vrot.slane %v2327, 2
    %v2480 = vrot.slane %v2329, 2
    %v2481 = vsel %vm1090, %v2479, %v2480
    %v2482 = vrot.slane %v2330, 2
    %v2483 = vrot.slane %v2332, 2
    %v2484 = vsel %vm1090, %v2482, %v2483
    %v2485 = vrot.slane %v2331, 2
    %v2486 = vrot.slane %v2333, 2
    %v2487 = vsel %vm1090, %v2485, %v2486
    %v2488 = vrot.slane %v2334, 2
    %v2489 = vrot.slane %v2336, 2
    %v2490 = vsel %vm1090, %v2488, %v2489
    %v2491 = vrot.slane %v2335, 2
    %v2492 = vrot.slane %v2337, 2
    %v2493 = vsel %vm1090, %v2491, %v2492
    %v2494 = vrot.slane %v2338, 2
    %v2495 = vrot.slane %v2340, 2
    %v2496 = vsel %vm1090, %v2494, %v2495
    %v2497 = vrot.slane %v2339, 2
    %v2498 = vrot.slane %v2341, 2
    %v2499 = vsel %vm1090, %v2497, %v2498
    %v2500 = vrot.slane %v2342, 2
    %v2501 = vrot.slane %v2344, 2
    %v2502 = vsel %vm1090, %v2500, %v2501
    %v2503 = vrot.slane %v2343, 2
    %v2504 = vrot.slane %v2345, 2
    %v2505 = vsel %vm1090, %v2503, %v2504
    %v2538 = vpack.c.bf16 %v2418, %v2412
    %v2539 = vpack.c.bf16 %v2421, %v2415
    %v2540 = vpack.c.bf16 %v2430, %v2424
    %v2541 = vpack.c.bf16 %v2433, %v2427
    %v2542 = vpack.c.bf16 %v2442, %v2436
    %v2543 = vpack.c.bf16 %v2445, %v2439
    %v2544 = vpack.c.bf16 %v2454, %v2448
    %v2545 = vpack.c.bf16 %v2457, %v2451
    %v2546 = vpack.c.bf16 %v2466, %v2460
    %v2547 = vpack.c.bf16 %v2469, %v2463
    %v2548 = vpack.c.bf16 %v2478, %v2472
    %v2549 = vpack.c.bf16 %v2481, %v2475
    %v2550 = vpack.c.bf16 %v2490, %v2484
    %v2551 = vpack.c.bf16 %v2493, %v2487
    %v2552 = vpack.c.bf16 %v2502, %v2496
    %v2553 = vpack.c.bf16 %v2505, %v2499
    %s2554 = scalar_lea.vmem %s2, 640
    %v2555 = vld [vmem:[%s2554] sm:$0xf]
    %v2556 = vld [vmem:[%s2554 + $0x4] sm:$0xf]
    %v2557 = vld [vmem:[%s2554 + $0x8] sm:$0xf]
    %v2558 = vld [vmem:[%s2554 + $0xc] sm:$0xf]
    %v2559 = vld [vmem:[%s2554 + $0x10] sm:$0xf]
    %v2560 = vld [vmem:[%s2554 + $0x14] sm:$0xf]
    %v2561 = vld [vmem:[%s2554 + $0x18] sm:$0xf]
    %v2562 = vld [vmem:[%s2554 + $0x1c] sm:$0xf]
    %v2563 = vld [vmem:[%s2554 + $0x20] sm:$0xf]
    %v2564 = vld [vmem:[%s2554 + $0x24] sm:$0xf]
    %v2565 = vld [vmem:[%s2554 + $0x28] sm:$0xf]
    %v2566 = vld [vmem:[%s2554 + $0x2c] sm:$0xf]
    %v2567 = vld [vmem:[%s2554 + $0x30] sm:$0xf]
    %v2568 = vld [vmem:[%s2554 + $0x34] sm:$0xf]
    %v2569 = vld [vmem:[%s2554 + $0x38] sm:$0xf]
    %v2570 = vld [vmem:[%s2554 + $0x3c] sm:$0xf]
    %v2571 = vld [vmem:[%s2554 + $0x40] sm:$0xf]
    %v2572 = vld [vmem:[%s2554 + $0x44] sm:$0xf]
    %v2573 = vld [vmem:[%s2554 + $0x48] sm:$0xf]
    %v2574 = vld [vmem:[%s2554 + $0x4c] sm:$0xf]
    %v2575 = vld [vmem:[%s2554 + $0x50] sm:$0xf]
    %v2576 = vld [vmem:[%s2554 + $0x54] sm:$0xf]
    %v2577 = vld [vmem:[%s2554 + $0x58] sm:$0xf]
    %v2578 = vld [vmem:[%s2554 + $0x5c] sm:$0xf]
    %v2579 = vld [vmem:[%s2554 + $0x60] sm:$0xf]
    %v2580 = vld [vmem:[%s2554 + $0x64] sm:$0xf]
    %v2581 = vld [vmem:[%s2554 + $0x68] sm:$0xf]
    %v2582 = vld [vmem:[%s2554 + $0x6c] sm:$0xf]
    %v2583 = vld [vmem:[%s2554 + $0x70] sm:$0xf]
    %v2584 = vld [vmem:[%s2554 + $0x74] sm:$0xf]
    %v2585 = vld [vmem:[%s2554 + $0x78] sm:$0xf]
    %v2586 = vld [vmem:[%s2554 + $0x7c] sm:$0xf]
    %v2619 = vunpack.c.l.b16 %v2555
    %v2620 = vunpack.c.l.b16 %v2556
    %v2621 = vunpack.c.l.b16 %v2557
    %v2622 = vunpack.c.l.b16 %v2558
    %v2623 = vunpack.c.l.b16 %v2559
    %v2624 = vunpack.c.l.b16 %v2560
    %v2625 = vunpack.c.l.b16 %v2561
    %v2626 = vunpack.c.l.b16 %v2562
    %v2627 = vunpack.c.l.b16 %v2563
    %v2628 = vunpack.c.l.b16 %v2564
    %v2629 = vunpack.c.l.b16 %v2565
    %v2630 = vunpack.c.l.b16 %v2566
    %v2631 = vunpack.c.l.b16 %v2567
    %v2632 = vunpack.c.l.b16 %v2568
    %v2633 = vunpack.c.l.b16 %v2569
    %v2634 = vunpack.c.l.b16 %v2570
    %v2635 = vunpack.c.l.b16 %v2571
    %v2636 = vunpack.c.l.b16 %v2572
    %v2637 = vunpack.c.l.b16 %v2573
    %v2638 = vunpack.c.l.b16 %v2574
    %v2639 = vunpack.c.l.b16 %v2575
    %v2640 = vunpack.c.l.b16 %v2576
    %v2641 = vunpack.c.l.b16 %v2577
    %v2642 = vunpack.c.l.b16 %v2578
    %v2643 = vunpack.c.l.b16 %v2579
    %v2644 = vunpack.c.l.b16 %v2580
    %v2645 = vunpack.c.l.b16 %v2581
    %v2646 = vunpack.c.l.b16 %v2582
    %v2647 = vunpack.c.l.b16 %v2583
    %v2648 = vunpack.c.l.b16 %v2584
    %v2649 = vunpack.c.l.b16 %v2585
    %v2650 = vunpack.c.l.b16 %v2586
    %v2651 = vpack.c.b16 %v2620, %v2619
    %v2652 = vpack.c.b16 %v2622, %v2621
    %v2653 = vpack.c.b16 %v2624, %v2623
    %v2654 = vpack.c.b16 %v2626, %v2625
    %v2655 = vpack.c.b16 %v2628, %v2627
    %v2656 = vpack.c.b16 %v2630, %v2629
    %v2657 = vpack.c.b16 %v2632, %v2631
    %v2658 = vpack.c.b16 %v2634, %v2633
    %v2659 = vpack.c.b16 %v2636, %v2635
    %v2660 = vpack.c.b16 %v2638, %v2637
    %v2661 = vpack.c.b16 %v2640, %v2639
    %v2662 = vpack.c.b16 %v2642, %v2641
    %v2663 = vpack.c.b16 %v2644, %v2643
    %v2664 = vpack.c.b16 %v2646, %v2645
    %v2665 = vpack.c.b16 %v2648, %v2647
    %v2666 = vpack.c.b16 %v2650, %v2649
    %2683 = vmatprep.subr.bf16.mxu0 0
    %2684 = vmatpush1.bf16.msra.mxu0 %v2651
    %2685 = vmatprep.subr.bf16.mxu0 0
    %2686 = vmatpush1.bf16.msra.mxu0 %v2652
    %2687 = vmatprep.subr.bf16.mxu0 0
    %2688 = vmatpush1.bf16.msra.mxu0 %v2653
    %2689 = vmatprep.subr.bf16.mxu0 0
    %2690 = vmatpush1.bf16.msra.mxu0 %v2654
    %2691 = vmatprep.subr.bf16.mxu0 0
    %2692 = vmatpush1.bf16.msra.mxu0 %v2655
    %2693 = vmatprep.subr.bf16.mxu0 0
    %2694 = vmatpush1.bf16.msra.mxu0 %v2656
    %2695 = vmatprep.subr.bf16.mxu0 0
    %2696 = vmatpush1.bf16.msra.mxu0 %v2657
    %2697 = vmatprep.subr.bf16.mxu0 0
    %2698 = vmatpush1.bf16.msra.mxu0 %v2658
    %2699 = vmatprep.subr.bf16.mxu0 0
    %2700 = vmatpush1.bf16.msra.mxu0 %v2659
    %2701 = vmatprep.subr.bf16.mxu0 0
    %2702 = vmatpush1.bf16.msra.mxu0 %v2660
    %2703 = vmatprep.subr.bf16.mxu0 0
    %2704 = vmatpush1.bf16.msra.mxu0 %v2661
    %2705 = vmatprep.subr.bf16.mxu0 0
    %2706 = vmatpush1.bf16.msra.mxu0 %v2662
    %2707 = vmatprep.subr.bf16.mxu0 0
    %2708 = vmatpush1.bf16.msra.mxu0 %v2663
    %2709 = vmatprep.subr.bf16.mxu0 0
    %2710 = vmatpush1.bf16.msra.mxu0 %v2664
    %2711 = vmatprep.subr.bf16.mxu0 0
    %2712 = vmatpush1.bf16.msra.mxu0 %v2665
    %2713 = vmatprep.subr.bf16.mxu0 0
    %2714 = vmatpush1.bf16.msra.mxu0 %v2666
    %2715 = vmatprep.mubr.bf16.mxu0 %v2539
    %2716 = vmatmul.mubr.bf16.gmra.mrb[0].mxu0 %v2538
    %v2717 = vpop.f32.mrb[0].mxu0
    %v2718 = vadd.f32 0.0, %v2717
    %v2719 = vpop.f32.mrb[0].mxu0
    %v2720 = vpop.f32.mrb[0].mxu0
    %v2721 = vadd.f32 0.0, %v2720
    %v2722 = vpop.f32.mrb[0].mxu0
    %2723 = vmatprep.mubr.bf16.mxu0 %v2541
    %2724 = vmatmul.mubr.bf16.gmra.mrb[0].mxu0 %v2540
    %v2725 = vpop.f32.mrb[0].mxu0
    %v2726 = vadd.f32 0.0, %v2725
    %v2727 = vpop.f32.mrb[0].mxu0
    %v2728 = vpop.f32.mrb[0].mxu0
    %v2729 = vadd.f32 0.0, %v2728
    %v2730 = vpop.f32.mrb[0].mxu0
    %2731 = vmatprep.mubr.bf16.mxu0 %v2543
    %2732 = vmatmul.mubr.bf16.gmra.mrb[0].mxu0 %v2542
    %v2733 = vpop.f32.mrb[0].mxu0
    %v2734 = vadd.f32 0.0, %v2733
    %v2735 = vpop.f32.mrb[0].mxu0
    %v2736 = vpop.f32.mrb[0].mxu0
    %v2737 = vadd.f32 0.0, %v2736
    %v2738 = vpop.f32.mrb[0].mxu0
    %2739 = vmatprep.mubr.bf16.mxu0 %v2545
    %2740 = vmatmul.mubr.bf16.gmra.mrb[0].mxu0 %v2544
    %v2741 = vpop.f32.mrb[0].mxu0
    %v2742 = vadd.f32 0.0, %v2741
    %v2743 = vpop.f32.mrb[0].mxu0
    %v2744 = vpop.f32.mrb[0].mxu0
    %v2745 = vadd.f32 0.0, %v2744
    %v2746 = vpop.f32.mrb[0].mxu0
    %2747 = vmatprep.mubr.bf16.mxu0 %v2547
    %2748 = vmatmul.mubr.bf16.gmra.mrb[0].mxu0 %v2546
    %v2749 = vpop.f32.mrb[0].mxu0
    %v2750 = vadd.f32 0.0, %v2749
    %v2751 = vpop.f32.mrb[0].mxu0
    %v2752 = vpop.f32.mrb[0].mxu0
    %v2753 = vadd.f32 0.0, %v2752
    %v2754 = vpop.f32.mrb[0].mxu0
    %2755 = vmatprep.mubr.bf16.mxu0 %v2549
    %2756 = vmatmul.mubr.bf16.gmra.mrb[0].mxu0 %v2548
    %v2757 = vpop.f32.mrb[0].mxu0
    %v2758 = vadd.f32 0.0, %v2757
    %v2759 = vpop.f32.mrb[0].mxu0
    %v2760 = vpop.f32.mrb[0].mxu0
    %v2761 = vadd.f32 0.0, %v2760
    %v2762 = vpop.f32.mrb[0].mxu0
    %2763 = vmatprep.mubr.bf16.mxu0 %v2551
    %2764 = vmatmul.mubr.bf16.gmra.mrb[0].mxu0 %v2550
    %v2765 = vpop.f32.mrb[0].mxu0
    %v2766 = vadd.f32 0.0, %v2765
    %v2767 = vpop.f32.mrb[0].mxu0
    %v2768 = vpop.f32.mrb[0].mxu0
    %v2769 = vadd.f32 0.0, %v2768
    %v2770 = vpop.f32.mrb[0].mxu0
    %2771 = vmatprep.mubr.bf16.mxu0 %v2553
    %2772 = vmatmul.mubr.bf16.gmra.mrb[0].mxu0 %v2552
    %v2773 = vpop.f32.mrb[0].mxu0
    %v2774 = vadd.f32 0.0, %v2773
    %v2775 = vpop.f32.mrb[0].mxu0
    %v2776 = vpop.f32.mrb[0].mxu0
    %v2777 = vadd.f32 0.0, %v2776
    %v2778 = vpop.f32.mrb[0].mxu0
    %2779 = vdwg.mxu0
    %v2780 = vadd.f32 %v2266, %v2718
    %v2781 = vadd.f32 %v2267, %v2721
    %v2782 = vadd.f32 %v2268, %v2726
    %v2783 = vadd.f32 %v2269, %v2729
    %v2784 = vadd.f32 %v2270, %v2734
    %v2785 = vadd.f32 %v2271, %v2737
    %v2786 = vadd.f32 %v2272, %v2742
    %v2787 = vadd.f32 %v2273, %v2745
    %v2788 = vadd.f32 %v2274, %v2750
    %v2789 = vadd.f32 %v2275, %v2753
    %v2790 = vadd.f32 %v2276, %v2758
    %v2791 = vadd.f32 %v2277, %v2761
    %v2792 = vadd.f32 %v2278, %v2766
    %v2793 = vadd.f32 %v2279, %v2769
    %v2794 = vadd.f32 %v2280, %v2774
    %v2795 = vadd.f32 %v2281, %v2777
    %s2796 = scalar_lea.vmem %s1, 64
    %v2797 = vld [vmem:[%s2796] sm:$0xff]
    %v2798 = vld [vmem:[%s2796 + $0x8] sm:$0xff]
    %v2799 = vld [vmem:[%s2796 + $0x20] sm:$0xff]
    %v2800 = vld [vmem:[%s2796 + $0x28] sm:$0xff]
    %v2801 = vld [vmem:[%s2796 + $0x40] sm:$0xff]
    %v2802 = vld [vmem:[%s2796 + $0x48] sm:$0xff]
    %v2803 = vld [vmem:[%s2796 + $0x60] sm:$0xff]
    %v2804 = vld [vmem:[%s2796 + $0x68] sm:$0xff]
    %v2805 = vld [vmem:[%s2796 + $0x80] sm:$0xff]
    %v2806 = vld [vmem:[%s2796 + $0x88] sm:$0xff]
    %v2807 = vld [vmem:[%s2796 + $0xa0] sm:$0xff]
    %v2808 = vld [vmem:[%s2796 + $0xa8] sm:$0xff]
    %v2809 = vld [vmem:[%s2796 + $0xc0] sm:$0xff]
    %v2810 = vld [vmem:[%s2796 + $0xc8] sm:$0xff]
    %v2811 = vld [vmem:[%s2796 + $0xe0] sm:$0xff]
    %v2812 = vld [vmem:[%s2796 + $0xe8] sm:$0xff]
    %v2813 = vld [vmem:[%s2796 + $0x140] sm:$0xff]
    %v2814 = vld [vmem:[%s2796 + $0x148] sm:$0xff]
    %v2815 = vld [vmem:[%s2796 + $0x160] sm:$0xff]
    %v2816 = vld [vmem:[%s2796 + $0x168] sm:$0xff]
    %v2817 = vld [vmem:[%s2796 + $0x180] sm:$0xff]
    %v2818 = vld [vmem:[%s2796 + $0x188] sm:$0xff]
    %v2819 = vld [vmem:[%s2796 + $0x1a0] sm:$0xff]
    %v2820 = vld [vmem:[%s2796 + $0x1a8] sm:$0xff]
    %v2821 = vld [vmem:[%s2796 + $0x1c0] sm:$0xff]
    %v2822 = vld [vmem:[%s2796 + $0x1c8] sm:$0xff]
    %v2823 = vld [vmem:[%s2796 + $0x1e0] sm:$0xff]
    %v2824 = vld [vmem:[%s2796 + $0x1e8] sm:$0xff]
    %v2825 = vld [vmem:[%s2796 + $0x200] sm:$0xff]
    %v2826 = vld [vmem:[%s2796 + $0x208] sm:$0xff]
    %v2827 = vld [vmem:[%s2796 + $0x220] sm:$0xff]
    %v2828 = vld [vmem:[%s2796 + $0x228] sm:$0xff]
    %v2829 = vpack.c.bf16 %v2799, %v2797
    %v2830 = vpack.c.bf16 %v2800, %v2798
    %v2831 = vpack.c.bf16 %v2803, %v2801
    %v2832 = vpack.c.bf16 %v2804, %v2802
    %v2833 = vpack.c.bf16 %v2807, %v2805
    %v2834 = vpack.c.bf16 %v2808, %v2806
    %v2835 = vpack.c.bf16 %v2811, %v2809
    %v2836 = vpack.c.bf16 %v2812, %v2810
    %v2837 = vpack.c.bf16 %v2815, %v2813
    %v2838 = vpack.c.bf16 %v2816, %v2814
    %v2839 = vpack.c.bf16 %v2819, %v2817
    %v2840 = vpack.c.bf16 %v2820, %v2818
    %v2841 = vpack.c.bf16 %v2823, %v2821
    %v2842 = vpack.c.bf16 %v2824, %v2822
    %v2843 = vpack.c.bf16 %v2827, %v2825
    %v2844 = vpack.c.bf16 %v2828, %v2826
    %s2845 = scalar_lea.vmem %s2, 768
    %v2846 = vld [vmem:[%s2845] sm:$0xf]
    %v2847 = vld [vmem:[%s2845 + $0x4] sm:$0xf]
    %v2848 = vld [vmem:[%s2845 + $0x8] sm:$0xf]
    %v2849 = vld [vmem:[%s2845 + $0xc] sm:$0xf]
    %v2850 = vld [vmem:[%s2845 + $0x10] sm:$0xf]
    %v2851 = vld [vmem:[%s2845 + $0x14] sm:$0xf]
    %v2852 = vld [vmem:[%s2845 + $0x18] sm:$0xf]
    %v2853 = vld [vmem:[%s2845 + $0x1c] sm:$0xf]
    %v2854 = vld [vmem:[%s2845 + $0x20] sm:$0xf]
    %v2855 = vld [vmem:[%s2845 + $0x24] sm:$0xf]
    %v2856 = vld [vmem:[%s2845 + $0x28] sm:$0xf]
    %v2857 = vld [vmem:[%s2845 + $0x2c] sm:$0xf]
    %v2858 = vld [vmem:[%s2845 + $0x30] sm:$0xf]
    %v2859 = vld [vmem:[%s2845 + $0x34] sm:$0xf]
    %v2860 = vld [vmem:[%s2845 + $0x38] sm:$0xf]
    %v2861 = vld [vmem:[%s2845 + $0x3c] sm:$0xf]
    %v2862 = vld [vmem:[%s2845 + $0x40] sm:$0xf]
    %v2863 = vld [vmem:[%s2845 + $0x44] sm:$0xf]
    %v2864 = vld [vmem:[%s2845 + $0x48] sm:$0xf]
    %v2865 = vld [vmem:[%s2845 + $0x4c] sm:$0xf]
    %v2866 = vld [vmem:[%s2845 + $0x50] sm:$0xf]
    %v2867 = vld [vmem:[%s2845 + $0x54] sm:$0xf]
    %v2868 = vld [vmem:[%s2845 + $0x58] sm:$0xf]
    %v2869 = vld [vmem:[%s2845 + $0x5c] sm:$0xf]
    %v2870 = vld [vmem:[%s2845 + $0x60] sm:$0xf]
    %v2871 = vld [vmem:[%s2845 + $0x64] sm:$0xf]
    %v2872 = vld [vmem:[%s2845 + $0x68] sm:$0xf]
    %v2873 = vld [vmem:[%s2845 + $0x6c] sm:$0xf]
    %v2874 = vld [vmem:[%s2845 + $0x70] sm:$0xf]
    %v2875 = vld [vmem:[%s2845 + $0x74] sm:$0xf]
    %v2876 = vld [vmem:[%s2845 + $0x78] sm:$0xf]
    %v2877 = vld [vmem:[%s2845 + $0x7c] sm:$0xf]
    %v2910 = vunpack.c.l.b16 %v2846
    %v2911 = vunpack.c.l.b16 %v2847
    %v2912 = vunpack.c.l.b16 %v2848
    %v2913 = vunpack.c.l.b16 %v2849
    %v2914 = vunpack.c.l.b16 %v2850
    %v2915 = vunpack.c.l.b16 %v2851
    %v2916 = vunpack.c.l.b16 %v2852
    %v2917 = vunpack.c.l.b16 %v2853
    %v2918 = vunpack.c.l.b16 %v2854
    %v2919 = vunpack.c.l.b16 %v2855
    %v2920 = vunpack.c.l.b16 %v2856
    %v2921 = vunpack.c.l.b16 %v2857
    %v2922 = vunpack.c.l.b16 %v2858
    %v2923 = vunpack.c.l.b16 %v2859
    %v2924 = vunpack.c.l.b16 %v2860
    %v2925 = vunpack.c.l.b16 %v2861
    %v2926 = vunpack.c.l.b16 %v2862
    %v2927 = vunpack.c.l.b16 %v2863
    %v2928 = vunpack.c.l.b16 %v2864
    %v2929 = vunpack.c.l.b16 %v2865
    %v2930 = vunpack.c.l.b16 %v2866
    %v2931 = vunpack.c.l.b16 %v2867
    %v2932 = vunpack.c.l.b16 %v2868
    %v2933 = vunpack.c.l.b16 %v2869
    %v2934 = vunpack.c.l.b16 %v2870
    %v2935 = vunpack.c.l.b16 %v2871
    %v2936 = vunpack.c.l.b16 %v2872
    %v2937 = vunpack.c.l.b16 %v2873
    %v2938 = vunpack.c.l.b16 %v2874
    %v2939 = vunpack.c.l.b16 %v2875
    %v2940 = vunpack.c.l.b16 %v2876
    %v2941 = vunpack.c.l.b16 %v2877
    %v2942 = vpack.c.b16 %v2911, %v2910
    %v2943 = vpack.c.b16 %v2913, %v2912
    %v2944 = vpack.c.b16 %v2915, %v2914
    %v2945 = vpack.c.b16 %v2917, %v2916
    %v2946 = vpack.c.b16 %v2919, %v2918
    %v2947 = vpack.c.b16 %v2921, %v2920
    %v2948 = vpack.c.b16 %v2923, %v2922
    %v2949 = vpack.c.b16 %v2925, %v2924
    %v2950 = vpack.c.b16 %v2927, %v2926
    %v2951 = vpack.c.b16 %v2929, %v2928
    %v2952 = vpack.c.b16 %v2931, %v2930
    %v2953 = vpack.c.b16 %v2933, %v2932
    %v2954 = vpack.c.b16 %v2935, %v2934
    %v2955 = vpack.c.b16 %v2937, %v2936
    %v2956 = vpack.c.b16 %v2939, %v2938
    %v2957 = vpack.c.b16 %v2941, %v2940
    %2974 = vmatprep.subr.bf16.mxu0 0
    %2975 = vmatpush1.bf16.msra.mxu0 %v2942
    %2976 = vmatprep.subr.bf16.mxu0 0
    %2977 = vmatpush1.bf16.msra.mxu0 %v2943
    %2978 = vmatprep.subr.bf16.mxu0 0
    %2979 = vmatpush1.bf16.msra.mxu0 %v2944
    %2980 = vmatprep.subr.bf16.mxu0 0
    %2981 = vmatpush1.bf16.msra.mxu0 %v2945
    %2982 = vmatprep.subr.bf16.mxu0 0
    %2983 = vmatpush1.bf16.msra.mxu0 %v2946
    %2984 = vmatprep.subr.bf16.mxu0 0
    %2985 = vmatpush1.bf16.msra.mxu0 %v2947
    %2986 = vmatprep.subr.bf16.mxu0 0
    %2987 = vmatpush1.bf16.msra.mxu0 %v2948
    %2988 = vmatprep.subr.bf16.mxu0 0
    %2989 = vmatpush1.bf16.msra.mxu0 %v2949
    %2990 = vmatprep.subr.bf16.mxu0 0
    %2991 = vmatpush1.bf16.msra.mxu0 %v2950
    %2992 = vmatprep.subr.bf16.mxu0 0
    %2993 = vmatpush1.bf16.msra.mxu0 %v2951
    %2994 = vmatprep.subr.bf16.mxu0 0
    %2995 = vmatpush1.bf16.msra.mxu0 %v2952
    %2996 = vmatprep.subr.bf16.mxu0 0
    %2997 = vmatpush1.bf16.msra.mxu0 %v2953
    %2998 = vmatprep.subr.bf16.mxu0 0
    %2999 = vmatpush1.bf16.msra.mxu0 %v2954
    %3000 = vmatprep.subr.bf16.mxu0 0
    %3001 = vmatpush1.bf16.msra.mxu0 %v2955
    %3002 = vmatprep.subr.bf16.mxu0 0
    %3003 = vmatpush1.bf16.msra.mxu0 %v2956
    %3004 = vmatprep.subr.bf16.mxu0 0
    %3005 = vmatpush1.bf16.msra.mxu0 %v2957
    %3006 = vmatprep.mubr.bf16.mxu0 %v2830
    %3007 = vmatmul.mubr.bf16.gmra.mrb[0].mxu0 %v2829
    %v3008 = vpop.f32.mrb[0].mxu0
    %v3009 = vadd.f32 0.0, %v3008
    %v3010 = vpop.f32.mrb[0].mxu0
    %v3011 = vpop.f32.mrb[0].mxu0
    %v3012 = vadd.f32 0.0, %v3011
    %v3013 = vpop.f32.mrb[0].mxu0
    %3014 = vmatprep.mubr.bf16.mxu0 %v2832
    %3015 = vmatmul.mubr.bf16.gmra.mrb[0].mxu0 %v2831
    %v3016 = vpop.f32.mrb[0].mxu0
    %v3017 = vadd.f32 0.0, %v3016
    %v3018 = vpop.f32.mrb[0].mxu0
    %v3019 = vpop.f32.mrb[0].mxu0
    %v3020 = vadd.f32 0.0, %v3019
    %v3021 = vpop.f32.mrb[0].mxu0
    %3022 = vmatprep.mubr.bf16.mxu0 %v2834
    %3023 = vmatmul.mubr.bf16.gmra.mrb[0].mxu0 %v2833
    %v3024 = vpop.f32.mrb[0].mxu0
    %v3025 = vadd.f32 0.0, %v3024
    %v3026 = vpop.f32.mrb[0].mxu0
    %v3027 = vpop.f32.mrb[0].mxu0
    %v3028 = vadd.f32 0.0, %v3027
    %v3029 = vpop.f32.mrb[0].mxu0
    %3030 = vmatprep.mubr.bf16.mxu0 %v2836
    %3031 = vmatmul.mubr.bf16.gmra.mrb[0].mxu0 %v2835
    %v3032 = vpop.f32.mrb[0].mxu0
    %v3033 = vadd.f32 0.0, %v3032
    %v3034 = vpop.f32.mrb[0].mxu0
    %v3035 = vpop.f32.mrb[0].mxu0
    %v3036 = vadd.f32 0.0, %v3035
    %v3037 = vpop.f32.mrb[0].mxu0
    %3038 = vmatprep.mubr.bf16.mxu0 %v2838
    %3039 = vmatmul.mubr.bf16.gmra.mrb[0].mxu0 %v2837
    %v3040 = vpop.f32.mrb[0].mxu0
    %v3041 = vadd.f32 0.0, %v3040
    %v3042 = vpop.f32.mrb[0].mxu0
    %v3043 = vpop.f32.mrb[0].mxu0
    %v3044 = vadd.f32 0.0, %v3043
    %v3045 = vpop.f32.mrb[0].mxu0
    %3046 = vmatprep.mubr.bf16.mxu0 %v2840
    %3047 = vmatmul.mubr.bf16.gmra.mrb[0].mxu0 %v2839
    %v3048 = vpop.f32.mrb[0].mxu0
    %v3049 = vadd.f32 0.0, %v3048
    %v3050 = vpop.f32.mrb[0].mxu0
    %v3051 = vpop.f32.mrb[0].mxu0
    %v3052 = vadd.f32 0.0, %v3051
    %v3053 = vpop.f32.mrb[0].mxu0
    %3054 = vmatprep.mubr.bf16.mxu0 %v2842
    %3055 = vmatmul.mubr.bf16.gmra.mrb[0].mxu0 %v2841
    %v3056 = vpop.f32.mrb[0].mxu0
    %v3057 = vadd.f32 0.0, %v3056
    %v3058 = vpop.f32.mrb[0].mxu0
    %v3059 = vpop.f32.mrb[0].mxu0
    %v3060 = vadd.f32 0.0, %v3059
    %v3061 = vpop.f32.mrb[0].mxu0
    %3062 = vmatprep.mubr.bf16.mxu0 %v2844
    %3063 = vmatmul.mubr.bf16.gmra.mrb[0].mxu0 %v2843
    %v3064 = vpop.f32.mrb[0].mxu0
    %v3065 = vadd.f32 0.0, %v3064
    %v3066 = vpop.f32.mrb[0].mxu0
    %v3067 = vpop.f32.mrb[0].mxu0
    %v3068 = vadd.f32 0.0, %v3067
    %v3069 = vpop.f32.mrb[0].mxu0
    %3070 = vdwg.mxu0
    %v3071 = vadd.f32 %v2780, %v3009
    %v3072 = vadd.f32 %v2781, %v3012
    %v3073 = vadd.f32 %v2782, %v3017
    %v3074 = vadd.f32 %v2783, %v3020
    %v3075 = vadd.f32 %v2784, %v3025
    %v3076 = vadd.f32 %v2785, %v3028
    %v3077 = vadd.f32 %v2786, %v3033
    %v3078 = vadd.f32 %v2787, %v3036
    %v3079 = vadd.f32 %v2788, %v3041
    %v3080 = vadd.f32 %v2789, %v3044
    %v3081 = vadd.f32 %v2790, %v3049
    %v3082 = vadd.f32 %v2791, %v3052
    %v3083 = vadd.f32 %v2792, %v3057
    %v3084 = vadd.f32 %v2793, %v3060
    %v3085 = vadd.f32 %v2794, %v3065
    %v3086 = vadd.f32 %v2795, %v3068
    %v3087 = vld [vmem:[%s2796] sm:$0xfe]
    %v3088 = vld [vmem:[%s2796 + $0x8] sm:$0xfe]
    %v3089 = vld [vmem:[%s2796 + $0x10] sm:$0x1]
    %v3090 = vld [vmem:[%s2796 + $0x18] sm:$0x1]
    %v3091 = vld [vmem:[%s2796 + $0x20] sm:$0xfe]
    %v3092 = vld [vmem:[%s2796 + $0x28] sm:$0xfe]
    %v3093 = vld [vmem:[%s2796 + $0x30] sm:$0x1]
    %v3094 = vld [vmem:[%s2796 + $0x38] sm:$0x1]
    %v3095 = vld [vmem:[%s2796 + $0x40] sm:$0xfe]
    %v3096 = vld [vmem:[%s2796 + $0x48] sm:$0xfe]
    %v3097 = vld [vmem:[%s2796 + $0x50] sm:$0x1]
    %v3098 = vld [vmem:[%s2796 + $0x58] sm:$0x1]
    %v3099 = vld [vmem:[%s2796 + $0x60] sm:$0xfe]
    %v3100 = vld [vmem:[%s2796 + $0x68] sm:$0xfe]
    %v3101 = vld [vmem:[%s2796 + $0x70] sm:$0x1]
    %v3102 = vld [vmem:[%s2796 + $0x78] sm:$0x1]
    %v3103 = vld [vmem:[%s2796 + $0x80] sm:$0xfe]
    %v3104 = vld [vmem:[%s2796 + $0x88] sm:$0xfe]
    %v3105 = vld [vmem:[%s2796 + $0x90] sm:$0x1]
    %v3106 = vld [vmem:[%s2796 + $0x98] sm:$0x1]
    %v3107 = vld [vmem:[%s2796 + $0xa0] sm:$0xfe]
    %v3108 = vld [vmem:[%s2796 + $0xa8] sm:$0xfe]
    %v3109 = vld [vmem:[%s2796 + $0xb0] sm:$0x1]
    %v3110 = vld [vmem:[%s2796 + $0xb8] sm:$0x1]
    %v3111 = vld [vmem:[%s2796 + $0xc0] sm:$0xfe]
    %v3112 = vld [vmem:[%s2796 + $0xc8] sm:$0xfe]
    %v3113 = vld [vmem:[%s2796 + $0xd0] sm:$0x1]
    %v3114 = vld [vmem:[%s2796 + $0xd8] sm:$0x1]
    %v3115 = vld [vmem:[%s2796 + $0xe0] sm:$0xfe]
    %v3116 = vld [vmem:[%s2796 + $0xe8] sm:$0xfe]
    %v3117 = vld [vmem:[%s2796 + $0xf0] sm:$0x1]
    %v3118 = vld [vmem:[%s2796 + $0xf8] sm:$0x1]
    %v3119 = vld [vmem:[%s2796 + $0x140] sm:$0xfe]
    %v3120 = vld [vmem:[%s2796 + $0x148] sm:$0xfe]
    %v3121 = vld [vmem:[%s2796 + $0x150] sm:$0x1]
    %v3122 = vld [vmem:[%s2796 + $0x158] sm:$0x1]
    %v3123 = vld [vmem:[%s2796 + $0x160] sm:$0xfe]
    %v3124 = vld [vmem:[%s2796 + $0x168] sm:$0xfe]
    %v3125 = vld [vmem:[%s2796 + $0x170] sm:$0x1]
    %v3126 = vld [vmem:[%s2796 + $0x178] sm:$0x1]
    %v3127 = vld [vmem:[%s2796 + $0x180] sm:$0xfe]
    %v3128 = vld [vmem:[%s2796 + $0x188] sm:$0xfe]
    %v3129 = vld [vmem:[%s2796 + $0x190] sm:$0x1]
    %v3130 = vld [vmem:[%s2796 + $0x198] sm:$0x1]
    %v3131 = vld [vmem:[%s2796 + $0x1a0] sm:$0xfe]
    %v3132 = vld [vmem:[%s2796 + $0x1a8] sm:$0xfe]
    %v3133 = vld [vmem:[%s2796 + $0x1b0] sm:$0x1]
    %v3134 = vld [vmem:[%s2796 + $0x1b8] sm:$0x1]
    %v3135 = vld [vmem:[%s2796 + $0x1c0] sm:$0xfe]
    %v3136 = vld [vmem:[%s2796 + $0x1c8] sm:$0xfe]
    %v3137 = vld [vmem:[%s2796 + $0x1d0] sm:$0x1]
    %v3138 = vld [vmem:[%s2796 + $0x1d8] sm:$0x1]
    %v3139 = vld [vmem:[%s2796 + $0x1e0] sm:$0xfe]
    %v3140 = vld [vmem:[%s2796 + $0x1e8] sm:$0xfe]
    %v3141 = vld [vmem:[%s2796 + $0x1f0] sm:$0x1]
    %v3142 = vld [vmem:[%s2796 + $0x1f8] sm:$0x1]
    %v3143 = vld [vmem:[%s2796 + $0x200] sm:$0xfe]
    %v3144 = vld [vmem:[%s2796 + $0x208] sm:$0xfe]
    %v3145 = vld [vmem:[%s2796 + $0x210] sm:$0x1]
    %v3146 = vld [vmem:[%s2796 + $0x218] sm:$0x1]
    %v3147 = vld [vmem:[%s2796 + $0x220] sm:$0xfe]
    %v3148 = vld [vmem:[%s2796 + $0x228] sm:$0xfe]
    %v3149 = vld [vmem:[%s2796 + $0x230] sm:$0x1]
    %v3150 = vld [vmem:[%s2796 + $0x238] sm:$0x1]
    %v3215 = vrot.slane %v3087, 1
    %v3216 = vrot.slane %v3089, 1
    %v3217 = vsel %vm398, %v3215, %v3216
    %v3218 = vrot.slane %v3088, 1
    %v3219 = vrot.slane %v3090, 1
    %v3220 = vsel %vm398, %v3218, %v3219
    %v3221 = vrot.slane %v3091, 1
    %v3222 = vrot.slane %v3093, 1
    %v3223 = vsel %vm398, %v3221, %v3222
    %v3224 = vrot.slane %v3092, 1
    %v3225 = vrot.slane %v3094, 1
    %v3226 = vsel %vm398, %v3224, %v3225
    %v3227 = vrot.slane %v3095, 1
    %v3228 = vrot.slane %v3097, 1
    %v3229 = vsel %vm398, %v3227, %v3228
    %v3230 = vrot.slane %v3096, 1
    %v3231 = vrot.slane %v3098, 1
    %v3232 = vsel %vm398, %v3230, %v3231
    %v3233 = vrot.slane %v3099, 1
    %v3234 = vrot.slane %v3101, 1
    %v3235 = vsel %vm398, %v3233, %v3234
    %v3236 = vrot.slane %v3100, 1
    %v3237 = vrot.slane %v3102, 1
    %v3238 = vsel %vm398, %v3236, %v3237
    %v3239 = vrot.slane %v3103, 1
    %v3240 = vrot.slane %v3105, 1
    %v3241 = vsel %vm398, %v3239, %v3240
    %v3242 = vrot.slane %v3104, 1
    %v3243 = vrot.slane %v3106, 1
    %v3244 = vsel %vm398, %v3242, %v3243
    %v3245 = vrot.slane %v3107, 1
    %v3246 = vrot.slane %v3109, 1
    %v3247 = vsel %vm398, %v3245, %v3246
    %v3248 = vrot.slane %v3108, 1
    %v3249 = vrot.slane %v3110, 1
    %v3250 = vsel %vm398, %v3248, %v3249
    %v3251 = vrot.slane %v3111, 1
    %v3252 = vrot.slane %v3113, 1
    %v3253 = vsel %vm398, %v3251, %v3252
    %v3254 = vrot.slane %v3112, 1
    %v3255 = vrot.slane %v3114, 1
    %v3256 = vsel %vm398, %v3254, %v3255
    %v3257 = vrot.slane %v3115, 1
    %v3258 = vrot.slane %v3117, 1
    %v3259 = vsel %vm398, %v3257, %v3258
    %v3260 = vrot.slane %v3116, 1
    %v3261 = vrot.slane %v3118, 1
    %v3262 = vsel %vm398, %v3260, %v3261
    %v3263 = vrot.slane %v3119, 1
    %v3264 = vrot.slane %v3121, 1
    %v3265 = vsel %vm398, %v3263, %v3264
    %v3266 = vrot.slane %v3120, 1
    %v3267 = vrot.slane %v3122, 1
    %v3268 = vsel %vm398, %v3266, %v3267
    %v3269 = vrot.slane %v3123, 1
    %v3270 = vrot.slane %v3125, 1
    %v3271 = vsel %vm398, %v3269, %v3270
    %v3272 = vrot.slane %v3124, 1
    %v3273 = vrot.slane %v3126, 1
    %v3274 = vsel %vm398, %v3272, %v3273
    %v3275 = vrot.slane %v3127, 1
    %v3276 = vrot.slane %v3129, 1
    %v3277 = vsel %vm398, %v3275, %v3276
    %v3278 = vrot.slane %v3128, 1
    %v3279 = vrot.slane %v3130, 1
    %v3280 = vsel %vm398, %v3278, %v3279
    %v3281 = vrot.slane %v3131, 1
    %v3282 = vrot.slane %v3133, 1
    %v3283 = vsel %vm398, %v3281, %v3282
    %v3284 = vrot.slane %v3132, 1
    %v3285 = vrot.slane %v3134, 1
    %v3286 = vsel %vm398, %v3284, %v3285
    %v3287 = vrot.slane %v3135, 1
    %v3288 = vrot.slane %v3137, 1
    %v3289 = vsel %vm398, %v3287, %v3288
    %v3290 = vrot.slane %v3136, 1
    %v3291 = vrot.slane %v3138, 1
    %v3292 = vsel %vm398, %v3290, %v3291
    %v3293 = vrot.slane %v3139, 1
    %v3294 = vrot.slane %v3141, 1
    %v3295 = vsel %vm398, %v3293, %v3294
    %v3296 = vrot.slane %v3140, 1
    %v3297 = vrot.slane %v3142, 1
    %v3298 = vsel %vm398, %v3296, %v3297
    %v3299 = vrot.slane %v3143, 1
    %v3300 = vrot.slane %v3145, 1
    %v3301 = vsel %vm398, %v3299, %v3300
    %v3302 = vrot.slane %v3144, 1
    %v3303 = vrot.slane %v3146, 1
    %v3304 = vsel %vm398, %v3302, %v3303
    %v3305 = vrot.slane %v3147, 1
    %v3306 = vrot.slane %v3149, 1
    %v3307 = vsel %vm398, %v3305, %v3306
    %v3308 = vrot.slane %v3148, 1
    %v3309 = vrot.slane %v3150, 1
    %v3310 = vsel %vm398, %v3308, %v3309
    %v3343 = vpack.c.bf16 %v3223, %v3217
    %v3344 = vpack.c.bf16 %v3226, %v3220
    %v3345 = vpack.c.bf16 %v3235, %v3229
    %v3346 = vpack.c.bf16 %v3238, %v3232
    %v3347 = vpack.c.bf16 %v3247, %v3241
    %v3348 = vpack.c.bf16 %v3250, %v3244
    %v3349 = vpack.c.bf16 %v3259, %v3253
    %v3350 = vpack.c.bf16 %v3262, %v3256
    %v3351 = vpack.c.bf16 %v3271, %v3265
    %v3352 = vpack.c.bf16 %v3274, %v3268
    %v3353 = vpack.c.bf16 %v3283, %v3277
    %v3354 = vpack.c.bf16 %v3286, %v3280
    %v3355 = vpack.c.bf16 %v3295, %v3289
    %v3356 = vpack.c.bf16 %v3298, %v3292
    %v3357 = vpack.c.bf16 %v3307, %v3301
    %v3358 = vpack.c.bf16 %v3310, %v3304
    %s3359 = scalar_lea.vmem %s2, 896
    %v3360 = vld [vmem:[%s3359] sm:$0xf]
    %v3361 = vld [vmem:[%s3359 + $0x4] sm:$0xf]
    %v3362 = vld [vmem:[%s3359 + $0x8] sm:$0xf]
    %v3363 = vld [vmem:[%s3359 + $0xc] sm:$0xf]
    %v3364 = vld [vmem:[%s3359 + $0x10] sm:$0xf]
    %v3365 = vld [vmem:[%s3359 + $0x14] sm:$0xf]
    %v3366 = vld [vmem:[%s3359 + $0x18] sm:$0xf]
    %v3367 = vld [vmem:[%s3359 + $0x1c] sm:$0xf]
    %v3368 = vld [vmem:[%s3359 + $0x20] sm:$0xf]
    %v3369 = vld [vmem:[%s3359 + $0x24] sm:$0xf]
    %v3370 = vld [vmem:[%s3359 + $0x28] sm:$0xf]
    %v3371 = vld [vmem:[%s3359 + $0x2c] sm:$0xf]
    %v3372 = vld [vmem:[%s3359 + $0x30] sm:$0xf]
    %v3373 = vld [vmem:[%s3359 + $0x34] sm:$0xf]
    %v3374 = vld [vmem:[%s3359 + $0x38] sm:$0xf]
    %v3375 = vld [vmem:[%s3359 + $0x3c] sm:$0xf]
    %v3376 = vld [vmem:[%s3359 + $0x40] sm:$0xf]
    %v3377 = vld [vmem:[%s3359 + $0x44] sm:$0xf]
    %v3378 = vld [vmem:[%s3359 + $0x48] sm:$0xf]
    %v3379 = vld [vmem:[%s3359 + $0x4c] sm:$0xf]
    %v3380 = vld [vmem:[%s3359 + $0x50] sm:$0xf]
    %v3381 = vld [vmem:[%s3359 + $0x54] sm:$0xf]
    %v3382 = vld [vmem:[%s3359 + $0x58] sm:$0xf]
    %v3383 = vld [vmem:[%s3359 + $0x5c] sm:$0xf]
    %v3384 = vld [vmem:[%s3359 + $0x60] sm:$0xf]
    %v3385 = vld [vmem:[%s3359 + $0x64] sm:$0xf]
    %v3386 = vld [vmem:[%s3359 + $0x68] sm:$0xf]
    %v3387 = vld [vmem:[%s3359 + $0x6c] sm:$0xf]
    %v3388 = vld [vmem:[%s3359 + $0x70] sm:$0xf]
    %v3389 = vld [vmem:[%s3359 + $0x74] sm:$0xf]
    %v3390 = vld [vmem:[%s3359 + $0x78] sm:$0xf]
    %v3391 = vld [vmem:[%s3359 + $0x7c] sm:$0xf]
    %v3424 = vunpack.c.l.b16 %v3360
    %v3425 = vunpack.c.l.b16 %v3361
    %v3426 = vunpack.c.l.b16 %v3362
    %v3427 = vunpack.c.l.b16 %v3363
    %v3428 = vunpack.c.l.b16 %v3364
    %v3429 = vunpack.c.l.b16 %v3365
    %v3430 = vunpack.c.l.b16 %v3366
    %v3431 = vunpack.c.l.b16 %v3367
    %v3432 = vunpack.c.l.b16 %v3368
    %v3433 = vunpack.c.l.b16 %v3369
    %v3434 = vunpack.c.l.b16 %v3370
    %v3435 = vunpack.c.l.b16 %v3371
    %v3436 = vunpack.c.l.b16 %v3372
    %v3437 = vunpack.c.l.b16 %v3373
    %v3438 = vunpack.c.l.b16 %v3374
    %v3439 = vunpack.c.l.b16 %v3375
    %v3440 = vunpack.c.l.b16 %v3376
    %v3441 = vunpack.c.l.b16 %v3377
    %v3442 = vunpack.c.l.b16 %v3378
    %v3443 = vunpack.c.l.b16 %v3379
    %v3444 = vunpack.c.l.b16 %v3380
    %v3445 = vunpack.c.l.b16 %v3381
    %v3446 = vunpack.c.l.b16 %v3382
    %v3447 = vunpack.c.l.b16 %v3383
    %v3448 = vunpack.c.l.b16 %v3384
    %v3449 = vunpack.c.l.b16 %v3385
    %v3450 = vunpack.c.l.b16 %v3386
    %v3451 = vunpack.c.l.b16 %v3387
    %v3452 = vunpack.c.l.b16 %v3388
    %v3453 = vunpack.c.l.b16 %v3389
    %v3454 = vunpack.c.l.b16 %v3390
    %v3455 = vunpack.c.l.b16 %v3391
    %v3456 = vpack.c.b16 %v3425, %v3424
    %v3457 = vpack.c.b16 %v3427, %v3426
    %v3458 = vpack.c.b16 %v3429, %v3428
    %v3459 = vpack.c.b16 %v3431, %v3430
    %v3460 = vpack.c.b16 %v3433, %v3432
    %v3461 = vpack.c.b16 %v3435, %v3434
    %v3462 = vpack.c.b16 %v3437, %v3436
    %v3463 = vpack.c.b16 %v3439, %v3438
    %v3464 = vpack.c.b16 %v3441, %v3440
    %v3465 = vpack.c.b16 %v3443, %v3442
    %v3466 = vpack.c.b16 %v3445, %v3444
    %v3467 = vpack.c.b16 %v3447, %v3446
    %v3468 = vpack.c.b16 %v3449, %v3448
    %v3469 = vpack.c.b16 %v3451, %v3450
    %v3470 = vpack.c.b16 %v3453, %v3452
    %v3471 = vpack.c.b16 %v3455, %v3454
    %3488 = vmatprep.subr.bf16.mxu0 0
    %3489 = vmatpush1.bf16.msra.mxu0 %v3456
    %3490 = vmatprep.subr.bf16.mxu0 0
    %3491 = vmatpush1.bf16.msra.mxu0 %v3457
    %3492 = vmatprep.subr.bf16.mxu0 0
    %3493 = vmatpush1.bf16.msra.mxu0 %v3458
    %3494 = vmatprep.subr.bf16.mxu0 0
    %3495 = vmatpush1.bf16.msra.mxu0 %v3459
    %3496 = vmatprep.subr.bf16.mxu0 0
    %3497 = vmatpush1.bf16.msra.mxu0 %v3460
    %3498 = vmatprep.subr.bf16.mxu0 0
    %3499 = vmatpush1.bf16.msra.mxu0 %v3461
    %3500 = vmatprep.subr.bf16.mxu0 0
    %3501 = vmatpush1.bf16.msra.mxu0 %v3462
    %3502 = vmatprep.subr.bf16.mxu0 0
    %3503 = vmatpush1.bf16.msra.mxu0 %v3463
    %3504 = vmatprep.subr.bf16.mxu0 0
    %3505 = vmatpush1.bf16.msra.mxu0 %v3464
    %3506 = vmatprep.subr.bf16.mxu0 0
    %3507 = vmatpush1.bf16.msra.mxu0 %v3465
    %3508 = vmatprep.subr.bf16.mxu0 0
    %3509 = vmatpush1.bf16.msra.mxu0 %v3466
    %3510 = vmatprep.subr.bf16.mxu0 0
    %3511 = vmatpush1.bf16.msra.mxu0 %v3467
    %3512 = vmatprep.subr.bf16.mxu0 0
    %3513 = vmatpush1.bf16.msra.mxu0 %v3468
    %3514 = vmatprep.subr.bf16.mxu0 0
    %3515 = vmatpush1.bf16.msra.mxu0 %v3469
    %3516 = vmatprep.subr.bf16.mxu0 0
    %3517 = vmatpush1.bf16.msra.mxu0 %v3470
    %3518 = vmatprep.subr.bf16.mxu0 0
    %3519 = vmatpush1.bf16.msra.mxu0 %v3471
    %3520 = vmatprep.mubr.bf16.mxu0 %v3344
    %3521 = vmatmul.mubr.bf16.gmra.mrb[0].mxu0 %v3343
    %v3522 = vpop.f32.mrb[0].mxu0
    %v3523 = vadd.f32 0.0, %v3522
    %v3524 = vpop.f32.mrb[0].mxu0
    %v3525 = vpop.f32.mrb[0].mxu0
    %v3526 = vadd.f32 0.0, %v3525
    %v3527 = vpop.f32.mrb[0].mxu0
    %3528 = vmatprep.mubr.bf16.mxu0 %v3346
    %3529 = vmatmul.mubr.bf16.gmra.mrb[0].mxu0 %v3345
    %v3530 = vpop.f32.mrb[0].mxu0
    %v3531 = vadd.f32 0.0, %v3530
    %v3532 = vpop.f32.mrb[0].mxu0
    %v3533 = vpop.f32.mrb[0].mxu0
    %v3534 = vadd.f32 0.0, %v3533
    %v3535 = vpop.f32.mrb[0].mxu0
    %3536 = vmatprep.mubr.bf16.mxu0 %v3348
    %3537 = vmatmul.mubr.bf16.gmra.mrb[0].mxu0 %v3347
    %v3538 = vpop.f32.mrb[0].mxu0
    %v3539 = vadd.f32 0.0, %v3538
    %v3540 = vpop.f32.mrb[0].mxu0
    %v3541 = vpop.f32.mrb[0].mxu0
    %v3542 = vadd.f32 0.0, %v3541
    %v3543 = vpop.f32.mrb[0].mxu0
    %3544 = vmatprep.mubr.bf16.mxu0 %v3350
    %3545 = vmatmul.mubr.bf16.gmra.mrb[0].mxu0 %v3349
    %v3546 = vpop.f32.mrb[0].mxu0
    %v3547 = vadd.f32 0.0, %v3546
    %v3548 = vpop.f32.mrb[0].mxu0
    %v3549 = vpop.f32.mrb[0].mxu0
    %v3550 = vadd.f32 0.0, %v3549
    %v3551 = vpop.f32.mrb[0].mxu0
    %3552 = vmatprep.mubr.bf16.mxu0 %v3352
    %3553 = vmatmul.mubr.bf16.gmra.mrb[0].mxu0 %v3351
    %v3554 = vpop.f32.mrb[0].mxu0
    %v3555 = vadd.f32 0.0, %v3554
    %v3556 = vpop.f32.mrb[0].mxu0
    %v3557 = vpop.f32.mrb[0].mxu0
    %v3558 = vadd.f32 0.0, %v3557
    %v3559 = vpop.f32.mrb[0].mxu0
    %3560 = vmatprep.mubr.bf16.mxu0 %v3354
    %3561 = vmatmul.mubr.bf16.gmra.mrb[0].mxu0 %v3353
    %v3562 = vpop.f32.mrb[0].mxu0
    %v3563 = vadd.f32 0.0, %v3562
    %v3564 = vpop.f32.mrb[0].mxu0
    %v3565 = vpop.f32.mrb[0].mxu0
    %v3566 = vadd.f32 0.0, %v3565
    %v3567 = vpop.f32.mrb[0].mxu0
    %3568 = vmatprep.mubr.bf16.mxu0 %v3356
    %3569 = vmatmul.mubr.bf16.gmra.mrb[0].mxu0 %v3355
    %v3570 = vpop.f32.mrb[0].mxu0
    %v3571 = vadd.f32 0.0, %v3570
    %v3572 = vpop.f32.mrb[0].mxu0
    %v3573 = vpop.f32.mrb[0].mxu0
    %v3574 = vadd.f32 0.0, %v3573
    %v3575 = vpop.f32.mrb[0].mxu0
    %3576 = vmatprep.mubr.bf16.mxu0 %v3358
    %3577 = vmatmul.mubr.bf16.gmra.mrb[0].mxu0 %v3357
    %v3578 = vpop.f32.mrb[0].mxu0
    %v3579 = vadd.f32 0.0, %v3578
    %v3580 = vpop.f32.mrb[0].mxu0
    %v3581 = vpop.f32.mrb[0].mxu0
    %v3582 = vadd.f32 0.0, %v3581
    %v3583 = vpop.f32.mrb[0].mxu0
    %3584 = vdwg.mxu0
    %v3585 = vadd.f32 %v3071, %v3523
    %v3586 = vadd.f32 %v3072, %v3526
    %v3587 = vadd.f32 %v3073, %v3531
    %v3588 = vadd.f32 %v3074, %v3534
    %v3589 = vadd.f32 %v3075, %v3539
    %v3590 = vadd.f32 %v3076, %v3542
    %v3591 = vadd.f32 %v3077, %v3547
    %v3592 = vadd.f32 %v3078, %v3550
    %v3593 = vadd.f32 %v3079, %v3555
    %v3594 = vadd.f32 %v3080, %v3558
    %v3595 = vadd.f32 %v3081, %v3563
    %v3596 = vadd.f32 %v3082, %v3566
    %v3597 = vadd.f32 %v3083, %v3571
    %v3598 = vadd.f32 %v3084, %v3574
    %v3599 = vadd.f32 %v3085, %v3579
    %v3600 = vadd.f32 %v3086, %v3582
    %v3601 = vld [vmem:[%s2796] sm:$0xfc]
    %v3602 = vld [vmem:[%s2796 + $0x8] sm:$0xfc]
    %v3603 = vld [vmem:[%s2796 + $0x10] sm:$0x3]
    %v3604 = vld [vmem:[%s2796 + $0x18] sm:$0x3]
    %v3605 = vld [vmem:[%s2796 + $0x20] sm:$0xfc]
    %v3606 = vld [vmem:[%s2796 + $0x28] sm:$0xfc]
    %v3607 = vld [vmem:[%s2796 + $0x30] sm:$0x3]
    %v3608 = vld [vmem:[%s2796 + $0x38] sm:$0x3]
    %v3609 = vld [vmem:[%s2796 + $0x40] sm:$0xfc]
    %v3610 = vld [vmem:[%s2796 + $0x48] sm:$0xfc]
    %v3611 = vld [vmem:[%s2796 + $0x50] sm:$0x3]
    %v3612 = vld [vmem:[%s2796 + $0x58] sm:$0x3]
    %v3613 = vld [vmem:[%s2796 + $0x60] sm:$0xfc]
    %v3614 = vld [vmem:[%s2796 + $0x68] sm:$0xfc]
    %v3615 = vld [vmem:[%s2796 + $0x70] sm:$0x3]
    %v3616 = vld [vmem:[%s2796 + $0x78] sm:$0x3]
    %v3617 = vld [vmem:[%s2796 + $0x80] sm:$0xfc]
    %v3618 = vld [vmem:[%s2796 + $0x88] sm:$0xfc]
    %v3619 = vld [vmem:[%s2796 + $0x90] sm:$0x3]
    %v3620 = vld [vmem:[%s2796 + $0x98] sm:$0x3]
    %v3621 = vld [vmem:[%s2796 + $0xa0] sm:$0xfc]
    %v3622 = vld [vmem:[%s2796 + $0xa8] sm:$0xfc]
    %v3623 = vld [vmem:[%s2796 + $0xb0] sm:$0x3]
    %v3624 = vld [vmem:[%s2796 + $0xb8] sm:$0x3]
    %v3625 = vld [vmem:[%s2796 + $0xc0] sm:$0xfc]
    %v3626 = vld [vmem:[%s2796 + $0xc8] sm:$0xfc]
    %v3627 = vld [vmem:[%s2796 + $0xd0] sm:$0x3]
    %v3628 = vld [vmem:[%s2796 + $0xd8] sm:$0x3]
    %v3629 = vld [vmem:[%s2796 + $0xe0] sm:$0xfc]
    %v3630 = vld [vmem:[%s2796 + $0xe8] sm:$0xfc]
    %v3631 = vld [vmem:[%s2796 + $0xf0] sm:$0x3]
    %v3632 = vld [vmem:[%s2796 + $0xf8] sm:$0x3]
    %v3633 = vld [vmem:[%s2796 + $0x140] sm:$0xfc]
    %v3634 = vld [vmem:[%s2796 + $0x148] sm:$0xfc]
    %v3635 = vld [vmem:[%s2796 + $0x150] sm:$0x3]
    %v3636 = vld [vmem:[%s2796 + $0x158] sm:$0x3]
    %v3637 = vld [vmem:[%s2796 + $0x160] sm:$0xfc]
    %v3638 = vld [vmem:[%s2796 + $0x168] sm:$0xfc]
    %v3639 = vld [vmem:[%s2796 + $0x170] sm:$0x3]
    %v3640 = vld [vmem:[%s2796 + $0x178] sm:$0x3]
    %v3641 = vld [vmem:[%s2796 + $0x180] sm:$0xfc]
    %v3642 = vld [vmem:[%s2796 + $0x188] sm:$0xfc]
    %v3643 = vld [vmem:[%s2796 + $0x190] sm:$0x3]
    %v3644 = vld [vmem:[%s2796 + $0x198] sm:$0x3]
    %v3645 = vld [vmem:[%s2796 + $0x1a0] sm:$0xfc]
    %v3646 = vld [vmem:[%s2796 + $0x1a8] sm:$0xfc]
    %v3647 = vld [vmem:[%s2796 + $0x1b0] sm:$0x3]
    %v3648 = vld [vmem:[%s2796 + $0x1b8] sm:$0x3]
    %v3649 = vld [vmem:[%s2796 + $0x1c0] sm:$0xfc]
    %v3650 = vld [vmem:[%s2796 + $0x1c8] sm:$0xfc]
    %v3651 = vld [vmem:[%s2796 + $0x1d0] sm:$0x3]
    %v3652 = vld [vmem:[%s2796 + $0x1d8] sm:$0x3]
    %v3653 = vld [vmem:[%s2796 + $0x1e0] sm:$0xfc]
    %v3654 = vld [vmem:[%s2796 + $0x1e8] sm:$0xfc]
    %v3655 = vld [vmem:[%s2796 + $0x1f0] sm:$0x3]
    %v3656 = vld [vmem:[%s2796 + $0x1f8] sm:$0x3]
    %v3657 = vld [vmem:[%s2796 + $0x200] sm:$0xfc]
    %v3658 = vld [vmem:[%s2796 + $0x208] sm:$0xfc]
    %v3659 = vld [vmem:[%s2796 + $0x210] sm:$0x3]
    %v3660 = vld [vmem:[%s2796 + $0x218] sm:$0x3]
    %v3661 = vld [vmem:[%s2796 + $0x220] sm:$0xfc]
    %v3662 = vld [vmem:[%s2796 + $0x228] sm:$0xfc]
    %v3663 = vld [vmem:[%s2796 + $0x230] sm:$0x3]
    %v3664 = vld [vmem:[%s2796 + $0x238] sm:$0x3]
    %v3729 = vrot.slane %v3601, 2
    %v3730 = vrot.slane %v3603, 2
    %v3731 = vsel %vm1090, %v3729, %v3730
    %v3732 = vrot.slane %v3602, 2
    %v3733 = vrot.slane %v3604, 2
    %v3734 = vsel %vm1090, %v3732, %v3733
    %v3735 = vrot.slane %v3605, 2
    %v3736 = vrot.slane %v3607, 2
    %v3737 = vsel %vm1090, %v3735, %v3736
    %v3738 = vrot.slane %v3606, 2
    %v3739 = vrot.slane %v3608, 2
    %v3740 = vsel %vm1090, %v3738, %v3739
    %v3741 = vrot.slane %v3609, 2
    %v3742 = vrot.slane %v3611, 2
    %v3743 = vsel %vm1090, %v3741, %v3742
    %v3744 = vrot.slane %v3610, 2
    %v3745 = vrot.slane %v3612, 2
    %v3746 = vsel %vm1090, %v3744, %v3745
    %v3747 = vrot.slane %v3613, 2
    %v3748 = vrot.slane %v3615, 2
    %v3749 = vsel %vm1090, %v3747, %v3748
    %v3750 = vrot.slane %v3614, 2
    %v3751 = vrot.slane %v3616, 2
    %v3752 = vsel %vm1090, %v3750, %v3751
    %v3753 = vrot.slane %v3617, 2
    %v3754 = vrot.slane %v3619, 2
    %v3755 = vsel %vm1090, %v3753, %v3754
    %v3756 = vrot.slane %v3618, 2
    %v3757 = vrot.slane %v3620, 2
    %v3758 = vsel %vm1090, %v3756, %v3757
    %v3759 = vrot.slane %v3621, 2
    %v3760 = vrot.slane %v3623, 2
    %v3761 = vsel %vm1090, %v3759, %v3760
    %v3762 = vrot.slane %v3622, 2
    %v3763 = vrot.slane %v3624, 2
    %v3764 = vsel %vm1090, %v3762, %v3763
    %v3765 = vrot.slane %v3625, 2
    %v3766 = vrot.slane %v3627, 2
    %v3767 = vsel %vm1090, %v3765, %v3766
    %v3768 = vrot.slane %v3626, 2
    %v3769 = vrot.slane %v3628, 2
    %v3770 = vsel %vm1090, %v3768, %v3769
    %v3771 = vrot.slane %v3629, 2
    %v3772 = vrot.slane %v3631, 2
    %v3773 = vsel %vm1090, %v3771, %v3772
    %v3774 = vrot.slane %v3630, 2
    %v3775 = vrot.slane %v3632, 2
    %v3776 = vsel %vm1090, %v3774, %v3775
    %v3777 = vrot.slane %v3633, 2
    %v3778 = vrot.slane %v3635, 2
    %v3779 = vsel %vm1090, %v3777, %v3778
    %v3780 = vrot.slane %v3634, 2
    %v3781 = vrot.slane %v3636, 2
    %v3782 = vsel %vm1090, %v3780, %v3781
    %v3783 = vrot.slane %v3637, 2
    %v3784 = vrot.slane %v3639, 2
    %v3785 = vsel %vm1090, %v3783, %v3784
    %v3786 = vrot.slane %v3638, 2
    %v3787 = vrot.slane %v3640, 2
    %v3788 = vsel %vm1090, %v3786, %v3787
    %v3789 = vrot.slane %v3641, 2
    %v3790 = vrot.slane %v3643, 2
    %v3791 = vsel %vm1090, %v3789, %v3790
    %v3792 = vrot.slane %v3642, 2
    %v3793 = vrot.slane %v3644, 2
    %v3794 = vsel %vm1090, %v3792, %v3793
    %v3795 = vrot.slane %v3645, 2
    %v3796 = vrot.slane %v3647, 2
    %v3797 = vsel %vm1090, %v3795, %v3796
    %v3798 = vrot.slane %v3646, 2
    %v3799 = vrot.slane %v3648, 2
    %v3800 = vsel %vm1090, %v3798, %v3799
    %v3801 = vrot.slane %v3649, 2
    %v3802 = vrot.slane %v3651, 2
    %v3803 = vsel %vm1090, %v3801, %v3802
    %v3804 = vrot.slane %v3650, 2
    %v3805 = vrot.slane %v3652, 2
    %v3806 = vsel %vm1090, %v3804, %v3805
    %v3807 = vrot.slane %v3653, 2
    %v3808 = vrot.slane %v3655, 2
    %v3809 = vsel %vm1090, %v3807, %v3808
    %v3810 = vrot.slane %v3654, 2
    %v3811 = vrot.slane %v3656, 2
    %v3812 = vsel %vm1090, %v3810, %v3811
    %v3813 = vrot.slane %v3657, 2
    %v3814 = vrot.slane %v3659, 2
    %v3815 = vsel %vm1090, %v3813, %v3814
    %v3816 = vrot.slane %v3658, 2
    %v3817 = vrot.slane %v3660, 2
    %v3818 = vsel %vm1090, %v3816, %v3817
    %v3819 = vrot.slane %v3661, 2
    %v3820 = vrot.slane %v3663, 2
    %v3821 = vsel %vm1090, %v3819, %v3820
    %v3822 = vrot.slane %v3662, 2
    %v3823 = vrot.slane %v3664, 2
    %v3824 = vsel %vm1090, %v3822, %v3823
    %v3857 = vpack.c.bf16 %v3737, %v3731
    %v3858 = vpack.c.bf16 %v3740, %v3734
    %v3859 = vpack.c.bf16 %v3749, %v3743
    %v3860 = vpack.c.bf16 %v3752, %v3746
    %v3861 = vpack.c.bf16 %v3761, %v3755
    %v3862 = vpack.c.bf16 %v3764, %v3758
    %v3863 = vpack.c.bf16 %v3773, %v3767
    %v3864 = vpack.c.bf16 %v3776, %v3770
    %v3865 = vpack.c.bf16 %v3785, %v3779
    %v3866 = vpack.c.bf16 %v3788, %v3782
    %v3867 = vpack.c.bf16 %v3797, %v3791
    %v3868 = vpack.c.bf16 %v3800, %v3794
    %v3869 = vpack.c.bf16 %v3809, %v3803
    %v3870 = vpack.c.bf16 %v3812, %v3806
    %v3871 = vpack.c.bf16 %v3821, %v3815
    %v3872 = vpack.c.bf16 %v3824, %v3818
    %s3873 = scalar_lea.vmem %s2, 1024
    %v3874 = vld [vmem:[%s3873] sm:$0xf]
    %v3875 = vld [vmem:[%s3873 + $0x4] sm:$0xf]
    %v3876 = vld [vmem:[%s3873 + $0x8] sm:$0xf]
    %v3877 = vld [vmem:[%s3873 + $0xc] sm:$0xf]
    %v3878 = vld [vmem:[%s3873 + $0x10] sm:$0xf]
    %v3879 = vld [vmem:[%s3873 + $0x14] sm:$0xf]
    %v3880 = vld [vmem:[%s3873 + $0x18] sm:$0xf]
    %v3881 = vld [vmem:[%s3873 + $0x1c] sm:$0xf]
    %v3882 = vld [vmem:[%s3873 + $0x20] sm:$0xf]
    %v3883 = vld [vmem:[%s3873 + $0x24] sm:$0xf]
    %v3884 = vld [vmem:[%s3873 + $0x28] sm:$0xf]
    %v3885 = vld [vmem:[%s3873 + $0x2c] sm:$0xf]
    %v3886 = vld [vmem:[%s3873 + $0x30] sm:$0xf]
    %v3887 = vld [vmem:[%s3873 + $0x34] sm:$0xf]
    %v3888 = vld [vmem:[%s3873 + $0x38] sm:$0xf]
    %v3889 = vld [vmem:[%s3873 + $0x3c] sm:$0xf]
    %v3890 = vld [vmem:[%s3873 + $0x40] sm:$0xf]
    %v3891 = vld [vmem:[%s3873 + $0x44] sm:$0xf]
    %v3892 = vld [vmem:[%s3873 + $0x48] sm:$0xf]
    %v3893 = vld [vmem:[%s3873 + $0x4c] sm:$0xf]
    %v3894 = vld [vmem:[%s3873 + $0x50] sm:$0xf]
    %v3895 = vld [vmem:[%s3873 + $0x54] sm:$0xf]
    %v3896 = vld [vmem:[%s3873 + $0x58] sm:$0xf]
    %v3897 = vld [vmem:[%s3873 + $0x5c] sm:$0xf]
    %v3898 = vld [vmem:[%s3873 + $0x60] sm:$0xf]
    %v3899 = vld [vmem:[%s3873 + $0x64] sm:$0xf]
    %v3900 = vld [vmem:[%s3873 + $0x68] sm:$0xf]
    %v3901 = vld [vmem:[%s3873 + $0x6c] sm:$0xf]
    %v3902 = vld [vmem:[%s3873 + $0x70] sm:$0xf]
    %v3903 = vld [vmem:[%s3873 + $0x74] sm:$0xf]
    %v3904 = vld [vmem:[%s3873 + $0x78] sm:$0xf]
    %v3905 = vld [vmem:[%s3873 + $0x7c] sm:$0xf]
    %v3938 = vunpack.c.l.b16 %v3874
    %v3939 = vunpack.c.l.b16 %v3875
    %v3940 = vunpack.c.l.b16 %v3876
    %v3941 = vunpack.c.l.b16 %v3877
    %v3942 = vunpack.c.l.b16 %v3878
    %v3943 = vunpack.c.l.b16 %v3879
    %v3944 = vunpack.c.l.b16 %v3880
    %v3945 = vunpack.c.l.b16 %v3881
    %v3946 = vunpack.c.l.b16 %v3882
    %v3947 = vunpack.c.l.b16 %v3883
    %v3948 = vunpack.c.l.b16 %v3884
    %v3949 = vunpack.c.l.b16 %v3885
    %v3950 = vunpack.c.l.b16 %v3886
    %v3951 = vunpack.c.l.b16 %v3887
    %v3952 = vunpack.c.l.b16 %v3888
    %v3953 = vunpack.c.l.b16 %v3889
    %v3954 = vunpack.c.l.b16 %v3890
    %v3955 = vunpack.c.l.b16 %v3891
    %v3956 = vunpack.c.l.b16 %v3892
    %v3957 = vunpack.c.l.b16 %v3893
    %v3958 = vunpack.c.l.b16 %v3894
    %v3959 = vunpack.c.l.b16 %v3895
    %v3960 = vunpack.c.l.b16 %v3896
    %v3961 = vunpack.c.l.b16 %v3897
    %v3962 = vunpack.c.l.b16 %v3898
    %v3963 = vunpack.c.l.b16 %v3899
    %v3964 = vunpack.c.l.b16 %v3900
    %v3965 = vunpack.c.l.b16 %v3901
    %v3966 = vunpack.c.l.b16 %v3902
    %v3967 = vunpack.c.l.b16 %v3903
    %v3968 = vunpack.c.l.b16 %v3904
    %v3969 = vunpack.c.l.b16 %v3905
    %v3970 = vpack.c.b16 %v3939, %v3938
    %v3971 = vpack.c.b16 %v3941, %v3940
    %v3972 = vpack.c.b16 %v3943, %v3942
    %v3973 = vpack.c.b16 %v3945, %v3944
    %v3974 = vpack.c.b16 %v3947, %v3946
    %v3975 = vpack.c.b16 %v3949, %v3948
    %v3976 = vpack.c.b16 %v3951, %v3950
    %v3977 = vpack.c.b16 %v3953, %v3952
    %v3978 = vpack.c.b16 %v3955, %v3954
    %v3979 = vpack.c.b16 %v3957, %v3956
    %v3980 = vpack.c.b16 %v3959, %v3958
    %v3981 = vpack.c.b16 %v3961, %v3960
    %v3982 = vpack.c.b16 %v3963, %v3962
    %v3983 = vpack.c.b16 %v3965, %v3964
    %v3984 = vpack.c.b16 %v3967, %v3966
    %v3985 = vpack.c.b16 %v3969, %v3968
    %4002 = vmatprep.subr.bf16.mxu0 0
    %4003 = vmatpush1.bf16.msra.mxu0 %v3970
    %4004 = vmatprep.subr.bf16.mxu0 0
    %4005 = vmatpush1.bf16.msra.mxu0 %v3971
    %4006 = vmatprep.subr.bf16.mxu0 0
    %4007 = vmatpush1.bf16.msra.mxu0 %v3972
    %4008 = vmatprep.subr.bf16.mxu0 0
    %4009 = vmatpush1.bf16.msra.mxu0 %v3973
    %4010 = vmatprep.subr.bf16.mxu0 0
    %4011 = vmatpush1.bf16.msra.mxu0 %v3974
    %4012 = vmatprep.subr.bf16.mxu0 0
    %4013 = vmatpush1.bf16.msra.mxu0 %v3975
    %4014 = vmatprep.subr.bf16.mxu0 0
    %4015 = vmatpush1.bf16.msra.mxu0 %v3976
    %4016 = vmatprep.subr.bf16.mxu0 0
    %4017 = vmatpush1.bf16.msra.mxu0 %v3977
    %4018 = vmatprep.subr.bf16.mxu0 0
    %4019 = vmatpush1.bf16.msra.mxu0 %v3978
    %4020 = vmatprep.subr.bf16.mxu0 0
    %4021 = vmatpush1.bf16.msra.mxu0 %v3979
    %4022 = vmatprep.subr.bf16.mxu0 0
    %4023 = vmatpush1.bf16.msra.mxu0 %v3980
    %4024 = vmatprep.subr.bf16.mxu0 0
    %4025 = vmatpush1.bf16.msra.mxu0 %v3981
    %4026 = vmatprep.subr.bf16.mxu0 0
    %4027 = vmatpush1.bf16.msra.mxu0 %v3982
    %4028 = vmatprep.subr.bf16.mxu0 0
    %4029 = vmatpush1.bf16.msra.mxu0 %v3983
    %4030 = vmatprep.subr.bf16.mxu0 0
    %4031 = vmatpush1.bf16.msra.mxu0 %v3984
    %4032 = vmatprep.subr.bf16.mxu0 0
    %4033 = vmatpush1.bf16.msra.mxu0 %v3985
    %4034 = vmatprep.mubr.bf16.mxu0 %v3858
    %4035 = vmatmul.mubr.bf16.gmra.mrb[0].mxu0 %v3857
    %v4036 = vpop.f32.mrb[0].mxu0
    %v4037 = vadd.f32 0.0, %v4036
    %v4038 = vpop.f32.mrb[0].mxu0
    %v4039 = vpop.f32.mrb[0].mxu0
    %v4040 = vadd.f32 0.0, %v4039
    %v4041 = vpop.f32.mrb[0].mxu0
    %4042 = vmatprep.mubr.bf16.mxu0 %v3860
    %4043 = vmatmul.mubr.bf16.gmra.mrb[0].mxu0 %v3859
    %v4044 = vpop.f32.mrb[0].mxu0
    %v4045 = vadd.f32 0.0, %v4044
    %v4046 = vpop.f32.mrb[0].mxu0
    %v4047 = vpop.f32.mrb[0].mxu0
    %v4048 = vadd.f32 0.0, %v4047
    %v4049 = vpop.f32.mrb[0].mxu0
    %4050 = vmatprep.mubr.bf16.mxu0 %v3862
    %4051 = vmatmul.mubr.bf16.gmra.mrb[0].mxu0 %v3861
    %v4052 = vpop.f32.mrb[0].mxu0
    %v4053 = vadd.f32 0.0, %v4052
    %v4054 = vpop.f32.mrb[0].mxu0
    %v4055 = vpop.f32.mrb[0].mxu0
    %v4056 = vadd.f32 0.0, %v4055
    %v4057 = vpop.f32.mrb[0].mxu0
    %4058 = vmatprep.mubr.bf16.mxu0 %v3864
    %4059 = vmatmul.mubr.bf16.gmra.mrb[0].mxu0 %v3863
    %v4060 = vpop.f32.mrb[0].mxu0
    %v4061 = vadd.f32 0.0, %v4060
    %v4062 = vpop.f32.mrb[0].mxu0
    %v4063 = vpop.f32.mrb[0].mxu0
    %v4064 = vadd.f32 0.0, %v4063
    %v4065 = vpop.f32.mrb[0].mxu0
    %4066 = vmatprep.mubr.bf16.mxu0 %v3866
    %4067 = vmatmul.mubr.bf16.gmra.mrb[0].mxu0 %v3865
    %v4068 = vpop.f32.mrb[0].mxu0
    %v4069 = vadd.f32 0.0, %v4068
    %v4070 = vpop.f32.mrb[0].mxu0
    %v4071 = vpop.f32.mrb[0].mxu0
    %v4072 = vadd.f32 0.0, %v4071
    %v4073 = vpop.f32.mrb[0].mxu0
    %4074 = vmatprep.mubr.bf16.mxu0 %v3868
    %4075 = vmatmul.mubr.bf16.gmra.mrb[0].mxu0 %v3867
    %v4076 = vpop.f32.mrb[0].mxu0
    %v4077 = vadd.f32 0.0, %v4076
    %v4078 = vpop.f32.mrb[0].mxu0
    %v4079 = vpop.f32.mrb[0].mxu0
    %v4080 = vadd.f32 0.0, %v4079
    %v4081 = vpop.f32.mrb[0].mxu0
    %4082 = vmatprep.mubr.bf16.mxu0 %v3870
    %4083 = vmatmul.mubr.bf16.gmra.mrb[0].mxu0 %v3869
    %v4084 = vpop.f32.mrb[0].mxu0
    %v4085 = vadd.f32 0.0, %v4084
    %v4086 = vpop.f32.mrb[0].mxu0
    %v4087 = vpop.f32.mrb[0].mxu0
    %v4088 = vadd.f32 0.0, %v4087
    %v4089 = vpop.f32.mrb[0].mxu0
    %4090 = vmatprep.mubr.bf16.mxu0 %v3872
    %4091 = vmatmul.mubr.bf16.gmra.mrb[0].mxu0 %v3871
    %v4092 = vpop.f32.mrb[0].mxu0
    %v4093 = vadd.f32 0.0, %v4092
    %v4094 = vpop.f32.mrb[0].mxu0
    %v4095 = vpop.f32.mrb[0].mxu0
    %v4096 = vadd.f32 0.0, %v4095
    %v4097 = vpop.f32.mrb[0].mxu0
    %4098 = vdwg.mxu0
    %v4099 = vadd.f32 %v3585, %v4037
    %v4100 = vadd.f32 %v3586, %v4040
    %v4101 = vadd.f32 %v3587, %v4045
    %v4102 = vadd.f32 %v3588, %v4048
    %v4103 = vadd.f32 %v3589, %v4053
    %v4104 = vadd.f32 %v3590, %v4056
    %v4105 = vadd.f32 %v3591, %v4061
    %v4106 = vadd.f32 %v3592, %v4064
    %v4107 = vadd.f32 %v3593, %v4069
    %v4108 = vadd.f32 %v3594, %v4072
    %v4109 = vadd.f32 %v3595, %v4077
    %v4110 = vadd.f32 %v3596, %v4080
    %v4111 = vadd.f32 %v3597, %v4085
    %v4112 = vadd.f32 %v3598, %v4088
    %v4113 = vadd.f32 %v3599, %v4093
    %v4114 = vadd.f32 %v3600, %v4096
    %s4115 = sld [smem:[#allocation5]]
    %v4116 = vld [vmem:[%s6] sm:$0x1]
    %v4118 = vlaneseq
    %v4119 = vshrl.u32 %v4118, 7
    %v4120 = vsub.s32 0, %v4119
    %v4121 = vrot.slane %v4116, %v4120
    %v4123 = vmul.f32 %v4099, %v4121
    %v4124 = vmul.f32 %v4100, %v4121
    %v4125 = vmul.f32 %v4101, %v4121
    %v4126 = vmul.f32 %v4102, %v4121
    %v4127 = vmul.f32 %v4103, %v4121
    %v4128 = vmul.f32 %v4104, %v4121
    %v4129 = vmul.f32 %v4105, %v4121
    %v4130 = vmul.f32 %v4106, %v4121
    %v4131 = vmul.f32 %v4107, %v4121
    %v4132 = vmul.f32 %v4108, %v4121
    %v4133 = vmul.f32 %v4109, %v4121
    %v4134 = vmul.f32 %v4110, %v4121
    %v4135 = vmul.f32 %v4111, %v4121
    %v4136 = vmul.f32 %v4112, %v4121
    %v4137 = vmul.f32 %v4113, %v4121
    %v4138 = vmul.f32 %v4114, %v4121
    %v4139 = vld [vmem:[%s7] sm:$0x1]
    %v4141 = vlaneseq
    %v4142 = vshrl.u32 %v4141, 7
    %v4143 = vsub.s32 0, %v4142
    %v4144 = vrot.slane %v4139, %v4143
    %v4146 = vadd.f32 %v4123, %v4144
    %v4147 = vadd.f32 %v4124, %v4144
    %v4148 = vadd.f32 %v4125, %v4144
    %v4149 = vadd.f32 %v4126, %v4144
    %v4150 = vadd.f32 %v4127, %v4144
    %v4151 = vadd.f32 %v4128, %v4144
    %v4152 = vadd.f32 %v4129, %v4144
    %v4153 = vadd.f32 %v4130, %v4144
    %v4154 = vadd.f32 %v4131, %v4144
    %v4155 = vadd.f32 %v4132, %v4144
    %v4156 = vadd.f32 %v4133, %v4144
    %v4157 = vadd.f32 %v4134, %v4144
    %v4158 = vadd.f32 %v4135, %v4144
    %v4159 = vadd.f32 %v4136, %v4144
    %v4160 = vadd.f32 %v4137, %v4144
    %v4161 = vadd.f32 %v4138, %v4144
    %vm4162 = vcmp.gt.f32.partialorder %v4146, 0.0
    %vm4163 = vcmp.gt.f32.partialorder %v4147, 0.0
    %vm4164 = vcmp.gt.f32.partialorder %v4148, 0.0
    %vm4165 = vcmp.gt.f32.partialorder %v4149, 0.0
    %vm4166 = vcmp.gt.f32.partialorder %v4150, 0.0
    %vm4167 = vcmp.gt.f32.partialorder %v4151, 0.0
    %vm4168 = vcmp.gt.f32.partialorder %v4152, 0.0
    %vm4169 = vcmp.gt.f32.partialorder %v4153, 0.0
    %vm4170 = vcmp.gt.f32.partialorder %v4154, 0.0
    %vm4171 = vcmp.gt.f32.partialorder %v4155, 0.0
    %vm4172 = vcmp.gt.f32.partialorder %v4156, 0.0
    %vm4173 = vcmp.gt.f32.partialorder %v4157, 0.0
    %vm4174 = vcmp.gt.f32.partialorder %v4158, 0.0
    %vm4175 = vcmp.gt.f32.partialorder %v4159, 0.0
    %vm4176 = vcmp.gt.f32.partialorder %v4160, 0.0
    %vm4177 = vcmp.gt.f32.partialorder %v4161, 0.0
    %v4178 = vstv %s4115
    %v4179 = vmul.f32 %v4178, %v4146
    %v4180 = vmul.f32 %v4178, %v4147
    %v4181 = vmul.f32 %v4178, %v4148
    %v4182 = vmul.f32 %v4178, %v4149
    %v4183 = vmul.f32 %v4178, %v4150
    %v4184 = vmul.f32 %v4178, %v4151
    %v4185 = vmul.f32 %v4178, %v4152
    %v4186 = vmul.f32 %v4178, %v4153
    %v4187 = vmul.f32 %v4178, %v4154
    %v4188 = vmul.f32 %v4178, %v4155
    %v4189 = vmul.f32 %v4178, %v4156
    %v4190 = vmul.f32 %v4178, %v4157
    %v4191 = vmul.f32 %v4178, %v4158
    %v4192 = vmul.f32 %v4178, %v4159
    %v4193 = vmul.f32 %v4178, %v4160
    %v4194 = vmul.f32 %v4178, %v4161
    %v4195 = vsel %vm4162, %v4146, %v4179
    %v4196 = vsel %vm4163, %v4147, %v4180
    %v4197 = vsel %vm4164, %v4148, %v4181
    %v4198 = vsel %vm4165, %v4149, %v4182
    %v4199 = vsel %vm4166, %v4150, %v4183
    %v4200 = vsel %vm4167, %v4151, %v4184
    %v4201 = vsel %vm4168, %v4152, %v4185
    %v4202 = vsel %vm4169, %v4153, %v4186
    %v4203 = vsel %vm4170, %v4154, %v4187
    %v4204 = vsel %vm4171, %v4155, %v4188
    %v4205 = vsel %vm4172, %v4156, %v4189
    %v4206 = vsel %vm4173, %v4157, %v4190
    %v4207 = vsel %vm4174, %v4158, %v4191
    %v4208 = vsel %vm4175, %v4159, %v4192
    %v4209 = vsel %vm4176, %v4160, %v4193
    %v4210 = vsel %vm4177, %v4161, %v4194
    %s4211 = scalar_lea.vmem [#allocation2], 16
    %4212 = vst [vmem:[%s4211 + $0x1] sm:$0xff] %v4195
    %4213 = vst [vmem:[%s4211 + $0x11] sm:$0xff] %v4196
    %4214 = vst [vmem:[%s4211 + $0x21] sm:$0xff] %v4197
    %4215 = vst [vmem:[%s4211 + $0x31] sm:$0xff] %v4198
    %4216 = vst [vmem:[%s4211 + $0x41] sm:$0xff] %v4199
    %4217 = vst [vmem:[%s4211 + $0x51] sm:$0xff] %v4200
    %4218 = vst [vmem:[%s4211 + $0x61] sm:$0xff] %v4201
    %4219 = vst [vmem:[%s4211 + $0x71] sm:$0xff] %v4202
    %4220 = vst [vmem:[%s4211 + $0xa1] sm:$0xff] %v4203
    %4221 = vst [vmem:[%s4211 + $0xb1] sm:$0xff] %v4204
    %4222 = vst [vmem:[%s4211 + $0xc1] sm:$0xff] %v4205
    %4223 = vst [vmem:[%s4211 + $0xd1] sm:$0xff] %v4206
    %4224 = vst [vmem:[%s4211 + $0xe1] sm:$0xff] %v4207
    %4225 = vst [vmem:[%s4211 + $0xf1] sm:$0xff] %v4208
    %4226 = vst [vmem:[%s4211 + $0x101] sm:$0xff] %v4209
    %4227 = vst [vmem:[%s4211 + $0x111] sm:$0xff] %v4210
    %v4228 = vld [vmem:[#allocation2] sm:$0xff]
    %v4229 = vld [vmem:[#allocation2 + $0x10] sm:$0xff]
    %v4230 = vld [vmem:[#allocation2 + $0x20] sm:$0xff]
    %v4231 = vld [vmem:[#allocation2 + $0x30] sm:$0xff]
    %v4232 = vld [vmem:[#allocation2 + $0x40] sm:$0xff]
    %v4233 = vld [vmem:[#allocation2 + $0x50] sm:$0xff]
    %v4234 = vld [vmem:[#allocation2 + $0x60] sm:$0xff]
    %v4235 = vld [vmem:[#allocation2 + $0x70] sm:$0xff]
    %v4236 = vld [vmem:[#allocation2 + $0xa0] sm:$0xff]
    %v4237 = vld [vmem:[#allocation2 + $0xb0] sm:$0xff]
    %v4238 = vld [vmem:[#allocation2 + $0xc0] sm:$0xff]
    %v4239 = vld [vmem:[#allocation2 + $0xd0] sm:$0xff]
    %v4240 = vld [vmem:[#allocation2 + $0xe0] sm:$0xff]
    %v4241 = vld [vmem:[#allocation2 + $0xf0] sm:$0xff]
    %v4242 = vld [vmem:[#allocation2 + $0x100] sm:$0xff]
    %v4243 = vld [vmem:[#allocation2 + $0x110] sm:$0xff]
    %v4244 = vpack.c.bf16 %v4229, %v4228
    %v4245 = vpack.c.bf16 %v4231, %v4230
    %v4246 = vpack.c.bf16 %v4233, %v4232
    %v4247 = vpack.c.bf16 %v4235, %v4234
    %v4248 = vpack.c.bf16 %v4237, %v4236
    %v4249 = vpack.c.bf16 %v4239, %v4238
    %v4250 = vpack.c.bf16 %v4241, %v4240
    %v4251 = vpack.c.bf16 %v4243, %v4242
    %v4252 = vld [vmem:[%s3] sm:$0xf]
    %v4253 = vld [vmem:[%s3 + $0x4] sm:$0xf]
    %v4254 = vld [vmem:[%s3 + $0x8] sm:$0xf]
    %v4255 = vld [vmem:[%s3 + $0xc] sm:$0xf]
    %v4256 = vld [vmem:[%s3 + $0x10] sm:$0xf]
    %v4257 = vld [vmem:[%s3 + $0x14] sm:$0xf]
    %v4258 = vld [vmem:[%s3 + $0x18] sm:$0xf]
    %v4259 = vld [vmem:[%s3 + $0x1c] sm:$0xf]
    %v4260 = vld [vmem:[%s3 + $0x20] sm:$0xf]
    %v4261 = vld [vmem:[%s3 + $0x24] sm:$0xf]
    %v4262 = vld [vmem:[%s3 + $0x28] sm:$0xf]
    %v4263 = vld [vmem:[%s3 + $0x2c] sm:$0xf]
    %v4264 = vld [vmem:[%s3 + $0x30] sm:$0xf]
    %v4265 = vld [vmem:[%s3 + $0x34] sm:$0xf]
    %v4266 = vld [vmem:[%s3 + $0x38] sm:$0xf]
    %v4267 = vld [vmem:[%s3 + $0x3c] sm:$0xf]
    %v4268 = vld [vmem:[#allocation2 + $0x1] sm:$0xff]
    %v4269 = vld [vmem:[#allocation2 + $0x11] sm:$0xff]
    %v4270 = vld [vmem:[#allocation2 + $0x21] sm:$0xff]
    %v4271 = vld [vmem:[#allocation2 + $0x31] sm:$0xff]
    %v4272 = vld [vmem:[#allocation2 + $0x41] sm:$0xff]
    %v4273 = vld [vmem:[#allocation2 + $0x51] sm:$0xff]
    %v4274 = vld [vmem:[#allocation2 + $0x61] sm:$0xff]
    %v4275 = vld [vmem:[#allocation2 + $0x71] sm:$0xff]
    %v4276 = vld [vmem:[#allocation2 + $0xa1] sm:$0xff]
    %v4277 = vld [vmem:[#allocation2 + $0xb1] sm:$0xff]
    %v4278 = vld [vmem:[#allocation2 + $0xc1] sm:$0xff]
    %v4279 = vld [vmem:[#allocation2 + $0xd1] sm:$0xff]
    %v4280 = vld [vmem:[#allocation2 + $0xe1] sm:$0xff]
    %v4281 = vld [vmem:[#allocation2 + $0xf1] sm:$0xff]
    %v4282 = vld [vmem:[#allocation2 + $0x101] sm:$0xff]
    %v4283 = vld [vmem:[#allocation2 + $0x111] sm:$0xff]
    %v4284 = vpack.c.bf16 %v4269, %v4268
    %v4285 = vpack.c.bf16 %v4271, %v4270
    %v4286 = vpack.c.bf16 %v4273, %v4272
    %v4287 = vpack.c.bf16 %v4275, %v4274
    %v4288 = vpack.c.bf16 %v4277, %v4276
    %v4289 = vpack.c.bf16 %v4279, %v4278
    %v4290 = vpack.c.bf16 %v4281, %v4280
    %v4291 = vpack.c.bf16 %v4283, %v4282
    %s4292 = scalar_lea.vmem %s3, 64
    %v4293 = vld [vmem:[%s4292] sm:$0xf]
    %v4294 = vld [vmem:[%s4292 + $0x4] sm:$0xf]
    %v4295 = vld [vmem:[%s4292 + $0x8] sm:$0xf]
    %v4296 = vld [vmem:[%s4292 + $0xc] sm:$0xf]
    %v4297 = vld [vmem:[%s4292 + $0x10] sm:$0xf]
    %v4298 = vld [vmem:[%s4292 + $0x14] sm:$0xf]
    %v4299 = vld [vmem:[%s4292 + $0x18] sm:$0xf]
    %v4300 = vld [vmem:[%s4292 + $0x1c] sm:$0xf]
    %v4301 = vld [vmem:[%s4292 + $0x20] sm:$0xf]
    %v4302 = vld [vmem:[%s4292 + $0x24] sm:$0xf]
    %v4303 = vld [vmem:[%s4292 + $0x28] sm:$0xf]
    %v4304 = vld [vmem:[%s4292 + $0x2c] sm:$0xf]
    %v4305 = vld [vmem:[%s4292 + $0x30] sm:$0xf]
    %v4306 = vld [vmem:[%s4292 + $0x34] sm:$0xf]
    %v4307 = vld [vmem:[%s4292 + $0x38] sm:$0xf]
    %v4308 = vld [vmem:[%s4292 + $0x3c] sm:$0xf]
    %v4325 = vunpack.c.l.b16 %v4293
    %v4326 = vunpack.c.l.b16 %v4294
    %v4327 = vunpack.c.l.b16 %v4295
    %v4328 = vunpack.c.l.b16 %v4296
    %v4329 = vunpack.c.l.b16 %v4297
    %v4330 = vunpack.c.l.b16 %v4298
    %v4331 = vunpack.c.l.b16 %v4299
    %v4332 = vunpack.c.l.b16 %v4300
    %v4333 = vunpack.c.l.b16 %v4301
    %v4334 = vunpack.c.l.b16 %v4302
    %v4335 = vunpack.c.l.b16 %v4303
    %v4336 = vunpack.c.l.b16 %v4304
    %v4337 = vunpack.c.l.b16 %v4305
    %v4338 = vunpack.c.l.b16 %v4306
    %v4339 = vunpack.c.l.b16 %v4307
    %v4340 = vunpack.c.l.b16 %v4308
    %v4341 = vpack.c.b16 %v4326, %v4325
    %v4342 = vpack.c.b16 %v4328, %v4327
    %v4343 = vpack.c.b16 %v4330, %v4329
    %v4344 = vpack.c.b16 %v4332, %v4331
    %v4345 = vpack.c.b16 %v4334, %v4333
    %v4346 = vpack.c.b16 %v4336, %v4335
    %v4347 = vpack.c.b16 %v4338, %v4337
    %v4348 = vpack.c.b16 %v4340, %v4339
    %4357 = vmatprep.subr.bf16.mxu0 0
    %4358 = vmatpush1.bf16.msra.mxu0 %v4341
    %4359 = vmatprep.subr.bf16.mxu0 0
    %4360 = vmatpush1.bf16.msra.mxu0 %v4342
    %4361 = vmatprep.subr.bf16.mxu0 0
    %4362 = vmatpush1.bf16.msra.mxu0 %v4343
    %4363 = vmatprep.subr.bf16.mxu0 0
    %4364 = vmatpush1.bf16.msra.mxu0 %v4344
    %4365 = vmatprep.subr.bf16.mxu0 0
    %4366 = vmatpush1.bf16.msra.mxu0 %v4345
    %4367 = vmatprep.subr.bf16.mxu0 0
    %4368 = vmatpush1.bf16.msra.mxu0 %v4346
    %4369 = vmatprep.subr.bf16.mxu0 0
    %4370 = vmatpush1.bf16.msra.mxu0 %v4347
    %4371 = vmatprep.subr.bf16.mxu0 0
    %4372 = vmatpush1.bf16.msra.mxu0 %v4348
    %4373 = vmatprep.subr.bf16.mxu0 0
    %4374 = vmatpush1.bf16.msra.mxu0 0
    %4375 = vmatprep.subr.bf16.mxu0 0
    %4376 = vmatpush1.bf16.msra.mxu0 0
    %4377 = vmatprep.subr.bf16.mxu0 0
    %4378 = vmatpush1.bf16.msra.mxu0 0
    %4379 = vmatprep.subr.bf16.mxu0 0
    %4380 = vmatpush1.bf16.msra.mxu0 0
    %4381 = vmatprep.subr.bf16.mxu0 0
    %4382 = vmatpush1.bf16.msra.mxu0 0
    %4383 = vmatprep.subr.bf16.mxu0 0
    %4384 = vmatpush1.bf16.msra.mxu0 0
    %4385 = vmatprep.subr.bf16.mxu0 0
    %4386 = vmatpush1.bf16.msra.mxu0 0
    %4387 = vmatprep.subr.bf16.mxu0 0
    %4388 = vmatpush1.bf16.msra.mxu0 0
    %4389 = vmatprep.mubr.bf16.mxu0 0
    %4390 = vmatmul.mubr.bf16.gmra.mrb[0].mxu0 %v4284
    %v4391 = vpop.f32.mrb[0].mxu0
    %v4392 = vadd.f32 0.0, %v4391
    %v4393 = vpop.f32.mrb[0].mxu0
    %v4394 = vpop.f32.mrb[0].mxu0
    %v4395 = vadd.f32 0.0, %v4394
    %v4396 = vpop.f32.mrb[0].mxu0
    %4397 = vmatprep.mubr.bf16.mxu0 0
    %4398 = vmatmul.mubr.bf16.gmra.mrb[0].mxu0 %v4285
    %v4399 = vpop.f32.mrb[0].mxu0
    %v4400 = vadd.f32 0.0, %v4399
    %v4401 = vpop.f32.mrb[0].mxu0
    %v4402 = vpop.f32.mrb[0].mxu0
    %v4403 = vadd.f32 0.0, %v4402
    %v4404 = vpop.f32.mrb[0].mxu0
    %4405 = vmatprep.mubr.bf16.mxu0 0
    %4406 = vmatmul.mubr.bf16.gmra.mrb[0].mxu0 %v4286
    %v4407 = vpop.f32.mrb[0].mxu0
    %v4408 = vadd.f32 0.0, %v4407
    %v4409 = vpop.f32.mrb[0].mxu0
    %v4410 = vpop.f32.mrb[0].mxu0
    %v4411 = vadd.f32 0.0, %v4410
    %v4412 = vpop.f32.mrb[0].mxu0
    %4413 = vmatprep.mubr.bf16.mxu0 0
    %4414 = vmatmul.mubr.bf16.gmra.mrb[0].mxu0 %v4287
    %v4415 = vpop.f32.mrb[0].mxu0
    %v4416 = vadd.f32 0.0, %v4415
    %v4417 = vpop.f32.mrb[0].mxu0
    %v4418 = vpop.f32.mrb[0].mxu0
    %v4419 = vadd.f32 0.0, %v4418
    %v4420 = vpop.f32.mrb[0].mxu0
    %4421 = vmatprep.mubr.bf16.mxu0 0
    %4422 = vmatmul.mubr.bf16.gmra.mrb[0].mxu0 %v4288
    %v4423 = vpop.f32.mrb[0].mxu0
    %v4424 = vadd.f32 0.0, %v4423
    %v4425 = vpop.f32.mrb[0].mxu0
    %v4426 = vpop.f32.mrb[0].mxu0
    %v4427 = vadd.f32 0.0, %v4426
    %v4428 = vpop.f32.mrb[0].mxu0
    %4429 = vmatprep.mubr.bf16.mxu0 0
    %4430 = vmatmul.mubr.bf16.gmra.mrb[0].mxu0 %v4289
    %v4431 = vpop.f32.mrb[0].mxu0
    %v4432 = vadd.f32 0.0, %v4431
    %v4433 = vpop.f32.mrb[0].mxu0
    %v4434 = vpop.f32.mrb[0].mxu0
    %v4435 = vadd.f32 0.0, %v4434
    %v4436 = vpop.f32.mrb[0].mxu0
    %4437 = vmatprep.mubr.bf16.mxu0 0
    %4438 = vmatmul.mubr.bf16.gmra.mrb[0].mxu0 %v4290
    %v4439 = vpop.f32.mrb[0].mxu0
    %v4440 = vadd.f32 0.0, %v4439
    %v4441 = vpop.f32.mrb[0].mxu0
    %v4442 = vpop.f32.mrb[0].mxu0
    %v4443 = vadd.f32 0.0, %v4442
    %v4444 = vpop.f32.mrb[0].mxu0
    %4445 = vmatprep.mubr.bf16.mxu0 0
    %4446 = vmatmul.mubr.bf16.gmra.mrb[0].mxu0 %v4291
    %v4447 = vpop.f32.mrb[0].mxu0
    %v4448 = vadd.f32 0.0, %v4447
    %v4449 = vpop.f32.mrb[0].mxu0
    %v4450 = vpop.f32.mrb[0].mxu0
    %v4451 = vadd.f32 0.0, %v4450
    %v4452 = vpop.f32.mrb[0].mxu0
    %4453 = vdwg.mxu0
    %v4470 = vunpack.c.l.b16 %v4252
    %v4471 = vunpack.c.l.b16 %v4253
    %v4472 = vunpack.c.l.b16 %v4254
    %v4473 = vunpack.c.l.b16 %v4255
    %v4474 = vunpack.c.l.b16 %v4256
    %v4475 = vunpack.c.l.b16 %v4257
    %v4476 = vunpack.c.l.b16 %v4258
    %v4477 = vunpack.c.l.b16 %v4259
    %v4478 = vunpack.c.l.b16 %v4260
    %v4479 = vunpack.c.l.b16 %v4261
    %v4480 = vunpack.c.l.b16 %v4262
    %v4481 = vunpack.c.l.b16 %v4263
    %v4482 = vunpack.c.l.b16 %v4264
    %v4483 = vunpack.c.l.b16 %v4265
    %v4484 = vunpack.c.l.b16 %v4266
    %v4485 = vunpack.c.l.b16 %v4267
    %v4486 = vpack.c.b16 %v4471, %v4470
    %v4487 = vpack.c.b16 %v4473, %v4472
    %v4488 = vpack.c.b16 %v4475, %v4474
    %v4489 = vpack.c.b16 %v4477, %v4476
    %v4490 = vpack.c.b16 %v4479, %v4478
    %v4491 = vpack.c.b16 %v4481, %v4480
    %v4492 = vpack.c.b16 %v4483, %v4482
    %v4493 = vpack.c.b16 %v4485, %v4484
    %4502 = vmatprep.subr.bf16.mxu0 0
    %4503 = vmatpush1.bf16.msra.mxu0 %v4486
    %4504 = vmatprep.subr.bf16.mxu0 0
    %4505 = vmatpush1.bf16.msra.mxu0 %v4487
    %4506 = vmatprep.subr.bf16.mxu0 0
    %4507 = vmatpush1.bf16.msra.mxu0 %v4488
    %4508 = vmatprep.subr.bf16.mxu0 0
    %4509 = vmatpush1.bf16.msra.mxu0 %v4489
    %4510 = vmatprep.subr.bf16.mxu0 0
    %4511 = vmatpush1.bf16.msra.mxu0 %v4490
    %4512 = vmatprep.subr.bf16.mxu0 0
    %4513 = vmatpush1.bf16.msra.mxu0 %v4491
    %4514 = vmatprep.subr.bf16.mxu0 0
    %4515 = vmatpush1.bf16.msra.mxu0 %v4492
    %4516 = vmatprep.subr.bf16.mxu0 0
    %4517 = vmatpush1.bf16.msra.mxu0 %v4493
    %4518 = vmatprep.subr.bf16.mxu0 0
    %4519 = vmatpush1.bf16.msra.mxu0 0
    %4520 = vmatprep.subr.bf16.mxu0 0
    %4521 = vmatpush1.bf16.msra.mxu0 0
    %4522 = vmatprep.subr.bf16.mxu0 0
    %4523 = vmatpush1.bf16.msra.mxu0 0
    %4524 = vmatprep.subr.bf16.mxu0 0
    %4525 = vmatpush1.bf16.msra.mxu0 0
    %4526 = vmatprep.subr.bf16.mxu0 0
    %4527 = vmatpush1.bf16.msra.mxu0 0
    %4528 = vmatprep.subr.bf16.mxu0 0
    %4529 = vmatpush1.bf16.msra.mxu0 0
    %4530 = vmatprep.subr.bf16.mxu0 0
    %4531 = vmatpush1.bf16.msra.mxu0 0
    %4532 = vmatprep.subr.bf16.mxu0 0
    %4533 = vmatpush1.bf16.msra.mxu0 0
    %4534 = vmatprep.mubr.bf16.mxu0 0
    %4535 = vmatmul.mubr.bf16.gmra.mrb[0].mxu0 %v4244
    %v4536 = vpop.f32.mrb[0].mxu0
    %v4537 = vadd.f32 %v4392, %v4536
    %v4538 = vpop.f32.mrb[0].mxu0
    %v4539 = vpop.f32.mrb[0].mxu0
    %v4540 = vadd.f32 %v4395, %v4539
    %v4541 = vpop.f32.mrb[0].mxu0
    %4542 = vmatprep.mubr.bf16.mxu0 0
    %4543 = vmatmul.mubr.bf16.gmra.mrb[0].mxu0 %v4245
    %v4544 = vpop.f32.mrb[0].mxu0
    %v4545 = vadd.f32 %v4400, %v4544
    %v4546 = vpop.f32.mrb[0].mxu0
    %v4547 = vpop.f32.mrb[0].mxu0
    %v4548 = vadd.f32 %v4403, %v4547
    %v4549 = vpop.f32.mrb[0].mxu0
    %4550 = vmatprep.mubr.bf16.mxu0 0
    %4551 = vmatmul.mubr.bf16.gmra.mrb[0].mxu0 %v4246
    %v4552 = vpop.f32.mrb[0].mxu0
    %v4553 = vadd.f32 %v4408, %v4552
    %v4554 = vpop.f32.mrb[0].mxu0
    %v4555 = vpop.f32.mrb[0].mxu0
    %v4556 = vadd.f32 %v4411, %v4555
    %v4557 = vpop.f32.mrb[0].mxu0
    %4558 = vmatprep.mubr.bf16.mxu0 0
    %4559 = vmatmul.mubr.bf16.gmra.mrb[0].mxu0 %v4247
    %v4560 = vpop.f32.mrb[0].mxu0
    %v4561 = vadd.f32 %v4416, %v4560
    %v4562 = vpop.f32.mrb[0].mxu0
    %v4563 = vpop.f32.mrb[0].mxu0
    %v4564 = vadd.f32 %v4419, %v4563
    %v4565 = vpop.f32.mrb[0].mxu0
    %4566 = vmatprep.mubr.bf16.mxu0 0
    %4567 = vmatmul.mubr.bf16.gmra.mrb[0].mxu0 %v4248
    %v4568 = vpop.f32.mrb[0].mxu0
    %v4569 = vadd.f32 %v4424, %v4568
    %v4570 = vpop.f32.mrb[0].mxu0
    %v4571 = vpop.f32.mrb[0].mxu0
    %v4572 = vadd.f32 %v4427, %v4571
    %v4573 = vpop.f32.mrb[0].mxu0
    %4574 = vmatprep.mubr.bf16.mxu0 0
    %4575 = vmatmul.mubr.bf16.gmra.mrb[0].mxu0 %v4249
    %v4576 = vpop.f32.mrb[0].mxu0
    %v4577 = vadd.f32 %v4432, %v4576
    %v4578 = vpop.f32.mrb[0].mxu0
    %v4579 = vpop.f32.mrb[0].mxu0
    %v4580 = vadd.f32 %v4435, %v4579
    %v4581 = vpop.f32.mrb[0].mxu0
    %4582 = vmatprep.mubr.bf16.mxu0 0
    %4583 = vmatmul.mubr.bf16.gmra.mrb[0].mxu0 %v4250
    %v4584 = vpop.f32.mrb[0].mxu0
    %v4585 = vadd.f32 %v4440, %v4584
    %v4586 = vpop.f32.mrb[0].mxu0
    %v4587 = vpop.f32.mrb[0].mxu0
    %v4588 = vadd.f32 %v4443, %v4587
    %v4589 = vpop.f32.mrb[0].mxu0
    %4590 = vmatprep.mubr.bf16.mxu0 0
    %4591 = vmatmul.mubr.bf16.gmra.mrb[0].mxu0 %v4251
    %v4592 = vpop.f32.mrb[0].mxu0
    %v4593 = vadd.f32 %v4448, %v4592
    %v4594 = vpop.f32.mrb[0].mxu0
    %v4595 = vpop.f32.mrb[0].mxu0
    %v4596 = vadd.f32 %v4451, %v4595
    %v4597 = vpop.f32.mrb[0].mxu0
    %4598 = vdwg.mxu0
    %v4599 = vld [vmem:[#allocation2 + $0x2] sm:$0xff]
    %v4600 = vld [vmem:[#allocation2 + $0x12] sm:$0xff]
    %v4601 = vld [vmem:[#allocation2 + $0x22] sm:$0xff]
    %v4602 = vld [vmem:[#allocation2 + $0x32] sm:$0xff]
    %v4603 = vld [vmem:[#allocation2 + $0x42] sm:$0xff]
    %v4604 = vld [vmem:[#allocation2 + $0x52] sm:$0xff]
    %v4605 = vld [vmem:[#allocation2 + $0x62] sm:$0xff]
    %v4606 = vld [vmem:[#allocation2 + $0x72] sm:$0xff]
    %v4607 = vld [vmem:[#allocation2 + $0xa2] sm:$0xff]
    %v4608 = vld [vmem:[#allocation2 + $0xb2] sm:$0xff]
    %v4609 = vld [vmem:[#allocation2 + $0xc2] sm:$0xff]
    %v4610 = vld [vmem:[#allocation2 + $0xd2] sm:$0xff]
    %v4611 = vld [vmem:[#allocation2 + $0xe2] sm:$0xff]
    %v4612 = vld [vmem:[#allocation2 + $0xf2] sm:$0xff]
    %v4613 = vld [vmem:[#allocation2 + $0x102] sm:$0xff]
    %v4614 = vld [vmem:[#allocation2 + $0x112] sm:$0xff]
    %v4615 = vpack.c.bf16 %v4600, %v4599
    %v4616 = vpack.c.bf16 %v4602, %v4601
    %v4617 = vpack.c.bf16 %v4604, %v4603
    %v4618 = vpack.c.bf16 %v4606, %v4605
    %v4619 = vpack.c.bf16 %v4608, %v4607
    %v4620 = vpack.c.bf16 %v4610, %v4609
    %v4621 = vpack.c.bf16 %v4612, %v4611
    %v4622 = vpack.c.bf16 %v4614, %v4613
    %s4623 = scalar_lea.vmem %s3, 128
    %v4624 = vld [vmem:[%s4623] sm:$0xf]
    %v4625 = vld [vmem:[%s4623 + $0x4] sm:$0xf]
    %v4626 = vld [vmem:[%s4623 + $0x8] sm:$0xf]
    %v4627 = vld [vmem:[%s4623 + $0xc] sm:$0xf]
    %v4628 = vld [vmem:[%s4623 + $0x10] sm:$0xf]
    %v4629 = vld [vmem:[%s4623 + $0x14] sm:$0xf]
    %v4630 = vld [vmem:[%s4623 + $0x18] sm:$0xf]
    %v4631 = vld [vmem:[%s4623 + $0x1c] sm:$0xf]
    %v4632 = vld [vmem:[%s4623 + $0x20] sm:$0xf]
    %v4633 = vld [vmem:[%s4623 + $0x24] sm:$0xf]
    %v4634 = vld [vmem:[%s4623 + $0x28] sm:$0xf]
    %v4635 = vld [vmem:[%s4623 + $0x2c] sm:$0xf]
    %v4636 = vld [vmem:[%s4623 + $0x30] sm:$0xf]
    %v4637 = vld [vmem:[%s4623 + $0x34] sm:$0xf]
    %v4638 = vld [vmem:[%s4623 + $0x38] sm:$0xf]
    %v4639 = vld [vmem:[%s4623 + $0x3c] sm:$0xf]
    %v4656 = vunpack.c.l.b16 %v4624
    %v4657 = vunpack.c.l.b16 %v4625
    %v4658 = vunpack.c.l.b16 %v4626
    %v4659 = vunpack.c.l.b16 %v4627
    %v4660 = vunpack.c.l.b16 %v4628
    %v4661 = vunpack.c.l.b16 %v4629
    %v4662 = vunpack.c.l.b16 %v4630
    %v4663 = vunpack.c.l.b16 %v4631
    %v4664 = vunpack.c.l.b16 %v4632
    %v4665 = vunpack.c.l.b16 %v4633
    %v4666 = vunpack.c.l.b16 %v4634
    %v4667 = vunpack.c.l.b16 %v4635
    %v4668 = vunpack.c.l.b16 %v4636
    %v4669 = vunpack.c.l.b16 %v4637
    %v4670 = vunpack.c.l.b16 %v4638
    %v4671 = vunpack.c.l.b16 %v4639
    %v4672 = vpack.c.b16 %v4657, %v4656
    %v4673 = vpack.c.b16 %v4659, %v4658
    %v4674 = vpack.c.b16 %v4661, %v4660
    %v4675 = vpack.c.b16 %v4663, %v4662
    %v4676 = vpack.c.b16 %v4665, %v4664
    %v4677 = vpack.c.b16 %v4667, %v4666
    %v4678 = vpack.c.b16 %v4669, %v4668
    %v4679 = vpack.c.b16 %v4671, %v4670
    %4688 = vmatprep.subr.bf16.mxu0 0
    %4689 = vmatpush1.bf16.msra.mxu0 %v4672
    %4690 = vmatprep.subr.bf16.mxu0 0
    %4691 = vmatpush1.bf16.msra.mxu0 %v4673
    %4692 = vmatprep.subr.bf16.mxu0 0
    %4693 = vmatpush1.bf16.msra.mxu0 %v4674
    %4694 = vmatprep.subr.bf16.mxu0 0
    %4695 = vmatpush1.bf16.msra.mxu0 %v4675
    %4696 = vmatprep.subr.bf16.mxu0 0
    %4697 = vmatpush1.bf16.msra.mxu0 %v4676
    %4698 = vmatprep.subr.bf16.mxu0 0
    %4699 = vmatpush1.bf16.msra.mxu0 %v4677
    %4700 = vmatprep.subr.bf16.mxu0 0
    %4701 = vmatpush1.bf16.msra.mxu0 %v4678
    %4702 = vmatprep.subr.bf16.mxu0 0
    %4703 = vmatpush1.bf16.msra.mxu0 %v4679
    %4704 = vmatprep.subr.bf16.mxu0 0
    %4705 = vmatpush1.bf16.msra.mxu0 0
    %4706 = vmatprep.subr.bf16.mxu0 0
    %4707 = vmatpush1.bf16.msra.mxu0 0
    %4708 = vmatprep.subr.bf16.mxu0 0
    %4709 = vmatpush1.bf16.msra.mxu0 0
    %4710 = vmatprep.subr.bf16.mxu0 0
    %4711 = vmatpush1.bf16.msra.mxu0 0
    %4712 = vmatprep.subr.bf16.mxu0 0
    %4713 = vmatpush1.bf16.msra.mxu0 0
    %4714 = vmatprep.subr.bf16.mxu0 0
    %4715 = vmatpush1.bf16.msra.mxu0 0
    %4716 = vmatprep.subr.bf16.mxu0 0
    %4717 = vmatpush1.bf16.msra.mxu0 0
    %4718 = vmatprep.subr.bf16.mxu0 0
    %4719 = vmatpush1.bf16.msra.mxu0 0
    %4720 = vmatprep.mubr.bf16.mxu0 0
    %4721 = vmatmul.mubr.bf16.gmra.mrb[0].mxu0 %v4615
    %v4722 = vpop.f32.mrb[0].mxu0
    %v4723 = vadd.f32 0.0, %v4722
    %v4724 = vpop.f32.mrb[0].mxu0
    %v4725 = vpop.f32.mrb[0].mxu0
    %v4726 = vadd.f32 0.0, %v4725
    %v4727 = vpop.f32.mrb[0].mxu0
    %4728 = vmatprep.mubr.bf16.mxu0 0
    %4729 = vmatmul.mubr.bf16.gmra.mrb[0].mxu0 %v4616
    %v4730 = vpop.f32.mrb[0].mxu0
    %v4731 = vadd.f32 0.0, %v4730
    %v4732 = vpop.f32.mrb[0].mxu0
    %v4733 = vpop.f32.mrb[0].mxu0
    %v4734 = vadd.f32 0.0, %v4733
    %v4735 = vpop.f32.mrb[0].mxu0
    %4736 = vmatprep.mubr.bf16.mxu0 0
    %4737 = vmatmul.mubr.bf16.gmra.mrb[0].mxu0 %v4617
    %v4738 = vpop.f32.mrb[0].mxu0
    %v4739 = vadd.f32 0.0, %v4738
    %v4740 = vpop.f32.mrb[0].mxu0
    %v4741 = vpop.f32.mrb[0].mxu0
    %v4742 = vadd.f32 0.0, %v4741
    %v4743 = vpop.f32.mrb[0].mxu0
    %4744 = vmatprep.mubr.bf16.mxu0 0
    %4745 = vmatmul.mubr.bf16.gmra.mrb[0].mxu0 %v4618
    %v4746 = vpop.f32.mrb[0].mxu0
    %v4747 = vadd.f32 0.0, %v4746
    %v4748 = vpop.f32.mrb[0].mxu0
    %v4749 = vpop.f32.mrb[0].mxu0
    %v4750 = vadd.f32 0.0, %v4749
    %v4751 = vpop.f32.mrb[0].mxu0
    %4752 = vmatprep.mubr.bf16.mxu0 0
    %4753 = vmatmul.mubr.bf16.gmra.mrb[0].mxu0 %v4619
    %v4754 = vpop.f32.mrb[0].mxu0
    %v4755 = vadd.f32 0.0, %v4754
    %v4756 = vpop.f32.mrb[0].mxu0
    %v4757 = vpop.f32.mrb[0].mxu0
    %v4758 = vadd.f32 0.0, %v4757
    %v4759 = vpop.f32.mrb[0].mxu0
    %4760 = vmatprep.mubr.bf16.mxu0 0
    %4761 = vmatmul.mubr.bf16.gmra.mrb[0].mxu0 %v4620
    %v4762 = vpop.f32.mrb[0].mxu0
    %v4763 = vadd.f32 0.0, %v4762
    %v4764 = vpop.f32.mrb[0].mxu0
    %v4765 = vpop.f32.mrb[0].mxu0
    %v4766 = vadd.f32 0.0, %v4765
    %v4767 = vpop.f32.mrb[0].mxu0
    %4768 = vmatprep.mubr.bf16.mxu0 0
    %4769 = vmatmul.mubr.bf16.gmra.mrb[0].mxu0 %v4621
    %v4770 = vpop.f32.mrb[0].mxu0
    %v4771 = vadd.f32 0.0, %v4770
    %v4772 = vpop.f32.mrb[0].mxu0
    %v4773 = vpop.f32.mrb[0].mxu0
    %v4774 = vadd.f32 0.0, %v4773
    %v4775 = vpop.f32.mrb[0].mxu0
    %4776 = vmatprep.mubr.bf16.mxu0 0
    %4777 = vmatmul.mubr.bf16.gmra.mrb[0].mxu0 %v4622
    %v4778 = vpop.f32.mrb[0].mxu0
    %v4779 = vadd.f32 0.0, %v4778
    %v4780 = vpop.f32.mrb[0].mxu0
    %v4781 = vpop.f32.mrb[0].mxu0
    %v4782 = vadd.f32 0.0, %v4781
    %v4783 = vpop.f32.mrb[0].mxu0
    %4784 = vdwg.mxu0
    %v4785 = vadd.f32 %v4537, %v4723
    %v4786 = vadd.f32 %v4540, %v4726
    %v4787 = vadd.f32 %v4545, %v4731
    %v4788 = vadd.f32 %v4548, %v4734
    %v4789 = vadd.f32 %v4553, %v4739
    %v4790 = vadd.f32 %v4556, %v4742
    %v4791 = vadd.f32 %v4561, %v4747
    %v4792 = vadd.f32 %v4564, %v4750
    %v4793 = vadd.f32 %v4569, %v4755
    %v4794 = vadd.f32 %v4572, %v4758
    %v4795 = vadd.f32 %v4577, %v4763
    %v4796 = vadd.f32 %v4580, %v4766
    %v4797 = vadd.f32 %v4585, %v4771
    %v4798 = vadd.f32 %v4588, %v4774
    %v4799 = vadd.f32 %v4593, %v4779
    %v4800 = vadd.f32 %v4596, %v4782
    %v4801 = vld [vmem:[%s4211] sm:$0xff]
    %v4802 = vld [vmem:[%s4211 + $0x10] sm:$0xff]
    %v4803 = vld [vmem:[%s4211 + $0x20] sm:$0xff]
    %v4804 = vld [vmem:[%s4211 + $0x30] sm:$0xff]
    %v4805 = vld [vmem:[%s4211 + $0x40] sm:$0xff]
    %v4806 = vld [vmem:[%s4211 + $0x50] sm:$0xff]
    %v4807 = vld [vmem:[%s4211 + $0x60] sm:$0xff]
    %v4808 = vld [vmem:[%s4211 + $0x70] sm:$0xff]
    %v4809 = vld [vmem:[%s4211 + $0xa0] sm:$0xff]
    %v4810 = vld [vmem:[%s4211 + $0xb0] sm:$0xff]
    %v4811 = vld [vmem:[%s4211 + $0xc0] sm:$0xff]
    %v4812 = vld [vmem:[%s4211 + $0xd0] sm:$0xff]
    %v4813 = vld [vmem:[%s4211 + $0xe0] sm:$0xff]
    %v4814 = vld [vmem:[%s4211 + $0xf0] sm:$0xff]
    %v4815 = vld [vmem:[%s4211 + $0x100] sm:$0xff]
    %v4816 = vld [vmem:[%s4211 + $0x110] sm:$0xff]
    %v4817 = vpack.c.bf16 %v4802, %v4801
    %v4818 = vpack.c.bf16 %v4804, %v4803
    %v4819 = vpack.c.bf16 %v4806, %v4805
    %v4820 = vpack.c.bf16 %v4808, %v4807
    %v4821 = vpack.c.bf16 %v4810, %v4809
    %v4822 = vpack.c.bf16 %v4812, %v4811
    %v4823 = vpack.c.bf16 %v4814, %v4813
    %v4824 = vpack.c.bf16 %v4816, %v4815
    %s4825 = scalar_lea.vmem %s3, 192
    %v4826 = vld [vmem:[%s4825] sm:$0xf]
    %v4827 = vld [vmem:[%s4825 + $0x4] sm:$0xf]
    %v4828 = vld [vmem:[%s4825 + $0x8] sm:$0xf]
    %v4829 = vld [vmem:[%s4825 + $0xc] sm:$0xf]
    %v4830 = vld [vmem:[%s4825 + $0x10] sm:$0xf]
    %v4831 = vld [vmem:[%s4825 + $0x14] sm:$0xf]
    %v4832 = vld [vmem:[%s4825 + $0x18] sm:$0xf]
    %v4833 = vld [vmem:[%s4825 + $0x1c] sm:$0xf]
    %v4834 = vld [vmem:[%s4825 + $0x20] sm:$0xf]
    %v4835 = vld [vmem:[%s4825 + $0x24] sm:$0xf]
    %v4836 = vld [vmem:[%s4825 + $0x28] sm:$0xf]
    %v4837 = vld [vmem:[%s4825 + $0x2c] sm:$0xf]
    %v4838 = vld [vmem:[%s4825 + $0x30] sm:$0xf]
    %v4839 = vld [vmem:[%s4825 + $0x34] sm:$0xf]
    %v4840 = vld [vmem:[%s4825 + $0x38] sm:$0xf]
    %v4841 = vld [vmem:[%s4825 + $0x3c] sm:$0xf]
    %v4858 = vunpack.c.l.b16 %v4826
    %v4859 = vunpack.c.l.b16 %v4827
    %v4860 = vunpack.c.l.b16 %v4828
    %v4861 = vunpack.c.l.b16 %v4829
    %v4862 = vunpack.c.l.b16 %v4830
    %v4863 = vunpack.c.l.b16 %v4831
    %v4864 = vunpack.c.l.b16 %v4832
    %v4865 = vunpack.c.l.b16 %v4833
    %v4866 = vunpack.c.l.b16 %v4834
    %v4867 = vunpack.c.l.b16 %v4835
    %v4868 = vunpack.c.l.b16 %v4836
    %v4869 = vunpack.c.l.b16 %v4837
    %v4870 = vunpack.c.l.b16 %v4838
    %v4871 = vunpack.c.l.b16 %v4839
    %v4872 = vunpack.c.l.b16 %v4840
    %v4873 = vunpack.c.l.b16 %v4841
    %v4874 = vpack.c.b16 %v4859, %v4858
    %v4875 = vpack.c.b16 %v4861, %v4860
    %v4876 = vpack.c.b16 %v4863, %v4862
    %v4877 = vpack.c.b16 %v4865, %v4864
    %v4878 = vpack.c.b16 %v4867, %v4866
    %v4879 = vpack.c.b16 %v4869, %v4868
    %v4880 = vpack.c.b16 %v4871, %v4870
    %v4881 = vpack.c.b16 %v4873, %v4872
    %4890 = vmatprep.subr.bf16.mxu0 0
    %4891 = vmatpush1.bf16.msra.mxu0 %v4874
    %4892 = vmatprep.subr.bf16.mxu0 0
    %4893 = vmatpush1.bf16.msra.mxu0 %v4875
    %4894 = vmatprep.subr.bf16.mxu0 0
    %4895 = vmatpush1.bf16.msra.mxu0 %v4876
    %4896 = vmatprep.subr.bf16.mxu0 0
    %4897 = vmatpush1.bf16.msra.mxu0 %v4877
    %4898 = vmatprep.subr.bf16.mxu0 0
    %4899 = vmatpush1.bf16.msra.mxu0 %v4878
    %4900 = vmatprep.subr.bf16.mxu0 0
    %4901 = vmatpush1.bf16.msra.mxu0 %v4879
    %4902 = vmatprep.subr.bf16.mxu0 0
    %4903 = vmatpush1.bf16.msra.mxu0 %v4880
    %4904 = vmatprep.subr.bf16.mxu0 0
    %4905 = vmatpush1.bf16.msra.mxu0 %v4881
    %4906 = vmatprep.subr.bf16.mxu0 0
    %4907 = vmatpush1.bf16.msra.mxu0 0
    %4908 = vmatprep.subr.bf16.mxu0 0
    %4909 = vmatpush1.bf16.msra.mxu0 0
    %4910 = vmatprep.subr.bf16.mxu0 0
    %4911 = vmatpush1.bf16.msra.mxu0 0
    %4912 = vmatprep.subr.bf16.mxu0 0
    %4913 = vmatpush1.bf16.msra.mxu0 0
    %4914 = vmatprep.subr.bf16.mxu0 0
    %4915 = vmatpush1.bf16.msra.mxu0 0
    %4916 = vmatprep.subr.bf16.mxu0 0
    %4917 = vmatpush1.bf16.msra.mxu0 0
    %4918 = vmatprep.subr.bf16.mxu0 0
    %4919 = vmatpush1.bf16.msra.mxu0 0
    %4920 = vmatprep.subr.bf16.mxu0 0
    %4921 = vmatpush1.bf16.msra.mxu0 0
    %4922 = vmatprep.mubr.bf16.mxu0 0
    %4923 = vmatmul.mubr.bf16.gmra.mrb[0].mxu0 %v4817
    %v4924 = vpop.f32.mrb[0].mxu0
    %v4925 = vadd.f32 0.0, %v4924
    %v4926 = vpop.f32.mrb[0].mxu0
    %v4927 = vpop.f32.mrb[0].mxu0
    %v4928 = vadd.f32 0.0, %v4927
    %v4929 = vpop.f32.mrb[0].mxu0
    %4930 = vmatprep.mubr.bf16.mxu0 0
    %4931 = vmatmul.mubr.bf16.gmra.mrb[0].mxu0 %v4818
    %v4932 = vpop.f32.mrb[0].mxu0
    %v4933 = vadd.f32 0.0, %v4932
    %v4934 = vpop.f32.mrb[0].mxu0
    %v4935 = vpop.f32.mrb[0].mxu0
    %v4936 = vadd.f32 0.0, %v4935
    %v4937 = vpop.f32.mrb[0].mxu0
    %4938 = vmatprep.mubr.bf16.mxu0 0
    %4939 = vmatmul.mubr.bf16.gmra.mrb[0].mxu0 %v4819
    %v4940 = vpop.f32.mrb[0].mxu0
    %v4941 = vadd.f32 0.0, %v4940
    %v4942 = vpop.f32.mrb[0].mxu0
    %v4943 = vpop.f32.mrb[0].mxu0
    %v4944 = vadd.f32 0.0, %v4943
    %v4945 = vpop.f32.mrb[0].mxu0
    %4946 = vmatprep.mubr.bf16.mxu0 0
    %4947 = vmatmul.mubr.bf16.gmra.mrb[0].mxu0 %v4820
    %v4948 = vpop.f32.mrb[0].mxu0
    %v4949 = vadd.f32 0.0, %v4948
    %v4950 = vpop.f32.mrb[0].mxu0
    %v4951 = vpop.f32.mrb[0].mxu0
    %v4952 = vadd.f32 0.0, %v4951
    %v4953 = vpop.f32.mrb[0].mxu0
    %4954 = vmatprep.mubr.bf16.mxu0 0
    %4955 = vmatmul.mubr.bf16.gmra.mrb[0].mxu0 %v4821
    %v4956 = vpop.f32.mrb[0].mxu0
    %v4957 = vadd.f32 0.0, %v4956
    %v4958 = vpop.f32.mrb[0].mxu0
    %v4959 = vpop.f32.mrb[0].mxu0
    %v4960 = vadd.f32 0.0, %v4959
    %v4961 = vpop.f32.mrb[0].mxu0
    %4962 = vmatprep.mubr.bf16.mxu0 0
    %4963 = vmatmul.mubr.bf16.gmra.mrb[0].mxu0 %v4822
    %v4964 = vpop.f32.mrb[0].mxu0
    %v4965 = vadd.f32 0.0, %v4964
    %v4966 = vpop.f32.mrb[0].mxu0
    %v4967 = vpop.f32.mrb[0].mxu0
    %v4968 = vadd.f32 0.0, %v4967
    %v4969 = vpop.f32.mrb[0].mxu0
    %4970 = vmatprep.mubr.bf16.mxu0 0
    %4971 = vmatmul.mubr.bf16.gmra.mrb[0].mxu0 %v4823
    %v4972 = vpop.f32.mrb[0].mxu0
    %v4973 = vadd.f32 0.0, %v4972
    %v4974 = vpop.f32.mrb[0].mxu0
    %v4975 = vpop.f32.mrb[0].mxu0
    %v4976 = vadd.f32 0.0, %v4975
    %v4977 = vpop.f32.mrb[0].mxu0
    %4978 = vmatprep.mubr.bf16.mxu0 0
    %4979 = vmatmul.mubr.bf16.gmra.mrb[0].mxu0 %v4824
    %v4980 = vpop.f32.mrb[0].mxu0
    %v4981 = vadd.f32 0.0, %v4980
    %v4982 = vpop.f32.mrb[0].mxu0
    %v4983 = vpop.f32.mrb[0].mxu0
    %v4984 = vadd.f32 0.0, %v4983
    %v4985 = vpop.f32.mrb[0].mxu0
    %4986 = vdwg.mxu0
    %v4987 = vadd.f32 %v4785, %v4925
    %v4988 = vadd.f32 %v4786, %v4928
    %v4989 = vadd.f32 %v4787, %v4933
    %v4990 = vadd.f32 %v4788, %v4936
    %v4991 = vadd.f32 %v4789, %v4941
    %v4992 = vadd.f32 %v4790, %v4944
    %v4993 = vadd.f32 %v4791, %v4949
    %v4994 = vadd.f32 %v4792, %v4952
    %v4995 = vadd.f32 %v4793, %v4957
    %v4996 = vadd.f32 %v4794, %v4960
    %v4997 = vadd.f32 %v4795, %v4965
    %v4998 = vadd.f32 %v4796, %v4968
    %v4999 = vadd.f32 %v4797, %v4973
    %v5000 = vadd.f32 %v4798, %v4976
    %v5001 = vadd.f32 %v4799, %v4981
    %v5002 = vadd.f32 %v4800, %v4984
    %v5003 = vld [vmem:[%s4211 + $0x1] sm:$0xff]
    %v5004 = vld [vmem:[%s4211 + $0x11] sm:$0xff]
    %v5005 = vld [vmem:[%s4211 + $0x21] sm:$0xff]
    %v5006 = vld [vmem:[%s4211 + $0x31] sm:$0xff]
    %v5007 = vld [vmem:[%s4211 + $0x41] sm:$0xff]
    %v5008 = vld [vmem:[%s4211 + $0x51] sm:$0xff]
    %v5009 = vld [vmem:[%s4211 + $0x61] sm:$0xff]
    %v5010 = vld [vmem:[%s4211 + $0x71] sm:$0xff]
    %v5011 = vld [vmem:[%s4211 + $0xa1] sm:$0xff]
    %v5012 = vld [vmem:[%s4211 + $0xb1] sm:$0xff]
    %v5013 = vld [vmem:[%s4211 + $0xc1] sm:$0xff]
    %v5014 = vld [vmem:[%s4211 + $0xd1] sm:$0xff]
    %v5015 = vld [vmem:[%s4211 + $0xe1] sm:$0xff]
    %v5016 = vld [vmem:[%s4211 + $0xf1] sm:$0xff]
    %v5017 = vld [vmem:[%s4211 + $0x101] sm:$0xff]
    %v5018 = vld [vmem:[%s4211 + $0x111] sm:$0xff]
    %v5019 = vpack.c.bf16 %v5004, %v5003
    %v5020 = vpack.c.bf16 %v5006, %v5005
    %v5021 = vpack.c.bf16 %v5008, %v5007
    %v5022 = vpack.c.bf16 %v5010, %v5009
    %v5023 = vpack.c.bf16 %v5012, %v5011
    %v5024 = vpack.c.bf16 %v5014, %v5013
    %v5025 = vpack.c.bf16 %v5016, %v5015
    %v5026 = vpack.c.bf16 %v5018, %v5017
    %s5027 = scalar_lea.vmem %s3, 256
    %v5028 = vld [vmem:[%s5027] sm:$0xf]
    %v5029 = vld [vmem:[%s5027 + $0x4] sm:$0xf]
    %v5030 = vld [vmem:[%s5027 + $0x8] sm:$0xf]
    %v5031 = vld [vmem:[%s5027 + $0xc] sm:$0xf]
    %v5032 = vld [vmem:[%s5027 + $0x10] sm:$0xf]
    %v5033 = vld [vmem:[%s5027 + $0x14] sm:$0xf]
    %v5034 = vld [vmem:[%s5027 + $0x18] sm:$0xf]
    %v5035 = vld [vmem:[%s5027 + $0x1c] sm:$0xf]
    %v5036 = vld [vmem:[%s5027 + $0x20] sm:$0xf]
    %v5037 = vld [vmem:[%s5027 + $0x24] sm:$0xf]
    %v5038 = vld [vmem:[%s5027 + $0x28] sm:$0xf]
    %v5039 = vld [vmem:[%s5027 + $0x2c] sm:$0xf]
    %v5040 = vld [vmem:[%s5027 + $0x30] sm:$0xf]
    %v5041 = vld [vmem:[%s5027 + $0x34] sm:$0xf]
    %v5042 = vld [vmem:[%s5027 + $0x38] sm:$0xf]
    %v5043 = vld [vmem:[%s5027 + $0x3c] sm:$0xf]
    %v5060 = vunpack.c.l.b16 %v5028
    %v5061 = vunpack.c.l.b16 %v5029
    %v5062 = vunpack.c.l.b16 %v5030
    %v5063 = vunpack.c.l.b16 %v5031
    %v5064 = vunpack.c.l.b16 %v5032
    %v5065 = vunpack.c.l.b16 %v5033
    %v5066 = vunpack.c.l.b16 %v5034
    %v5067 = vunpack.c.l.b16 %v5035
    %v5068 = vunpack.c.l.b16 %v5036
    %v5069 = vunpack.c.l.b16 %v5037
    %v5070 = vunpack.c.l.b16 %v5038
    %v5071 = vunpack.c.l.b16 %v5039
    %v5072 = vunpack.c.l.b16 %v5040
    %v5073 = vunpack.c.l.b16 %v5041
    %v5074 = vunpack.c.l.b16 %v5042
    %v5075 = vunpack.c.l.b16 %v5043
    %v5076 = vpack.c.b16 %v5061, %v5060
    %v5077 = vpack.c.b16 %v5063, %v5062
    %v5078 = vpack.c.b16 %v5065, %v5064
    %v5079 = vpack.c.b16 %v5067, %v5066
    %v5080 = vpack.c.b16 %v5069, %v5068
    %v5081 = vpack.c.b16 %v5071, %v5070
    %v5082 = vpack.c.b16 %v5073, %v5072
    %v5083 = vpack.c.b16 %v5075, %v5074
    %5092 = vmatprep.subr.bf16.mxu0 0
    %5093 = vmatpush1.bf16.msra.mxu0 %v5076
    %5094 = vmatprep.subr.bf16.mxu0 0
    %5095 = vmatpush1.bf16.msra.mxu0 %v5077
    %5096 = vmatprep.subr.bf16.mxu0 0
    %5097 = vmatpush1.bf16.msra.mxu0 %v5078
    %5098 = vmatprep.subr.bf16.mxu0 0
    %5099 = vmatpush1.bf16.msra.mxu0 %v5079
    %5100 = vmatprep.subr.bf16.mxu0 0
    %5101 = vmatpush1.bf16.msra.mxu0 %v5080
    %5102 = vmatprep.subr.bf16.mxu0 0
    %5103 = vmatpush1.bf16.msra.mxu0 %v5081
    %5104 = vmatprep.subr.bf16.mxu0 0
    %5105 = vmatpush1.bf16.msra.mxu0 %v5082
    %5106 = vmatprep.subr.bf16.mxu0 0
    %5107 = vmatpush1.bf16.msra.mxu0 %v5083
    %5108 = vmatprep.subr.bf16.mxu0 0
    %5109 = vmatpush1.bf16.msra.mxu0 0
    %5110 = vmatprep.subr.bf16.mxu0 0
    %5111 = vmatpush1.bf16.msra.mxu0 0
    %5112 = vmatprep.subr.bf16.mxu0 0
    %5113 = vmatpush1.bf16.msra.mxu0 0
    %5114 = vmatprep.subr.bf16.mxu0 0
    %5115 = vmatpush1.bf16.msra.mxu0 0
    %5116 = vmatprep.subr.bf16.mxu0 0
    %5117 = vmatpush1.bf16.msra.mxu0 0
    %5118 = vmatprep.subr.bf16.mxu0 0
    %5119 = vmatpush1.bf16.msra.mxu0 0
    %5120 = vmatprep.subr.bf16.mxu0 0
    %5121 = vmatpush1.bf16.msra.mxu0 0
    %5122 = vmatprep.subr.bf16.mxu0 0
    %5123 = vmatpush1.bf16.msra.mxu0 0
    %5124 = vmatprep.mubr.bf16.mxu0 0
    %5125 = vmatmul.mubr.bf16.gmra.mrb[0].mxu0 %v5019
    %v5126 = vpop.f32.mrb[0].mxu0
    %v5127 = vadd.f32 0.0, %v5126
    %v5128 = vpop.f32.mrb[0].mxu0
    %v5129 = vpop.f32.mrb[0].mxu0
    %v5130 = vadd.f32 0.0, %v5129
    %v5131 = vpop.f32.mrb[0].mxu0
    %5132 = vmatprep.mubr.bf16.mxu0 0
    %5133 = vmatmul.mubr.bf16.gmra.mrb[0].mxu0 %v5020
    %v5134 = vpop.f32.mrb[0].mxu0
    %v5135 = vadd.f32 0.0, %v5134
    %v5136 = vpop.f32.mrb[0].mxu0
    %v5137 = vpop.f32.mrb[0].mxu0
    %v5138 = vadd.f32 0.0, %v5137
    %v5139 = vpop.f32.mrb[0].mxu0
    %5140 = vmatprep.mubr.bf16.mxu0 0
    %5141 = vmatmul.mubr.bf16.gmra.mrb[0].mxu0 %v5021
    %v5142 = vpop.f32.mrb[0].mxu0
    %v5143 = vadd.f32 0.0, %v5142
    %v5144 = vpop.f32.mrb[0].mxu0
    %v5145 = vpop.f32.mrb[0].mxu0
    %v5146 = vadd.f32 0.0, %v5145
    %v5147 = vpop.f32.mrb[0].mxu0
    %5148 = vmatprep.mubr.bf16.mxu0 0
    %5149 = vmatmul.mubr.bf16.gmra.mrb[0].mxu0 %v5022
    %v5150 = vpop.f32.mrb[0].mxu0
    %v5151 = vadd.f32 0.0, %v5150
    %v5152 = vpop.f32.mrb[0].mxu0
    %v5153 = vpop.f32.mrb[0].mxu0
    %v5154 = vadd.f32 0.0, %v5153
    %v5155 = vpop.f32.mrb[0].mxu0
    %5156 = vmatprep.mubr.bf16.mxu0 0
    %5157 = vmatmul.mubr.bf16.gmra.mrb[0].mxu0 %v5023
    %v5158 = vpop.f32.mrb[0].mxu0
    %v5159 = vadd.f32 0.0, %v5158
    %v5160 = vpop.f32.mrb[0].mxu0
    %v5161 = vpop.f32.mrb[0].mxu0
    %v5162 = vadd.f32 0.0, %v5161
    %v5163 = vpop.f32.mrb[0].mxu0
    %5164 = vmatprep.mubr.bf16.mxu0 0
    %5165 = vmatmul.mubr.bf16.gmra.mrb[0].mxu0 %v5024
    %v5166 = vpop.f32.mrb[0].mxu0
    %v5167 = vadd.f32 0.0, %v5166
    %v5168 = vpop.f32.mrb[0].mxu0
    %v5169 = vpop.f32.mrb[0].mxu0
    %v5170 = vadd.f32 0.0, %v5169
    %v5171 = vpop.f32.mrb[0].mxu0
    %5172 = vmatprep.mubr.bf16.mxu0 0
    %5173 = vmatmul.mubr.bf16.gmra.mrb[0].mxu0 %v5025
    %v5174 = vpop.f32.mrb[0].mxu0
    %v5175 = vadd.f32 0.0, %v5174
    %v5176 = vpop.f32.mrb[0].mxu0
    %v5177 = vpop.f32.mrb[0].mxu0
    %v5178 = vadd.f32 0.0, %v5177
    %v5179 = vpop.f32.mrb[0].mxu0
    %5180 = vmatprep.mubr.bf16.mxu0 0
    %5181 = vmatmul.mubr.bf16.gmra.mrb[0].mxu0 %v5026
    %v5182 = vpop.f32.mrb[0].mxu0
    %v5183 = vadd.f32 0.0, %v5182
    %v5184 = vpop.f32.mrb[0].mxu0
    %v5185 = vpop.f32.mrb[0].mxu0
    %v5186 = vadd.f32 0.0, %v5185
    %v5187 = vpop.f32.mrb[0].mxu0
    %5188 = vdwg.mxu0
    %v5189 = vadd.f32 %v4987, %v5127
    %v5190 = vadd.f32 %v4988, %v5130
    %v5191 = vadd.f32 %v4989, %v5135
    %v5192 = vadd.f32 %v4990, %v5138
    %v5193 = vadd.f32 %v4991, %v5143
    %v5194 = vadd.f32 %v4992, %v5146
    %v5195 = vadd.f32 %v4993, %v5151
    %v5196 = vadd.f32 %v4994, %v5154
    %v5197 = vadd.f32 %v4995, %v5159
    %v5198 = vadd.f32 %v4996, %v5162
    %v5199 = vadd.f32 %v4997, %v5167
    %v5200 = vadd.f32 %v4998, %v5170
    %v5201 = vadd.f32 %v4999, %v5175
    %v5202 = vadd.f32 %v5000, %v5178
    %v5203 = vadd.f32 %v5001, %v5183
    %v5204 = vadd.f32 %v5002, %v5186
    %v5205 = vld [vmem:[%s4211 + $0x2] sm:$0xff]
    %v5206 = vld [vmem:[%s4211 + $0x12] sm:$0xff]
    %v5207 = vld [vmem:[%s4211 + $0x22] sm:$0xff]
    %v5208 = vld [vmem:[%s4211 + $0x32] sm:$0xff]
    %v5209 = vld [vmem:[%s4211 + $0x42] sm:$0xff]
    %v5210 = vld [vmem:[%s4211 + $0x52] sm:$0xff]
    %v5211 = vld [vmem:[%s4211 + $0x62] sm:$0xff]
    %v5212 = vld [vmem:[%s4211 + $0x72] sm:$0xff]
    %v5213 = vld [vmem:[%s4211 + $0xa2] sm:$0xff]
    %v5214 = vld [vmem:[%s4211 + $0xb2] sm:$0xff]
    %v5215 = vld [vmem:[%s4211 + $0xc2] sm:$0xff]
    %v5216 = vld [vmem:[%s4211 + $0xd2] sm:$0xff]
    %v5217 = vld [vmem:[%s4211 + $0xe2] sm:$0xff]
    %v5218 = vld [vmem:[%s4211 + $0xf2] sm:$0xff]
    %v5219 = vld [vmem:[%s4211 + $0x102] sm:$0xff]
    %v5220 = vld [vmem:[%s4211 + $0x112] sm:$0xff]
    %v5221 = vpack.c.bf16 %v5206, %v5205
    %v5222 = vpack.c.bf16 %v5208, %v5207
    %v5223 = vpack.c.bf16 %v5210, %v5209
    %v5224 = vpack.c.bf16 %v5212, %v5211
    %v5225 = vpack.c.bf16 %v5214, %v5213
    %v5226 = vpack.c.bf16 %v5216, %v5215
    %v5227 = vpack.c.bf16 %v5218, %v5217
    %v5228 = vpack.c.bf16 %v5220, %v5219
    %s5229 = scalar_lea.vmem %s3, 320
    %v5230 = vld [vmem:[%s5229] sm:$0xf]
    %v5231 = vld [vmem:[%s5229 + $0x4] sm:$0xf]
    %v5232 = vld [vmem:[%s5229 + $0x8] sm:$0xf]
    %v5233 = vld [vmem:[%s5229 + $0xc] sm:$0xf]
    %v5234 = vld [vmem:[%s5229 + $0x10] sm:$0xf]
    %v5235 = vld [vmem:[%s5229 + $0x14] sm:$0xf]
    %v5236 = vld [vmem:[%s5229 + $0x18] sm:$0xf]
    %v5237 = vld [vmem:[%s5229 + $0x1c] sm:$0xf]
    %v5238 = vld [vmem:[%s5229 + $0x20] sm:$0xf]
    %v5239 = vld [vmem:[%s5229 + $0x24] sm:$0xf]
    %v5240 = vld [vmem:[%s5229 + $0x28] sm:$0xf]
    %v5241 = vld [vmem:[%s5229 + $0x2c] sm:$0xf]
    %v5242 = vld [vmem:[%s5229 + $0x30] sm:$0xf]
    %v5243 = vld [vmem:[%s5229 + $0x34] sm:$0xf]
    %v5244 = vld [vmem:[%s5229 + $0x38] sm:$0xf]
    %v5245 = vld [vmem:[%s5229 + $0x3c] sm:$0xf]
    %v5262 = vunpack.c.l.b16 %v5230
    %v5263 = vunpack.c.l.b16 %v5231
    %v5264 = vunpack.c.l.b16 %v5232
    %v5265 = vunpack.c.l.b16 %v5233
    %v5266 = vunpack.c.l.b16 %v5234
    %v5267 = vunpack.c.l.b16 %v5235
    %v5268 = vunpack.c.l.b16 %v5236
    %v5269 = vunpack.c.l.b16 %v5237
    %v5270 = vunpack.c.l.b16 %v5238
    %v5271 = vunpack.c.l.b16 %v5239
    %v5272 = vunpack.c.l.b16 %v5240
    %v5273 = vunpack.c.l.b16 %v5241
    %v5274 = vunpack.c.l.b16 %v5242
    %v5275 = vunpack.c.l.b16 %v5243
    %v5276 = vunpack.c.l.b16 %v5244
    %v5277 = vunpack.c.l.b16 %v5245
    %v5278 = vpack.c.b16 %v5263, %v5262
    %v5279 = vpack.c.b16 %v5265, %v5264
    %v5280 = vpack.c.b16 %v5267, %v5266
    %v5281 = vpack.c.b16 %v5269, %v5268
    %v5282 = vpack.c.b16 %v5271, %v5270
    %v5283 = vpack.c.b16 %v5273, %v5272
    %v5284 = vpack.c.b16 %v5275, %v5274
    %v5285 = vpack.c.b16 %v5277, %v5276
    %5294 = vmatprep.subr.bf16.mxu0 0
    %5295 = vmatpush1.bf16.msra.mxu0 %v5278
    %5296 = vmatprep.subr.bf16.mxu0 0
    %5297 = vmatpush1.bf16.msra.mxu0 %v5279
    %5298 = vmatprep.subr.bf16.mxu0 0
    %5299 = vmatpush1.bf16.msra.mxu0 %v5280
    %5300 = vmatprep.subr.bf16.mxu0 0
    %5301 = vmatpush1.bf16.msra.mxu0 %v5281
    %5302 = vmatprep.subr.bf16.mxu0 0
    %5303 = vmatpush1.bf16.msra.mxu0 %v5282
    %5304 = vmatprep.subr.bf16.mxu0 0
    %5305 = vmatpush1.bf16.msra.mxu0 %v5283
    %5306 = vmatprep.subr.bf16.mxu0 0
    %5307 = vmatpush1.bf16.msra.mxu0 %v5284
    %5308 = vmatprep.subr.bf16.mxu0 0
    %5309 = vmatpush1.bf16.msra.mxu0 %v5285
    %5310 = vmatprep.subr.bf16.mxu0 0
    %5311 = vmatpush1.bf16.msra.mxu0 0
    %5312 = vmatprep.subr.bf16.mxu0 0
    %5313 = vmatpush1.bf16.msra.mxu0 0
    %5314 = vmatprep.subr.bf16.mxu0 0
    %5315 = vmatpush1.bf16.msra.mxu0 0
    %5316 = vmatprep.subr.bf16.mxu0 0
    %5317 = vmatpush1.bf16.msra.mxu0 0
    %5318 = vmatprep.subr.bf16.mxu0 0
    %5319 = vmatpush1.bf16.msra.mxu0 0
    %5320 = vmatprep.subr.bf16.mxu0 0
    %5321 = vmatpush1.bf16.msra.mxu0 0
    %5322 = vmatprep.subr.bf16.mxu0 0
    %5323 = vmatpush1.bf16.msra.mxu0 0
    %5324 = vmatprep.subr.bf16.mxu0 0
    %5325 = vmatpush1.bf16.msra.mxu0 0
    %5326 = vmatprep.mubr.bf16.mxu0 0
    %5327 = vmatmul.mubr.bf16.gmra.mrb[0].mxu0 %v5221
    %v5328 = vpop.f32.mrb[0].mxu0
    %v5329 = vadd.f32 0.0, %v5328
    %v5330 = vpop.f32.mrb[0].mxu0
    %v5331 = vpop.f32.mrb[0].mxu0
    %v5332 = vadd.f32 0.0, %v5331
    %v5333 = vpop.f32.mrb[0].mxu0
    %5334 = vmatprep.mubr.bf16.mxu0 0
    %5335 = vmatmul.mubr.bf16.gmra.mrb[0].mxu0 %v5222
    %v5336 = vpop.f32.mrb[0].mxu0
    %v5337 = vadd.f32 0.0, %v5336
    %v5338 = vpop.f32.mrb[0].mxu0
    %v5339 = vpop.f32.mrb[0].mxu0
    %v5340 = vadd.f32 0.0, %v5339
    %v5341 = vpop.f32.mrb[0].mxu0
    %5342 = vmatprep.mubr.bf16.mxu0 0
    %5343 = vmatmul.mubr.bf16.gmra.mrb[0].mxu0 %v5223
    %v5344 = vpop.f32.mrb[0].mxu0
    %v5345 = vadd.f32 0.0, %v5344
    %v5346 = vpop.f32.mrb[0].mxu0
    %v5347 = vpop.f32.mrb[0].mxu0
    %v5348 = vadd.f32 0.0, %v5347
    %v5349 = vpop.f32.mrb[0].mxu0
    %5350 = vmatprep.mubr.bf16.mxu0 0
    %5351 = vmatmul.mubr.bf16.gmra.mrb[0].mxu0 %v5224
    %v5352 = vpop.f32.mrb[0].mxu0
    %v5353 = vadd.f32 0.0, %v5352
    %v5354 = vpop.f32.mrb[0].mxu0
    %v5355 = vpop.f32.mrb[0].mxu0
    %v5356 = vadd.f32 0.0, %v5355
    %v5357 = vpop.f32.mrb[0].mxu0
    %5358 = vmatprep.mubr.bf16.mxu0 0
    %5359 = vmatmul.mubr.bf16.gmra.mrb[0].mxu0 %v5225
    %v5360 = vpop.f32.mrb[0].mxu0
    %v5361 = vadd.f32 0.0, %v5360
    %v5362 = vpop.f32.mrb[0].mxu0
    %v5363 = vpop.f32.mrb[0].mxu0
    %v5364 = vadd.f32 0.0, %v5363
    %v5365 = vpop.f32.mrb[0].mxu0
    %5366 = vmatprep.mubr.bf16.mxu0 0
    %5367 = vmatmul.mubr.bf16.gmra.mrb[0].mxu0 %v5226
    %v5368 = vpop.f32.mrb[0].mxu0
    %v5369 = vadd.f32 0.0, %v5368
    %v5370 = vpop.f32.mrb[0].mxu0
    %v5371 = vpop.f32.mrb[0].mxu0
    %v5372 = vadd.f32 0.0, %v5371
    %v5373 = vpop.f32.mrb[0].mxu0
    %5374 = vmatprep.mubr.bf16.mxu0 0
    %5375 = vmatmul.mubr.bf16.gmra.mrb[0].mxu0 %v5227
    %v5376 = vpop.f32.mrb[0].mxu0
    %v5377 = vadd.f32 0.0, %v5376
    %v5378 = vpop.f32.mrb[0].mxu0
    %v5379 = vpop.f32.mrb[0].mxu0
    %v5380 = vadd.f32 0.0, %v5379
    %v5381 = vpop.f32.mrb[0].mxu0
    %5382 = vmatprep.mubr.bf16.mxu0 0
    %5383 = vmatmul.mubr.bf16.gmra.mrb[0].mxu0 %v5228
    %v5384 = vpop.f32.mrb[0].mxu0
    %v5385 = vadd.f32 0.0, %v5384
    %v5386 = vpop.f32.mrb[0].mxu0
    %v5387 = vpop.f32.mrb[0].mxu0
    %v5388 = vadd.f32 0.0, %v5387
    %v5389 = vpop.f32.mrb[0].mxu0
    %5390 = vdwg.mxu0
    %v5391 = vadd.f32 %v5189, %v5329
    %v5392 = vadd.f32 %v5190, %v5332
    %v5393 = vadd.f32 %v5191, %v5337
    %v5394 = vadd.f32 %v5192, %v5340
    %v5395 = vadd.f32 %v5193, %v5345
    %v5396 = vadd.f32 %v5194, %v5348
    %v5397 = vadd.f32 %v5195, %v5353
    %v5398 = vadd.f32 %v5196, %v5356
    %v5399 = vadd.f32 %v5197, %v5361
    %v5400 = vadd.f32 %v5198, %v5364
    %v5401 = vadd.f32 %v5199, %v5369
    %v5402 = vadd.f32 %v5200, %v5372
    %v5403 = vadd.f32 %v5201, %v5377
    %v5404 = vadd.f32 %v5202, %v5380
    %v5405 = vadd.f32 %v5203, %v5385
    %v5406 = vadd.f32 %v5204, %v5388
    %s5407 = scalar_lea.vmem [#allocation2], 32
    %v5408 = vld [vmem:[%s5407] sm:$0xff]
    %v5409 = vld [vmem:[%s5407 + $0x10] sm:$0xff]
    %v5410 = vld [vmem:[%s5407 + $0x20] sm:$0xff]
    %v5411 = vld [vmem:[%s5407 + $0x30] sm:$0xff]
    %v5412 = vld [vmem:[%s5407 + $0x40] sm:$0xff]
    %v5413 = vld [vmem:[%s5407 + $0x50] sm:$0xff]
    %v5414 = vld [vmem:[%s5407 + $0x60] sm:$0xff]
    %v5415 = vld [vmem:[%s5407 + $0x70] sm:$0xff]
    %v5416 = vld [vmem:[%s5407 + $0xa0] sm:$0xff]
    %v5417 = vld [vmem:[%s5407 + $0xb0] sm:$0xff]
    %v5418 = vld [vmem:[%s5407 + $0xc0] sm:$0xff]
    %v5419 = vld [vmem:[%s5407 + $0xd0] sm:$0xff]
    %v5420 = vld [vmem:[%s5407 + $0xe0] sm:$0xff]
    %v5421 = vld [vmem:[%s5407 + $0xf0] sm:$0xff]
    %v5422 = vld [vmem:[%s5407 + $0x100] sm:$0xff]
    %v5423 = vld [vmem:[%s5407 + $0x110] sm:$0xff]
    %v5424 = vpack.c.bf16 %v5409, %v5408
    %v5425 = vpack.c.bf16 %v5411, %v5410
    %v5426 = vpack.c.bf16 %v5413, %v5412
    %v5427 = vpack.c.bf16 %v5415, %v5414
    %v5428 = vpack.c.bf16 %v5417, %v5416
    %v5429 = vpack.c.bf16 %v5419, %v5418
    %v5430 = vpack.c.bf16 %v5421, %v5420
    %v5431 = vpack.c.bf16 %v5423, %v5422
    %s5432 = scalar_lea.vmem %s3, 384
    %v5433 = vld [vmem:[%s5432] sm:$0xf]
    %v5434 = vld [vmem:[%s5432 + $0x4] sm:$0xf]
    %v5435 = vld [vmem:[%s5432 + $0x8] sm:$0xf]
    %v5436 = vld [vmem:[%s5432 + $0xc] sm:$0xf]
    %v5437 = vld [vmem:[%s5432 + $0x10] sm:$0xf]
    %v5438 = vld [vmem:[%s5432 + $0x14] sm:$0xf]
    %v5439 = vld [vmem:[%s5432 + $0x18] sm:$0xf]
    %v5440 = vld [vmem:[%s5432 + $0x1c] sm:$0xf]
    %v5441 = vld [vmem:[%s5432 + $0x20] sm:$0xf]
    %v5442 = vld [vmem:[%s5432 + $0x24] sm:$0xf]
    %v5443 = vld [vmem:[%s5432 + $0x28] sm:$0xf]
    %v5444 = vld [vmem:[%s5432 + $0x2c] sm:$0xf]
    %v5445 = vld [vmem:[%s5432 + $0x30] sm:$0xf]
    %v5446 = vld [vmem:[%s5432 + $0x34] sm:$0xf]
    %v5447 = vld [vmem:[%s5432 + $0x38] sm:$0xf]
    %v5448 = vld [vmem:[%s5432 + $0x3c] sm:$0xf]
    %v5465 = vunpack.c.l.b16 %v5433
    %v5466 = vunpack.c.l.b16 %v5434
    %v5467 = vunpack.c.l.b16 %v5435
    %v5468 = vunpack.c.l.b16 %v5436
    %v5469 = vunpack.c.l.b16 %v5437
    %v5470 = vunpack.c.l.b16 %v5438
    %v5471 = vunpack.c.l.b16 %v5439
    %v5472 = vunpack.c.l.b16 %v5440
    %v5473 = vunpack.c.l.b16 %v5441
    %v5474 = vunpack.c.l.b16 %v5442
    %v5475 = vunpack.c.l.b16 %v5443
    %v5476 = vunpack.c.l.b16 %v5444
    %v5477 = vunpack.c.l.b16 %v5445
    %v5478 = vunpack.c.l.b16 %v5446
    %v5479 = vunpack.c.l.b16 %v5447
    %v5480 = vunpack.c.l.b16 %v5448
    %v5481 = vpack.c.b16 %v5466, %v5465
    %v5482 = vpack.c.b16 %v5468, %v5467
    %v5483 = vpack.c.b16 %v5470, %v5469
    %v5484 = vpack.c.b16 %v5472, %v5471
    %v5485 = vpack.c.b16 %v5474, %v5473
    %v5486 = vpack.c.b16 %v5476, %v5475
    %v5487 = vpack.c.b16 %v5478, %v5477
    %v5488 = vpack.c.b16 %v5480, %v5479
    %5497 = vmatprep.subr.bf16.mxu0 0
    %5498 = vmatpush1.bf16.msra.mxu0 %v5481
    %5499 = vmatprep.subr.bf16.mxu0 0
    %5500 = vmatpush1.bf16.msra.mxu0 %v5482
    %5501 = vmatprep.subr.bf16.mxu0 0
    %5502 = vmatpush1.bf16.msra.mxu0 %v5483
    %5503 = vmatprep.subr.bf16.mxu0 0
    %5504 = vmatpush1.bf16.msra.mxu0 %v5484
    %5505 = vmatprep.subr.bf16.mxu0 0
    %5506 = vmatpush1.bf16.msra.mxu0 %v5485
    %5507 = vmatprep.subr.bf16.mxu0 0
    %5508 = vmatpush1.bf16.msra.mxu0 %v5486
    %5509 = vmatprep.subr.bf16.mxu0 0
    %5510 = vmatpush1.bf16.msra.mxu0 %v5487
    %5511 = vmatprep.subr.bf16.mxu0 0
    %5512 = vmatpush1.bf16.msra.mxu0 %v5488
    %5513 = vmatprep.subr.bf16.mxu0 0
    %5514 = vmatpush1.bf16.msra.mxu0 0
    %5515 = vmatprep.subr.bf16.mxu0 0
    %5516 = vmatpush1.bf16.msra.mxu0 0
    %5517 = vmatprep.subr.bf16.mxu0 0
    %5518 = vmatpush1.bf16.msra.mxu0 0
    %5519 = vmatprep.subr.bf16.mxu0 0
    %5520 = vmatpush1.bf16.msra.mxu0 0
    %5521 = vmatprep.subr.bf16.mxu0 0
    %5522 = vmatpush1.bf16.msra.mxu0 0
    %5523 = vmatprep.subr.bf16.mxu0 0
    %5524 = vmatpush1.bf16.msra.mxu0 0
    %5525 = vmatprep.subr.bf16.mxu0 0
    %5526 = vmatpush1.bf16.msra.mxu0 0
    %5527 = vmatprep.subr.bf16.mxu0 0
    %5528 = vmatpush1.bf16.msra.mxu0 0
    %5529 = vmatprep.mubr.bf16.mxu0 0
    %5530 = vmatmul.mubr.bf16.gmra.mrb[0].mxu0 %v5424
    %v5531 = vpop.f32.mrb[0].mxu0
    %v5532 = vadd.f32 0.0, %v5531
    %v5533 = vpop.f32.mrb[0].mxu0
    %v5534 = vpop.f32.mrb[0].mxu0
    %v5535 = vadd.f32 0.0, %v5534
    %v5536 = vpop.f32.mrb[0].mxu0
    %5537 = vmatprep.mubr.bf16.mxu0 0
    %5538 = vmatmul.mubr.bf16.gmra.mrb[0].mxu0 %v5425
    %v5539 = vpop.f32.mrb[0].mxu0
    %v5540 = vadd.f32 0.0, %v5539
    %v5541 = vpop.f32.mrb[0].mxu0
    %v5542 = vpop.f32.mrb[0].mxu0
    %v5543 = vadd.f32 0.0, %v5542
    %v5544 = vpop.f32.mrb[0].mxu0
    %5545 = vmatprep.mubr.bf16.mxu0 0
    %5546 = vmatmul.mubr.bf16.gmra.mrb[0].mxu0 %v5426
    %v5547 = vpop.f32.mrb[0].mxu0
    %v5548 = vadd.f32 0.0, %v5547
    %v5549 = vpop.f32.mrb[0].mxu0
    %v5550 = vpop.f32.mrb[0].mxu0
    %v5551 = vadd.f32 0.0, %v5550
    %v5552 = vpop.f32.mrb[0].mxu0
    %5553 = vmatprep.mubr.bf16.mxu0 0
    %5554 = vmatmul.mubr.bf16.gmra.mrb[0].mxu0 %v5427
    %v5555 = vpop.f32.mrb[0].mxu0
    %v5556 = vadd.f32 0.0, %v5555
    %v5557 = vpop.f32.mrb[0].mxu0
    %v5558 = vpop.f32.mrb[0].mxu0
    %v5559 = vadd.f32 0.0, %v5558
    %v5560 = vpop.f32.mrb[0].mxu0
    %5561 = vmatprep.mubr.bf16.mxu0 0
    %5562 = vmatmul.mubr.bf16.gmra.mrb[0].mxu0 %v5428
    %v5563 = vpop.f32.mrb[0].mxu0
    %v5564 = vadd.f32 0.0, %v5563
    %v5565 = vpop.f32.mrb[0].mxu0
    %v5566 = vpop.f32.mrb[0].mxu0
    %v5567 = vadd.f32 0.0, %v5566
    %v5568 = vpop.f32.mrb[0].mxu0
    %5569 = vmatprep.mubr.bf16.mxu0 0
    %5570 = vmatmul.mubr.bf16.gmra.mrb[0].mxu0 %v5429
    %v5571 = vpop.f32.mrb[0].mxu0
    %v5572 = vadd.f32 0.0, %v5571
    %v5573 = vpop.f32.mrb[0].mxu0
    %v5574 = vpop.f32.mrb[0].mxu0
    %v5575 = vadd.f32 0.0, %v5574
    %v5576 = vpop.f32.mrb[0].mxu0
    %5577 = vmatprep.mubr.bf16.mxu0 0
    %5578 = vmatmul.mubr.bf16.gmra.mrb[0].mxu0 %v5430
    %v5579 = vpop.f32.mrb[0].mxu0
    %v5580 = vadd.f32 0.0, %v5579
    %v5581 = vpop.f32.mrb[0].mxu0
    %v5582 = vpop.f32.mrb[0].mxu0
    %v5583 = vadd.f32 0.0, %v5582
    %v5584 = vpop.f32.mrb[0].mxu0
    %5585 = vmatprep.mubr.bf16.mxu0 0
    %5586 = vmatmul.mubr.bf16.gmra.mrb[0].mxu0 %v5431
    %v5587 = vpop.f32.mrb[0].mxu0
    %v5588 = vadd.f32 0.0, %v5587
    %v5589 = vpop.f32.mrb[0].mxu0
    %v5590 = vpop.f32.mrb[0].mxu0
    %v5591 = vadd.f32 0.0, %v5590
    %v5592 = vpop.f32.mrb[0].mxu0
    %5593 = vdwg.mxu0
    %v5594 = vadd.f32 %v5391, %v5532
    %v5595 = vadd.f32 %v5392, %v5535
    %v5596 = vadd.f32 %v5393, %v5540
    %v5597 = vadd.f32 %v5394, %v5543
    %v5598 = vadd.f32 %v5395, %v5548
    %v5599 = vadd.f32 %v5396, %v5551
    %v5600 = vadd.f32 %v5397, %v5556
    %v5601 = vadd.f32 %v5398, %v5559
    %v5602 = vadd.f32 %v5399, %v5564
    %v5603 = vadd.f32 %v5400, %v5567
    %v5604 = vadd.f32 %v5401, %v5572
    %v5605 = vadd.f32 %v5402, %v5575
    %v5606 = vadd.f32 %v5403, %v5580
    %v5607 = vadd.f32 %v5404, %v5583
    %v5608 = vadd.f32 %v5405, %v5588
    %v5609 = vadd.f32 %v5406, %v5591
    %v5610 = vld [vmem:[%s5407 + $0x1] sm:$0xff]
    %v5611 = vld [vmem:[%s5407 + $0x11] sm:$0xff]
    %v5612 = vld [vmem:[%s5407 + $0x21] sm:$0xff]
    %v5613 = vld [vmem:[%s5407 + $0x31] sm:$0xff]
    %v5614 = vld [vmem:[%s5407 + $0x41] sm:$0xff]
    %v5615 = vld [vmem:[%s5407 + $0x51] sm:$0xff]
    %v5616 = vld [vmem:[%s5407 + $0x61] sm:$0xff]
    %v5617 = vld [vmem:[%s5407 + $0x71] sm:$0xff]
    %v5618 = vld [vmem:[%s5407 + $0xa1] sm:$0xff]
    %v5619 = vld [vmem:[%s5407 + $0xb1] sm:$0xff]
    %v5620 = vld [vmem:[%s5407 + $0xc1] sm:$0xff]
    %v5621 = vld [vmem:[%s5407 + $0xd1] sm:$0xff]
    %v5622 = vld [vmem:[%s5407 + $0xe1] sm:$0xff]
    %v5623 = vld [vmem:[%s5407 + $0xf1] sm:$0xff]
    %v5624 = vld [vmem:[%s5407 + $0x101] sm:$0xff]
    %v5625 = vld [vmem:[%s5407 + $0x111] sm:$0xff]
    %v5626 = vpack.c.bf16 %v5611, %v5610
    %v5627 = vpack.c.bf16 %v5613, %v5612
    %v5628 = vpack.c.bf16 %v5615, %v5614
    %v5629 = vpack.c.bf16 %v5617, %v5616
    %v5630 = vpack.c.bf16 %v5619, %v5618
    %v5631 = vpack.c.bf16 %v5621, %v5620
    %v5632 = vpack.c.bf16 %v5623, %v5622
    %v5633 = vpack.c.bf16 %v5625, %v5624
    %s5634 = scalar_lea.vmem %s3, 448
    %v5635 = vld [vmem:[%s5634] sm:$0xf]
    %v5636 = vld [vmem:[%s5634 + $0x4] sm:$0xf]
    %v5637 = vld [vmem:[%s5634 + $0x8] sm:$0xf]
    %v5638 = vld [vmem:[%s5634 + $0xc] sm:$0xf]
    %v5639 = vld [vmem:[%s5634 + $0x10] sm:$0xf]
    %v5640 = vld [vmem:[%s5634 + $0x14] sm:$0xf]
    %v5641 = vld [vmem:[%s5634 + $0x18] sm:$0xf]
    %v5642 = vld [vmem:[%s5634 + $0x1c] sm:$0xf]
    %v5643 = vld [vmem:[%s5634 + $0x20] sm:$0xf]
    %v5644 = vld [vmem:[%s5634 + $0x24] sm:$0xf]
    %v5645 = vld [vmem:[%s5634 + $0x28] sm:$0xf]
    %v5646 = vld [vmem:[%s5634 + $0x2c] sm:$0xf]
    %v5647 = vld [vmem:[%s5634 + $0x30] sm:$0xf]
    %v5648 = vld [vmem:[%s5634 + $0x34] sm:$0xf]
    %v5649 = vld [vmem:[%s5634 + $0x38] sm:$0xf]
    %v5650 = vld [vmem:[%s5634 + $0x3c] sm:$0xf]
    %v5667 = vunpack.c.l.b16 %v5635
    %v5668 = vunpack.c.l.b16 %v5636
    %v5669 = vunpack.c.l.b16 %v5637
    %v5670 = vunpack.c.l.b16 %v5638
    %v5671 = vunpack.c.l.b16 %v5639
    %v5672 = vunpack.c.l.b16 %v5640
    %v5673 = vunpack.c.l.b16 %v5641
    %v5674 = vunpack.c.l.b16 %v5642
    %v5675 = vunpack.c.l.b16 %v5643
    %v5676 = vunpack.c.l.b16 %v5644
    %v5677 = vunpack.c.l.b16 %v5645
    %v5678 = vunpack.c.l.b16 %v5646
    %v5679 = vunpack.c.l.b16 %v5647
    %v5680 = vunpack.c.l.b16 %v5648
    %v5681 = vunpack.c.l.b16 %v5649
    %v5682 = vunpack.c.l.b16 %v5650
    %v5683 = vpack.c.b16 %v5668, %v5667
    %v5684 = vpack.c.b16 %v5670, %v5669
    %v5685 = vpack.c.b16 %v5672, %v5671
    %v5686 = vpack.c.b16 %v5674, %v5673
    %v5687 = vpack.c.b16 %v5676, %v5675
    %v5688 = vpack.c.b16 %v5678, %v5677
    %v5689 = vpack.c.b16 %v5680, %v5679
    %v5690 = vpack.c.b16 %v5682, %v5681
    %5699 = vmatprep.subr.bf16.mxu0 0
    %5700 = vmatpush1.bf16.msra.mxu0 %v5683
    %5701 = vmatprep.subr.bf16.mxu0 0
    %5702 = vmatpush1.bf16.msra.mxu0 %v5684
    %5703 = vmatprep.subr.bf16.mxu0 0
    %5704 = vmatpush1.bf16.msra.mxu0 %v5685
    %5705 = vmatprep.subr.bf16.mxu0 0
    %5706 = vmatpush1.bf16.msra.mxu0 %v5686
    %5707 = vmatprep.subr.bf16.mxu0 0
    %5708 = vmatpush1.bf16.msra.mxu0 %v5687
    %5709 = vmatprep.subr.bf16.mxu0 0
    %5710 = vmatpush1.bf16.msra.mxu0 %v5688
    %5711 = vmatprep.subr.bf16.mxu0 0
    %5712 = vmatpush1.bf16.msra.mxu0 %v5689
    %5713 = vmatprep.subr.bf16.mxu0 0
    %5714 = vmatpush1.bf16.msra.mxu0 %v5690
    %5715 = vmatprep.subr.bf16.mxu0 0
    %5716 = vmatpush1.bf16.msra.mxu0 0
    %5717 = vmatprep.subr.bf16.mxu0 0
    %5718 = vmatpush1.bf16.msra.mxu0 0
    %5719 = vmatprep.subr.bf16.mxu0 0
    %5720 = vmatpush1.bf16.msra.mxu0 0
    %5721 = vmatprep.subr.bf16.mxu0 0
    %5722 = vmatpush1.bf16.msra.mxu0 0
    %5723 = vmatprep.subr.bf16.mxu0 0
    %5724 = vmatpush1.bf16.msra.mxu0 0
    %5725 = vmatprep.subr.bf16.mxu0 0
    %5726 = vmatpush1.bf16.msra.mxu0 0
    %5727 = vmatprep.subr.bf16.mxu0 0
    %5728 = vmatpush1.bf16.msra.mxu0 0
    %5729 = vmatprep.subr.bf16.mxu0 0
    %5730 = vmatpush1.bf16.msra.mxu0 0
    %5731 = vmatprep.mubr.bf16.mxu0 0
    %5732 = vmatmul.mubr.bf16.gmra.mrb[0].mxu0 %v5626
    %v5733 = vpop.f32.mrb[0].mxu0
    %v5734 = vadd.f32 0.0, %v5733
    %v5735 = vpop.f32.mrb[0].mxu0
    %v5736 = vpop.f32.mrb[0].mxu0
    %v5737 = vadd.f32 0.0, %v5736
    %v5738 = vpop.f32.mrb[0].mxu0
    %5739 = vmatprep.mubr.bf16.mxu0 0
    %5740 = vmatmul.mubr.bf16.gmra.mrb[0].mxu0 %v5627
    %v5741 = vpop.f32.mrb[0].mxu0
    %v5742 = vadd.f32 0.0, %v5741
    %v5743 = vpop.f32.mrb[0].mxu0
    %v5744 = vpop.f32.mrb[0].mxu0
    %v5745 = vadd.f32 0.0, %v5744
    %v5746 = vpop.f32.mrb[0].mxu0
    %5747 = vmatprep.mubr.bf16.mxu0 0
    %5748 = vmatmul.mubr.bf16.gmra.mrb[0].mxu0 %v5628
    %v5749 = vpop.f32.mrb[0].mxu0
    %v5750 = vadd.f32 0.0, %v5749
    %v5751 = vpop.f32.mrb[0].mxu0
    %v5752 = vpop.f32.mrb[0].mxu0
    %v5753 = vadd.f32 0.0, %v5752
    %v5754 = vpop.f32.mrb[0].mxu0
    %5755 = vmatprep.mubr.bf16.mxu0 0
    %5756 = vmatmul.mubr.bf16.gmra.mrb[0].mxu0 %v5629
    %v5757 = vpop.f32.mrb[0].mxu0
    %v5758 = vadd.f32 0.0, %v5757
    %v5759 = vpop.f32.mrb[0].mxu0
    %v5760 = vpop.f32.mrb[0].mxu0
    %v5761 = vadd.f32 0.0, %v5760
    %v5762 = vpop.f32.mrb[0].mxu0
    %5763 = vmatprep.mubr.bf16.mxu0 0
    %5764 = vmatmul.mubr.bf16.gmra.mrb[0].mxu0 %v5630
    %v5765 = vpop.f32.mrb[0].mxu0
    %v5766 = vadd.f32 0.0, %v5765
    %v5767 = vpop.f32.mrb[0].mxu0
    %v5768 = vpop.f32.mrb[0].mxu0
    %v5769 = vadd.f32 0.0, %v5768
    %v5770 = vpop.f32.mrb[0].mxu0
    %5771 = vmatprep.mubr.bf16.mxu0 0
    %5772 = vmatmul.mubr.bf16.gmra.mrb[0].mxu0 %v5631
    %v5773 = vpop.f32.mrb[0].mxu0
    %v5774 = vadd.f32 0.0, %v5773
    %v5775 = vpop.f32.mrb[0].mxu0
    %v5776 = vpop.f32.mrb[0].mxu0
    %v5777 = vadd.f32 0.0, %v5776
    %v5778 = vpop.f32.mrb[0].mxu0
    %5779 = vmatprep.mubr.bf16.mxu0 0
    %5780 = vmatmul.mubr.bf16.gmra.mrb[0].mxu0 %v5632
    %v5781 = vpop.f32.mrb[0].mxu0
    %v5782 = vadd.f32 0.0, %v5781
    %v5783 = vpop.f32.mrb[0].mxu0
    %v5784 = vpop.f32.mrb[0].mxu0
    %v5785 = vadd.f32 0.0, %v5784
    %v5786 = vpop.f32.mrb[0].mxu0
    %5787 = vmatprep.mubr.bf16.mxu0 0
    %5788 = vmatmul.mubr.bf16.gmra.mrb[0].mxu0 %v5633
    %v5789 = vpop.f32.mrb[0].mxu0
    %v5790 = vadd.f32 0.0, %v5789
    %v5791 = vpop.f32.mrb[0].mxu0
    %v5792 = vpop.f32.mrb[0].mxu0
    %v5793 = vadd.f32 0.0, %v5792
    %v5794 = vpop.f32.mrb[0].mxu0
    %5795 = vdwg.mxu0
    %v5796 = vadd.f32 %v5594, %v5734
    %v5797 = vadd.f32 %v5595, %v5737
    %v5798 = vadd.f32 %v5596, %v5742
    %v5799 = vadd.f32 %v5597, %v5745
    %v5800 = vadd.f32 %v5598, %v5750
    %v5801 = vadd.f32 %v5599, %v5753
    %v5802 = vadd.f32 %v5600, %v5758
    %v5803 = vadd.f32 %v5601, %v5761
    %v5804 = vadd.f32 %v5602, %v5766
    %v5805 = vadd.f32 %v5603, %v5769
    %v5806 = vadd.f32 %v5604, %v5774
    %v5807 = vadd.f32 %v5605, %v5777
    %v5808 = vadd.f32 %v5606, %v5782
    %v5809 = vadd.f32 %v5607, %v5785
    %v5810 = vadd.f32 %v5608, %v5790
    %v5811 = vadd.f32 %v5609, %v5793
    %v5812 = vld [vmem:[%s5407 + $0x2] sm:$0xff]
    %v5813 = vld [vmem:[%s5407 + $0x12] sm:$0xff]
    %v5814 = vld [vmem:[%s5407 + $0x22] sm:$0xff]
    %v5815 = vld [vmem:[%s5407 + $0x32] sm:$0xff]
    %v5816 = vld [vmem:[%s5407 + $0x42] sm:$0xff]
    %v5817 = vld [vmem:[%s5407 + $0x52] sm:$0xff]
    %v5818 = vld [vmem:[%s5407 + $0x62] sm:$0xff]
    %v5819 = vld [vmem:[%s5407 + $0x72] sm:$0xff]
    %v5820 = vld [vmem:[%s5407 + $0xa2] sm:$0xff]
    %v5821 = vld [vmem:[%s5407 + $0xb2] sm:$0xff]
    %v5822 = vld [vmem:[%s5407 + $0xc2] sm:$0xff]
    %v5823 = vld [vmem:[%s5407 + $0xd2] sm:$0xff]
    %v5824 = vld [vmem:[%s5407 + $0xe2] sm:$0xff]
    %v5825 = vld [vmem:[%s5407 + $0xf2] sm:$0xff]
    %v5826 = vld [vmem:[%s5407 + $0x102] sm:$0xff]
    %v5827 = vld [vmem:[%s5407 + $0x112] sm:$0xff]
    %v5828 = vpack.c.bf16 %v5813, %v5812
    %v5829 = vpack.c.bf16 %v5815, %v5814
    %v5830 = vpack.c.bf16 %v5817, %v5816
    %v5831 = vpack.c.bf16 %v5819, %v5818
    %v5832 = vpack.c.bf16 %v5821, %v5820
    %v5833 = vpack.c.bf16 %v5823, %v5822
    %v5834 = vpack.c.bf16 %v5825, %v5824
    %v5835 = vpack.c.bf16 %v5827, %v5826
    %s5836 = scalar_lea.vmem %s3, 512
    %v5837 = vld [vmem:[%s5836] sm:$0xf]
    %v5838 = vld [vmem:[%s5836 + $0x4] sm:$0xf]
    %v5839 = vld [vmem:[%s5836 + $0x8] sm:$0xf]
    %v5840 = vld [vmem:[%s5836 + $0xc] sm:$0xf]
    %v5841 = vld [vmem:[%s5836 + $0x10] sm:$0xf]
    %v5842 = vld [vmem:[%s5836 + $0x14] sm:$0xf]
    %v5843 = vld [vmem:[%s5836 + $0x18] sm:$0xf]
    %v5844 = vld [vmem:[%s5836 + $0x1c] sm:$0xf]
    %v5845 = vld [vmem:[%s5836 + $0x20] sm:$0xf]
    %v5846 = vld [vmem:[%s5836 + $0x24] sm:$0xf]
    %v5847 = vld [vmem:[%s5836 + $0x28] sm:$0xf]
    %v5848 = vld [vmem:[%s5836 + $0x2c] sm:$0xf]
    %v5849 = vld [vmem:[%s5836 + $0x30] sm:$0xf]
    %v5850 = vld [vmem:[%s5836 + $0x34] sm:$0xf]
    %v5851 = vld [vmem:[%s5836 + $0x38] sm:$0xf]
    %v5852 = vld [vmem:[%s5836 + $0x3c] sm:$0xf]
    %v5869 = vunpack.c.l.b16 %v5837
    %v5870 = vunpack.c.l.b16 %v5838
    %v5871 = vunpack.c.l.b16 %v5839
    %v5872 = vunpack.c.l.b16 %v5840
    %v5873 = vunpack.c.l.b16 %v5841
    %v5874 = vunpack.c.l.b16 %v5842
    %v5875 = vunpack.c.l.b16 %v5843
    %v5876 = vunpack.c.l.b16 %v5844
    %v5877 = vunpack.c.l.b16 %v5845
    %v5878 = vunpack.c.l.b16 %v5846
    %v5879 = vunpack.c.l.b16 %v5847
    %v5880 = vunpack.c.l.b16 %v5848
    %v5881 = vunpack.c.l.b16 %v5849
    %v5882 = vunpack.c.l.b16 %v5850
    %v5883 = vunpack.c.l.b16 %v5851
    %v5884 = vunpack.c.l.b16 %v5852
    %v5885 = vpack.c.b16 %v5870, %v5869
    %v5886 = vpack.c.b16 %v5872, %v5871
    %v5887 = vpack.c.b16 %v5874, %v5873
    %v5888 = vpack.c.b16 %v5876, %v5875
    %v5889 = vpack.c.b16 %v5878, %v5877
    %v5890 = vpack.c.b16 %v5880, %v5879
    %v5891 = vpack.c.b16 %v5882, %v5881
    %v5892 = vpack.c.b16 %v5884, %v5883
    %5901 = vmatprep.subr.bf16.mxu0 0
    %5902 = vmatpush1.bf16.msra.mxu0 %v5885
    %5903 = vmatprep.subr.bf16.mxu0 0
    %5904 = vmatpush1.bf16.msra.mxu0 %v5886
    %5905 = vmatprep.subr.bf16.mxu0 0
    %5906 = vmatpush1.bf16.msra.mxu0 %v5887
    %5907 = vmatprep.subr.bf16.mxu0 0
    %5908 = vmatpush1.bf16.msra.mxu0 %v5888
    %5909 = vmatprep.subr.bf16.mxu0 0
    %5910 = vmatpush1.bf16.msra.mxu0 %v5889
    %5911 = vmatprep.subr.bf16.mxu0 0
    %5912 = vmatpush1.bf16.msra.mxu0 %v5890
    %5913 = vmatprep.subr.bf16.mxu0 0
    %5914 = vmatpush1.bf16.msra.mxu0 %v5891
    %5915 = vmatprep.subr.bf16.mxu0 0
    %5916 = vmatpush1.bf16.msra.mxu0 %v5892
    %5917 = vmatprep.subr.bf16.mxu0 0
    %5918 = vmatpush1.bf16.msra.mxu0 0
    %5919 = vmatprep.subr.bf16.mxu0 0
    %5920 = vmatpush1.bf16.msra.mxu0 0
    %5921 = vmatprep.subr.bf16.mxu0 0
    %5922 = vmatpush1.bf16.msra.mxu0 0
    %5923 = vmatprep.subr.bf16.mxu0 0
    %5924 = vmatpush1.bf16.msra.mxu0 0
    %5925 = vmatprep.subr.bf16.mxu0 0
    %5926 = vmatpush1.bf16.msra.mxu0 0
    %5927 = vmatprep.subr.bf16.mxu0 0
    %5928 = vmatpush1.bf16.msra.mxu0 0
    %5929 = vmatprep.subr.bf16.mxu0 0
    %5930 = vmatpush1.bf16.msra.mxu0 0
    %5931 = vmatprep.subr.bf16.mxu0 0
    %5932 = vmatpush1.bf16.msra.mxu0 0
    %5933 = vmatprep.mubr.bf16.mxu0 0
    %5934 = vmatmul.mubr.bf16.gmra.mrb[0].mxu0 %v5828
    %v5935 = vpop.f32.mrb[0].mxu0
    %v5936 = vadd.f32 0.0, %v5935
    %v5937 = vpop.f32.mrb[0].mxu0
    %v5938 = vpop.f32.mrb[0].mxu0
    %v5939 = vadd.f32 0.0, %v5938
    %v5940 = vpop.f32.mrb[0].mxu0
    %5941 = vmatprep.mubr.bf16.mxu0 0
    %5942 = vmatmul.mubr.bf16.gmra.mrb[0].mxu0 %v5829
    %v5943 = vpop.f32.mrb[0].mxu0
    %v5944 = vadd.f32 0.0, %v5943
    %v5945 = vpop.f32.mrb[0].mxu0
    %v5946 = vpop.f32.mrb[0].mxu0
    %v5947 = vadd.f32 0.0, %v5946
    %v5948 = vpop.f32.mrb[0].mxu0
    %5949 = vmatprep.mubr.bf16.mxu0 0
    %5950 = vmatmul.mubr.bf16.gmra.mrb[0].mxu0 %v5830
    %v5951 = vpop.f32.mrb[0].mxu0
    %v5952 = vadd.f32 0.0, %v5951
    %v5953 = vpop.f32.mrb[0].mxu0
    %v5954 = vpop.f32.mrb[0].mxu0
    %v5955 = vadd.f32 0.0, %v5954
    %v5956 = vpop.f32.mrb[0].mxu0
    %5957 = vmatprep.mubr.bf16.mxu0 0
    %5958 = vmatmul.mubr.bf16.gmra.mrb[0].mxu0 %v5831
    %v5959 = vpop.f32.mrb[0].mxu0
    %v5960 = vadd.f32 0.0, %v5959
    %v5961 = vpop.f32.mrb[0].mxu0
    %v5962 = vpop.f32.mrb[0].mxu0
    %v5963 = vadd.f32 0.0, %v5962
    %v5964 = vpop.f32.mrb[0].mxu0
    %5965 = vmatprep.mubr.bf16.mxu0 0
    %5966 = vmatmul.mubr.bf16.gmra.mrb[0].mxu0 %v5832
    %v5967 = vpop.f32.mrb[0].mxu0
    %v5968 = vadd.f32 0.0, %v5967
    %v5969 = vpop.f32.mrb[0].mxu0
    %v5970 = vpop.f32.mrb[0].mxu0
    %v5971 = vadd.f32 0.0, %v5970
    %v5972 = vpop.f32.mrb[0].mxu0
    %5973 = vmatprep.mubr.bf16.mxu0 0
    %5974 = vmatmul.mubr.bf16.gmra.mrb[0].mxu0 %v5833
    %v5975 = vpop.f32.mrb[0].mxu0
    %v5976 = vadd.f32 0.0, %v5975
    %v5977 = vpop.f32.mrb[0].mxu0
    %v5978 = vpop.f32.mrb[0].mxu0
    %v5979 = vadd.f32 0.0, %v5978
    %v5980 = vpop.f32.mrb[0].mxu0
    %5981 = vmatprep.mubr.bf16.mxu0 0
    %5982 = vmatmul.mubr.bf16.gmra.mrb[0].mxu0 %v5834
    %v5983 = vpop.f32.mrb[0].mxu0
    %v5984 = vadd.f32 0.0, %v5983
    %v5985 = vpop.f32.mrb[0].mxu0
    %v5986 = vpop.f32.mrb[0].mxu0
    %v5987 = vadd.f32 0.0, %v5986
    %v5988 = vpop.f32.mrb[0].mxu0
    %5989 = vmatprep.mubr.bf16.mxu0 0
    %5990 = vmatmul.mubr.bf16.gmra.mrb[0].mxu0 %v5835
    %v5991 = vpop.f32.mrb[0].mxu0
    %v5992 = vadd.f32 0.0, %v5991
    %v5993 = vpop.f32.mrb[0].mxu0
    %v5994 = vpop.f32.mrb[0].mxu0
    %v5995 = vadd.f32 0.0, %v5994
    %v5996 = vpop.f32.mrb[0].mxu0
    %5997 = vdwg.mxu0
    %v5998 = vadd.f32 %v5796, %v5936
    %v5999 = vadd.f32 %v5797, %v5939
    %v6000 = vadd.f32 %v5798, %v5944
    %v6001 = vadd.f32 %v5799, %v5947
    %v6002 = vadd.f32 %v5800, %v5952
    %v6003 = vadd.f32 %v5801, %v5955
    %v6004 = vadd.f32 %v5802, %v5960
    %v6005 = vadd.f32 %v5803, %v5963
    %v6006 = vadd.f32 %v5804, %v5968
    %v6007 = vadd.f32 %v5805, %v5971
    %v6008 = vadd.f32 %v5806, %v5976
    %v6009 = vadd.f32 %v5807, %v5979
    %v6010 = vadd.f32 %v5808, %v5984
    %v6011 = vadd.f32 %v5809, %v5987
    %v6012 = vadd.f32 %v5810, %v5992
    %v6013 = vadd.f32 %v5811, %v5995
    %s6014 = sld [smem:[#allocation5 + $0x1]]
    %v6015 = vld [vmem:[%s8] sm:$0x1]
    %v6017 = vlaneseq
    %v6018 = vshrl.u32 %v6017, 7
    %v6019 = vsub.s32 0, %v6018
    %v6020 = vrot.slane %v6015, %v6019
    %v6022 = vmul.f32 %v5998, %v6020
    %v6023 = vmul.f32 %v5999, %v6020
    %v6024 = vmul.f32 %v6000, %v6020
    %v6025 = vmul.f32 %v6001, %v6020
    %v6026 = vmul.f32 %v6002, %v6020
    %v6027 = vmul.f32 %v6003, %v6020
    %v6028 = vmul.f32 %v6004, %v6020
    %v6029 = vmul.f32 %v6005, %v6020
    %v6030 = vmul.f32 %v6006, %v6020
    %v6031 = vmul.f32 %v6007, %v6020
    %v6032 = vmul.f32 %v6008, %v6020
    %v6033 = vmul.f32 %v6009, %v6020
    %v6034 = vmul.f32 %v6010, %v6020
    %v6035 = vmul.f32 %v6011, %v6020
    %v6036 = vmul.f32 %v6012, %v6020
    %v6037 = vmul.f32 %v6013, %v6020
    %v6038 = vld [vmem:[%s9] sm:$0x1]
    %v6040 = vlaneseq
    %v6041 = vshrl.u32 %v6040, 7
    %v6042 = vsub.s32 0, %v6041
    %v6043 = vrot.slane %v6038, %v6042
    %v6045 = vadd.f32 %v6022, %v6043
    %v6046 = vadd.f32 %v6023, %v6043
    %v6047 = vadd.f32 %v6024, %v6043
    %v6048 = vadd.f32 %v6025, %v6043
    %v6049 = vadd.f32 %v6026, %v6043
    %v6050 = vadd.f32 %v6027, %v6043
    %v6051 = vadd.f32 %v6028, %v6043
    %v6052 = vadd.f32 %v6029, %v6043
    %v6053 = vadd.f32 %v6030, %v6043
    %v6054 = vadd.f32 %v6031, %v6043
    %v6055 = vadd.f32 %v6032, %v6043
    %v6056 = vadd.f32 %v6033, %v6043
    %v6057 = vadd.f32 %v6034, %v6043
    %v6058 = vadd.f32 %v6035, %v6043
    %v6059 = vadd.f32 %v6036, %v6043
    %v6060 = vadd.f32 %v6037, %v6043
    %vm6061 = vcmp.gt.f32.partialorder %v6045, 0.0
    %vm6062 = vcmp.gt.f32.partialorder %v6046, 0.0
    %vm6063 = vcmp.gt.f32.partialorder %v6047, 0.0
    %vm6064 = vcmp.gt.f32.partialorder %v6048, 0.0
    %vm6065 = vcmp.gt.f32.partialorder %v6049, 0.0
    %vm6066 = vcmp.gt.f32.partialorder %v6050, 0.0
    %vm6067 = vcmp.gt.f32.partialorder %v6051, 0.0
    %vm6068 = vcmp.gt.f32.partialorder %v6052, 0.0
    %vm6069 = vcmp.gt.f32.partialorder %v6053, 0.0
    %vm6070 = vcmp.gt.f32.partialorder %v6054, 0.0
    %vm6071 = vcmp.gt.f32.partialorder %v6055, 0.0
    %vm6072 = vcmp.gt.f32.partialorder %v6056, 0.0
    %vm6073 = vcmp.gt.f32.partialorder %v6057, 0.0
    %vm6074 = vcmp.gt.f32.partialorder %v6058, 0.0
    %vm6075 = vcmp.gt.f32.partialorder %v6059, 0.0
    %vm6076 = vcmp.gt.f32.partialorder %v6060, 0.0
    %v6077 = vstv %s6014
    %v6078 = vmul.f32 %v6077, %v6045
    %v6079 = vmul.f32 %v6077, %v6046
    %v6080 = vmul.f32 %v6077, %v6047
    %v6081 = vmul.f32 %v6077, %v6048
    %v6082 = vmul.f32 %v6077, %v6049
    %v6083 = vmul.f32 %v6077, %v6050
    %v6084 = vmul.f32 %v6077, %v6051
    %v6085 = vmul.f32 %v6077, %v6052
    %v6086 = vmul.f32 %v6077, %v6053
    %v6087 = vmul.f32 %v6077, %v6054
    %v6088 = vmul.f32 %v6077, %v6055
    %v6089 = vmul.f32 %v6077, %v6056
    %v6090 = vmul.f32 %v6077, %v6057
    %v6091 = vmul.f32 %v6077, %v6058
    %v6092 = vmul.f32 %v6077, %v6059
    %v6093 = vmul.f32 %v6077, %v6060
    %v6094 = vsel %vm6061, %v6045, %v6078
    %v6095 = vsel %vm6062, %v6046, %v6079
    %v6096 = vsel %vm6063, %v6047, %v6080
    %v6097 = vsel %vm6064, %v6048, %v6081
    %v6098 = vsel %vm6065, %v6049, %v6082
    %v6099 = vsel %vm6066, %v6050, %v6083
    %v6100 = vsel %vm6067, %v6051, %v6084
    %v6101 = vsel %vm6068, %v6052, %v6085
    %v6102 = vsel %vm6069, %v6053, %v6086
    %v6103 = vsel %vm6070, %v6054, %v6087
    %v6104 = vsel %vm6071, %v6055, %v6088
    %v6105 = vsel %vm6072, %v6056, %v6089
    %v6106 = vsel %vm6073, %v6057, %v6090
    %v6107 = vsel %vm6074, %v6058, %v6091
    %v6108 = vsel %vm6075, %v6059, %v6092
    %v6109 = vsel %vm6076, %v6060, %v6093
    %s6110 = scalar_lea.vmem [#allocation3], 16
    %6111 = vst.msk [vmem:[%s6110 + $0x1] sm:$0xff] %vm106, %v6094
    %6112 = vst.msk [vmem:[%s6110 + $0x11] sm:$0xff] %vm106, %v6095
    %6113 = vst.msk [vmem:[%s6110 + $0x21] sm:$0xff] %vm106, %v6096
    %6114 = vst.msk [vmem:[%s6110 + $0x31] sm:$0xff] %vm106, %v6097
    %6115 = vst.msk [vmem:[%s6110 + $0x41] sm:$0xff] %vm106, %v6098
    %6116 = vst.msk [vmem:[%s6110 + $0x51] sm:$0xff] %vm106, %v6099
    %6117 = vst.msk [vmem:[%s6110 + $0x61] sm:$0xff] %vm106, %v6100
    %6118 = vst.msk [vmem:[%s6110 + $0x71] sm:$0xff] %vm106, %v6101
    %6119 = vst.msk [vmem:[%s6110 + $0xa1] sm:$0xff] %vm106, %v6102
    %6120 = vst.msk [vmem:[%s6110 + $0xb1] sm:$0xff] %vm106, %v6103
    %6121 = vst.msk [vmem:[%s6110 + $0xc1] sm:$0xff] %vm106, %v6104
    %6122 = vst.msk [vmem:[%s6110 + $0xd1] sm:$0xff] %vm106, %v6105
    %6123 = vst.msk [vmem:[%s6110 + $0xe1] sm:$0xff] %vm106, %v6106
    %6124 = vst.msk [vmem:[%s6110 + $0xf1] sm:$0xff] %vm106, %v6107
    %6125 = vst.msk [vmem:[%s6110 + $0x101] sm:$0xff] %vm106, %v6108
    %6126 = vst.msk [vmem:[%s6110 + $0x111] sm:$0xff] %vm106, %v6109
    %v6127 = vld [vmem:[#allocation3] sm:$0xff]
    %v6128 = vld [vmem:[#allocation3 + $0x10] sm:$0xff]
    %v6129 = vld [vmem:[#allocation3 + $0x20] sm:$0xff]
    %v6130 = vld [vmem:[#allocation3 + $0x30] sm:$0xff]
    %v6131 = vld [vmem:[#allocation3 + $0x40] sm:$0xff]
    %v6132 = vld [vmem:[#allocation3 + $0x50] sm:$0xff]
    %v6133 = vld [vmem:[#allocation3 + $0x60] sm:$0xff]
    %v6134 = vld [vmem:[#allocation3 + $0x70] sm:$0xff]
    %v6135 = vld [vmem:[#allocation3 + $0xa0] sm:$0xff]
    %v6136 = vld [vmem:[#allocation3 + $0xb0] sm:$0xff]
    %v6137 = vld [vmem:[#allocation3 + $0xc0] sm:$0xff]
    %v6138 = vld [vmem:[#allocation3 + $0xd0] sm:$0xff]
    %v6139 = vld [vmem:[#allocation3 + $0xe0] sm:$0xff]
    %v6140 = vld [vmem:[#allocation3 + $0xf0] sm:$0xff]
    %v6141 = vld [vmem:[#allocation3 + $0x100] sm:$0xff]
    %v6142 = vld [vmem:[#allocation3 + $0x110] sm:$0xff]
    %v6143 = vpack.c.bf16 %v6128, %v6127
    %v6144 = vpack.c.bf16 %v6130, %v6129
    %v6145 = vpack.c.bf16 %v6132, %v6131
    %v6146 = vpack.c.bf16 %v6134, %v6133
    %v6147 = vpack.c.bf16 %v6136, %v6135
    %v6148 = vpack.c.bf16 %v6138, %v6137
    %v6149 = vpack.c.bf16 %v6140, %v6139
    %v6150 = vpack.c.bf16 %v6142, %v6141
    %v6151 = vld [vmem:[%s4] sm:$0xf]
    %v6152 = vld [vmem:[%s4 + $0x4] sm:$0xf]
    %v6153 = vld [vmem:[%s4 + $0x8] sm:$0xf]
    %v6154 = vld [vmem:[%s4 + $0xc] sm:$0xf]
    %v6155 = vld [vmem:[%s4 + $0x10] sm:$0xf]
    %v6156 = vld [vmem:[%s4 + $0x14] sm:$0xf]
    %v6157 = vld [vmem:[%s4 + $0x18] sm:$0xf]
    %v6158 = vld [vmem:[%s4 + $0x1c] sm:$0xf]
    %v6159 = vld [vmem:[#allocation3 + $0x1] sm:$0xff]
    %v6160 = vld [vmem:[#allocation3 + $0x11] sm:$0xff]
    %v6161 = vld [vmem:[#allocation3 + $0x21] sm:$0xff]
    %v6162 = vld [vmem:[#allocation3 + $0x31] sm:$0xff]
    %v6163 = vld [vmem:[#allocation3 + $0x41] sm:$0xff]
    %v6164 = vld [vmem:[#allocation3 + $0x51] sm:$0xff]
    %v6165 = vld [vmem:[#allocation3 + $0x61] sm:$0xff]
    %v6166 = vld [vmem:[#allocation3 + $0x71] sm:$0xff]
    %v6167 = vld [vmem:[#allocation3 + $0xa1] sm:$0xff]
    %v6168 = vld [vmem:[#allocation3 + $0xb1] sm:$0xff]
    %v6169 = vld [vmem:[#allocation3 + $0xc1] sm:$0xff]
    %v6170 = vld [vmem:[#allocation3 + $0xd1] sm:$0xff]
    %v6171 = vld [vmem:[#allocation3 + $0xe1] sm:$0xff]
    %v6172 = vld [vmem:[#allocation3 + $0xf1] sm:$0xff]
    %v6173 = vld [vmem:[#allocation3 + $0x101] sm:$0xff]
    %v6174 = vld [vmem:[#allocation3 + $0x111] sm:$0xff]
    %v6175 = vpack.c.bf16 %v6160, %v6159
    %v6176 = vpack.c.bf16 %v6162, %v6161
    %v6177 = vpack.c.bf16 %v6164, %v6163
    %v6178 = vpack.c.bf16 %v6166, %v6165
    %v6179 = vpack.c.bf16 %v6168, %v6167
    %v6180 = vpack.c.bf16 %v6170, %v6169
    %v6181 = vpack.c.bf16 %v6172, %v6171
    %v6182 = vpack.c.bf16 %v6174, %v6173
    %s6183 = scalar_lea.vmem %s4, 32
    %v6184 = vld [vmem:[%s6183] sm:$0xf]
    %v6185 = vld [vmem:[%s6183 + $0x4] sm:$0xf]
    %v6186 = vld [vmem:[%s6183 + $0x8] sm:$0xf]
    %v6187 = vld [vmem:[%s6183 + $0xc] sm:$0xf]
    %v6188 = vld [vmem:[%s6183 + $0x10] sm:$0xf]
    %v6189 = vld [vmem:[%s6183 + $0x14] sm:$0xf]
    %v6190 = vld [vmem:[%s6183 + $0x18] sm:$0xf]
    %v6191 = vld [vmem:[%s6183 + $0x1c] sm:$0xf]
    %v6200 = vunpack.c.l.b16 %v6184
    %v6201 = vunpack.c.l.b16 %v6185
    %v6202 = vunpack.c.l.b16 %v6186
    %v6203 = vunpack.c.l.b16 %v6187
    %v6204 = vunpack.c.l.b16 %v6188
    %v6205 = vunpack.c.l.b16 %v6189
    %v6206 = vunpack.c.l.b16 %v6190
    %v6207 = vunpack.c.l.b16 %v6191
    %v6208 = vpack.c.b16 %v6201, %v6200
    %v6209 = vpack.c.b16 %v6203, %v6202
    %v6210 = vpack.c.b16 %v6205, %v6204
    %v6211 = vpack.c.b16 %v6207, %v6206
    %v6217 = vsel %vm106, %v6175, 0
    %v6220 = vsel %vm106, %v6176, 0
    %v6223 = vsel %vm106, %v6177, 0
    %v6226 = vsel %vm106, %v6178, 0
    %v6229 = vsel %vm106, %v6179, 0
    %v6232 = vsel %vm106, %v6180, 0
    %v6235 = vsel %vm106, %v6181, 0
    %v6238 = vsel %vm106, %v6182, 0
    %6240 = vmatprep.subr.bf16.mxu0 0
    %6241 = vmatpush1.bf16.msra.mxu0 %v6208
    %6242 = vmatprep.subr.bf16.mxu0 0
    %6243 = vmatpush1.bf16.msra.mxu0 %v6209
    %6244 = vmatprep.subr.bf16.mxu0 0
    %6245 = vmatpush1.bf16.msra.mxu0 %v6210
    %6246 = vmatprep.subr.bf16.mxu0 0
    %6247 = vmatpush1.bf16.msra.mxu0 %v6211
    %6248 = vmatprep.subr.bf16.mxu0 0
    %6249 = vmatpush1.bf16.msra.mxu0 0
    %6250 = vmatprep.subr.bf16.mxu0 0
    %6251 = vmatpush1.bf16.msra.mxu0 0
    %6252 = vmatprep.subr.bf16.mxu0 0
    %6253 = vmatpush1.bf16.msra.mxu0 0
    %6254 = vmatprep.subr.bf16.mxu0 0
    %6255 = vmatpush1.bf16.msra.mxu0 0
    %6256 = vmatprep.subr.bf16.mxu0 0
    %6257 = vmatpush1.bf16.msra.mxu0 0
    %6258 = vmatprep.subr.bf16.mxu0 0
    %6259 = vmatpush1.bf16.msra.mxu0 0
    %6260 = vmatprep.subr.bf16.mxu0 0
    %6261 = vmatpush1.bf16.msra.mxu0 0
    %6262 = vmatprep.subr.bf16.mxu0 0
    %6263 = vmatpush1.bf16.msra.mxu0 0
    %6264 = vmatprep.subr.bf16.mxu0 0
    %6265 = vmatpush1.bf16.msra.mxu0 0
    %6266 = vmatprep.subr.bf16.mxu0 0
    %6267 = vmatpush1.bf16.msra.mxu0 0
    %6268 = vmatprep.subr.bf16.mxu0 0
    %6269 = vmatpush1.bf16.msra.mxu0 0
    %6270 = vmatprep.subr.bf16.mxu0 0
    %6271 = vmatpush1.bf16.msra.mxu0 0
    %6272 = vmatprep.mubr.bf16.mxu0 0
    %6273 = vmatmul.mubr.bf16.gmra.mrb[0].mxu0 %v6217
    %v6274 = vpop.f32.mrb[0].mxu0
    %v6275 = vadd.f32 0.0, %v6274
    %v6276 = vpop.f32.mrb[0].mxu0
    %v6277 = vpop.f32.mrb[0].mxu0
    %v6278 = vadd.f32 0.0, %v6277
    %v6279 = vpop.f32.mrb[0].mxu0
    %6280 = vmatprep.mubr.bf16.mxu0 0
    %6281 = vmatmul.mubr.bf16.gmra.mrb[0].mxu0 %v6220
    %v6282 = vpop.f32.mrb[0].mxu0
    %v6283 = vadd.f32 0.0, %v6282
    %v6284 = vpop.f32.mrb[0].mxu0
    %v6285 = vpop.f32.mrb[0].mxu0
    %v6286 = vadd.f32 0.0, %v6285
    %v6287 = vpop.f32.mrb[0].mxu0
    %6288 = vmatprep.mubr.bf16.mxu0 0
    %6289 = vmatmul.mubr.bf16.gmra.mrb[0].mxu0 %v6223
    %v6290 = vpop.f32.mrb[0].mxu0
    %v6291 = vadd.f32 0.0, %v6290
    %v6292 = vpop.f32.mrb[0].mxu0
    %v6293 = vpop.f32.mrb[0].mxu0
    %v6294 = vadd.f32 0.0, %v6293
    %v6295 = vpop.f32.mrb[0].mxu0
    %6296 = vmatprep.mubr.bf16.mxu0 0
    %6297 = vmatmul.mubr.bf16.gmra.mrb[0].mxu0 %v6226
    %v6298 = vpop.f32.mrb[0].mxu0
    %v6299 = vadd.f32 0.0, %v6298
    %v6300 = vpop.f32.mrb[0].mxu0
    %v6301 = vpop.f32.mrb[0].mxu0
    %v6302 = vadd.f32 0.0, %v6301
    %v6303 = vpop.f32.mrb[0].mxu0
    %6304 = vmatprep.mubr.bf16.mxu0 0
    %6305 = vmatmul.mubr.bf16.gmra.mrb[0].mxu0 %v6229
    %v6306 = vpop.f32.mrb[0].mxu0
    %v6307 = vadd.f32 0.0, %v6306
    %v6308 = vpop.f32.mrb[0].mxu0
    %v6309 = vpop.f32.mrb[0].mxu0
    %v6310 = vadd.f32 0.0, %v6309
    %v6311 = vpop.f32.mrb[0].mxu0
    %6312 = vmatprep.mubr.bf16.mxu0 0
    %6313 = vmatmul.mubr.bf16.gmra.mrb[0].mxu0 %v6232
    %v6314 = vpop.f32.mrb[0].mxu0
    %v6315 = vadd.f32 0.0, %v6314
    %v6316 = vpop.f32.mrb[0].mxu0
    %v6317 = vpop.f32.mrb[0].mxu0
    %v6318 = vadd.f32 0.0, %v6317
    %v6319 = vpop.f32.mrb[0].mxu0
    %6320 = vmatprep.mubr.bf16.mxu0 0
    %6321 = vmatmul.mubr.bf16.gmra.mrb[0].mxu0 %v6235
    %v6322 = vpop.f32.mrb[0].mxu0
    %v6323 = vadd.f32 0.0, %v6322
    %v6324 = vpop.f32.mrb[0].mxu0
    %v6325 = vpop.f32.mrb[0].mxu0
    %v6326 = vadd.f32 0.0, %v6325
    %v6327 = vpop.f32.mrb[0].mxu0
    %6328 = vmatprep.mubr.bf16.mxu0 0
    %6329 = vmatmul.mubr.bf16.gmra.mrb[0].mxu0 %v6238
    %v6330 = vpop.f32.mrb[0].mxu0
    %v6331 = vadd.f32 0.0, %v6330
    %v6332 = vpop.f32.mrb[0].mxu0
    %v6333 = vpop.f32.mrb[0].mxu0
    %v6334 = vadd.f32 0.0, %v6333
    %v6335 = vpop.f32.mrb[0].mxu0
    %6336 = vdwg.mxu0
    %v6345 = vunpack.c.l.b16 %v6151
    %v6346 = vunpack.c.l.b16 %v6152
    %v6347 = vunpack.c.l.b16 %v6153
    %v6348 = vunpack.c.l.b16 %v6154
    %v6349 = vunpack.c.l.b16 %v6155
    %v6350 = vunpack.c.l.b16 %v6156
    %v6351 = vunpack.c.l.b16 %v6157
    %v6352 = vunpack.c.l.b16 %v6158
    %v6353 = vpack.c.b16 %v6346, %v6345
    %v6354 = vpack.c.b16 %v6348, %v6347
    %v6355 = vpack.c.b16 %v6350, %v6349
    %v6356 = vpack.c.b16 %v6352, %v6351
    %v6362 = vsel %vm106, %v6143, 0
    %v6365 = vsel %vm106, %v6144, 0
    %v6368 = vsel %vm106, %v6145, 0
    %v6371 = vsel %vm106, %v6146, 0
    %v6374 = vsel %vm106, %v6147, 0
    %v6377 = vsel %vm106, %v6148, 0
    %v6380 = vsel %vm106, %v6149, 0
    %v6383 = vsel %vm106, %v6150, 0
    %6385 = vmatprep.subr.bf16.mxu0 0
    %6386 = vmatpush1.bf16.msra.mxu0 %v6353
    %6387 = vmatprep.subr.bf16.mxu0 0
    %6388 = vmatpush1.bf16.msra.mxu0 %v6354
    %6389 = vmatprep.subr.bf16.mxu0 0
    %6390 = vmatpush1.bf16.msra.mxu0 %v6355
    %6391 = vmatprep.subr.bf16.mxu0 0
    %6392 = vmatpush1.bf16.msra.mxu0 %v6356
    %6393 = vmatprep.subr.bf16.mxu0 0
    %6394 = vmatpush1.bf16.msra.mxu0 0
    %6395 = vmatprep.subr.bf16.mxu0 0
    %6396 = vmatpush1.bf16.msra.mxu0 0
    %6397 = vmatprep.subr.bf16.mxu0 0
    %6398 = vmatpush1.bf16.msra.mxu0 0
    %6399 = vmatprep.subr.bf16.mxu0 0
    %6400 = vmatpush1.bf16.msra.mxu0 0
    %6401 = vmatprep.subr.bf16.mxu0 0
    %6402 = vmatpush1.bf16.msra.mxu0 0
    %6403 = vmatprep.subr.bf16.mxu0 0
    %6404 = vmatpush1.bf16.msra.mxu0 0
    %6405 = vmatprep.subr.bf16.mxu0 0
    %6406 = vmatpush1.bf16.msra.mxu0 0
    %6407 = vmatprep.subr.bf16.mxu0 0
    %6408 = vmatpush1.bf16.msra.mxu0 0
    %6409 = vmatprep.subr.bf16.mxu0 0
    %6410 = vmatpush1.bf16.msra.mxu0 0
    %6411 = vmatprep.subr.bf16.mxu0 0
    %6412 = vmatpush1.bf16.msra.mxu0 0
    %6413 = vmatprep.subr.bf16.mxu0 0
    %6414 = vmatpush1.bf16.msra.mxu0 0
    %6415 = vmatprep.subr.bf16.mxu0 0
    %6416 = vmatpush1.bf16.msra.mxu0 0
    %6417 = vmatprep.mubr.bf16.mxu0 0
    %6418 = vmatmul.mubr.bf16.gmra.mrb[0].mxu0 %v6362
    %v6419 = vpop.f32.mrb[0].mxu0
    %v6420 = vadd.f32 %v6275, %v6419
    %v6421 = vpop.f32.mrb[0].mxu0
    %v6422 = vpop.f32.mrb[0].mxu0
    %v6423 = vadd.f32 %v6278, %v6422
    %v6424 = vpop.f32.mrb[0].mxu0
    %6425 = vmatprep.mubr.bf16.mxu0 0
    %6426 = vmatmul.mubr.bf16.gmra.mrb[0].mxu0 %v6365
    %v6427 = vpop.f32.mrb[0].mxu0
    %v6428 = vadd.f32 %v6283, %v6427
    %v6429 = vpop.f32.mrb[0].mxu0
    %v6430 = vpop.f32.mrb[0].mxu0
    %v6431 = vadd.f32 %v6286, %v6430
    %v6432 = vpop.f32.mrb[0].mxu0
    %6433 = vmatprep.mubr.bf16.mxu0 0
    %6434 = vmatmul.mubr.bf16.gmra.mrb[0].mxu0 %v6368
    %v6435 = vpop.f32.mrb[0].mxu0
    %v6436 = vadd.f32 %v6291, %v6435
    %v6437 = vpop.f32.mrb[0].mxu0
    %v6438 = vpop.f32.mrb[0].mxu0
    %v6439 = vadd.f32 %v6294, %v6438
    %v6440 = vpop.f32.mrb[0].mxu0
    %6441 = vmatprep.mubr.bf16.mxu0 0
    %6442 = vmatmul.mubr.bf16.gmra.mrb[0].mxu0 %v6371
    %v6443 = vpop.f32.mrb[0].mxu0
    %v6444 = vadd.f32 %v6299, %v6443
    %v6445 = vpop.f32.mrb[0].mxu0
    %v6446 = vpop.f32.mrb[0].mxu0
    %v6447 = vadd.f32 %v6302, %v6446
    %v6448 = vpop.f32.mrb[0].mxu0
    %6449 = vmatprep.mubr.bf16.mxu0 0
    %6450 = vmatmul.mubr.bf16.gmra.mrb[0].mxu0 %v6374
    %v6451 = vpop.f32.mrb[0].mxu0
    %v6452 = vadd.f32 %v6307, %v6451
    %v6453 = vpop.f32.mrb[0].mxu0
    %v6454 = vpop.f32.mrb[0].mxu0
    %v6455 = vadd.f32 %v6310, %v6454
    %v6456 = vpop.f32.mrb[0].mxu0
    %6457 = vmatprep.mubr.bf16.mxu0 0
    %6458 = vmatmul.mubr.bf16.gmra.mrb[0].mxu0 %v6377
    %v6459 = vpop.f32.mrb[0].mxu0
    %v6460 = vadd.f32 %v6315, %v6459
    %v6461 = vpop.f32.mrb[0].mxu0
    %v6462 = vpop.f32.mrb[0].mxu0
    %v6463 = vadd.f32 %v6318, %v6462
    %v6464 = vpop.f32.mrb[0].mxu0
    %6465 = vmatprep.mubr.bf16.mxu0 0
    %6466 = vmatmul.mubr.bf16.gmra.mrb[0].mxu0 %v6380
    %v6467 = vpop.f32.mrb[0].mxu0
    %v6468 = vadd.f32 %v6323, %v6467
    %v6469 = vpop.f32.mrb[0].mxu0
    %v6470 = vpop.f32.mrb[0].mxu0
    %v6471 = vadd.f32 %v6326, %v6470
    %v6472 = vpop.f32.mrb[0].mxu0
    %6473 = vmatprep.mubr.bf16.mxu0 0
    %6474 = vmatmul.mubr.bf16.gmra.mrb[0].mxu0 %v6383
    %v6475 = vpop.f32.mrb[0].mxu0
    %v6476 = vadd.f32 %v6331, %v6475
    %v6477 = vpop.f32.mrb[0].mxu0
    %v6478 = vpop.f32.mrb[0].mxu0
    %v6479 = vadd.f32 %v6334, %v6478
    %v6480 = vpop.f32.mrb[0].mxu0
    %6481 = vdwg.mxu0
    %v6482 = vld [vmem:[#allocation3 + $0x2] sm:$0xff]
    %v6483 = vld [vmem:[#allocation3 + $0x12] sm:$0xff]
    %v6484 = vld [vmem:[#allocation3 + $0x22] sm:$0xff]
    %v6485 = vld [vmem:[#allocation3 + $0x32] sm:$0xff]
    %v6486 = vld [vmem:[#allocation3 + $0x42] sm:$0xff]
    %v6487 = vld [vmem:[#allocation3 + $0x52] sm:$0xff]
    %v6488 = vld [vmem:[#allocation3 + $0x62] sm:$0xff]
    %v6489 = vld [vmem:[#allocation3 + $0x72] sm:$0xff]
    %v6490 = vld [vmem:[#allocation3 + $0xa2] sm:$0xff]
    %v6491 = vld [vmem:[#allocation3 + $0xb2] sm:$0xff]
    %v6492 = vld [vmem:[#allocation3 + $0xc2] sm:$0xff]
    %v6493 = vld [vmem:[#allocation3 + $0xd2] sm:$0xff]
    %v6494 = vld [vmem:[#allocation3 + $0xe2] sm:$0xff]
    %v6495 = vld [vmem:[#allocation3 + $0xf2] sm:$0xff]
    %v6496 = vld [vmem:[#allocation3 + $0x102] sm:$0xff]
    %v6497 = vld [vmem:[#allocation3 + $0x112] sm:$0xff]
    %v6498 = vpack.c.bf16 %v6483, %v6482
    %v6499 = vpack.c.bf16 %v6485, %v6484
    %v6500 = vpack.c.bf16 %v6487, %v6486
    %v6501 = vpack.c.bf16 %v6489, %v6488
    %v6502 = vpack.c.bf16 %v6491, %v6490
    %v6503 = vpack.c.bf16 %v6493, %v6492
    %v6504 = vpack.c.bf16 %v6495, %v6494
    %v6505 = vpack.c.bf16 %v6497, %v6496
    %s6506 = scalar_lea.vmem %s4, 64
    %v6507 = vld [vmem:[%s6506] sm:$0xf]
    %v6508 = vld [vmem:[%s6506 + $0x4] sm:$0xf]
    %v6509 = vld [vmem:[%s6506 + $0x8] sm:$0xf]
    %v6510 = vld [vmem:[%s6506 + $0xc] sm:$0xf]
    %v6511 = vld [vmem:[%s6506 + $0x10] sm:$0xf]
    %v6512 = vld [vmem:[%s6506 + $0x14] sm:$0xf]
    %v6513 = vld [vmem:[%s6506 + $0x18] sm:$0xf]
    %v6514 = vld [vmem:[%s6506 + $0x1c] sm:$0xf]
    %v6523 = vunpack.c.l.b16 %v6507
    %v6524 = vunpack.c.l.b16 %v6508
    %v6525 = vunpack.c.l.b16 %v6509
    %v6526 = vunpack.c.l.b16 %v6510
    %v6527 = vunpack.c.l.b16 %v6511
    %v6528 = vunpack.c.l.b16 %v6512
    %v6529 = vunpack.c.l.b16 %v6513
    %v6530 = vunpack.c.l.b16 %v6514
    %v6531 = vpack.c.b16 %v6524, %v6523
    %v6532 = vpack.c.b16 %v6526, %v6525
    %v6533 = vpack.c.b16 %v6528, %v6527
    %v6534 = vpack.c.b16 %v6530, %v6529
    %v6540 = vsel %vm106, %v6498, 0
    %v6543 = vsel %vm106, %v6499, 0
    %v6546 = vsel %vm106, %v6500, 0
    %v6549 = vsel %vm106, %v6501, 0
    %v6552 = vsel %vm106, %v6502, 0
    %v6555 = vsel %vm106, %v6503, 0
    %v6558 = vsel %vm106, %v6504, 0
    %v6561 = vsel %vm106, %v6505, 0
    %6563 = vmatprep.subr.bf16.mxu0 0
    %6564 = vmatpush1.bf16.msra.mxu0 %v6531
    %6565 = vmatprep.subr.bf16.mxu0 0
    %6566 = vmatpush1.bf16.msra.mxu0 %v6532
    %6567 = vmatprep.subr.bf16.mxu0 0
    %6568 = vmatpush1.bf16.msra.mxu0 %v6533
    %6569 = vmatprep.subr.bf16.mxu0 0
    %6570 = vmatpush1.bf16.msra.mxu0 %v6534
    %6571 = vmatprep.subr.bf16.mxu0 0
    %6572 = vmatpush1.bf16.msra.mxu0 0
    %6573 = vmatprep.subr.bf16.mxu0 0
    %6574 = vmatpush1.bf16.msra.mxu0 0
    %6575 = vmatprep.subr.bf16.mxu0 0
    %6576 = vmatpush1.bf16.msra.mxu0 0
    %6577 = vmatprep.subr.bf16.mxu0 0
    %6578 = vmatpush1.bf16.msra.mxu0 0
    %6579 = vmatprep.subr.bf16.mxu0 0
    %6580 = vmatpush1.bf16.msra.mxu0 0
    %6581 = vmatprep.subr.bf16.mxu0 0
    %6582 = vmatpush1.bf16.msra.mxu0 0
    %6583 = vmatprep.subr.bf16.mxu0 0
    %6584 = vmatpush1.bf16.msra.mxu0 0
    %6585 = vmatprep.subr.bf16.mxu0 0
    %6586 = vmatpush1.bf16.msra.mxu0 0
    %6587 = vmatprep.subr.bf16.mxu0 0
    %6588 = vmatpush1.bf16.msra.mxu0 0
    %6589 = vmatprep.subr.bf16.mxu0 0
    %6590 = vmatpush1.bf16.msra.mxu0 0
    %6591 = vmatprep.subr.bf16.mxu0 0
    %6592 = vmatpush1.bf16.msra.mxu0 0
    %6593 = vmatprep.subr.bf16.mxu0 0
    %6594 = vmatpush1.bf16.msra.mxu0 0
    %6595 = vmatprep.mubr.bf16.mxu0 0
    %6596 = vmatmul.mubr.bf16.gmra.mrb[0].mxu0 %v6540
    %v6597 = vpop.f32.mrb[0].mxu0
    %v6598 = vadd.f32 0.0, %v6597
    %v6599 = vpop.f32.mrb[0].mxu0
    %v6600 = vpop.f32.mrb[0].mxu0
    %v6601 = vadd.f32 0.0, %v6600
    %v6602 = vpop.f32.mrb[0].mxu0
    %6603 = vmatprep.mubr.bf16.mxu0 0
    %6604 = vmatmul.mubr.bf16.gmra.mrb[0].mxu0 %v6543
    %v6605 = vpop.f32.mrb[0].mxu0
    %v6606 = vadd.f32 0.0, %v6605
    %v6607 = vpop.f32.mrb[0].mxu0
    %v6608 = vpop.f32.mrb[0].mxu0
    %v6609 = vadd.f32 0.0, %v6608
    %v6610 = vpop.f32.mrb[0].mxu0
    %6611 = vmatprep.mubr.bf16.mxu0 0
    %6612 = vmatmul.mubr.bf16.gmra.mrb[0].mxu0 %v6546
    %v6613 = vpop.f32.mrb[0].mxu0
    %v6614 = vadd.f32 0.0, %v6613
    %v6615 = vpop.f32.mrb[0].mxu0
    %v6616 = vpop.f32.mrb[0].mxu0
    %v6617 = vadd.f32 0.0, %v6616
    %v6618 = vpop.f32.mrb[0].mxu0
    %6619 = vmatprep.mubr.bf16.mxu0 0
    %6620 = vmatmul.mubr.bf16.gmra.mrb[0].mxu0 %v6549
    %v6621 = vpop.f32.mrb[0].mxu0
    %v6622 = vadd.f32 0.0, %v6621
    %v6623 = vpop.f32.mrb[0].mxu0
    %v6624 = vpop.f32.mrb[0].mxu0
    %v6625 = vadd.f32 0.0, %v6624
    %v6626 = vpop.f32.mrb[0].mxu0
    %6627 = vmatprep.mubr.bf16.mxu0 0
    %6628 = vmatmul.mubr.bf16.gmra.mrb[0].mxu0 %v6552
    %v6629 = vpop.f32.mrb[0].mxu0
    %v6630 = vadd.f32 0.0, %v6629
    %v6631 = vpop.f32.mrb[0].mxu0
    %v6632 = vpop.f32.mrb[0].mxu0
    %v6633 = vadd.f32 0.0, %v6632
    %v6634 = vpop.f32.mrb[0].mxu0
    %6635 = vmatprep.mubr.bf16.mxu0 0
    %6636 = vmatmul.mubr.bf16.gmra.mrb[0].mxu0 %v6555
    %v6637 = vpop.f32.mrb[0].mxu0
    %v6638 = vadd.f32 0.0, %v6637
    %v6639 = vpop.f32.mrb[0].mxu0
    %v6640 = vpop.f32.mrb[0].mxu0
    %v6641 = vadd.f32 0.0, %v6640
    %v6642 = vpop.f32.mrb[0].mxu0
    %6643 = vmatprep.mubr.bf16.mxu0 0
    %6644 = vmatmul.mubr.bf16.gmra.mrb[0].mxu0 %v6558
    %v6645 = vpop.f32.mrb[0].mxu0
    %v6646 = vadd.f32 0.0, %v6645
    %v6647 = vpop.f32.mrb[0].mxu0
    %v6648 = vpop.f32.mrb[0].mxu0
    %v6649 = vadd.f32 0.0, %v6648
    %v6650 = vpop.f32.mrb[0].mxu0
    %6651 = vmatprep.mubr.bf16.mxu0 0
    %6652 = vmatmul.mubr.bf16.gmra.mrb[0].mxu0 %v6561
    %v6653 = vpop.f32.mrb[0].mxu0
    %v6654 = vadd.f32 0.0, %v6653
    %v6655 = vpop.f32.mrb[0].mxu0
    %v6656 = vpop.f32.mrb[0].mxu0
    %v6657 = vadd.f32 0.0, %v6656
    %v6658 = vpop.f32.mrb[0].mxu0
    %6659 = vdwg.mxu0
    %v6660 = vadd.f32 %v6420, %v6598
    %v6661 = vadd.f32 %v6423, %v6601
    %v6662 = vadd.f32 %v6428, %v6606
    %v6663 = vadd.f32 %v6431, %v6609
    %v6664 = vadd.f32 %v6436, %v6614
    %v6665 = vadd.f32 %v6439, %v6617
    %v6666 = vadd.f32 %v6444, %v6622
    %v6667 = vadd.f32 %v6447, %v6625
    %v6668 = vadd.f32 %v6452, %v6630
    %v6669 = vadd.f32 %v6455, %v6633
    %v6670 = vadd.f32 %v6460, %v6638
    %v6671 = vadd.f32 %v6463, %v6641
    %v6672 = vadd.f32 %v6468, %v6646
    %v6673 = vadd.f32 %v6471, %v6649
    %v6674 = vadd.f32 %v6476, %v6654
    %v6675 = vadd.f32 %v6479, %v6657
    %v6676 = vld [vmem:[%s6110] sm:$0xff]
    %v6677 = vld [vmem:[%s6110 + $0x10] sm:$0xff]
    %v6678 = vld [vmem:[%s6110 + $0x20] sm:$0xff]
    %v6679 = vld [vmem:[%s6110 + $0x30] sm:$0xff]
    %v6680 = vld [vmem:[%s6110 + $0x40] sm:$0xff]
    %v6681 = vld [vmem:[%s6110 + $0x50] sm:$0xff]
    %v6682 = vld [vmem:[%s6110 + $0x60] sm:$0xff]
    %v6683 = vld [vmem:[%s6110 + $0x70] sm:$0xff]
    %v6684 = vld [vmem:[%s6110 + $0xa0] sm:$0xff]
    %v6685 = vld [vmem:[%s6110 + $0xb0] sm:$0xff]
    %v6686 = vld [vmem:[%s6110 + $0xc0] sm:$0xff]
    %v6687 = vld [vmem:[%s6110 + $0xd0] sm:$0xff]
    %v6688 = vld [vmem:[%s6110 + $0xe0] sm:$0xff]
    %v6689 = vld [vmem:[%s6110 + $0xf0] sm:$0xff]
    %v6690 = vld [vmem:[%s6110 + $0x100] sm:$0xff]
    %v6691 = vld [vmem:[%s6110 + $0x110] sm:$0xff]
    %v6692 = vpack.c.bf16 %v6677, %v6676
    %v6693 = vpack.c.bf16 %v6679, %v6678
    %v6694 = vpack.c.bf16 %v6681, %v6680
    %v6695 = vpack.c.bf16 %v6683, %v6682
    %v6696 = vpack.c.bf16 %v6685, %v6684
    %v6697 = vpack.c.bf16 %v6687, %v6686
    %v6698 = vpack.c.bf16 %v6689, %v6688
    %v6699 = vpack.c.bf16 %v6691, %v6690
    %s6700 = scalar_lea.vmem %s4, 96
    %v6701 = vld [vmem:[%s6700] sm:$0xf]
    %v6702 = vld [vmem:[%s6700 + $0x4] sm:$0xf]
    %v6703 = vld [vmem:[%s6700 + $0x8] sm:$0xf]
    %v6704 = vld [vmem:[%s6700 + $0xc] sm:$0xf]
    %v6705 = vld [vmem:[%s6700 + $0x10] sm:$0xf]
    %v6706 = vld [vmem:[%s6700 + $0x14] sm:$0xf]
    %v6707 = vld [vmem:[%s6700 + $0x18] sm:$0xf]
    %v6708 = vld [vmem:[%s6700 + $0x1c] sm:$0xf]
    %v6717 = vunpack.c.l.b16 %v6701
    %v6718 = vunpack.c.l.b16 %v6702
    %v6719 = vunpack.c.l.b16 %v6703
    %v6720 = vunpack.c.l.b16 %v6704
    %v6721 = vunpack.c.l.b16 %v6705
    %v6722 = vunpack.c.l.b16 %v6706
    %v6723 = vunpack.c.l.b16 %v6707
    %v6724 = vunpack.c.l.b16 %v6708
    %v6725 = vpack.c.b16 %v6718, %v6717
    %v6726 = vpack.c.b16 %v6720, %v6719
    %v6727 = vpack.c.b16 %v6722, %v6721
    %v6728 = vpack.c.b16 %v6724, %v6723
    %v6734 = vsel %vm106, %v6692, 0
    %v6737 = vsel %vm106, %v6693, 0
    %v6740 = vsel %vm106, %v6694, 0
    %v6743 = vsel %vm106, %v6695, 0
    %v6746 = vsel %vm106, %v6696, 0
    %v6749 = vsel %vm106, %v6697, 0
    %v6752 = vsel %vm106, %v6698, 0
    %v6755 = vsel %vm106, %v6699, 0
    %6757 = vmatprep.subr.bf16.mxu0 0
    %6758 = vmatpush1.bf16.msra.mxu0 %v6725
    %6759 = vmatprep.subr.bf16.mxu0 0
    %6760 = vmatpush1.bf16.msra.mxu0 %v6726
    %6761 = vmatprep.subr.bf16.mxu0 0
    %6762 = vmatpush1.bf16.msra.mxu0 %v6727
    %6763 = vmatprep.subr.bf16.mxu0 0
    %6764 = vmatpush1.bf16.msra.mxu0 %v6728
    %6765 = vmatprep.subr.bf16.mxu0 0
    %6766 = vmatpush1.bf16.msra.mxu0 0
    %6767 = vmatprep.subr.bf16.mxu0 0
    %6768 = vmatpush1.bf16.msra.mxu0 0
    %6769 = vmatprep.subr.bf16.mxu0 0
    %6770 = vmatpush1.bf16.msra.mxu0 0
    %6771 = vmatprep.subr.bf16.mxu0 0
    %6772 = vmatpush1.bf16.msra.mxu0 0
    %6773 = vmatprep.subr.bf16.mxu0 0
    %6774 = vmatpush1.bf16.msra.mxu0 0
    %6775 = vmatprep.subr.bf16.mxu0 0
    %6776 = vmatpush1.bf16.msra.mxu0 0
    %6777 = vmatprep.subr.bf16.mxu0 0
    %6778 = vmatpush1.bf16.msra.mxu0 0
    %6779 = vmatprep.subr.bf16.mxu0 0
    %6780 = vmatpush1.bf16.msra.mxu0 0
    %6781 = vmatprep.subr.bf16.mxu0 0
    %6782 = vmatpush1.bf16.msra.mxu0 0
    %6783 = vmatprep.subr.bf16.mxu0 0
    %6784 = vmatpush1.bf16.msra.mxu0 0
    %6785 = vmatprep.subr.bf16.mxu0 0
    %6786 = vmatpush1.bf16.msra.mxu0 0
    %6787 = vmatprep.subr.bf16.mxu0 0
    %6788 = vmatpush1.bf16.msra.mxu0 0
    %6789 = vmatprep.mubr.bf16.mxu0 0
    %6790 = vmatmul.mubr.bf16.gmra.mrb[0].mxu0 %v6734
    %v6791 = vpop.f32.mrb[0].mxu0
    %v6792 = vadd.f32 0.0, %v6791
    %v6793 = vpop.f32.mrb[0].mxu0
    %v6794 = vpop.f32.mrb[0].mxu0
    %v6795 = vadd.f32 0.0, %v6794
    %v6796 = vpop.f32.mrb[0].mxu0
    %6797 = vmatprep.mubr.bf16.mxu0 0
    %6798 = vmatmul.mubr.bf16.gmra.mrb[0].mxu0 %v6737
    %v6799 = vpop.f32.mrb[0].mxu0
    %v6800 = vadd.f32 0.0, %v6799
    %v6801 = vpop.f32.mrb[0].mxu0
    %v6802 = vpop.f32.mrb[0].mxu0
    %v6803 = vadd.f32 0.0, %v6802
    %v6804 = vpop.f32.mrb[0].mxu0
    %6805 = vmatprep.mubr.bf16.mxu0 0
    %6806 = vmatmul.mubr.bf16.gmra.mrb[0].mxu0 %v6740
    %v6807 = vpop.f32.mrb[0].mxu0
    %v6808 = vadd.f32 0.0, %v6807
    %v6809 = vpop.f32.mrb[0].mxu0
    %v6810 = vpop.f32.mrb[0].mxu0
    %v6811 = vadd.f32 0.0, %v6810
    %v6812 = vpop.f32.mrb[0].mxu0
    %6813 = vmatprep.mubr.bf16.mxu0 0
    %6814 = vmatmul.mubr.bf16.gmra.mrb[0].mxu0 %v6743
    %v6815 = vpop.f32.mrb[0].mxu0
    %v6816 = vadd.f32 0.0, %v6815
    %v6817 = vpop.f32.mrb[0].mxu0
    %v6818 = vpop.f32.mrb[0].mxu0
    %v6819 = vadd.f32 0.0, %v6818
    %v6820 = vpop.f32.mrb[0].mxu0
    %6821 = vmatprep.mubr.bf16.mxu0 0
    %6822 = vmatmul.mubr.bf16.gmra.mrb[0].mxu0 %v6746
    %v6823 = vpop.f32.mrb[0].mxu0
    %v6824 = vadd.f32 0.0, %v6823
    %v6825 = vpop.f32.mrb[0].mxu0
    %v6826 = vpop.f32.mrb[0].mxu0
    %v6827 = vadd.f32 0.0, %v6826
    %v6828 = vpop.f32.mrb[0].mxu0
    %6829 = vmatprep.mubr.bf16.mxu0 0
    %6830 = vmatmul.mubr.bf16.gmra.mrb[0].mxu0 %v6749
    %v6831 = vpop.f32.mrb[0].mxu0
    %v6832 = vadd.f32 0.0, %v6831
    %v6833 = vpop.f32.mrb[0].mxu0
    %v6834 = vpop.f32.mrb[0].mxu0
    %v6835 = vadd.f32 0.0, %v6834
    %v6836 = vpop.f32.mrb[0].mxu0
    %6837 = vmatprep.mubr.bf16.mxu0 0
    %6838 = vmatmul.mubr.bf16.gmra.mrb[0].mxu0 %v6752
    %v6839 = vpop.f32.mrb[0].mxu0
    %v6840 = vadd.f32 0.0, %v6839
    %v6841 = vpop.f32.mrb[0].mxu0
    %v6842 = vpop.f32.mrb[0].mxu0
    %v6843 = vadd.f32 0.0, %v6842
    %v6844 = vpop.f32.mrb[0].mxu0
    %6845 = vmatprep.mubr.bf16.mxu0 0
    %6846 = vmatmul.mubr.bf16.gmra.mrb[0].mxu0 %v6755
    %v6847 = vpop.f32.mrb[0].mxu0
    %v6848 = vadd.f32 0.0, %v6847
    %v6849 = vpop.f32.mrb[0].mxu0
    %v6850 = vpop.f32.mrb[0].mxu0
    %v6851 = vadd.f32 0.0, %v6850
    %v6852 = vpop.f32.mrb[0].mxu0
    %6853 = vdwg.mxu0
    %v6854 = vadd.f32 %v6660, %v6792
    %v6855 = vadd.f32 %v6661, %v6795
    %v6856 = vadd.f32 %v6662, %v6800
    %v6857 = vadd.f32 %v6663, %v6803
    %v6858 = vadd.f32 %v6664, %v6808
    %v6859 = vadd.f32 %v6665, %v6811
    %v6860 = vadd.f32 %v6666, %v6816
    %v6861 = vadd.f32 %v6667, %v6819
    %v6862 = vadd.f32 %v6668, %v6824
    %v6863 = vadd.f32 %v6669, %v6827
    %v6864 = vadd.f32 %v6670, %v6832
    %v6865 = vadd.f32 %v6671, %v6835
    %v6866 = vadd.f32 %v6672, %v6840
    %v6867 = vadd.f32 %v6673, %v6843
    %v6868 = vadd.f32 %v6674, %v6848
    %v6869 = vadd.f32 %v6675, %v6851
    %v6870 = vld [vmem:[%s6110 + $0x1] sm:$0xff]
    %v6871 = vld [vmem:[%s6110 + $0x11] sm:$0xff]
    %v6872 = vld [vmem:[%s6110 + $0x21] sm:$0xff]
    %v6873 = vld [vmem:[%s6110 + $0x31] sm:$0xff]
    %v6874 = vld [vmem:[%s6110 + $0x41] sm:$0xff]
    %v6875 = vld [vmem:[%s6110 + $0x51] sm:$0xff]
    %v6876 = vld [vmem:[%s6110 + $0x61] sm:$0xff]
    %v6877 = vld [vmem:[%s6110 + $0x71] sm:$0xff]
    %v6878 = vld [vmem:[%s6110 + $0xa1] sm:$0xff]
    %v6879 = vld [vmem:[%s6110 + $0xb1] sm:$0xff]
    %v6880 = vld [vmem:[%s6110 + $0xc1] sm:$0xff]
    %v6881 = vld [vmem:[%s6110 + $0xd1] sm:$0xff]
    %v6882 = vld [vmem:[%s6110 + $0xe1] sm:$0xff]
    %v6883 = vld [vmem:[%s6110 + $0xf1] sm:$0xff]
    %v6884 = vld [vmem:[%s6110 + $0x101] sm:$0xff]
    %v6885 = vld [vmem:[%s6110 + $0x111] sm:$0xff]
    %v6886 = vpack.c.bf16 %v6871, %v6870
    %v6887 = vpack.c.bf16 %v6873, %v6872
    %v6888 = vpack.c.bf16 %v6875, %v6874
    %v6889 = vpack.c.bf16 %v6877, %v6876
    %v6890 = vpack.c.bf16 %v6879, %v6878
    %v6891 = vpack.c.bf16 %v6881, %v6880
    %v6892 = vpack.c.bf16 %v6883, %v6882
    %v6893 = vpack.c.bf16 %v6885, %v6884
    %s6894 = scalar_lea.vmem %s4, 128
    %v6895 = vld [vmem:[%s6894] sm:$0xf]
    %v6896 = vld [vmem:[%s6894 + $0x4] sm:$0xf]
    %v6897 = vld [vmem:[%s6894 + $0x8] sm:$0xf]
    %v6898 = vld [vmem:[%s6894 + $0xc] sm:$0xf]
    %v6899 = vld [vmem:[%s6894 + $0x10] sm:$0xf]
    %v6900 = vld [vmem:[%s6894 + $0x14] sm:$0xf]
    %v6901 = vld [vmem:[%s6894 + $0x18] sm:$0xf]
    %v6902 = vld [vmem:[%s6894 + $0x1c] sm:$0xf]
    %v6911 = vunpack.c.l.b16 %v6895
    %v6912 = vunpack.c.l.b16 %v6896
    %v6913 = vunpack.c.l.b16 %v6897
    %v6914 = vunpack.c.l.b16 %v6898
    %v6915 = vunpack.c.l.b16 %v6899
    %v6916 = vunpack.c.l.b16 %v6900
    %v6917 = vunpack.c.l.b16 %v6901
    %v6918 = vunpack.c.l.b16 %v6902
    %v6919 = vpack.c.b16 %v6912, %v6911
    %v6920 = vpack.c.b16 %v6914, %v6913
    %v6921 = vpack.c.b16 %v6916, %v6915
    %v6922 = vpack.c.b16 %v6918, %v6917
    %v6928 = vsel %vm106, %v6886, 0
    %v6931 = vsel %vm106, %v6887, 0
    %v6934 = vsel %vm106, %v6888, 0
    %v6937 = vsel %vm106, %v6889, 0
    %v6940 = vsel %vm106, %v6890, 0
    %v6943 = vsel %vm106, %v6891, 0
    %v6946 = vsel %vm106, %v6892, 0
    %v6949 = vsel %vm106, %v6893, 0
    %6951 = vmatprep.subr.bf16.mxu0 0
    %6952 = vmatpush1.bf16.msra.mxu0 %v6919
    %6953 = vmatprep.subr.bf16.mxu0 0
    %6954 = vmatpush1.bf16.msra.mxu0 %v6920
    %6955 = vmatprep.subr.bf16.mxu0 0
    %6956 = vmatpush1.bf16.msra.mxu0 %v6921
    %6957 = vmatprep.subr.bf16.mxu0 0
    %6958 = vmatpush1.bf16.msra.mxu0 %v6922
    %6959 = vmatprep.subr.bf16.mxu0 0
    %6960 = vmatpush1.bf16.msra.mxu0 0
    %6961 = vmatprep.subr.bf16.mxu0 0
    %6962 = vmatpush1.bf16.msra.mxu0 0
    %6963 = vmatprep.subr.bf16.mxu0 0
    %6964 = vmatpush1.bf16.msra.mxu0 0
    %6965 = vmatprep.subr.bf16.mxu0 0
    %6966 = vmatpush1.bf16.msra.mxu0 0
    %6967 = vmatprep.subr.bf16.mxu0 0
    %6968 = vmatpush1.bf16.msra.mxu0 0
    %6969 = vmatprep.subr.bf16.mxu0 0
    %6970 = vmatpush1.bf16.msra.mxu0 0
    %6971 = vmatprep.subr.bf16.mxu0 0
    %6972 = vmatpush1.bf16.msra.mxu0 0
    %6973 = vmatprep.subr.bf16.mxu0 0
    %6974 = vmatpush1.bf16.msra.mxu0 0
    %6975 = vmatprep.subr.bf16.mxu0 0
    %6976 = vmatpush1.bf16.msra.mxu0 0
    %6977 = vmatprep.subr.bf16.mxu0 0
    %6978 = vmatpush1.bf16.msra.mxu0 0
    %6979 = vmatprep.subr.bf16.mxu0 0
    %6980 = vmatpush1.bf16.msra.mxu0 0
    %6981 = vmatprep.subr.bf16.mxu0 0
    %6982 = vmatpush1.bf16.msra.mxu0 0
    %6983 = vmatprep.mubr.bf16.mxu0 0
    %6984 = vmatmul.mubr.bf16.gmra.mrb[0].mxu0 %v6928
    %v6985 = vpop.f32.mrb[0].mxu0
    %v6986 = vadd.f32 0.0, %v6985
    %v6987 = vpop.f32.mrb[0].mxu0
    %v6988 = vpop.f32.mrb[0].mxu0
    %v6989 = vadd.f32 0.0, %v6988
    %v6990 = vpop.f32.mrb[0].mxu0
    %6991 = vmatprep.mubr.bf16.mxu0 0
    %6992 = vmatmul.mubr.bf16.gmra.mrb[0].mxu0 %v6931
    %v6993 = vpop.f32.mrb[0].mxu0
    %v6994 = vadd.f32 0.0, %v6993
    %v6995 = vpop.f32.mrb[0].mxu0
    %v6996 = vpop.f32.mrb[0].mxu0
    %v6997 = vadd.f32 0.0, %v6996
    %v6998 = vpop.f32.mrb[0].mxu0
    %6999 = vmatprep.mubr.bf16.mxu0 0
    %7000 = vmatmul.mubr.bf16.gmra.mrb[0].mxu0 %v6934
    %v7001 = vpop.f32.mrb[0].mxu0
    %v7002 = vadd.f32 0.0, %v7001
    %v7003 = vpop.f32.mrb[0].mxu0
    %v7004 = vpop.f32.mrb[0].mxu0
    %v7005 = vadd.f32 0.0, %v7004
    %v7006 = vpop.f32.mrb[0].mxu0
    %7007 = vmatprep.mubr.bf16.mxu0 0
    %7008 = vmatmul.mubr.bf16.gmra.mrb[0].mxu0 %v6937
    %v7009 = vpop.f32.mrb[0].mxu0
    %v7010 = vadd.f32 0.0, %v7009
    %v7011 = vpop.f32.mrb[0].mxu0
    %v7012 = vpop.f32.mrb[0].mxu0
    %v7013 = vadd.f32 0.0, %v7012
    %v7014 = vpop.f32.mrb[0].mxu0
    %7015 = vmatprep.mubr.bf16.mxu0 0
    %7016 = vmatmul.mubr.bf16.gmra.mrb[0].mxu0 %v6940
    %v7017 = vpop.f32.mrb[0].mxu0
    %v7018 = vadd.f32 0.0, %v7017
    %v7019 = vpop.f32.mrb[0].mxu0
    %v7020 = vpop.f32.mrb[0].mxu0
    %v7021 = vadd.f32 0.0, %v7020
    %v7022 = vpop.f32.mrb[0].mxu0
    %7023 = vmatprep.mubr.bf16.mxu0 0
    %7024 = vmatmul.mubr.bf16.gmra.mrb[0].mxu0 %v6943
    %v7025 = vpop.f32.mrb[0].mxu0
    %v7026 = vadd.f32 0.0, %v7025
    %v7027 = vpop.f32.mrb[0].mxu0
    %v7028 = vpop.f32.mrb[0].mxu0
    %v7029 = vadd.f32 0.0, %v7028
    %v7030 = vpop.f32.mrb[0].mxu0
    %7031 = vmatprep.mubr.bf16.mxu0 0
    %7032 = vmatmul.mubr.bf16.gmra.mrb[0].mxu0 %v6946
    %v7033 = vpop.f32.mrb[0].mxu0
    %v7034 = vadd.f32 0.0, %v7033
    %v7035 = vpop.f32.mrb[0].mxu0
    %v7036 = vpop.f32.mrb[0].mxu0
    %v7037 = vadd.f32 0.0, %v7036
    %v7038 = vpop.f32.mrb[0].mxu0
    %7039 = vmatprep.mubr.bf16.mxu0 0
    %7040 = vmatmul.mubr.bf16.gmra.mrb[0].mxu0 %v6949
    %v7041 = vpop.f32.mrb[0].mxu0
    %v7042 = vadd.f32 0.0, %v7041
    %v7043 = vpop.f32.mrb[0].mxu0
    %v7044 = vpop.f32.mrb[0].mxu0
    %v7045 = vadd.f32 0.0, %v7044
    %v7046 = vpop.f32.mrb[0].mxu0
    %7047 = vdwg.mxu0
    %v7048 = vadd.f32 %v6854, %v6986
    %v7049 = vadd.f32 %v6855, %v6989
    %v7050 = vadd.f32 %v6856, %v6994
    %v7051 = vadd.f32 %v6857, %v6997
    %v7052 = vadd.f32 %v6858, %v7002
    %v7053 = vadd.f32 %v6859, %v7005
    %v7054 = vadd.f32 %v6860, %v7010
    %v7055 = vadd.f32 %v6861, %v7013
    %v7056 = vadd.f32 %v6862, %v7018
    %v7057 = vadd.f32 %v6863, %v7021
    %v7058 = vadd.f32 %v6864, %v7026
    %v7059 = vadd.f32 %v6865, %v7029
    %v7060 = vadd.f32 %v6866, %v7034
    %v7061 = vadd.f32 %v6867, %v7037
    %v7062 = vadd.f32 %v6868, %v7042
    %v7063 = vadd.f32 %v6869, %v7045
    %v7064 = vld [vmem:[%s6110 + $0x2] sm:$0xff]
    %v7065 = vld [vmem:[%s6110 + $0x12] sm:$0xff]
    %v7066 = vld [vmem:[%s6110 + $0x22] sm:$0xff]
    %v7067 = vld [vmem:[%s6110 + $0x32] sm:$0xff]
    %v7068 = vld [vmem:[%s6110 + $0x42] sm:$0xff]
    %v7069 = vld [vmem:[%s6110 + $0x52] sm:$0xff]
    %v7070 = vld [vmem:[%s6110 + $0x62] sm:$0xff]
    %v7071 = vld [vmem:[%s6110 + $0x72] sm:$0xff]
    %v7072 = vld [vmem:[%s6110 + $0xa2] sm:$0xff]
    %v7073 = vld [vmem:[%s6110 + $0xb2] sm:$0xff]
    %v7074 = vld [vmem:[%s6110 + $0xc2] sm:$0xff]
    %v7075 = vld [vmem:[%s6110 + $0xd2] sm:$0xff]
    %v7076 = vld [vmem:[%s6110 + $0xe2] sm:$0xff]
    %v7077 = vld [vmem:[%s6110 + $0xf2] sm:$0xff]
    %v7078 = vld [vmem:[%s6110 + $0x102] sm:$0xff]
    %v7079 = vld [vmem:[%s6110 + $0x112] sm:$0xff]
    %v7080 = vpack.c.bf16 %v7065, %v7064
    %v7081 = vpack.c.bf16 %v7067, %v7066
    %v7082 = vpack.c.bf16 %v7069, %v7068
    %v7083 = vpack.c.bf16 %v7071, %v7070
    %v7084 = vpack.c.bf16 %v7073, %v7072
    %v7085 = vpack.c.bf16 %v7075, %v7074
    %v7086 = vpack.c.bf16 %v7077, %v7076
    %v7087 = vpack.c.bf16 %v7079, %v7078
    %s7088 = scalar_lea.vmem %s4, 160
    %v7089 = vld [vmem:[%s7088] sm:$0xf]
    %v7090 = vld [vmem:[%s7088 + $0x4] sm:$0xf]
    %v7091 = vld [vmem:[%s7088 + $0x8] sm:$0xf]
    %v7092 = vld [vmem:[%s7088 + $0xc] sm:$0xf]
    %v7093 = vld [vmem:[%s7088 + $0x10] sm:$0xf]
    %v7094 = vld [vmem:[%s7088 + $0x14] sm:$0xf]
    %v7095 = vld [vmem:[%s7088 + $0x18] sm:$0xf]
    %v7096 = vld [vmem:[%s7088 + $0x1c] sm:$0xf]
    %v7105 = vunpack.c.l.b16 %v7089
    %v7106 = vunpack.c.l.b16 %v7090
    %v7107 = vunpack.c.l.b16 %v7091
    %v7108 = vunpack.c.l.b16 %v7092
    %v7109 = vunpack.c.l.b16 %v7093
    %v7110 = vunpack.c.l.b16 %v7094
    %v7111 = vunpack.c.l.b16 %v7095
    %v7112 = vunpack.c.l.b16 %v7096
    %v7113 = vpack.c.b16 %v7106, %v7105
    %v7114 = vpack.c.b16 %v7108, %v7107
    %v7115 = vpack.c.b16 %v7110, %v7109
    %v7116 = vpack.c.b16 %v7112, %v7111
    %v7122 = vsel %vm106, %v7080, 0
    %v7125 = vsel %vm106, %v7081, 0
    %v7128 = vsel %vm106, %v7082, 0
    %v7131 = vsel %vm106, %v7083, 0
    %v7134 = vsel %vm106, %v7084, 0
    %v7137 = vsel %vm106, %v7085, 0
    %v7140 = vsel %vm106, %v7086, 0
    %v7143 = vsel %vm106, %v7087, 0
    %7145 = vmatprep.subr.bf16.mxu0 0
    %7146 = vmatpush1.bf16.msra.mxu0 %v7113
    %7147 = vmatprep.subr.bf16.mxu0 0
    %7148 = vmatpush1.bf16.msra.mxu0 %v7114
    %7149 = vmatprep.subr.bf16.mxu0 0
    %7150 = vmatpush1.bf16.msra.mxu0 %v7115
    %7151 = vmatprep.subr.bf16.mxu0 0
    %7152 = vmatpush1.bf16.msra.mxu0 %v7116
    %7153 = vmatprep.subr.bf16.mxu0 0
    %7154 = vmatpush1.bf16.msra.mxu0 0
    %7155 = vmatprep.subr.bf16.mxu0 0
    %7156 = vmatpush1.bf16.msra.mxu0 0
    %7157 = vmatprep.subr.bf16.mxu0 0
    %7158 = vmatpush1.bf16.msra.mxu0 0
    %7159 = vmatprep.subr.bf16.mxu0 0
    %7160 = vmatpush1.bf16.msra.mxu0 0
    %7161 = vmatprep.subr.bf16.mxu0 0
    %7162 = vmatpush1.bf16.msra.mxu0 0
    %7163 = vmatprep.subr.bf16.mxu0 0
    %7164 = vmatpush1.bf16.msra.mxu0 0
    %7165 = vmatprep.subr.bf16.mxu0 0
    %7166 = vmatpush1.bf16.msra.mxu0 0
    %7167 = vmatprep.subr.bf16.mxu0 0
    %7168 = vmatpush1.bf16.msra.mxu0 0
    %7169 = vmatprep.subr.bf16.mxu0 0
    %7170 = vmatpush1.bf16.msra.mxu0 0
    %7171 = vmatprep.subr.bf16.mxu0 0
    %7172 = vmatpush1.bf16.msra.mxu0 0
    %7173 = vmatprep.subr.bf16.mxu0 0
    %7174 = vmatpush1.bf16.msra.mxu0 0
    %7175 = vmatprep.subr.bf16.mxu0 0
    %7176 = vmatpush1.bf16.msra.mxu0 0
    %7177 = vmatprep.mubr.bf16.mxu0 0
    %7178 = vmatmul.mubr.bf16.gmra.mrb[0].mxu0 %v7122
    %v7179 = vpop.f32.mrb[0].mxu0
    %v7180 = vadd.f32 0.0, %v7179
    %v7181 = vpop.f32.mrb[0].mxu0
    %v7182 = vpop.f32.mrb[0].mxu0
    %v7183 = vadd.f32 0.0, %v7182
    %v7184 = vpop.f32.mrb[0].mxu0
    %7185 = vmatprep.mubr.bf16.mxu0 0
    %7186 = vmatmul.mubr.bf16.gmra.mrb[0].mxu0 %v7125
    %v7187 = vpop.f32.mrb[0].mxu0
    %v7188 = vadd.f32 0.0, %v7187
    %v7189 = vpop.f32.mrb[0].mxu0
    %v7190 = vpop.f32.mrb[0].mxu0
    %v7191 = vadd.f32 0.0, %v7190
    %v7192 = vpop.f32.mrb[0].mxu0
    %7193 = vmatprep.mubr.bf16.mxu0 0
    %7194 = vmatmul.mubr.bf16.gmra.mrb[0].mxu0 %v7128
    %v7195 = vpop.f32.mrb[0].mxu0
    %v7196 = vadd.f32 0.0, %v7195
    %v7197 = vpop.f32.mrb[0].mxu0
    %v7198 = vpop.f32.mrb[0].mxu0
    %v7199 = vadd.f32 0.0, %v7198
    %v7200 = vpop.f32.mrb[0].mxu0
    %7201 = vmatprep.mubr.bf16.mxu0 0
    %7202 = vmatmul.mubr.bf16.gmra.mrb[0].mxu0 %v7131
    %v7203 = vpop.f32.mrb[0].mxu0
    %v7204 = vadd.f32 0.0, %v7203
    %v7205 = vpop.f32.mrb[0].mxu0
    %v7206 = vpop.f32.mrb[0].mxu0
    %v7207 = vadd.f32 0.0, %v7206
    %v7208 = vpop.f32.mrb[0].mxu0
    %7209 = vmatprep.mubr.bf16.mxu0 0
    %7210 = vmatmul.mubr.bf16.gmra.mrb[0].mxu0 %v7134
    %v7211 = vpop.f32.mrb[0].mxu0
    %v7212 = vadd.f32 0.0, %v7211
    %v7213 = vpop.f32.mrb[0].mxu0
    %v7214 = vpop.f32.mrb[0].mxu0
    %v7215 = vadd.f32 0.0, %v7214
    %v7216 = vpop.f32.mrb[0].mxu0
    %7217 = vmatprep.mubr.bf16.mxu0 0
    %7218 = vmatmul.mubr.bf16.gmra.mrb[0].mxu0 %v7137
    %v7219 = vpop.f32.mrb[0].mxu0
    %v7220 = vadd.f32 0.0, %v7219
    %v7221 = vpop.f32.mrb[0].mxu0
    %v7222 = vpop.f32.mrb[0].mxu0
    %v7223 = vadd.f32 0.0, %v7222
    %v7224 = vpop.f32.mrb[0].mxu0
    %7225 = vmatprep.mubr.bf16.mxu0 0
    %7226 = vmatmul.mubr.bf16.gmra.mrb[0].mxu0 %v7140
    %v7227 = vpop.f32.mrb[0].mxu0
    %v7228 = vadd.f32 0.0, %v7227
    %v7229 = vpop.f32.mrb[0].mxu0
    %v7230 = vpop.f32.mrb[0].mxu0
    %v7231 = vadd.f32 0.0, %v7230
    %v7232 = vpop.f32.mrb[0].mxu0
    %7233 = vmatprep.mubr.bf16.mxu0 0
    %7234 = vmatmul.mubr.bf16.gmra.mrb[0].mxu0 %v7143
    %v7235 = vpop.f32.mrb[0].mxu0
    %v7236 = vadd.f32 0.0, %v7235
    %v7237 = vpop.f32.mrb[0].mxu0
    %v7238 = vpop.f32.mrb[0].mxu0
    %v7239 = vadd.f32 0.0, %v7238
    %v7240 = vpop.f32.mrb[0].mxu0
    %7241 = vdwg.mxu0
    %v7242 = vadd.f32 %v7048, %v7180
    %v7243 = vadd.f32 %v7049, %v7183
    %v7244 = vadd.f32 %v7050, %v7188
    %v7245 = vadd.f32 %v7051, %v7191
    %v7246 = vadd.f32 %v7052, %v7196
    %v7247 = vadd.f32 %v7053, %v7199
    %v7248 = vadd.f32 %v7054, %v7204
    %v7249 = vadd.f32 %v7055, %v7207
    %v7250 = vadd.f32 %v7056, %v7212
    %v7251 = vadd.f32 %v7057, %v7215
    %v7252 = vadd.f32 %v7058, %v7220
    %v7253 = vadd.f32 %v7059, %v7223
    %v7254 = vadd.f32 %v7060, %v7228
    %v7255 = vadd.f32 %v7061, %v7231
    %v7256 = vadd.f32 %v7062, %v7236
    %v7257 = vadd.f32 %v7063, %v7239
    %s7258 = scalar_lea.vmem [#allocation3], 32
    %v7259 = vld [vmem:[%s7258] sm:$0xff]
    %v7260 = vld [vmem:[%s7258 + $0x10] sm:$0xff]
    %v7261 = vld [vmem:[%s7258 + $0x20] sm:$0xff]
    %v7262 = vld [vmem:[%s7258 + $0x30] sm:$0xff]
    %v7263 = vld [vmem:[%s7258 + $0x40] sm:$0xff]
    %v7264 = vld [vmem:[%s7258 + $0x50] sm:$0xff]
    %v7265 = vld [vmem:[%s7258 + $0x60] sm:$0xff]
    %v7266 = vld [vmem:[%s7258 + $0x70] sm:$0xff]
    %v7267 = vld [vmem:[%s7258 + $0xa0] sm:$0xff]
    %v7268 = vld [vmem:[%s7258 + $0xb0] sm:$0xff]
    %v7269 = vld [vmem:[%s7258 + $0xc0] sm:$0xff]
    %v7270 = vld [vmem:[%s7258 + $0xd0] sm:$0xff]
    %v7271 = vld [vmem:[%s7258 + $0xe0] sm:$0xff]
    %v7272 = vld [vmem:[%s7258 + $0xf0] sm:$0xff]
    %v7273 = vld [vmem:[%s7258 + $0x100] sm:$0xff]
    %v7274 = vld [vmem:[%s7258 + $0x110] sm:$0xff]
    %v7275 = vpack.c.bf16 %v7260, %v7259
    %v7276 = vpack.c.bf16 %v7262, %v7261
    %v7277 = vpack.c.bf16 %v7264, %v7263
    %v7278 = vpack.c.bf16 %v7266, %v7265
    %v7279 = vpack.c.bf16 %v7268, %v7267
    %v7280 = vpack.c.bf16 %v7270, %v7269
    %v7281 = vpack.c.bf16 %v7272, %v7271
    %v7282 = vpack.c.bf16 %v7274, %v7273
    %s7283 = scalar_lea.vmem %s4, 192
    %v7284 = vld [vmem:[%s7283] sm:$0xf]
    %v7285 = vld [vmem:[%s7283 + $0x4] sm:$0xf]
    %v7286 = vld [vmem:[%s7283 + $0x8] sm:$0xf]
    %v7287 = vld [vmem:[%s7283 + $0xc] sm:$0xf]
    %v7288 = vld [vmem:[%s7283 + $0x10] sm:$0xf]
    %v7289 = vld [vmem:[%s7283 + $0x14] sm:$0xf]
    %v7290 = vld [vmem:[%s7283 + $0x18] sm:$0xf]
    %v7291 = vld [vmem:[%s7283 + $0x1c] sm:$0xf]
    %v7300 = vunpack.c.l.b16 %v7284
    %v7301 = vunpack.c.l.b16 %v7285
    %v7302 = vunpack.c.l.b16 %v7286
    %v7303 = vunpack.c.l.b16 %v7287
    %v7304 = vunpack.c.l.b16 %v7288
    %v7305 = vunpack.c.l.b16 %v7289
    %v7306 = vunpack.c.l.b16 %v7290
    %v7307 = vunpack.c.l.b16 %v7291
    %v7308 = vpack.c.b16 %v7301, %v7300
    %v7309 = vpack.c.b16 %v7303, %v7302
    %v7310 = vpack.c.b16 %v7305, %v7304
    %v7311 = vpack.c.b16 %v7307, %v7306
    %v7317 = vsel %vm106, %v7275, 0
    %v7320 = vsel %vm106, %v7276, 0
    %v7323 = vsel %vm106, %v7277, 0
    %v7326 = vsel %vm106, %v7278, 0
    %v7329 = vsel %vm106, %v7279, 0
    %v7332 = vsel %vm106, %v7280, 0
    %v7335 = vsel %vm106, %v7281, 0
    %v7338 = vsel %vm106, %v7282, 0
    %7340 = vmatprep.subr.bf16.mxu0 0
    %7341 = vmatpush1.bf16.msra.mxu0 %v7308
    %7342 = vmatprep.subr.bf16.mxu0 0
    %7343 = vmatpush1.bf16.msra.mxu0 %v7309
    %7344 = vmatprep.subr.bf16.mxu0 0
    %7345 = vmatpush1.bf16.msra.mxu0 %v7310
    %7346 = vmatprep.subr.bf16.mxu0 0
    %7347 = vmatpush1.bf16.msra.mxu0 %v7311
    %7348 = vmatprep.subr.bf16.mxu0 0
    %7349 = vmatpush1.bf16.msra.mxu0 0
    %7350 = vmatprep.subr.bf16.mxu0 0
    %7351 = vmatpush1.bf16.msra.mxu0 0
    %7352 = vmatprep.subr.bf16.mxu0 0
    %7353 = vmatpush1.bf16.msra.mxu0 0
    %7354 = vmatprep.subr.bf16.mxu0 0
    %7355 = vmatpush1.bf16.msra.mxu0 0
    %7356 = vmatprep.subr.bf16.mxu0 0
    %7357 = vmatpush1.bf16.msra.mxu0 0
    %7358 = vmatprep.subr.bf16.mxu0 0
    %7359 = vmatpush1.bf16.msra.mxu0 0
    %7360 = vmatprep.subr.bf16.mxu0 0
    %7361 = vmatpush1.bf16.msra.mxu0 0
    %7362 = vmatprep.subr.bf16.mxu0 0
    %7363 = vmatpush1.bf16.msra.mxu0 0
    %7364 = vmatprep.subr.bf16.mxu0 0
    %7365 = vmatpush1.bf16.msra.mxu0 0
    %7366 = vmatprep.subr.bf16.mxu0 0
    %7367 = vmatpush1.bf16.msra.mxu0 0
    %7368 = vmatprep.subr.bf16.mxu0 0
    %7369 = vmatpush1.bf16.msra.mxu0 0
    %7370 = vmatprep.subr.bf16.mxu0 0
    %7371 = vmatpush1.bf16.msra.mxu0 0
    %7372 = vmatprep.mubr.bf16.mxu0 0
    %7373 = vmatmul.mubr.bf16.gmra.mrb[0].mxu0 %v7317
    %v7374 = vpop.f32.mrb[0].mxu0
    %v7375 = vadd.f32 0.0, %v7374
    %v7376 = vpop.f32.mrb[0].mxu0
    %v7377 = vpop.f32.mrb[0].mxu0
    %v7378 = vadd.f32 0.0, %v7377
    %v7379 = vpop.f32.mrb[0].mxu0
    %7380 = vmatprep.mubr.bf16.mxu0 0
    %7381 = vmatmul.mubr.bf16.gmra.mrb[0].mxu0 %v7320
    %v7382 = vpop.f32.mrb[0].mxu0
    %v7383 = vadd.f32 0.0, %v7382
    %v7384 = vpop.f32.mrb[0].mxu0
    %v7385 = vpop.f32.mrb[0].mxu0
    %v7386 = vadd.f32 0.0, %v7385
    %v7387 = vpop.f32.mrb[0].mxu0
    %7388 = vmatprep.mubr.bf16.mxu0 0
    %7389 = vmatmul.mubr.bf16.gmra.mrb[0].mxu0 %v7323
    %v7390 = vpop.f32.mrb[0].mxu0
    %v7391 = vadd.f32 0.0, %v7390
    %v7392 = vpop.f32.mrb[0].mxu0
    %v7393 = vpop.f32.mrb[0].mxu0
    %v7394 = vadd.f32 0.0, %v7393
    %v7395 = vpop.f32.mrb[0].mxu0
    %7396 = vmatprep.mubr.bf16.mxu0 0
    %7397 = vmatmul.mubr.bf16.gmra.mrb[0].mxu0 %v7326
    %v7398 = vpop.f32.mrb[0].mxu0
    %v7399 = vadd.f32 0.0, %v7398
    %v7400 = vpop.f32.mrb[0].mxu0
    %v7401 = vpop.f32.mrb[0].mxu0
    %v7402 = vadd.f32 0.0, %v7401
    %v7403 = vpop.f32.mrb[0].mxu0
    %7404 = vmatprep.mubr.bf16.mxu0 0
    %7405 = vmatmul.mubr.bf16.gmra.mrb[0].mxu0 %v7329
    %v7406 = vpop.f32.mrb[0].mxu0
    %v7407 = vadd.f32 0.0, %v7406
    %v7408 = vpop.f32.mrb[0].mxu0
    %v7409 = vpop.f32.mrb[0].mxu0
    %v7410 = vadd.f32 0.0, %v7409
    %v7411 = vpop.f32.mrb[0].mxu0
    %7412 = vmatprep.mubr.bf16.mxu0 0
    %7413 = vmatmul.mubr.bf16.gmra.mrb[0].mxu0 %v7332
    %v7414 = vpop.f32.mrb[0].mxu0
    %v7415 = vadd.f32 0.0, %v7414
    %v7416 = vpop.f32.mrb[0].mxu0
    %v7417 = vpop.f32.mrb[0].mxu0
    %v7418 = vadd.f32 0.0, %v7417
    %v7419 = vpop.f32.mrb[0].mxu0
    %7420 = vmatprep.mubr.bf16.mxu0 0
    %7421 = vmatmul.mubr.bf16.gmra.mrb[0].mxu0 %v7335
    %v7422 = vpop.f32.mrb[0].mxu0
    %v7423 = vadd.f32 0.0, %v7422
    %v7424 = vpop.f32.mrb[0].mxu0
    %v7425 = vpop.f32.mrb[0].mxu0
    %v7426 = vadd.f32 0.0, %v7425
    %v7427 = vpop.f32.mrb[0].mxu0
    %7428 = vmatprep.mubr.bf16.mxu0 0
    %7429 = vmatmul.mubr.bf16.gmra.mrb[0].mxu0 %v7338
    %v7430 = vpop.f32.mrb[0].mxu0
    %v7431 = vadd.f32 0.0, %v7430
    %v7432 = vpop.f32.mrb[0].mxu0
    %v7433 = vpop.f32.mrb[0].mxu0
    %v7434 = vadd.f32 0.0, %v7433
    %v7435 = vpop.f32.mrb[0].mxu0
    %7436 = vdwg.mxu0
    %v7437 = vadd.f32 %v7242, %v7375
    %v7438 = vadd.f32 %v7243, %v7378
    %v7439 = vadd.f32 %v7244, %v7383
    %v7440 = vadd.f32 %v7245, %v7386
    %v7441 = vadd.f32 %v7246, %v7391
    %v7442 = vadd.f32 %v7247, %v7394
    %v7443 = vadd.f32 %v7248, %v7399
    %v7444 = vadd.f32 %v7249, %v7402
    %v7445 = vadd.f32 %v7250, %v7407
    %v7446 = vadd.f32 %v7251, %v7410
    %v7447 = vadd.f32 %v7252, %v7415
    %v7448 = vadd.f32 %v7253, %v7418
    %v7449 = vadd.f32 %v7254, %v7423
    %v7450 = vadd.f32 %v7255, %v7426
    %v7451 = vadd.f32 %v7256, %v7431
    %v7452 = vadd.f32 %v7257, %v7434
    %v7453 = vld [vmem:[%s7258 + $0x1] sm:$0xff]
    %v7454 = vld [vmem:[%s7258 + $0x11] sm:$0xff]
    %v7455 = vld [vmem:[%s7258 + $0x21] sm:$0xff]
    %v7456 = vld [vmem:[%s7258 + $0x31] sm:$0xff]
    %v7457 = vld [vmem:[%s7258 + $0x41] sm:$0xff]
    %v7458 = vld [vmem:[%s7258 + $0x51] sm:$0xff]
    %v7459 = vld [vmem:[%s7258 + $0x61] sm:$0xff]
    %v7460 = vld [vmem:[%s7258 + $0x71] sm:$0xff]
    %v7461 = vld [vmem:[%s7258 + $0xa1] sm:$0xff]
    %v7462 = vld [vmem:[%s7258 + $0xb1] sm:$0xff]
    %v7463 = vld [vmem:[%s7258 + $0xc1] sm:$0xff]
    %v7464 = vld [vmem:[%s7258 + $0xd1] sm:$0xff]
    %v7465 = vld [vmem:[%s7258 + $0xe1] sm:$0xff]
    %v7466 = vld [vmem:[%s7258 + $0xf1] sm:$0xff]
    %v7467 = vld [vmem:[%s7258 + $0x101] sm:$0xff]
    %v7468 = vld [vmem:[%s7258 + $0x111] sm:$0xff]
    %v7469 = vpack.c.bf16 %v7454, %v7453
    %v7470 = vpack.c.bf16 %v7456, %v7455
    %v7471 = vpack.c.bf16 %v7458, %v7457
    %v7472 = vpack.c.bf16 %v7460, %v7459
    %v7473 = vpack.c.bf16 %v7462, %v7461
    %v7474 = vpack.c.bf16 %v7464, %v7463
    %v7475 = vpack.c.bf16 %v7466, %v7465
    %v7476 = vpack.c.bf16 %v7468, %v7467
    %s7477 = scalar_lea.vmem %s4, 224
    %v7478 = vld [vmem:[%s7477] sm:$0xf]
    %v7479 = vld [vmem:[%s7477 + $0x4] sm:$0xf]
    %v7480 = vld [vmem:[%s7477 + $0x8] sm:$0xf]
    %v7481 = vld [vmem:[%s7477 + $0xc] sm:$0xf]
    %v7482 = vld [vmem:[%s7477 + $0x10] sm:$0xf]
    %v7483 = vld [vmem:[%s7477 + $0x14] sm:$0xf]
    %v7484 = vld [vmem:[%s7477 + $0x18] sm:$0xf]
    %v7485 = vld [vmem:[%s7477 + $0x1c] sm:$0xf]
    %v7494 = vunpack.c.l.b16 %v7478
    %v7495 = vunpack.c.l.b16 %v7479
    %v7496 = vunpack.c.l.b16 %v7480
    %v7497 = vunpack.c.l.b16 %v7481
    %v7498 = vunpack.c.l.b16 %v7482
    %v7499 = vunpack.c.l.b16 %v7483
    %v7500 = vunpack.c.l.b16 %v7484
    %v7501 = vunpack.c.l.b16 %v7485
    %v7502 = vpack.c.b16 %v7495, %v7494
    %v7503 = vpack.c.b16 %v7497, %v7496
    %v7504 = vpack.c.b16 %v7499, %v7498
    %v7505 = vpack.c.b16 %v7501, %v7500
    %v7511 = vsel %vm106, %v7469, 0
    %v7514 = vsel %vm106, %v7470, 0
    %v7517 = vsel %vm106, %v7471, 0
    %v7520 = vsel %vm106, %v7472, 0
    %v7523 = vsel %vm106, %v7473, 0
    %v7526 = vsel %vm106, %v7474, 0
    %v7529 = vsel %vm106, %v7475, 0
    %v7532 = vsel %vm106, %v7476, 0
    %7534 = vmatprep.subr.bf16.mxu0 0
    %7535 = vmatpush1.bf16.msra.mxu0 %v7502
    %7536 = vmatprep.subr.bf16.mxu0 0
    %7537 = vmatpush1.bf16.msra.mxu0 %v7503
    %7538 = vmatprep.subr.bf16.mxu0 0
    %7539 = vmatpush1.bf16.msra.mxu0 %v7504
    %7540 = vmatprep.subr.bf16.mxu0 0
    %7541 = vmatpush1.bf16.msra.mxu0 %v7505
    %7542 = vmatprep.subr.bf16.mxu0 0
    %7543 = vmatpush1.bf16.msra.mxu0 0
    %7544 = vmatprep.subr.bf16.mxu0 0
    %7545 = vmatpush1.bf16.msra.mxu0 0
    %7546 = vmatprep.subr.bf16.mxu0 0
    %7547 = vmatpush1.bf16.msra.mxu0 0
    %7548 = vmatprep.subr.bf16.mxu0 0
    %7549 = vmatpush1.bf16.msra.mxu0 0
    %7550 = vmatprep.subr.bf16.mxu0 0
    %7551 = vmatpush1.bf16.msra.mxu0 0
    %7552 = vmatprep.subr.bf16.mxu0 0
    %7553 = vmatpush1.bf16.msra.mxu0 0
    %7554 = vmatprep.subr.bf16.mxu0 0
    %7555 = vmatpush1.bf16.msra.mxu0 0
    %7556 = vmatprep.subr.bf16.mxu0 0
    %7557 = vmatpush1.bf16.msra.mxu0 0
    %7558 = vmatprep.subr.bf16.mxu0 0
    %7559 = vmatpush1.bf16.msra.mxu0 0
    %7560 = vmatprep.subr.bf16.mxu0 0
    %7561 = vmatpush1.bf16.msra.mxu0 0
    %7562 = vmatprep.subr.bf16.mxu0 0
    %7563 = vmatpush1.bf16.msra.mxu0 0
    %7564 = vmatprep.subr.bf16.mxu0 0
    %7565 = vmatpush1.bf16.msra.mxu0 0
    %7566 = vmatprep.mubr.bf16.mxu0 0
    %7567 = vmatmul.mubr.bf16.gmra.mrb[0].mxu0 %v7511
    %v7568 = vpop.f32.mrb[0].mxu0
    %v7569 = vadd.f32 0.0, %v7568
    %v7570 = vpop.f32.mrb[0].mxu0
    %v7571 = vpop.f32.mrb[0].mxu0
    %v7572 = vadd.f32 0.0, %v7571
    %v7573 = vpop.f32.mrb[0].mxu0
    %7574 = vmatprep.mubr.bf16.mxu0 0
    %7575 = vmatmul.mubr.bf16.gmra.mrb[0].mxu0 %v7514
    %v7576 = vpop.f32.mrb[0].mxu0
    %v7577 = vadd.f32 0.0, %v7576
    %v7578 = vpop.f32.mrb[0].mxu0
    %v7579 = vpop.f32.mrb[0].mxu0
    %v7580 = vadd.f32 0.0, %v7579
    %v7581 = vpop.f32.mrb[0].mxu0
    %7582 = vmatprep.mubr.bf16.mxu0 0
    %7583 = vmatmul.mubr.bf16.gmra.mrb[0].mxu0 %v7517
    %v7584 = vpop.f32.mrb[0].mxu0
    %v7585 = vadd.f32 0.0, %v7584
    %v7586 = vpop.f32.mrb[0].mxu0
    %v7587 = vpop.f32.mrb[0].mxu0
    %v7588 = vadd.f32 0.0, %v7587
    %v7589 = vpop.f32.mrb[0].mxu0
    %7590 = vmatprep.mubr.bf16.mxu0 0
    %7591 = vmatmul.mubr.bf16.gmra.mrb[0].mxu0 %v7520
    %v7592 = vpop.f32.mrb[0].mxu0
    %v7593 = vadd.f32 0.0, %v7592
    %v7594 = vpop.f32.mrb[0].mxu0
    %v7595 = vpop.f32.mrb[0].mxu0
    %v7596 = vadd.f32 0.0, %v7595
    %v7597 = vpop.f32.mrb[0].mxu0
    %7598 = vmatprep.mubr.bf16.mxu0 0
    %7599 = vmatmul.mubr.bf16.gmra.mrb[0].mxu0 %v7523
    %v7600 = vpop.f32.mrb[0].mxu0
    %v7601 = vadd.f32 0.0, %v7600
    %v7602 = vpop.f32.mrb[0].mxu0
    %v7603 = vpop.f32.mrb[0].mxu0
    %v7604 = vadd.f32 0.0, %v7603
    %v7605 = vpop.f32.mrb[0].mxu0
    %7606 = vmatprep.mubr.bf16.mxu0 0
    %7607 = vmatmul.mubr.bf16.gmra.mrb[0].mxu0 %v7526
    %v7608 = vpop.f32.mrb[0].mxu0
    %v7609 = vadd.f32 0.0, %v7608
    %v7610 = vpop.f32.mrb[0].mxu0
    %v7611 = vpop.f32.mrb[0].mxu0
    %v7612 = vadd.f32 0.0, %v7611
    %v7613 = vpop.f32.mrb[0].mxu0
    %7614 = vmatprep.mubr.bf16.mxu0 0
    %7615 = vmatmul.mubr.bf16.gmra.mrb[0].mxu0 %v7529
    %v7616 = vpop.f32.mrb[0].mxu0
    %v7617 = vadd.f32 0.0, %v7616
    %v7618 = vpop.f32.mrb[0].mxu0
    %v7619 = vpop.f32.mrb[0].mxu0
    %v7620 = vadd.f32 0.0, %v7619
    %v7621 = vpop.f32.mrb[0].mxu0
    %7622 = vmatprep.mubr.bf16.mxu0 0
    %7623 = vmatmul.mubr.bf16.gmra.mrb[0].mxu0 %v7532
    %v7624 = vpop.f32.mrb[0].mxu0
    %v7625 = vadd.f32 0.0, %v7624
    %v7626 = vpop.f32.mrb[0].mxu0
    %v7627 = vpop.f32.mrb[0].mxu0
    %v7628 = vadd.f32 0.0, %v7627
    %v7629 = vpop.f32.mrb[0].mxu0
    %7630 = vdwg.mxu0
    %v7631 = vadd.f32 %v7437, %v7569
    %v7632 = vadd.f32 %v7438, %v7572
    %v7633 = vadd.f32 %v7439, %v7577
    %v7634 = vadd.f32 %v7440, %v7580
    %v7635 = vadd.f32 %v7441, %v7585
    %v7636 = vadd.f32 %v7442, %v7588
    %v7637 = vadd.f32 %v7443, %v7593
    %v7638 = vadd.f32 %v7444, %v7596
    %v7639 = vadd.f32 %v7445, %v7601
    %v7640 = vadd.f32 %v7446, %v7604
    %v7641 = vadd.f32 %v7447, %v7609
    %v7642 = vadd.f32 %v7448, %v7612
    %v7643 = vadd.f32 %v7449, %v7617
    %v7644 = vadd.f32 %v7450, %v7620
    %v7645 = vadd.f32 %v7451, %v7625
    %v7646 = vadd.f32 %v7452, %v7628
    %v7647 = vld [vmem:[%s7258 + $0x2] sm:$0xff]
    %v7648 = vld [vmem:[%s7258 + $0x12] sm:$0xff]
    %v7649 = vld [vmem:[%s7258 + $0x22] sm:$0xff]
    %v7650 = vld [vmem:[%s7258 + $0x32] sm:$0xff]
    %v7651 = vld [vmem:[%s7258 + $0x42] sm:$0xff]
    %v7652 = vld [vmem:[%s7258 + $0x52] sm:$0xff]
    %v7653 = vld [vmem:[%s7258 + $0x62] sm:$0xff]
    %v7654 = vld [vmem:[%s7258 + $0x72] sm:$0xff]
    %v7655 = vld [vmem:[%s7258 + $0xa2] sm:$0xff]
    %v7656 = vld [vmem:[%s7258 + $0xb2] sm:$0xff]
    %v7657 = vld [vmem:[%s7258 + $0xc2] sm:$0xff]
    %v7658 = vld [vmem:[%s7258 + $0xd2] sm:$0xff]
    %v7659 = vld [vmem:[%s7258 + $0xe2] sm:$0xff]
    %v7660 = vld [vmem:[%s7258 + $0xf2] sm:$0xff]
    %v7661 = vld [vmem:[%s7258 + $0x102] sm:$0xff]
    %v7662 = vld [vmem:[%s7258 + $0x112] sm:$0xff]
    %v7663 = vpack.c.bf16 %v7648, %v7647
    %v7664 = vpack.c.bf16 %v7650, %v7649
    %v7665 = vpack.c.bf16 %v7652, %v7651
    %v7666 = vpack.c.bf16 %v7654, %v7653
    %v7667 = vpack.c.bf16 %v7656, %v7655
    %v7668 = vpack.c.bf16 %v7658, %v7657
    %v7669 = vpack.c.bf16 %v7660, %v7659
    %v7670 = vpack.c.bf16 %v7662, %v7661
    %s7671 = scalar_lea.vmem %s4, 256
    %v7672 = vld [vmem:[%s7671] sm:$0xf]
    %v7673 = vld [vmem:[%s7671 + $0x4] sm:$0xf]
    %v7674 = vld [vmem:[%s7671 + $0x8] sm:$0xf]
    %v7675 = vld [vmem:[%s7671 + $0xc] sm:$0xf]
    %v7676 = vld [vmem:[%s7671 + $0x10] sm:$0xf]
    %v7677 = vld [vmem:[%s7671 + $0x14] sm:$0xf]
    %v7678 = vld [vmem:[%s7671 + $0x18] sm:$0xf]
    %v7679 = vld [vmem:[%s7671 + $0x1c] sm:$0xf]
    %v7688 = vunpack.c.l.b16 %v7672
    %v7689 = vunpack.c.l.b16 %v7673
    %v7690 = vunpack.c.l.b16 %v7674
    %v7691 = vunpack.c.l.b16 %v7675
    %v7692 = vunpack.c.l.b16 %v7676
    %v7693 = vunpack.c.l.b16 %v7677
    %v7694 = vunpack.c.l.b16 %v7678
    %v7695 = vunpack.c.l.b16 %v7679
    %v7696 = vpack.c.b16 %v7689, %v7688
    %v7697 = vpack.c.b16 %v7691, %v7690
    %v7698 = vpack.c.b16 %v7693, %v7692
    %v7699 = vpack.c.b16 %v7695, %v7694
    %v7705 = vsel %vm106, %v7663, 0
    %v7708 = vsel %vm106, %v7664, 0
    %v7711 = vsel %vm106, %v7665, 0
    %v7714 = vsel %vm106, %v7666, 0
    %v7717 = vsel %vm106, %v7667, 0
    %v7720 = vsel %vm106, %v7668, 0
    %v7723 = vsel %vm106, %v7669, 0
    %v7726 = vsel %vm106, %v7670, 0
    %7728 = vmatprep.subr.bf16.mxu0 0
    %7729 = vmatpush1.bf16.msra.mxu0 %v7696
    %7730 = vmatprep.subr.bf16.mxu0 0
    %7731 = vmatpush1.bf16.msra.mxu0 %v7697
    %7732 = vmatprep.subr.bf16.mxu0 0
    %7733 = vmatpush1.bf16.msra.mxu0 %v7698
    %7734 = vmatprep.subr.bf16.mxu0 0
    %7735 = vmatpush1.bf16.msra.mxu0 %v7699
    %7736 = vmatprep.subr.bf16.mxu0 0
    %7737 = vmatpush1.bf16.msra.mxu0 0
    %7738 = vmatprep.subr.bf16.mxu0 0
    %7739 = vmatpush1.bf16.msra.mxu0 0
    %7740 = vmatprep.subr.bf16.mxu0 0
    %7741 = vmatpush1.bf16.msra.mxu0 0
    %7742 = vmatprep.subr.bf16.mxu0 0
    %7743 = vmatpush1.bf16.msra.mxu0 0
    %7744 = vmatprep.subr.bf16.mxu0 0
    %7745 = vmatpush1.bf16.msra.mxu0 0
    %7746 = vmatprep.subr.bf16.mxu0 0
    %7747 = vmatpush1.bf16.msra.mxu0 0
    %7748 = vmatprep.subr.bf16.mxu0 0
    %7749 = vmatpush1.bf16.msra.mxu0 0
    %7750 = vmatprep.subr.bf16.mxu0 0
    %7751 = vmatpush1.bf16.msra.mxu0 0
    %7752 = vmatprep.subr.bf16.mxu0 0
    %7753 = vmatpush1.bf16.msra.mxu0 0
    %7754 = vmatprep.subr.bf16.mxu0 0
    %7755 = vmatpush1.bf16.msra.mxu0 0
    %7756 = vmatprep.subr.bf16.mxu0 0
    %7757 = vmatpush1.bf16.msra.mxu0 0
    %7758 = vmatprep.subr.bf16.mxu0 0
    %7759 = vmatpush1.bf16.msra.mxu0 0
    %7760 = vmatprep.mubr.bf16.mxu0 0
    %7761 = vmatmul.mubr.bf16.gmra.mrb[0].mxu0 %v7705
    %v7762 = vpop.f32.mrb[0].mxu0
    %v7763 = vadd.f32 0.0, %v7762
    %v7764 = vpop.f32.mrb[0].mxu0
    %v7765 = vpop.f32.mrb[0].mxu0
    %v7766 = vadd.f32 0.0, %v7765
    %v7767 = vpop.f32.mrb[0].mxu0
    %7768 = vmatprep.mubr.bf16.mxu0 0
    %7769 = vmatmul.mubr.bf16.gmra.mrb[0].mxu0 %v7708
    %v7770 = vpop.f32.mrb[0].mxu0
    %v7771 = vadd.f32 0.0, %v7770
    %v7772 = vpop.f32.mrb[0].mxu0
    %v7773 = vpop.f32.mrb[0].mxu0
    %v7774 = vadd.f32 0.0, %v7773
    %v7775 = vpop.f32.mrb[0].mxu0
    %7776 = vmatprep.mubr.bf16.mxu0 0
    %7777 = vmatmul.mubr.bf16.gmra.mrb[0].mxu0 %v7711
    %v7778 = vpop.f32.mrb[0].mxu0
    %v7779 = vadd.f32 0.0, %v7778
    %v7780 = vpop.f32.mrb[0].mxu0
    %v7781 = vpop.f32.mrb[0].mxu0
    %v7782 = vadd.f32 0.0, %v7781
    %v7783 = vpop.f32.mrb[0].mxu0
    %7784 = vmatprep.mubr.bf16.mxu0 0
    %7785 = vmatmul.mubr.bf16.gmra.mrb[0].mxu0 %v7714
    %v7786 = vpop.f32.mrb[0].mxu0
    %v7787 = vadd.f32 0.0, %v7786
    %v7788 = vpop.f32.mrb[0].mxu0
    %v7789 = vpop.f32.mrb[0].mxu0
    %v7790 = vadd.f32 0.0, %v7789
    %v7791 = vpop.f32.mrb[0].mxu0
    %7792 = vmatprep.mubr.bf16.mxu0 0
    %7793 = vmatmul.mubr.bf16.gmra.mrb[0].mxu0 %v7717
    %v7794 = vpop.f32.mrb[0].mxu0
    %v7795 = vadd.f32 0.0, %v7794
    %v7796 = vpop.f32.mrb[0].mxu0
    %v7797 = vpop.f32.mrb[0].mxu0
    %v7798 = vadd.f32 0.0, %v7797
    %v7799 = vpop.f32.mrb[0].mxu0
    %7800 = vmatprep.mubr.bf16.mxu0 0
    %7801 = vmatmul.mubr.bf16.gmra.mrb[0].mxu0 %v7720
    %v7802 = vpop.f32.mrb[0].mxu0
    %v7803 = vadd.f32 0.0, %v7802
    %v7804 = vpop.f32.mrb[0].mxu0
    %v7805 = vpop.f32.mrb[0].mxu0
    %v7806 = vadd.f32 0.0, %v7805
    %v7807 = vpop.f32.mrb[0].mxu0
    %7808 = vmatprep.mubr.bf16.mxu0 0
    %7809 = vmatmul.mubr.bf16.gmra.mrb[0].mxu0 %v7723
    %v7810 = vpop.f32.mrb[0].mxu0
    %v7811 = vadd.f32 0.0, %v7810
    %v7812 = vpop.f32.mrb[0].mxu0
    %v7813 = vpop.f32.mrb[0].mxu0
    %v7814 = vadd.f32 0.0, %v7813
    %v7815 = vpop.f32.mrb[0].mxu0
    %7816 = vmatprep.mubr.bf16.mxu0 0
    %7817 = vmatmul.mubr.bf16.gmra.mrb[0].mxu0 %v7726
    %v7818 = vpop.f32.mrb[0].mxu0
    %v7819 = vadd.f32 0.0, %v7818
    %v7820 = vpop.f32.mrb[0].mxu0
    %v7821 = vpop.f32.mrb[0].mxu0
    %v7822 = vadd.f32 0.0, %v7821
    %v7823 = vpop.f32.mrb[0].mxu0
    %7824 = vdwg.mxu0
    %v7825 = vadd.f32 %v7631, %v7763
    %v7826 = vadd.f32 %v7632, %v7766
    %v7827 = vadd.f32 %v7633, %v7771
    %v7828 = vadd.f32 %v7634, %v7774
    %v7829 = vadd.f32 %v7635, %v7779
    %v7830 = vadd.f32 %v7636, %v7782
    %v7831 = vadd.f32 %v7637, %v7787
    %v7832 = vadd.f32 %v7638, %v7790
    %v7833 = vadd.f32 %v7639, %v7795
    %v7834 = vadd.f32 %v7640, %v7798
    %v7835 = vadd.f32 %v7641, %v7803
    %v7836 = vadd.f32 %v7642, %v7806
    %v7837 = vadd.f32 %v7643, %v7811
    %v7838 = vadd.f32 %v7644, %v7814
    %v7839 = vadd.f32 %v7645, %v7819
    %v7840 = vadd.f32 %v7646, %v7822
    %s7841 = sld [smem:[#allocation5 + $0x2]]
    %v7842 = vld [vmem:[%s10] sm:$0x1]
    %v7844 = vlaneseq
    %v7845 = vshrl.u32 %v7844, 7
    %v7846 = vsub.s32 0, %v7845
    %v7847 = vrot.slane %v7842, %v7846
    %v7849 = vmul.f32 %v7825, %v7847
    %v7850 = vmul.f32 %v7826, %v7847
    %v7851 = vmul.f32 %v7827, %v7847
    %v7852 = vmul.f32 %v7828, %v7847
    %v7853 = vmul.f32 %v7829, %v7847
    %v7854 = vmul.f32 %v7830, %v7847
    %v7855 = vmul.f32 %v7831, %v7847
    %v7856 = vmul.f32 %v7832, %v7847
    %v7857 = vmul.f32 %v7833, %v7847
    %v7858 = vmul.f32 %v7834, %v7847
    %v7859 = vmul.f32 %v7835, %v7847
    %v7860 = vmul.f32 %v7836, %v7847
    %v7861 = vmul.f32 %v7837, %v7847
    %v7862 = vmul.f32 %v7838, %v7847
    %v7863 = vmul.f32 %v7839, %v7847
    %v7864 = vmul.f32 %v7840, %v7847
    %v7865 = vld [vmem:[%s11] sm:$0x1]
    %v7867 = vlaneseq
    %v7868 = vshrl.u32 %v7867, 7
    %v7869 = vsub.s32 0, %v7868
    %v7870 = vrot.slane %v7865, %v7869
    %v7872 = vadd.f32 %v7849, %v7870
    %v7873 = vadd.f32 %v7850, %v7870
    %v7874 = vadd.f32 %v7851, %v7870
    %v7875 = vadd.f32 %v7852, %v7870
    %v7876 = vadd.f32 %v7853, %v7870
    %v7877 = vadd.f32 %v7854, %v7870
    %v7878 = vadd.f32 %v7855, %v7870
    %v7879 = vadd.f32 %v7856, %v7870
    %v7880 = vadd.f32 %v7857, %v7870
    %v7881 = vadd.f32 %v7858, %v7870
    %v7882 = vadd.f32 %v7859, %v7870
    %v7883 = vadd.f32 %v7860, %v7870
    %v7884 = vadd.f32 %v7861, %v7870
    %v7885 = vadd.f32 %v7862, %v7870
    %v7886 = vadd.f32 %v7863, %v7870
    %v7887 = vadd.f32 %v7864, %v7870
    %vm7888 = vcmp.gt.f32.partialorder %v7872, 0.0
    %vm7889 = vcmp.gt.f32.partialorder %v7873, 0.0
    %vm7890 = vcmp.gt.f32.partialorder %v7874, 0.0
    %vm7891 = vcmp.gt.f32.partialorder %v7875, 0.0
    %vm7892 = vcmp.gt.f32.partialorder %v7876, 0.0
    %vm7893 = vcmp.gt.f32.partialorder %v7877, 0.0
    %vm7894 = vcmp.gt.f32.partialorder %v7878, 0.0
    %vm7895 = vcmp.gt.f32.partialorder %v7879, 0.0
    %vm7896 = vcmp.gt.f32.partialorder %v7880, 0.0
    %vm7897 = vcmp.gt.f32.partialorder %v7881, 0.0
    %vm7898 = vcmp.gt.f32.partialorder %v7882, 0.0
    %vm7899 = vcmp.gt.f32.partialorder %v7883, 0.0
    %vm7900 = vcmp.gt.f32.partialorder %v7884, 0.0
    %vm7901 = vcmp.gt.f32.partialorder %v7885, 0.0
    %vm7902 = vcmp.gt.f32.partialorder %v7886, 0.0
    %vm7903 = vcmp.gt.f32.partialorder %v7887, 0.0
    %v7904 = vstv %s7841
    %v7905 = vmul.f32 %v7904, %v7872
    %v7906 = vmul.f32 %v7904, %v7873
    %v7907 = vmul.f32 %v7904, %v7874
    %v7908 = vmul.f32 %v7904, %v7875
    %v7909 = vmul.f32 %v7904, %v7876
    %v7910 = vmul.f32 %v7904, %v7877
    %v7911 = vmul.f32 %v7904, %v7878
    %v7912 = vmul.f32 %v7904, %v7879
    %v7913 = vmul.f32 %v7904, %v7880
    %v7914 = vmul.f32 %v7904, %v7881
    %v7915 = vmul.f32 %v7904, %v7882
    %v7916 = vmul.f32 %v7904, %v7883
    %v7917 = vmul.f32 %v7904, %v7884
    %v7918 = vmul.f32 %v7904, %v7885
    %v7919 = vmul.f32 %v7904, %v7886
    %v7920 = vmul.f32 %v7904, %v7887
    %v7921 = vsel %vm7888, %v7872, %v7905
    %v7922 = vsel %vm7889, %v7873, %v7906
    %v7923 = vsel %vm7890, %v7874, %v7907
    %v7924 = vsel %vm7891, %v7875, %v7908
    %v7925 = vsel %vm7892, %v7876, %v7909
    %v7926 = vsel %vm7893, %v7877, %v7910
    %v7927 = vsel %vm7894, %v7878, %v7911
    %v7928 = vsel %vm7895, %v7879, %v7912
    %v7929 = vsel %vm7896, %v7880, %v7913
    %v7930 = vsel %vm7897, %v7881, %v7914
    %v7931 = vsel %vm7898, %v7882, %v7915
    %v7932 = vsel %vm7899, %v7883, %v7916
    %v7933 = vsel %vm7900, %v7884, %v7917
    %v7934 = vsel %vm7901, %v7885, %v7918
    %v7935 = vsel %vm7902, %v7886, %v7919
    %v7936 = vsel %vm7903, %v7887, %v7920
    %s7937 = scalar_lea.vmem [#allocation4], 16
    %7938 = vst.msk [vmem:[%s7937 + $0x1] sm:$0xff] %vm148, %v7921
    %7939 = vst.msk [vmem:[%s7937 + $0x11] sm:$0xff] %vm148, %v7922
    %7940 = vst.msk [vmem:[%s7937 + $0x21] sm:$0xff] %vm148, %v7923
    %7941 = vst.msk [vmem:[%s7937 + $0x31] sm:$0xff] %vm148, %v7924
    %7942 = vst.msk [vmem:[%s7937 + $0x41] sm:$0xff] %vm148, %v7925
    %7943 = vst.msk [vmem:[%s7937 + $0x51] sm:$0xff] %vm148, %v7926
    %7944 = vst.msk [vmem:[%s7937 + $0x61] sm:$0xff] %vm148, %v7927
    %7945 = vst.msk [vmem:[%s7937 + $0x71] sm:$0xff] %vm148, %v7928
    %7946 = vst.msk [vmem:[%s7937 + $0xa1] sm:$0xff] %vm148, %v7929
    %7947 = vst.msk [vmem:[%s7937 + $0xb1] sm:$0xff] %vm148, %v7930
    %7948 = vst.msk [vmem:[%s7937 + $0xc1] sm:$0xff] %vm148, %v7931
    %7949 = vst.msk [vmem:[%s7937 + $0xd1] sm:$0xff] %vm148, %v7932
    %7950 = vst.msk [vmem:[%s7937 + $0xe1] sm:$0xff] %vm148, %v7933
    %7951 = vst.msk [vmem:[%s7937 + $0xf1] sm:$0xff] %vm148, %v7934
    %7952 = vst.msk [vmem:[%s7937 + $0x101] sm:$0xff] %vm148, %v7935
    %7953 = vst.msk [vmem:[%s7937 + $0x111] sm:$0xff] %vm148, %v7936
    %v7954 = vld [vmem:[#allocation4] sm:$0xff]
    %v7955 = vld [vmem:[#allocation4 + $0x10] sm:$0xff]
    %v7956 = vld [vmem:[#allocation4 + $0x20] sm:$0xff]
    %v7957 = vld [vmem:[#allocation4 + $0x30] sm:$0xff]
    %v7958 = vld [vmem:[#allocation4 + $0x40] sm:$0xff]
    %v7959 = vld [vmem:[#allocation4 + $0x50] sm:$0xff]
    %v7960 = vld [vmem:[#allocation4 + $0x60] sm:$0xff]
    %v7961 = vld [vmem:[#allocation4 + $0x70] sm:$0xff]
    %v7962 = vld [vmem:[#allocation4 + $0xa0] sm:$0xff]
    %v7963 = vld [vmem:[#allocation4 + $0xb0] sm:$0xff]
    %v7964 = vld [vmem:[#allocation4 + $0xc0] sm:$0xff]
    %v7965 = vld [vmem:[#allocation4 + $0xd0] sm:$0xff]
    %v7966 = vld [vmem:[#allocation4 + $0xe0] sm:$0xff]
    %v7967 = vld [vmem:[#allocation4 + $0xf0] sm:$0xff]
    %v7968 = vld [vmem:[#allocation4 + $0x100] sm:$0xff]
    %v7969 = vld [vmem:[#allocation4 + $0x110] sm:$0xff]
    %v7970 = vpack.c.bf16 %v7955, %v7954
    %v7971 = vpack.c.bf16 %v7957, %v7956
    %v7972 = vpack.c.bf16 %v7959, %v7958
    %v7973 = vpack.c.bf16 %v7961, %v7960
    %v7974 = vpack.c.bf16 %v7963, %v7962
    %v7975 = vpack.c.bf16 %v7965, %v7964
    %v7976 = vpack.c.bf16 %v7967, %v7966
    %v7977 = vpack.c.bf16 %v7969, %v7968
    %v7978 = vld [vmem:[%s5] sm:$0xf]
    %v7979 = vld [vmem:[%s5 + $0x4] sm:$0xf]
    %v7980 = vld [vmem:[%s5 + $0x8] sm:$0xf]
    %v7981 = vld [vmem:[%s5 + $0xc] sm:$0xf]
    %v7982 = vld [vmem:[#allocation4 + $0x1] sm:$0xff]
    %v7983 = vld [vmem:[#allocation4 + $0x11] sm:$0xff]
    %v7984 = vld [vmem:[#allocation4 + $0x21] sm:$0xff]
    %v7985 = vld [vmem:[#allocation4 + $0x31] sm:$0xff]
    %v7986 = vld [vmem:[#allocation4 + $0x41] sm:$0xff]
    %v7987 = vld [vmem:[#allocation4 + $0x51] sm:$0xff]
    %v7988 = vld [vmem:[#allocation4 + $0x61] sm:$0xff]
    %v7989 = vld [vmem:[#allocation4 + $0x71] sm:$0xff]
    %v7990 = vld [vmem:[#allocation4 + $0xa1] sm:$0xff]
    %v7991 = vld [vmem:[#allocation4 + $0xb1] sm:$0xff]
    %v7992 = vld [vmem:[#allocation4 + $0xc1] sm:$0xff]
    %v7993 = vld [vmem:[#allocation4 + $0xd1] sm:$0xff]
    %v7994 = vld [vmem:[#allocation4 + $0xe1] sm:$0xff]
    %v7995 = vld [vmem:[#allocation4 + $0xf1] sm:$0xff]
    %v7996 = vld [vmem:[#allocation4 + $0x101] sm:$0xff]
    %v7997 = vld [vmem:[#allocation4 + $0x111] sm:$0xff]
    %v7998 = vpack.c.bf16 %v7983, %v7982
    %v7999 = vpack.c.bf16 %v7985, %v7984
    %v8000 = vpack.c.bf16 %v7987, %v7986
    %v8001 = vpack.c.bf16 %v7989, %v7988
    %v8002 = vpack.c.bf16 %v7991, %v7990
    %v8003 = vpack.c.bf16 %v7993, %v7992
    %v8004 = vpack.c.bf16 %v7995, %v7994
    %v8005 = vpack.c.bf16 %v7997, %v7996
    %s8006 = scalar_lea.vmem %s5, 16
    %v8007 = vld [vmem:[%s8006] sm:$0xf]
    %v8008 = vld [vmem:[%s8006 + $0x4] sm:$0xf]
    %v8009 = vld [vmem:[%s8006 + $0x8] sm:$0xf]
    %v8010 = vld [vmem:[%s8006 + $0xc] sm:$0xf]
    %v8015 = vunpack.c.l.b16 %v8007
    %v8016 = vunpack.c.l.b16 %v8008
    %v8017 = vunpack.c.l.b16 %v8009
    %v8018 = vunpack.c.l.b16 %v8010
    %v8019 = vpack.c.b16 %v8016, %v8015
    %v8020 = vpack.c.b16 %v8018, %v8017
    %v8024 = vsel %vm148, %v7998, 0
    %v8027 = vsel %vm148, %v7999, 0
    %v8030 = vsel %vm148, %v8000, 0
    %v8033 = vsel %vm148, %v8001, 0
    %v8036 = vsel %vm148, %v8002, 0
    %v8039 = vsel %vm148, %v8003, 0
    %v8042 = vsel %vm148, %v8004, 0
    %v8045 = vsel %vm148, %v8005, 0
    %8047 = vmatprep.subr.bf16.mxu0 0
    %8048 = vmatpush1.bf16.msra.mxu0 %v8019
    %8049 = vmatprep.subr.bf16.mxu0 0
    %8050 = vmatpush1.bf16.msra.mxu0 %v8020
    %8051 = vmatprep.subr.bf16.mxu0 0
    %8052 = vmatpush1.bf16.msra.mxu0 0
    %8053 = vmatprep.subr.bf16.mxu0 0
    %8054 = vmatpush1.bf16.msra.mxu0 0
    %8055 = vmatprep.subr.bf16.mxu0 0
    %8056 = vmatpush1.bf16.msra.mxu0 0
    %8057 = vmatprep.subr.bf16.mxu0 0
    %8058 = vmatpush1.bf16.msra.mxu0 0
    %8059 = vmatprep.subr.bf16.mxu0 0
    %8060 = vmatpush1.bf16.msra.mxu0 0
    %8061 = vmatprep.subr.bf16.mxu0 0
    %8062 = vmatpush1.bf16.msra.mxu0 0
    %8063 = vmatprep.subr.bf16.mxu0 0
    %8064 = vmatpush1.bf16.msra.mxu0 0
    %8065 = vmatprep.subr.bf16.mxu0 0
    %8066 = vmatpush1.bf16.msra.mxu0 0
    %8067 = vmatprep.subr.bf16.mxu0 0
    %8068 = vmatpush1.bf16.msra.mxu0 0
    %8069 = vmatprep.subr.bf16.mxu0 0
    %8070 = vmatpush1.bf16.msra.mxu0 0
    %8071 = vmatprep.subr.bf16.mxu0 0
    %8072 = vmatpush1.bf16.msra.mxu0 0
    %8073 = vmatprep.subr.bf16.mxu0 0
    %8074 = vmatpush1.bf16.msra.mxu0 0
    %8075 = vmatprep.subr.bf16.mxu0 0
    %8076 = vmatpush1.bf16.msra.mxu0 0
    %8077 = vmatprep.subr.bf16.mxu0 0
    %8078 = vmatpush1.bf16.msra.mxu0 0
    %8079 = vmatprep.mubr.bf16.mxu0 0
    %8080 = vmatmul.mubr.bf16.gmra.mrb[0].mxu0 %v8024
    %v8081 = vpop.f32.mrb[0].mxu0
    %v8082 = vadd.f32 0.0, %v8081
    %v8083 = vpop.f32.mrb[0].mxu0
    %v8084 = vpop.f32.mrb[0].mxu0
    %v8085 = vadd.f32 0.0, %v8084
    %v8086 = vpop.f32.mrb[0].mxu0
    %8087 = vmatprep.mubr.bf16.mxu0 0
    %8088 = vmatmul.mubr.bf16.gmra.mrb[0].mxu0 %v8027
    %v8089 = vpop.f32.mrb[0].mxu0
    %v8090 = vadd.f32 0.0, %v8089
    %v8091 = vpop.f32.mrb[0].mxu0
    %v8092 = vpop.f32.mrb[0].mxu0
    %v8093 = vadd.f32 0.0, %v8092
    %v8094 = vpop.f32.mrb[0].mxu0
    %8095 = vmatprep.mubr.bf16.mxu0 0
    %8096 = vmatmul.mubr.bf16.gmra.mrb[0].mxu0 %v8030
    %v8097 = vpop.f32.mrb[0].mxu0
    %v8098 = vadd.f32 0.0, %v8097
    %v8099 = vpop.f32.mrb[0].mxu0
    %v8100 = vpop.f32.mrb[0].mxu0
    %v8101 = vadd.f32 0.0, %v8100
    %v8102 = vpop.f32.mrb[0].mxu0
    %8103 = vmatprep.mubr.bf16.mxu0 0
    %8104 = vmatmul.mubr.bf16.gmra.mrb[0].mxu0 %v8033
    %v8105 = vpop.f32.mrb[0].mxu0
    %v8106 = vadd.f32 0.0, %v8105
    %v8107 = vpop.f32.mrb[0].mxu0
    %v8108 = vpop.f32.mrb[0].mxu0
    %v8109 = vadd.f32 0.0, %v8108
    %v8110 = vpop.f32.mrb[0].mxu0
    %8111 = vmatprep.mubr.bf16.mxu0 0
    %8112 = vmatmul.mubr.bf16.gmra.mrb[0].mxu0 %v8036
    %v8113 = vpop.f32.mrb[0].mxu0
    %v8114 = vadd.f32 0.0, %v8113
    %v8115 = vpop.f32.mrb[0].mxu0
    %v8116 = vpop.f32.mrb[0].mxu0
    %v8117 = vadd.f32 0.0, %v8116
    %v8118 = vpop.f32.mrb[0].mxu0
    %8119 = vmatprep.mubr.bf16.mxu0 0
    %8120 = vmatmul.mubr.bf16.gmra.mrb[0].mxu0 %v8039
    %v8121 = vpop.f32.mrb[0].mxu0
    %v8122 = vadd.f32 0.0, %v8121
    %v8123 = vpop.f32.mrb[0].mxu0
    %v8124 = vpop.f32.mrb[0].mxu0
    %v8125 = vadd.f32 0.0, %v8124
    %v8126 = vpop.f32.mrb[0].mxu0
    %8127 = vmatprep.mubr.bf16.mxu0 0
    %8128 = vmatmul.mubr.bf16.gmra.mrb[0].mxu0 %v8042
    %v8129 = vpop.f32.mrb[0].mxu0
    %v8130 = vadd.f32 0.0, %v8129
    %v8131 = vpop.f32.mrb[0].mxu0
    %v8132 = vpop.f32.mrb[0].mxu0
    %v8133 = vadd.f32 0.0, %v8132
    %v8134 = vpop.f32.mrb[0].mxu0
    %8135 = vmatprep.mubr.bf16.mxu0 0
    %8136 = vmatmul.mubr.bf16.gmra.mrb[0].mxu0 %v8045
    %v8137 = vpop.f32.mrb[0].mxu0
    %v8138 = vadd.f32 0.0, %v8137
    %v8139 = vpop.f32.mrb[0].mxu0
    %v8140 = vpop.f32.mrb[0].mxu0
    %v8141 = vadd.f32 0.0, %v8140
    %v8142 = vpop.f32.mrb[0].mxu0
    %8143 = vdwg.mxu0
    %v8148 = vunpack.c.l.b16 %v7978
    %v8149 = vunpack.c.l.b16 %v7979
    %v8150 = vunpack.c.l.b16 %v7980
    %v8151 = vunpack.c.l.b16 %v7981
    %v8152 = vpack.c.b16 %v8149, %v8148
    %v8153 = vpack.c.b16 %v8151, %v8150
    %v8157 = vsel %vm148, %v7970, 0
    %v8160 = vsel %vm148, %v7971, 0
    %v8163 = vsel %vm148, %v7972, 0
    %v8166 = vsel %vm148, %v7973, 0
    %v8169 = vsel %vm148, %v7974, 0
    %v8172 = vsel %vm148, %v7975, 0
    %v8175 = vsel %vm148, %v7976, 0
    %v8178 = vsel %vm148, %v7977, 0
    %8180 = vmatprep.subr.bf16.mxu0 0
    %8181 = vmatpush1.bf16.msra.mxu0 %v8152
    %8182 = vmatprep.subr.bf16.mxu0 0
    %8183 = vmatpush1.bf16.msra.mxu0 %v8153
    %8184 = vmatprep.subr.bf16.mxu0 0
    %8185 = vmatpush1.bf16.msra.mxu0 0
    %8186 = vmatprep.subr.bf16.mxu0 0
    %8187 = vmatpush1.bf16.msra.mxu0 0
    %8188 = vmatprep.subr.bf16.mxu0 0
    %8189 = vmatpush1.bf16.msra.mxu0 0
    %8190 = vmatprep.subr.bf16.mxu0 0
    %8191 = vmatpush1.bf16.msra.mxu0 0
    %8192 = vmatprep.subr.bf16.mxu0 0
    %8193 = vmatpush1.bf16.msra.mxu0 0
    %8194 = vmatprep.subr.bf16.mxu0 0
    %8195 = vmatpush1.bf16.msra.mxu0 0
    %8196 = vmatprep.subr.bf16.mxu0 0
    %8197 = vmatpush1.bf16.msra.mxu0 0
    %8198 = vmatprep.subr.bf16.mxu0 0
    %8199 = vmatpush1.bf16.msra.mxu0 0
    %8200 = vmatprep.subr.bf16.mxu0 0
    %8201 = vmatpush1.bf16.msra.mxu0 0
    %8202 = vmatprep.subr.bf16.mxu0 0
    %8203 = vmatpush1.bf16.msra.mxu0 0
    %8204 = vmatprep.subr.bf16.mxu0 0
    %8205 = vmatpush1.bf16.msra.mxu0 0
    %8206 = vmatprep.subr.bf16.mxu0 0
    %8207 = vmatpush1.bf16.msra.mxu0 0
    %8208 = vmatprep.subr.bf16.mxu0 0
    %8209 = vmatpush1.bf16.msra.mxu0 0
    %8210 = vmatprep.subr.bf16.mxu0 0
    %8211 = vmatpush1.bf16.msra.mxu0 0
    %8212 = vmatprep.mubr.bf16.mxu0 0
    %8213 = vmatmul.mubr.bf16.gmra.mrb[0].mxu0 %v8157
    %v8214 = vpop.f32.mrb[0].mxu0
    %v8215 = vadd.f32 %v8082, %v8214
    %v8216 = vpop.f32.mrb[0].mxu0
    %v8217 = vpop.f32.mrb[0].mxu0
    %v8218 = vadd.f32 %v8085, %v8217
    %v8219 = vpop.f32.mrb[0].mxu0
    %8220 = vmatprep.mubr.bf16.mxu0 0
    %8221 = vmatmul.mubr.bf16.gmra.mrb[0].mxu0 %v8160
    %v8222 = vpop.f32.mrb[0].mxu0
    %v8223 = vadd.f32 %v8090, %v8222
    %v8224 = vpop.f32.mrb[0].mxu0
    %v8225 = vpop.f32.mrb[0].mxu0
    %v8226 = vadd.f32 %v8093, %v8225
    %v8227 = vpop.f32.mrb[0].mxu0
    %8228 = vmatprep.mubr.bf16.mxu0 0
    %8229 = vmatmul.mubr.bf16.gmra.mrb[0].mxu0 %v8163
    %v8230 = vpop.f32.mrb[0].mxu0
    %v8231 = vadd.f32 %v8098, %v8230
    %v8232 = vpop.f32.mrb[0].mxu0
    %v8233 = vpop.f32.mrb[0].mxu0
    %v8234 = vadd.f32 %v8101, %v8233
    %v8235 = vpop.f32.mrb[0].mxu0
    %8236 = vmatprep.mubr.bf16.mxu0 0
    %8237 = vmatmul.mubr.bf16.gmra.mrb[0].mxu0 %v8166
    %v8238 = vpop.f32.mrb[0].mxu0
    %v8239 = vadd.f32 %v8106, %v8238
    %v8240 = vpop.f32.mrb[0].mxu0
    %v8241 = vpop.f32.mrb[0].mxu0
    %v8242 = vadd.f32 %v8109, %v8241
    %v8243 = vpop.f32.mrb[0].mxu0
    %8244 = vmatprep.mubr.bf16.mxu0 0
    %8245 = vmatmul.mubr.bf16.gmra.mrb[0].mxu0 %v8169
    %v8246 = vpop.f32.mrb[0].mxu0
    %v8247 = vadd.f32 %v8114, %v8246
    %v8248 = vpop.f32.mrb[0].mxu0
    %v8249 = vpop.f32.mrb[0].mxu0
    %v8250 = vadd.f32 %v8117, %v8249
    %v8251 = vpop.f32.mrb[0].mxu0
    %8252 = vmatprep.mubr.bf16.mxu0 0
    %8253 = vmatmul.mubr.bf16.gmra.mrb[0].mxu0 %v8172
    %v8254 = vpop.f32.mrb[0].mxu0
    %v8255 = vadd.f32 %v8122, %v8254
    %v8256 = vpop.f32.mrb[0].mxu0
    %v8257 = vpop.f32.mrb[0].mxu0
    %v8258 = vadd.f32 %v8125, %v8257
    %v8259 = vpop.f32.mrb[0].mxu0
    %8260 = vmatprep.mubr.bf16.mxu0 0
    %8261 = vmatmul.mubr.bf16.gmra.mrb[0].mxu0 %v8175
    %v8262 = vpop.f32.mrb[0].mxu0
    %v8263 = vadd.f32 %v8130, %v8262
    %v8264 = vpop.f32.mrb[0].mxu0
    %v8265 = vpop.f32.mrb[0].mxu0
    %v8266 = vadd.f32 %v8133, %v8265
    %v8267 = vpop.f32.mrb[0].mxu0
    %8268 = vmatprep.mubr.bf16.mxu0 0
    %8269 = vmatmul.mubr.bf16.gmra.mrb[0].mxu0 %v8178
    %v8270 = vpop.f32.mrb[0].mxu0
    %v8271 = vadd.f32 %v8138, %v8270
    %v8272 = vpop.f32.mrb[0].mxu0
    %v8273 = vpop.f32.mrb[0].mxu0
    %v8274 = vadd.f32 %v8141, %v8273
    %v8275 = vpop.f32.mrb[0].mxu0
    %8276 = vdwg.mxu0
    %v8277 = vld [vmem:[#allocation4 + $0x2] sm:$0xff]
    %v8278 = vld [vmem:[#allocation4 + $0x12] sm:$0xff]
    %v8279 = vld [vmem:[#allocation4 + $0x22] sm:$0xff]
    %v8280 = vld [vmem:[#allocation4 + $0x32] sm:$0xff]
    %v8281 = vld [vmem:[#allocation4 + $0x42] sm:$0xff]
    %v8282 = vld [vmem:[#allocation4 + $0x52] sm:$0xff]
    %v8283 = vld [vmem:[#allocation4 + $0x62] sm:$0xff]
    %v8284 = vld [vmem:[#allocation4 + $0x72] sm:$0xff]
    %v8285 = vld [vmem:[#allocation4 + $0xa2] sm:$0xff]
    %v8286 = vld [vmem:[#allocation4 + $0xb2] sm:$0xff]
    %v8287 = vld [vmem:[#allocation4 + $0xc2] sm:$0xff]
    %v8288 = vld [vmem:[#allocation4 + $0xd2] sm:$0xff]
    %v8289 = vld [vmem:[#allocation4 + $0xe2] sm:$0xff]
    %v8290 = vld [vmem:[#allocation4 + $0xf2] sm:$0xff]
    %v8291 = vld [vmem:[#allocation4 + $0x102] sm:$0xff]
    %v8292 = vld [vmem:[#allocation4 + $0x112] sm:$0xff]
    %v8293 = vpack.c.bf16 %v8278, %v8277
    %v8294 = vpack.c.bf16 %v8280, %v8279
    %v8295 = vpack.c.bf16 %v8282, %v8281
    %v8296 = vpack.c.bf16 %v8284, %v8283
    %v8297 = vpack.c.bf16 %v8286, %v8285
    %v8298 = vpack.c.bf16 %v8288, %v8287
    %v8299 = vpack.c.bf16 %v8290, %v8289
    %v8300 = vpack.c.bf16 %v8292, %v8291
    %s8301 = scalar_lea.vmem %s5, 32
    %v8302 = vld [vmem:[%s8301] sm:$0xf]
    %v8303 = vld [vmem:[%s8301 + $0x4] sm:$0xf]
    %v8304 = vld [vmem:[%s8301 + $0x8] sm:$0xf]
    %v8305 = vld [vmem:[%s8301 + $0xc] sm:$0xf]
    %v8310 = vunpack.c.l.b16 %v8302
    %v8311 = vunpack.c.l.b16 %v8303
    %v8312 = vunpack.c.l.b16 %v8304
    %v8313 = vunpack.c.l.b16 %v8305
    %v8314 = vpack.c.b16 %v8311, %v8310
    %v8315 = vpack.c.b16 %v8313, %v8312
    %v8319 = vsel %vm148, %v8293, 0
    %v8322 = vsel %vm148, %v8294, 0
    %v8325 = vsel %vm148, %v8295, 0
    %v8328 = vsel %vm148, %v8296, 0
    %v8331 = vsel %vm148, %v8297, 0
    %v8334 = vsel %vm148, %v8298, 0
    %v8337 = vsel %vm148, %v8299, 0
    %v8340 = vsel %vm148, %v8300, 0
    %8342 = vmatprep.subr.bf16.mxu0 0
    %8343 = vmatpush1.bf16.msra.mxu0 %v8314
    %8344 = vmatprep.subr.bf16.mxu0 0
    %8345 = vmatpush1.bf16.msra.mxu0 %v8315
    %8346 = vmatprep.subr.bf16.mxu0 0
    %8347 = vmatpush1.bf16.msra.mxu0 0
    %8348 = vmatprep.subr.bf16.mxu0 0
    %8349 = vmatpush1.bf16.msra.mxu0 0
    %8350 = vmatprep.subr.bf16.mxu0 0
    %8351 = vmatpush1.bf16.msra.mxu0 0
    %8352 = vmatprep.subr.bf16.mxu0 0
    %8353 = vmatpush1.bf16.msra.mxu0 0
    %8354 = vmatprep.subr.bf16.mxu0 0
    %8355 = vmatpush1.bf16.msra.mxu0 0
    %8356 = vmatprep.subr.bf16.mxu0 0
    %8357 = vmatpush1.bf16.msra.mxu0 0
    %8358 = vmatprep.subr.bf16.mxu0 0
    %8359 = vmatpush1.bf16.msra.mxu0 0
    %8360 = vmatprep.subr.bf16.mxu0 0
    %8361 = vmatpush1.bf16.msra.mxu0 0
    %8362 = vmatprep.subr.bf16.mxu0 0
    %8363 = vmatpush1.bf16.msra.mxu0 0
    %8364 = vmatprep.subr.bf16.mxu0 0
    %8365 = vmatpush1.bf16.msra.mxu0 0
    %8366 = vmatprep.subr.bf16.mxu0 0
    %8367 = vmatpush1.bf16.msra.mxu0 0
    %8368 = vmatprep.subr.bf16.mxu0 0
    %8369 = vmatpush1.bf16.msra.mxu0 0
    %8370 = vmatprep.subr.bf16.mxu0 0
    %8371 = vmatpush1.bf16.msra.mxu0 0
    %8372 = vmatprep.subr.bf16.mxu0 0
    %8373 = vmatpush1.bf16.msra.mxu0 0
    %8374 = vmatprep.mubr.bf16.mxu0 0
    %8375 = vmatmul.mubr.bf16.gmra.mrb[0].mxu0 %v8319
    %v8376 = vpop.f32.mrb[0].mxu0
    %v8377 = vadd.f32 0.0, %v8376
    %v8378 = vpop.f32.mrb[0].mxu0
    %v8379 = vpop.f32.mrb[0].mxu0
    %v8380 = vadd.f32 0.0, %v8379
    %v8381 = vpop.f32.mrb[0].mxu0
    %8382 = vmatprep.mubr.bf16.mxu0 0
    %8383 = vmatmul.mubr.bf16.gmra.mrb[0].mxu0 %v8322
    %v8384 = vpop.f32.mrb[0].mxu0
    %v8385 = vadd.f32 0.0, %v8384
    %v8386 = vpop.f32.mrb[0].mxu0
    %v8387 = vpop.f32.mrb[0].mxu0
    %v8388 = vadd.f32 0.0, %v8387
    %v8389 = vpop.f32.mrb[0].mxu0
    %8390 = vmatprep.mubr.bf16.mxu0 0
    %8391 = vmatmul.mubr.bf16.gmra.mrb[0].mxu0 %v8325
    %v8392 = vpop.f32.mrb[0].mxu0
    %v8393 = vadd.f32 0.0, %v8392
    %v8394 = vpop.f32.mrb[0].mxu0
    %v8395 = vpop.f32.mrb[0].mxu0
    %v8396 = vadd.f32 0.0, %v8395
    %v8397 = vpop.f32.mrb[0].mxu0
    %8398 = vmatprep.mubr.bf16.mxu0 0
    %8399 = vmatmul.mubr.bf16.gmra.mrb[0].mxu0 %v8328
    %v8400 = vpop.f32.mrb[0].mxu0
    %v8401 = vadd.f32 0.0, %v8400
    %v8402 = vpop.f32.mrb[0].mxu0
    %v8403 = vpop.f32.mrb[0].mxu0
    %v8404 = vadd.f32 0.0, %v8403
    %v8405 = vpop.f32.mrb[0].mxu0
    %8406 = vmatprep.mubr.bf16.mxu0 0
    %8407 = vmatmul.mubr.bf16.gmra.mrb[0].mxu0 %v8331
    %v8408 = vpop.f32.mrb[0].mxu0
    %v8409 = vadd.f32 0.0, %v8408
    %v8410 = vpop.f32.mrb[0].mxu0
    %v8411 = vpop.f32.mrb[0].mxu0
    %v8412 = vadd.f32 0.0, %v8411
    %v8413 = vpop.f32.mrb[0].mxu0
    %8414 = vmatprep.mubr.bf16.mxu0 0
    %8415 = vmatmul.mubr.bf16.gmra.mrb[0].mxu0 %v8334
    %v8416 = vpop.f32.mrb[0].mxu0
    %v8417 = vadd.f32 0.0, %v8416
    %v8418 = vpop.f32.mrb[0].mxu0
    %v8419 = vpop.f32.mrb[0].mxu0
    %v8420 = vadd.f32 0.0, %v8419
    %v8421 = vpop.f32.mrb[0].mxu0
    %8422 = vmatprep.mubr.bf16.mxu0 0
    %8423 = vmatmul.mubr.bf16.gmra.mrb[0].mxu0 %v8337
    %v8424 = vpop.f32.mrb[0].mxu0
    %v8425 = vadd.f32 0.0, %v8424
    %v8426 = vpop.f32.mrb[0].mxu0
    %v8427 = vpop.f32.mrb[0].mxu0
    %v8428 = vadd.f32 0.0, %v8427
    %v8429 = vpop.f32.mrb[0].mxu0
    %8430 = vmatprep.mubr.bf16.mxu0 0
    %8431 = vmatmul.mubr.bf16.gmra.mrb[0].mxu0 %v8340
    %v8432 = vpop.f32.mrb[0].mxu0
    %v8433 = vadd.f32 0.0, %v8432
    %v8434 = vpop.f32.mrb[0].mxu0
    %v8435 = vpop.f32.mrb[0].mxu0
    %v8436 = vadd.f32 0.0, %v8435
    %v8437 = vpop.f32.mrb[0].mxu0
    %8438 = vdwg.mxu0
    %v8439 = vadd.f32 %v8215, %v8377
    %v8440 = vadd.f32 %v8218, %v8380
    %v8441 = vadd.f32 %v8223, %v8385
    %v8442 = vadd.f32 %v8226, %v8388
    %v8443 = vadd.f32 %v8231, %v8393
    %v8444 = vadd.f32 %v8234, %v8396
    %v8445 = vadd.f32 %v8239, %v8401
    %v8446 = vadd.f32 %v8242, %v8404
    %v8447 = vadd.f32 %v8247, %v8409
    %v8448 = vadd.f32 %v8250, %v8412
    %v8449 = vadd.f32 %v8255, %v8417
    %v8450 = vadd.f32 %v8258, %v8420
    %v8451 = vadd.f32 %v8263, %v8425
    %v8452 = vadd.f32 %v8266, %v8428
    %v8453 = vadd.f32 %v8271, %v8433
    %v8454 = vadd.f32 %v8274, %v8436
    %v8455 = vld [vmem:[%s7937] sm:$0xff]
    %v8456 = vld [vmem:[%s7937 + $0x10] sm:$0xff]
    %v8457 = vld [vmem:[%s7937 + $0x20] sm:$0xff]
    %v8458 = vld [vmem:[%s7937 + $0x30] sm:$0xff]
    %v8459 = vld [vmem:[%s7937 + $0x40] sm:$0xff]
    %v8460 = vld [vmem:[%s7937 + $0x50] sm:$0xff]
    %v8461 = vld [vmem:[%s7937 + $0x60] sm:$0xff]
    %v8462 = vld [vmem:[%s7937 + $0x70] sm:$0xff]
    %v8463 = vld [vmem:[%s7937 + $0xa0] sm:$0xff]
    %v8464 = vld [vmem:[%s7937 + $0xb0] sm:$0xff]
    %v8465 = vld [vmem:[%s7937 + $0xc0] sm:$0xff]
    %v8466 = vld [vmem:[%s7937 + $0xd0] sm:$0xff]
    %v8467 = vld [vmem:[%s7937 + $0xe0] sm:$0xff]
    %v8468 = vld [vmem:[%s7937 + $0xf0] sm:$0xff]
    %v8469 = vld [vmem:[%s7937 + $0x100] sm:$0xff]
    %v8470 = vld [vmem:[%s7937 + $0x110] sm:$0xff]
    %v8471 = vpack.c.bf16 %v8456, %v8455
    %v8472 = vpack.c.bf16 %v8458, %v8457
    %v8473 = vpack.c.bf16 %v8460, %v8459
    %v8474 = vpack.c.bf16 %v8462, %v8461
    %v8475 = vpack.c.bf16 %v8464, %v8463
    %v8476 = vpack.c.bf16 %v8466, %v8465
    %v8477 = vpack.c.bf16 %v8468, %v8467
    %v8478 = vpack.c.bf16 %v8470, %v8469
    %s8479 = scalar_lea.vmem %s5, 48
    %v8480 = vld [vmem:[%s8479] sm:$0xf]
    %v8481 = vld [vmem:[%s8479 + $0x4] sm:$0xf]
    %v8482 = vld [vmem:[%s8479 + $0x8] sm:$0xf]
    %v8483 = vld [vmem:[%s8479 + $0xc] sm:$0xf]
    %v8488 = vunpack.c.l.b16 %v8480
    %v8489 = vunpack.c.l.b16 %v8481
    %v8490 = vunpack.c.l.b16 %v8482
    %v8491 = vunpack.c.l.b16 %v8483
    %v8492 = vpack.c.b16 %v8489, %v8488
    %v8493 = vpack.c.b16 %v8491, %v8490
    %v8497 = vsel %vm148, %v8471, 0
    %v8500 = vsel %vm148, %v8472, 0
    %v8503 = vsel %vm148, %v8473, 0
    %v8506 = vsel %vm148, %v8474, 0
    %v8509 = vsel %vm148, %v8475, 0
    %v8512 = vsel %vm148, %v8476, 0
    %v8515 = vsel %vm148, %v8477, 0
    %v8518 = vsel %vm148, %v8478, 0
    %8520 = vmatprep.subr.bf16.mxu0 0
    %8521 = vmatpush1.bf16.msra.mxu0 %v8492
    %8522 = vmatprep.subr.bf16.mxu0 0
    %8523 = vmatpush1.bf16.msra.mxu0 %v8493
    %8524 = vmatprep.subr.bf16.mxu0 0
    %8525 = vmatpush1.bf16.msra.mxu0 0
    %8526 = vmatprep.subr.bf16.mxu0 0
    %8527 = vmatpush1.bf16.msra.mxu0 0
    %8528 = vmatprep.subr.bf16.mxu0 0
    %8529 = vmatpush1.bf16.msra.mxu0 0
    %8530 = vmatprep.subr.bf16.mxu0 0
    %8531 = vmatpush1.bf16.msra.mxu0 0
    %8532 = vmatprep.subr.bf16.mxu0 0
    %8533 = vmatpush1.bf16.msra.mxu0 0
    %8534 = vmatprep.subr.bf16.mxu0 0
    %8535 = vmatpush1.bf16.msra.mxu0 0
    %8536 = vmatprep.subr.bf16.mxu0 0
    %8537 = vmatpush1.bf16.msra.mxu0 0
    %8538 = vmatprep.subr.bf16.mxu0 0
    %8539 = vmatpush1.bf16.msra.mxu0 0
    %8540 = vmatprep.subr.bf16.mxu0 0
    %8541 = vmatpush1.bf16.msra.mxu0 0
    %8542 = vmatprep.subr.bf16.mxu0 0
    %8543 = vmatpush1.bf16.msra.mxu0 0
    %8544 = vmatprep.subr.bf16.mxu0 0
    %8545 = vmatpush1.bf16.msra.mxu0 0
    %8546 = vmatprep.subr.bf16.mxu0 0
    %8547 = vmatpush1.bf16.msra.mxu0 0
    %8548 = vmatprep.subr.bf16.mxu0 0
    %8549 = vmatpush1.bf16.msra.mxu0 0
    %8550 = vmatprep.subr.bf16.mxu0 0
    %8551 = vmatpush1.bf16.msra.mxu0 0
    %8552 = vmatprep.mubr.bf16.mxu0 0
    %8553 = vmatmul.mubr.bf16.gmra.mrb[0].mxu0 %v8497
    %v8554 = vpop.f32.mrb[0].mxu0
    %v8555 = vadd.f32 0.0, %v8554
    %v8556 = vpop.f32.mrb[0].mxu0
    %v8557 = vpop.f32.mrb[0].mxu0
    %v8558 = vadd.f32 0.0, %v8557
    %v8559 = vpop.f32.mrb[0].mxu0
    %8560 = vmatprep.mubr.bf16.mxu0 0
    %8561 = vmatmul.mubr.bf16.gmra.mrb[0].mxu0 %v8500
    %v8562 = vpop.f32.mrb[0].mxu0
    %v8563 = vadd.f32 0.0, %v8562
    %v8564 = vpop.f32.mrb[0].mxu0
    %v8565 = vpop.f32.mrb[0].mxu0
    %v8566 = vadd.f32 0.0, %v8565
    %v8567 = vpop.f32.mrb[0].mxu0
    %8568 = vmatprep.mubr.bf16.mxu0 0
    %8569 = vmatmul.mubr.bf16.gmra.mrb[0].mxu0 %v8503
    %v8570 = vpop.f32.mrb[0].mxu0
    %v8571 = vadd.f32 0.0, %v8570
    %v8572 = vpop.f32.mrb[0].mxu0
    %v8573 = vpop.f32.mrb[0].mxu0
    %v8574 = vadd.f32 0.0, %v8573
    %v8575 = vpop.f32.mrb[0].mxu0
    %8576 = vmatprep.mubr.bf16.mxu0 0
    %8577 = vmatmul.mubr.bf16.gmra.mrb[0].mxu0 %v8506
    %v8578 = vpop.f32.mrb[0].mxu0
    %v8579 = vadd.f32 0.0, %v8578
    %v8580 = vpop.f32.mrb[0].mxu0
    %v8581 = vpop.f32.mrb[0].mxu0
    %v8582 = vadd.f32 0.0, %v8581
    %v8583 = vpop.f32.mrb[0].mxu0
    %8584 = vmatprep.mubr.bf16.mxu0 0
    %8585 = vmatmul.mubr.bf16.gmra.mrb[0].mxu0 %v8509
    %v8586 = vpop.f32.mrb[0].mxu0
    %v8587 = vadd.f32 0.0, %v8586
    %v8588 = vpop.f32.mrb[0].mxu0
    %v8589 = vpop.f32.mrb[0].mxu0
    %v8590 = vadd.f32 0.0, %v8589
    %v8591 = vpop.f32.mrb[0].mxu0
    %8592 = vmatprep.mubr.bf16.mxu0 0
    %8593 = vmatmul.mubr.bf16.gmra.mrb[0].mxu0 %v8512
    %v8594 = vpop.f32.mrb[0].mxu0
    %v8595 = vadd.f32 0.0, %v8594
    %v8596 = vpop.f32.mrb[0].mxu0
    %v8597 = vpop.f32.mrb[0].mxu0
    %v8598 = vadd.f32 0.0, %v8597
    %v8599 = vpop.f32.mrb[0].mxu0
    %8600 = vmatprep.mubr.bf16.mxu0 0
    %8601 = vmatmul.mubr.bf16.gmra.mrb[0].mxu0 %v8515
    %v8602 = vpop.f32.mrb[0].mxu0
    %v8603 = vadd.f32 0.0, %v8602
    %v8604 = vpop.f32.mrb[0].mxu0
    %v8605 = vpop.f32.mrb[0].mxu0
    %v8606 = vadd.f32 0.0, %v8605
    %v8607 = vpop.f32.mrb[0].mxu0
    %8608 = vmatprep.mubr.bf16.mxu0 0
    %8609 = vmatmul.mubr.bf16.gmra.mrb[0].mxu0 %v8518
    %v8610 = vpop.f32.mrb[0].mxu0
    %v8611 = vadd.f32 0.0, %v8610
    %v8612 = vpop.f32.mrb[0].mxu0
    %v8613 = vpop.f32.mrb[0].mxu0
    %v8614 = vadd.f32 0.0, %v8613
    %v8615 = vpop.f32.mrb[0].mxu0
    %8616 = vdwg.mxu0
    %v8617 = vadd.f32 %v8439, %v8555
    %v8618 = vadd.f32 %v8440, %v8558
    %v8619 = vadd.f32 %v8441, %v8563
    %v8620 = vadd.f32 %v8442, %v8566
    %v8621 = vadd.f32 %v8443, %v8571
    %v8622 = vadd.f32 %v8444, %v8574
    %v8623 = vadd.f32 %v8445, %v8579
    %v8624 = vadd.f32 %v8446, %v8582
    %v8625 = vadd.f32 %v8447, %v8587
    %v8626 = vadd.f32 %v8448, %v8590
    %v8627 = vadd.f32 %v8449, %v8595
    %v8628 = vadd.f32 %v8450, %v8598
    %v8629 = vadd.f32 %v8451, %v8603
    %v8630 = vadd.f32 %v8452, %v8606
    %v8631 = vadd.f32 %v8453, %v8611
    %v8632 = vadd.f32 %v8454, %v8614
    %v8633 = vld [vmem:[%s7937 + $0x1] sm:$0xff]
    %v8634 = vld [vmem:[%s7937 + $0x11] sm:$0xff]
    %v8635 = vld [vmem:[%s7937 + $0x21] sm:$0xff]
    %v8636 = vld [vmem:[%s7937 + $0x31] sm:$0xff]
    %v8637 = vld [vmem:[%s7937 + $0x41] sm:$0xff]
    %v8638 = vld [vmem:[%s7937 + $0x51] sm:$0xff]
    %v8639 = vld [vmem:[%s7937 + $0x61] sm:$0xff]
    %v8640 = vld [vmem:[%s7937 + $0x71] sm:$0xff]
    %v8641 = vld [vmem:[%s7937 + $0xa1] sm:$0xff]
    %v8642 = vld [vmem:[%s7937 + $0xb1] sm:$0xff]
    %v8643 = vld [vmem:[%s7937 + $0xc1] sm:$0xff]
    %v8644 = vld [vmem:[%s7937 + $0xd1] sm:$0xff]
    %v8645 = vld [vmem:[%s7937 + $0xe1] sm:$0xff]
    %v8646 = vld [vmem:[%s7937 + $0xf1] sm:$0xff]
    %v8647 = vld [vmem:[%s7937 + $0x101] sm:$0xff]
    %v8648 = vld [vmem:[%s7937 + $0x111] sm:$0xff]
    %v8649 = vpack.c.bf16 %v8634, %v8633
    %v8650 = vpack.c.bf16 %v8636, %v8635
    %v8651 = vpack.c.bf16 %v8638, %v8637
    %v8652 = vpack.c.bf16 %v8640, %v8639
    %v8653 = vpack.c.bf16 %v8642, %v8641
    %v8654 = vpack.c.bf16 %v8644, %v8643
    %v8655 = vpack.c.bf16 %v8646, %v8645
    %v8656 = vpack.c.bf16 %v8648, %v8647
    %s8657 = scalar_lea.vmem %s5, 64
    %v8658 = vld [vmem:[%s8657] sm:$0xf]
    %v8659 = vld [vmem:[%s8657 + $0x4] sm:$0xf]
    %v8660 = vld [vmem:[%s8657 + $0x8] sm:$0xf]
    %v8661 = vld [vmem:[%s8657 + $0xc] sm:$0xf]
    %v8666 = vunpack.c.l.b16 %v8658
    %v8667 = vunpack.c.l.b16 %v8659
    %v8668 = vunpack.c.l.b16 %v8660
    %v8669 = vunpack.c.l.b16 %v8661
    %v8670 = vpack.c.b16 %v8667, %v8666
    %v8671 = vpack.c.b16 %v8669, %v8668
    %v8675 = vsel %vm148, %v8649, 0
    %v8678 = vsel %vm148, %v8650, 0
    %v8681 = vsel %vm148, %v8651, 0
    %v8684 = vsel %vm148, %v8652, 0
    %v8687 = vsel %vm148, %v8653, 0
    %v8690 = vsel %vm148, %v8654, 0
    %v8693 = vsel %vm148, %v8655, 0
    %v8696 = vsel %vm148, %v8656, 0
    %8698 = vmatprep.subr.bf16.mxu0 0
    %8699 = vmatpush1.bf16.msra.mxu0 %v8670
    %8700 = vmatprep.subr.bf16.mxu0 0
    %8701 = vmatpush1.bf16.msra.mxu0 %v8671
    %8702 = vmatprep.subr.bf16.mxu0 0
    %8703 = vmatpush1.bf16.msra.mxu0 0
    %8704 = vmatprep.subr.bf16.mxu0 0
    %8705 = vmatpush1.bf16.msra.mxu0 0
    %8706 = vmatprep.subr.bf16.mxu0 0
    %8707 = vmatpush1.bf16.msra.mxu0 0
    %8708 = vmatprep.subr.bf16.mxu0 0
    %8709 = vmatpush1.bf16.msra.mxu0 0
    %8710 = vmatprep.subr.bf16.mxu0 0
    %8711 = vmatpush1.bf16.msra.mxu0 0
    %8712 = vmatprep.subr.bf16.mxu0 0
    %8713 = vmatpush1.bf16.msra.mxu0 0
    %8714 = vmatprep.subr.bf16.mxu0 0
    %8715 = vmatpush1.bf16.msra.mxu0 0
    %8716 = vmatprep.subr.bf16.mxu0 0
    %8717 = vmatpush1.bf16.msra.mxu0 0
    %8718 = vmatprep.subr.bf16.mxu0 0
    %8719 = vmatpush1.bf16.msra.mxu0 0
    %8720 = vmatprep.subr.bf16.mxu0 0
    %8721 = vmatpush1.bf16.msra.mxu0 0
    %8722 = vmatprep.subr.bf16.mxu0 0
    %8723 = vmatpush1.bf16.msra.mxu0 0
    %8724 = vmatprep.subr.bf16.mxu0 0
    %8725 = vmatpush1.bf16.msra.mxu0 0
    %8726 = vmatprep.subr.bf16.mxu0 0
    %8727 = vmatpush1.bf16.msra.mxu0 0
    %8728 = vmatprep.subr.bf16.mxu0 0
    %8729 = vmatpush1.bf16.msra.mxu0 0
    %8730 = vmatprep.mubr.bf16.mxu0 0
    %8731 = vmatmul.mubr.bf16.gmra.mrb[0].mxu0 %v8675
    %v8732 = vpop.f32.mrb[0].mxu0
    %v8733 = vadd.f32 0.0, %v8732
    %v8734 = vpop.f32.mrb[0].mxu0
    %v8735 = vpop.f32.mrb[0].mxu0
    %v8736 = vadd.f32 0.0, %v8735
    %v8737 = vpop.f32.mrb[0].mxu0
    %8738 = vmatprep.mubr.bf16.mxu0 0
    %8739 = vmatmul.mubr.bf16.gmra.mrb[0].mxu0 %v8678
    %v8740 = vpop.f32.mrb[0].mxu0
    %v8741 = vadd.f32 0.0, %v8740
    %v8742 = vpop.f32.mrb[0].mxu0
    %v8743 = vpop.f32.mrb[0].mxu0
    %v8744 = vadd.f32 0.0, %v8743
    %v8745 = vpop.f32.mrb[0].mxu0
    %8746 = vmatprep.mubr.bf16.mxu0 0
    %8747 = vmatmul.mubr.bf16.gmra.mrb[0].mxu0 %v8681
    %v8748 = vpop.f32.mrb[0].mxu0
    %v8749 = vadd.f32 0.0, %v8748
    %v8750 = vpop.f32.mrb[0].mxu0
    %v8751 = vpop.f32.mrb[0].mxu0
    %v8752 = vadd.f32 0.0, %v8751
    %v8753 = vpop.f32.mrb[0].mxu0
    %8754 = vmatprep.mubr.bf16.mxu0 0
    %8755 = vmatmul.mubr.bf16.gmra.mrb[0].mxu0 %v8684
    %v8756 = vpop.f32.mrb[0].mxu0
    %v8757 = vadd.f32 0.0, %v8756
    %v8758 = vpop.f32.mrb[0].mxu0
    %v8759 = vpop.f32.mrb[0].mxu0
    %v8760 = vadd.f32 0.0, %v8759
    %v8761 = vpop.f32.mrb[0].mxu0
    %8762 = vmatprep.mubr.bf16.mxu0 0
    %8763 = vmatmul.mubr.bf16.gmra.mrb[0].mxu0 %v8687
    %v8764 = vpop.f32.mrb[0].mxu0
    %v8765 = vadd.f32 0.0, %v8764
    %v8766 = vpop.f32.mrb[0].mxu0
    %v8767 = vpop.f32.mrb[0].mxu0
    %v8768 = vadd.f32 0.0, %v8767
    %v8769 = vpop.f32.mrb[0].mxu0
    %8770 = vmatprep.mubr.bf16.mxu0 0
    %8771 = vmatmul.mubr.bf16.gmra.mrb[0].mxu0 %v8690
    %v8772 = vpop.f32.mrb[0].mxu0
    %v8773 = vadd.f32 0.0, %v8772
    %v8774 = vpop.f32.mrb[0].mxu0
    %v8775 = vpop.f32.mrb[0].mxu0
    %v8776 = vadd.f32 0.0, %v8775
    %v8777 = vpop.f32.mrb[0].mxu0
    %8778 = vmatprep.mubr.bf16.mxu0 0
    %8779 = vmatmul.mubr.bf16.gmra.mrb[0].mxu0 %v8693
    %v8780 = vpop.f32.mrb[0].mxu0
    %v8781 = vadd.f32 0.0, %v8780
    %v8782 = vpop.f32.mrb[0].mxu0
    %v8783 = vpop.f32.mrb[0].mxu0
    %v8784 = vadd.f32 0.0, %v8783
    %v8785 = vpop.f32.mrb[0].mxu0
    %8786 = vmatprep.mubr.bf16.mxu0 0
    %8787 = vmatmul.mubr.bf16.gmra.mrb[0].mxu0 %v8696
    %v8788 = vpop.f32.mrb[0].mxu0
    %v8789 = vadd.f32 0.0, %v8788
    %v8790 = vpop.f32.mrb[0].mxu0
    %v8791 = vpop.f32.mrb[0].mxu0
    %v8792 = vadd.f32 0.0, %v8791
    %v8793 = vpop.f32.mrb[0].mxu0
    %8794 = vdwg.mxu0
    %v8795 = vadd.f32 %v8617, %v8733
    %v8796 = vadd.f32 %v8618, %v8736
    %v8797 = vadd.f32 %v8619, %v8741
    %v8798 = vadd.f32 %v8620, %v8744
    %v8799 = vadd.f32 %v8621, %v8749
    %v8800 = vadd.f32 %v8622, %v8752
    %v8801 = vadd.f32 %v8623, %v8757
    %v8802 = vadd.f32 %v8624, %v8760
    %v8803 = vadd.f32 %v8625, %v8765
    %v8804 = vadd.f32 %v8626, %v8768
    %v8805 = vadd.f32 %v8627, %v8773
    %v8806 = vadd.f32 %v8628, %v8776
    %v8807 = vadd.f32 %v8629, %v8781
    %v8808 = vadd.f32 %v8630, %v8784
    %v8809 = vadd.f32 %v8631, %v8789
    %v8810 = vadd.f32 %v8632, %v8792
    %v8811 = vld [vmem:[%s7937 + $0x2] sm:$0xff]
    %v8812 = vld [vmem:[%s7937 + $0x12] sm:$0xff]
    %v8813 = vld [vmem:[%s7937 + $0x22] sm:$0xff]
    %v8814 = vld [vmem:[%s7937 + $0x32] sm:$0xff]
    %v8815 = vld [vmem:[%s7937 + $0x42] sm:$0xff]
    %v8816 = vld [vmem:[%s7937 + $0x52] sm:$0xff]
    %v8817 = vld [vmem:[%s7937 + $0x62] sm:$0xff]
    %v8818 = vld [vmem:[%s7937 + $0x72] sm:$0xff]
    %v8819 = vld [vmem:[%s7937 + $0xa2] sm:$0xff]
    %v8820 = vld [vmem:[%s7937 + $0xb2] sm:$0xff]
    %v8821 = vld [vmem:[%s7937 + $0xc2] sm:$0xff]
    %v8822 = vld [vmem:[%s7937 + $0xd2] sm:$0xff]
    %v8823 = vld [vmem:[%s7937 + $0xe2] sm:$0xff]
    %v8824 = vld [vmem:[%s7937 + $0xf2] sm:$0xff]
    %v8825 = vld [vmem:[%s7937 + $0x102] sm:$0xff]
    %v8826 = vld [vmem:[%s7937 + $0x112] sm:$0xff]
    %v8827 = vpack.c.bf16 %v8812, %v8811
    %v8828 = vpack.c.bf16 %v8814, %v8813
    %v8829 = vpack.c.bf16 %v8816, %v8815
    %v8830 = vpack.c.bf16 %v8818, %v8817
    %v8831 = vpack.c.bf16 %v8820, %v8819
    %v8832 = vpack.c.bf16 %v8822, %v8821
    %v8833 = vpack.c.bf16 %v8824, %v8823
    %v8834 = vpack.c.bf16 %v8826, %v8825
    %s8835 = scalar_lea.vmem %s5, 80
    %v8836 = vld [vmem:[%s8835] sm:$0xf]
    %v8837 = vld [vmem:[%s8835 + $0x4] sm:$0xf]
    %v8838 = vld [vmem:[%s8835 + $0x8] sm:$0xf]
    %v8839 = vld [vmem:[%s8835 + $0xc] sm:$0xf]
    %v8844 = vunpack.c.l.b16 %v8836
    %v8845 = vunpack.c.l.b16 %v8837
    %v8846 = vunpack.c.l.b16 %v8838
    %v8847 = vunpack.c.l.b16 %v8839
    %v8848 = vpack.c.b16 %v8845, %v8844
    %v8849 = vpack.c.b16 %v8847, %v8846
    %v8853 = vsel %vm148, %v8827, 0
    %v8856 = vsel %vm148, %v8828, 0
    %v8859 = vsel %vm148, %v8829, 0
    %v8862 = vsel %vm148, %v8830, 0
    %v8865 = vsel %vm148, %v8831, 0
    %v8868 = vsel %vm148, %v8832, 0
    %v8871 = vsel %vm148, %v8833, 0
    %v8874 = vsel %vm148, %v8834, 0
    %8876 = vmatprep.subr.bf16.mxu0 0
    %8877 = vmatpush1.bf16.msra.mxu0 %v8848
    %8878 = vmatprep.subr.bf16.mxu0 0
    %8879 = vmatpush1.bf16.msra.mxu0 %v8849
    %8880 = vmatprep.subr.bf16.mxu0 0
    %8881 = vmatpush1.bf16.msra.mxu0 0
    %8882 = vmatprep.subr.bf16.mxu0 0
    %8883 = vmatpush1.bf16.msra.mxu0 0
    %8884 = vmatprep.subr.bf16.mxu0 0
    %8885 = vmatpush1.bf16.msra.mxu0 0
    %8886 = vmatprep.subr.bf16.mxu0 0
    %8887 = vmatpush1.bf16.msra.mxu0 0
    %8888 = vmatprep.subr.bf16.mxu0 0
    %8889 = vmatpush1.bf16.msra.mxu0 0
    %8890 = vmatprep.subr.bf16.mxu0 0
    %8891 = vmatpush1.bf16.msra.mxu0 0
    %8892 = vmatprep.subr.bf16.mxu0 0
    %8893 = vmatpush1.bf16.msra.mxu0 0
    %8894 = vmatprep.subr.bf16.mxu0 0
    %8895 = vmatpush1.bf16.msra.mxu0 0
    %8896 = vmatprep.subr.bf16.mxu0 0
    %8897 = vmatpush1.bf16.msra.mxu0 0
    %8898 = vmatprep.subr.bf16.mxu0 0
    %8899 = vmatpush1.bf16.msra.mxu0 0
    %8900 = vmatprep.subr.bf16.mxu0 0
    %8901 = vmatpush1.bf16.msra.mxu0 0
    %8902 = vmatprep.subr.bf16.mxu0 0
    %8903 = vmatpush1.bf16.msra.mxu0 0
    %8904 = vmatprep.subr.bf16.mxu0 0
    %8905 = vmatpush1.bf16.msra.mxu0 0
    %8906 = vmatprep.subr.bf16.mxu0 0
    %8907 = vmatpush1.bf16.msra.mxu0 0
    %8908 = vmatprep.mubr.bf16.mxu0 0
    %8909 = vmatmul.mubr.bf16.gmra.mrb[0].mxu0 %v8853
    %v8910 = vpop.f32.mrb[0].mxu0
    %v8911 = vadd.f32 0.0, %v8910
    %v8912 = vpop.f32.mrb[0].mxu0
    %v8913 = vpop.f32.mrb[0].mxu0
    %v8914 = vadd.f32 0.0, %v8913
    %v8915 = vpop.f32.mrb[0].mxu0
    %8916 = vmatprep.mubr.bf16.mxu0 0
    %8917 = vmatmul.mubr.bf16.gmra.mrb[0].mxu0 %v8856
    %v8918 = vpop.f32.mrb[0].mxu0
    %v8919 = vadd.f32 0.0, %v8918
    %v8920 = vpop.f32.mrb[0].mxu0
    %v8921 = vpop.f32.mrb[0].mxu0
    %v8922 = vadd.f32 0.0, %v8921
    %v8923 = vpop.f32.mrb[0].mxu0
    %8924 = vmatprep.mubr.bf16.mxu0 0
    %8925 = vmatmul.mubr.bf16.gmra.mrb[0].mxu0 %v8859
    %v8926 = vpop.f32.mrb[0].mxu0
    %v8927 = vadd.f32 0.0, %v8926
    %v8928 = vpop.f32.mrb[0].mxu0
    %v8929 = vpop.f32.mrb[0].mxu0
    %v8930 = vadd.f32 0.0, %v8929
    %v8931 = vpop.f32.mrb[0].mxu0
    %8932 = vmatprep.mubr.bf16.mxu0 0
    %8933 = vmatmul.mubr.bf16.gmra.mrb[0].mxu0 %v8862
    %v8934 = vpop.f32.mrb[0].mxu0
    %v8935 = vadd.f32 0.0, %v8934
    %v8936 = vpop.f32.mrb[0].mxu0
    %v8937 = vpop.f32.mrb[0].mxu0
    %v8938 = vadd.f32 0.0, %v8937
    %v8939 = vpop.f32.mrb[0].mxu0
    %8940 = vmatprep.mubr.bf16.mxu0 0
    %8941 = vmatmul.mubr.bf16.gmra.mrb[0].mxu0 %v8865
    %v8942 = vpop.f32.mrb[0].mxu0
    %v8943 = vadd.f32 0.0, %v8942
    %v8944 = vpop.f32.mrb[0].mxu0
    %v8945 = vpop.f32.mrb[0].mxu0
    %v8946 = vadd.f32 0.0, %v8945
    %v8947 = vpop.f32.mrb[0].mxu0
    %8948 = vmatprep.mubr.bf16.mxu0 0
    %8949 = vmatmul.mubr.bf16.gmra.mrb[0].mxu0 %v8868
    %v8950 = vpop.f32.mrb[0].mxu0
    %v8951 = vadd.f32 0.0, %v8950
    %v8952 = vpop.f32.mrb[0].mxu0
    %v8953 = vpop.f32.mrb[0].mxu0
    %v8954 = vadd.f32 0.0, %v8953
    %v8955 = vpop.f32.mrb[0].mxu0
    %8956 = vmatprep.mubr.bf16.mxu0 0
    %8957 = vmatmul.mubr.bf16.gmra.mrb[0].mxu0 %v8871
    %v8958 = vpop.f32.mrb[0].mxu0
    %v8959 = vadd.f32 0.0, %v8958
    %v8960 = vpop.f32.mrb[0].mxu0
    %v8961 = vpop.f32.mrb[0].mxu0
    %v8962 = vadd.f32 0.0, %v8961
    %v8963 = vpop.f32.mrb[0].mxu0
    %8964 = vmatprep.mubr.bf16.mxu0 0
    %8965 = vmatmul.mubr.bf16.gmra.mrb[0].mxu0 %v8874
    %v8966 = vpop.f32.mrb[0].mxu0
    %v8967 = vadd.f32 0.0, %v8966
    %v8968 = vpop.f32.mrb[0].mxu0
    %v8969 = vpop.f32.mrb[0].mxu0
    %v8970 = vadd.f32 0.0, %v8969
    %v8971 = vpop.f32.mrb[0].mxu0
    %8972 = vdwg.mxu0
    %v8973 = vadd.f32 %v8795, %v8911
    %v8974 = vadd.f32 %v8796, %v8914
    %v8975 = vadd.f32 %v8797, %v8919
    %v8976 = vadd.f32 %v8798, %v8922
    %v8977 = vadd.f32 %v8799, %v8927
    %v8978 = vadd.f32 %v8800, %v8930
    %v8979 = vadd.f32 %v8801, %v8935
    %v8980 = vadd.f32 %v8802, %v8938
    %v8981 = vadd.f32 %v8803, %v8943
    %v8982 = vadd.f32 %v8804, %v8946
    %v8983 = vadd.f32 %v8805, %v8951
    %v8984 = vadd.f32 %v8806, %v8954
    %v8985 = vadd.f32 %v8807, %v8959
    %v8986 = vadd.f32 %v8808, %v8962
    %v8987 = vadd.f32 %v8809, %v8967
    %v8988 = vadd.f32 %v8810, %v8970
    %s8989 = scalar_lea.vmem [#allocation4], 32
    %v8990 = vld [vmem:[%s8989] sm:$0xff]
    %v8991 = vld [vmem:[%s8989 + $0x10] sm:$0xff]
    %v8992 = vld [vmem:[%s8989 + $0x20] sm:$0xff]
    %v8993 = vld [vmem:[%s8989 + $0x30] sm:$0xff]
    %v8994 = vld [vmem:[%s8989 + $0x40] sm:$0xff]
    %v8995 = vld [vmem:[%s8989 + $0x50] sm:$0xff]
    %v8996 = vld [vmem:[%s8989 + $0x60] sm:$0xff]
    %v8997 = vld [vmem:[%s8989 + $0x70] sm:$0xff]
    %v8998 = vld [vmem:[%s8989 + $0xa0] sm:$0xff]
    %v8999 = vld [vmem:[%s8989 + $0xb0] sm:$0xff]
    %v9000 = vld [vmem:[%s8989 + $0xc0] sm:$0xff]
    %v9001 = vld [vmem:[%s8989 + $0xd0] sm:$0xff]
    %v9002 = vld [vmem:[%s8989 + $0xe0] sm:$0xff]
    %v9003 = vld [vmem:[%s8989 + $0xf0] sm:$0xff]
    %v9004 = vld [vmem:[%s8989 + $0x100] sm:$0xff]
    %v9005 = vld [vmem:[%s8989 + $0x110] sm:$0xff]
    %v9006 = vpack.c.bf16 %v8991, %v8990
    %v9007 = vpack.c.bf16 %v8993, %v8992
    %v9008 = vpack.c.bf16 %v8995, %v8994
    %v9009 = vpack.c.bf16 %v8997, %v8996
    %v9010 = vpack.c.bf16 %v8999, %v8998
    %v9011 = vpack.c.bf16 %v9001, %v9000
    %v9012 = vpack.c.bf16 %v9003, %v9002
    %v9013 = vpack.c.bf16 %v9005, %v9004
    %s9014 = scalar_lea.vmem %s5, 96
    %v9015 = vld [vmem:[%s9014] sm:$0xf]
    %v9016 = vld [vmem:[%s9014 + $0x4] sm:$0xf]
    %v9017 = vld [vmem:[%s9014 + $0x8] sm:$0xf]
    %v9018 = vld [vmem:[%s9014 + $0xc] sm:$0xf]
    %v9023 = vunpack.c.l.b16 %v9015
    %v9024 = vunpack.c.l.b16 %v9016
    %v9025 = vunpack.c.l.b16 %v9017
    %v9026 = vunpack.c.l.b16 %v9018
    %v9027 = vpack.c.b16 %v9024, %v9023
    %v9028 = vpack.c.b16 %v9026, %v9025
    %v9032 = vsel %vm148, %v9006, 0
    %v9035 = vsel %vm148, %v9007, 0
    %v9038 = vsel %vm148, %v9008, 0
    %v9041 = vsel %vm148, %v9009, 0
    %v9044 = vsel %vm148, %v9010, 0
    %v9047 = vsel %vm148, %v9011, 0
    %v9050 = vsel %vm148, %v9012, 0
    %v9053 = vsel %vm148, %v9013, 0
    %9055 = vmatprep.subr.bf16.mxu0 0
    %9056 = vmatpush1.bf16.msra.mxu0 %v9027
    %9057 = vmatprep.subr.bf16.mxu0 0
    %9058 = vmatpush1.bf16.msra.mxu0 %v9028
    %9059 = vmatprep.subr.bf16.mxu0 0
    %9060 = vmatpush1.bf16.msra.mxu0 0
    %9061 = vmatprep.subr.bf16.mxu0 0
    %9062 = vmatpush1.bf16.msra.mxu0 0
    %9063 = vmatprep.subr.bf16.mxu0 0
    %9064 = vmatpush1.bf16.msra.mxu0 0
    %9065 = vmatprep.subr.bf16.mxu0 0
    %9066 = vmatpush1.bf16.msra.mxu0 0
    %9067 = vmatprep.subr.bf16.mxu0 0
    %9068 = vmatpush1.bf16.msra.mxu0 0
    %9069 = vmatprep.subr.bf16.mxu0 0
    %9070 = vmatpush1.bf16.msra.mxu0 0
    %9071 = vmatprep.subr.bf16.mxu0 0
    %9072 = vmatpush1.bf16.msra.mxu0 0
    %9073 = vmatprep.subr.bf16.mxu0 0
    %9074 = vmatpush1.bf16.msra.mxu0 0
    %9075 = vmatprep.subr.bf16.mxu0 0
    %9076 = vmatpush1.bf16.msra.mxu0 0
    %9077 = vmatprep.subr.bf16.mxu0 0
    %9078 = vmatpush1.bf16.msra.mxu0 0
    %9079 = vmatprep.subr.bf16.mxu0 0
    %9080 = vmatpush1.bf16.msra.mxu0 0
    %9081 = vmatprep.subr.bf16.mxu0 0
    %9082 = vmatpush1.bf16.msra.mxu0 0
    %9083 = vmatprep.subr.bf16.mxu0 0
    %9084 = vmatpush1.bf16.msra.mxu0 0
    %9085 = vmatprep.subr.bf16.mxu0 0
    %9086 = vmatpush1.bf16.msra.mxu0 0
    %9087 = vmatprep.mubr.bf16.mxu0 0
    %9088 = vmatmul.mubr.bf16.gmra.mrb[0].mxu0 %v9032
    %v9089 = vpop.f32.mrb[0].mxu0
    %v9090 = vadd.f32 0.0, %v9089
    %v9091 = vpop.f32.mrb[0].mxu0
    %v9092 = vpop.f32.mrb[0].mxu0
    %v9093 = vadd.f32 0.0, %v9092
    %v9094 = vpop.f32.mrb[0].mxu0
    %9095 = vmatprep.mubr.bf16.mxu0 0
    %9096 = vmatmul.mubr.bf16.gmra.mrb[0].mxu0 %v9035
    %v9097 = vpop.f32.mrb[0].mxu0
    %v9098 = vadd.f32 0.0, %v9097
    %v9099 = vpop.f32.mrb[0].mxu0
    %v9100 = vpop.f32.mrb[0].mxu0
    %v9101 = vadd.f32 0.0, %v9100
    %v9102 = vpop.f32.mrb[0].mxu0
    %9103 = vmatprep.mubr.bf16.mxu0 0
    %9104 = vmatmul.mubr.bf16.gmra.mrb[0].mxu0 %v9038
    %v9105 = vpop.f32.mrb[0].mxu0
    %v9106 = vadd.f32 0.0, %v9105
    %v9107 = vpop.f32.mrb[0].mxu0
    %v9108 = vpop.f32.mrb[0].mxu0
    %v9109 = vadd.f32 0.0, %v9108
    %v9110 = vpop.f32.mrb[0].mxu0
    %9111 = vmatprep.mubr.bf16.mxu0 0
    %9112 = vmatmul.mubr.bf16.gmra.mrb[0].mxu0 %v9041
    %v9113 = vpop.f32.mrb[0].mxu0
    %v9114 = vadd.f32 0.0, %v9113
    %v9115 = vpop.f32.mrb[0].mxu0
    %v9116 = vpop.f32.mrb[0].mxu0
    %v9117 = vadd.f32 0.0, %v9116
    %v9118 = vpop.f32.mrb[0].mxu0
    %9119 = vmatprep.mubr.bf16.mxu0 0
    %9120 = vmatmul.mubr.bf16.gmra.mrb[0].mxu0 %v9044
    %v9121 = vpop.f32.mrb[0].mxu0
    %v9122 = vadd.f32 0.0, %v9121
    %v9123 = vpop.f32.mrb[0].mxu0
    %v9124 = vpop.f32.mrb[0].mxu0
    %v9125 = vadd.f32 0.0, %v9124
    %v9126 = vpop.f32.mrb[0].mxu0
    %9127 = vmatprep.mubr.bf16.mxu0 0
    %9128 = vmatmul.mubr.bf16.gmra.mrb[0].mxu0 %v9047
    %v9129 = vpop.f32.mrb[0].mxu0
    %v9130 = vadd.f32 0.0, %v9129
    %v9131 = vpop.f32.mrb[0].mxu0
    %v9132 = vpop.f32.mrb[0].mxu0
    %v9133 = vadd.f32 0.0, %v9132
    %v9134 = vpop.f32.mrb[0].mxu0
    %9135 = vmatprep.mubr.bf16.mxu0 0
    %9136 = vmatmul.mubr.bf16.gmra.mrb[0].mxu0 %v9050
    %v9137 = vpop.f32.mrb[0].mxu0
    %v9138 = vadd.f32 0.0, %v9137
    %v9139 = vpop.f32.mrb[0].mxu0
    %v9140 = vpop.f32.mrb[0].mxu0
    %v9141 = vadd.f32 0.0, %v9140
    %v9142 = vpop.f32.mrb[0].mxu0
    %9143 = vmatprep.mubr.bf16.mxu0 0
    %9144 = vmatmul.mubr.bf16.gmra.mrb[0].mxu0 %v9053
    %v9145 = vpop.f32.mrb[0].mxu0
    %v9146 = vadd.f32 0.0, %v9145
    %v9147 = vpop.f32.mrb[0].mxu0
    %v9148 = vpop.f32.mrb[0].mxu0
    %v9149 = vadd.f32 0.0, %v9148
    %v9150 = vpop.f32.mrb[0].mxu0
    %9151 = vdwg.mxu0
    %v9152 = vadd.f32 %v8973, %v9090
    %v9153 = vadd.f32 %v8974, %v9093
    %v9154 = vadd.f32 %v8975, %v9098
    %v9155 = vadd.f32 %v8976, %v9101
    %v9156 = vadd.f32 %v8977, %v9106
    %v9157 = vadd.f32 %v8978, %v9109
    %v9158 = vadd.f32 %v8979, %v9114
    %v9159 = vadd.f32 %v8980, %v9117
    %v9160 = vadd.f32 %v8981, %v9122
    %v9161 = vadd.f32 %v8982, %v9125
    %v9162 = vadd.f32 %v8983, %v9130
    %v9163 = vadd.f32 %v8984, %v9133
    %v9164 = vadd.f32 %v8985, %v9138
    %v9165 = vadd.f32 %v8986, %v9141
    %v9166 = vadd.f32 %v8987, %v9146
    %v9167 = vadd.f32 %v8988, %v9149
    %v9168 = vld [vmem:[%s8989 + $0x1] sm:$0xff]
    %v9169 = vld [vmem:[%s8989 + $0x11] sm:$0xff]
    %v9170 = vld [vmem:[%s8989 + $0x21] sm:$0xff]
    %v9171 = vld [vmem:[%s8989 + $0x31] sm:$0xff]
    %v9172 = vld [vmem:[%s8989 + $0x41] sm:$0xff]
    %v9173 = vld [vmem:[%s8989 + $0x51] sm:$0xff]
    %v9174 = vld [vmem:[%s8989 + $0x61] sm:$0xff]
    %v9175 = vld [vmem:[%s8989 + $0x71] sm:$0xff]
    %v9176 = vld [vmem:[%s8989 + $0xa1] sm:$0xff]
    %v9177 = vld [vmem:[%s8989 + $0xb1] sm:$0xff]
    %v9178 = vld [vmem:[%s8989 + $0xc1] sm:$0xff]
    %v9179 = vld [vmem:[%s8989 + $0xd1] sm:$0xff]
    %v9180 = vld [vmem:[%s8989 + $0xe1] sm:$0xff]
    %v9181 = vld [vmem:[%s8989 + $0xf1] sm:$0xff]
    %v9182 = vld [vmem:[%s8989 + $0x101] sm:$0xff]
    %v9183 = vld [vmem:[%s8989 + $0x111] sm:$0xff]
    %v9184 = vpack.c.bf16 %v9169, %v9168
    %v9185 = vpack.c.bf16 %v9171, %v9170
    %v9186 = vpack.c.bf16 %v9173, %v9172
    %v9187 = vpack.c.bf16 %v9175, %v9174
    %v9188 = vpack.c.bf16 %v9177, %v9176
    %v9189 = vpack.c.bf16 %v9179, %v9178
    %v9190 = vpack.c.bf16 %v9181, %v9180
    %v9191 = vpack.c.bf16 %v9183, %v9182
    %s9192 = scalar_lea.vmem %s5, 112
    %v9193 = vld [vmem:[%s9192] sm:$0xf]
    %v9194 = vld [vmem:[%s9192 + $0x4] sm:$0xf]
    %v9195 = vld [vmem:[%s9192 + $0x8] sm:$0xf]
    %v9196 = vld [vmem:[%s9192 + $0xc] sm:$0xf]
    %v9201 = vunpack.c.l.b16 %v9193
    %v9202 = vunpack.c.l.b16 %v9194
    %v9203 = vunpack.c.l.b16 %v9195
    %v9204 = vunpack.c.l.b16 %v9196
    %v9205 = vpack.c.b16 %v9202, %v9201
    %v9206 = vpack.c.b16 %v9204, %v9203
    %v9210 = vsel %vm148, %v9184, 0
    %v9213 = vsel %vm148, %v9185, 0
    %v9216 = vsel %vm148, %v9186, 0
    %v9219 = vsel %vm148, %v9187, 0
    %v9222 = vsel %vm148, %v9188, 0
    %v9225 = vsel %vm148, %v9189, 0
    %v9228 = vsel %vm148, %v9190, 0
    %v9231 = vsel %vm148, %v9191, 0
    %9233 = vmatprep.subr.bf16.mxu0 0
    %9234 = vmatpush1.bf16.msra.mxu0 %v9205
    %9235 = vmatprep.subr.bf16.mxu0 0
    %9236 = vmatpush1.bf16.msra.mxu0 %v9206
    %9237 = vmatprep.subr.bf16.mxu0 0
    %9238 = vmatpush1.bf16.msra.mxu0 0
    %9239 = vmatprep.subr.bf16.mxu0 0
    %9240 = vmatpush1.bf16.msra.mxu0 0
    %9241 = vmatprep.subr.bf16.mxu0 0
    %9242 = vmatpush1.bf16.msra.mxu0 0
    %9243 = vmatprep.subr.bf16.mxu0 0
    %9244 = vmatpush1.bf16.msra.mxu0 0
    %9245 = vmatprep.subr.bf16.mxu0 0
    %9246 = vmatpush1.bf16.msra.mxu0 0
    %9247 = vmatprep.subr.bf16.mxu0 0
    %9248 = vmatpush1.bf16.msra.mxu0 0
    %9249 = vmatprep.subr.bf16.mxu0 0
    %9250 = vmatpush1.bf16.msra.mxu0 0
    %9251 = vmatprep.subr.bf16.mxu0 0
    %9252 = vmatpush1.bf16.msra.mxu0 0
    %9253 = vmatprep.subr.bf16.mxu0 0
    %9254 = vmatpush1.bf16.msra.mxu0 0
    %9255 = vmatprep.subr.bf16.mxu0 0
    %9256 = vmatpush1.bf16.msra.mxu0 0
    %9257 = vmatprep.subr.bf16.mxu0 0
    %9258 = vmatpush1.bf16.msra.mxu0 0
    %9259 = vmatprep.subr.bf16.mxu0 0
    %9260 = vmatpush1.bf16.msra.mxu0 0
    %9261 = vmatprep.subr.bf16.mxu0 0
    %9262 = vmatpush1.bf16.msra.mxu0 0
    %9263 = vmatprep.subr.bf16.mxu0 0
    %9264 = vmatpush1.bf16.msra.mxu0 0
    %9265 = vmatprep.mubr.bf16.mxu0 0
    %9266 = vmatmul.mubr.bf16.gmra.mrb[0].mxu0 %v9210
    %v9267 = vpop.f32.mrb[0].mxu0
    %v9268 = vadd.f32 0.0, %v9267
    %v9269 = vpop.f32.mrb[0].mxu0
    %v9270 = vpop.f32.mrb[0].mxu0
    %v9271 = vadd.f32 0.0, %v9270
    %v9272 = vpop.f32.mrb[0].mxu0
    %9273 = vmatprep.mubr.bf16.mxu0 0
    %9274 = vmatmul.mubr.bf16.gmra.mrb[0].mxu0 %v9213
    %v9275 = vpop.f32.mrb[0].mxu0
    %v9276 = vadd.f32 0.0, %v9275
    %v9277 = vpop.f32.mrb[0].mxu0
    %v9278 = vpop.f32.mrb[0].mxu0
    %v9279 = vadd.f32 0.0, %v9278
    %v9280 = vpop.f32.mrb[0].mxu0
    %9281 = vmatprep.mubr.bf16.mxu0 0
    %9282 = vmatmul.mubr.bf16.gmra.mrb[0].mxu0 %v9216
    %v9283 = vpop.f32.mrb[0].mxu0
    %v9284 = vadd.f32 0.0, %v9283
    %v9285 = vpop.f32.mrb[0].mxu0
    %v9286 = vpop.f32.mrb[0].mxu0
    %v9287 = vadd.f32 0.0, %v9286
    %v9288 = vpop.f32.mrb[0].mxu0
    %9289 = vmatprep.mubr.bf16.mxu0 0
    %9290 = vmatmul.mubr.bf16.gmra.mrb[0].mxu0 %v9219
    %v9291 = vpop.f32.mrb[0].mxu0
    %v9292 = vadd.f32 0.0, %v9291
    %v9293 = vpop.f32.mrb[0].mxu0
    %v9294 = vpop.f32.mrb[0].mxu0
    %v9295 = vadd.f32 0.0, %v9294
    %v9296 = vpop.f32.mrb[0].mxu0
    %9297 = vmatprep.mubr.bf16.mxu0 0
    %9298 = vmatmul.mubr.bf16.gmra.mrb[0].mxu0 %v9222
    %v9299 = vpop.f32.mrb[0].mxu0
    %v9300 = vadd.f32 0.0, %v9299
    %v9301 = vpop.f32.mrb[0].mxu0
    %v9302 = vpop.f32.mrb[0].mxu0
    %v9303 = vadd.f32 0.0, %v9302
    %v9304 = vpop.f32.mrb[0].mxu0
    %9305 = vmatprep.mubr.bf16.mxu0 0
    %9306 = vmatmul.mubr.bf16.gmra.mrb[0].mxu0 %v9225
    %v9307 = vpop.f32.mrb[0].mxu0
    %v9308 = vadd.f32 0.0, %v9307
    %v9309 = vpop.f32.mrb[0].mxu0
    %v9310 = vpop.f32.mrb[0].mxu0
    %v9311 = vadd.f32 0.0, %v9310
    %v9312 = vpop.f32.mrb[0].mxu0
    %9313 = vmatprep.mubr.bf16.mxu0 0
    %9314 = vmatmul.mubr.bf16.gmra.mrb[0].mxu0 %v9228
    %v9315 = vpop.f32.mrb[0].mxu0
    %v9316 = vadd.f32 0.0, %v9315
    %v9317 = vpop.f32.mrb[0].mxu0
    %v9318 = vpop.f32.mrb[0].mxu0
    %v9319 = vadd.f32 0.0, %v9318
    %v9320 = vpop.f32.mrb[0].mxu0
    %9321 = vmatprep.mubr.bf16.mxu0 0
    %9322 = vmatmul.mubr.bf16.gmra.mrb[0].mxu0 %v9231
    %v9323 = vpop.f32.mrb[0].mxu0
    %v9324 = vadd.f32 0.0, %v9323
    %v9325 = vpop.f32.mrb[0].mxu0
    %v9326 = vpop.f32.mrb[0].mxu0
    %v9327 = vadd.f32 0.0, %v9326
    %v9328 = vpop.f32.mrb[0].mxu0
    %9329 = vdwg.mxu0
    %v9330 = vadd.f32 %v9152, %v9268
    %v9331 = vadd.f32 %v9153, %v9271
    %v9332 = vadd.f32 %v9154, %v9276
    %v9333 = vadd.f32 %v9155, %v9279
    %v9334 = vadd.f32 %v9156, %v9284
    %v9335 = vadd.f32 %v9157, %v9287
    %v9336 = vadd.f32 %v9158, %v9292
    %v9337 = vadd.f32 %v9159, %v9295
    %v9338 = vadd.f32 %v9160, %v9300
    %v9339 = vadd.f32 %v9161, %v9303
    %v9340 = vadd.f32 %v9162, %v9308
    %v9341 = vadd.f32 %v9163, %v9311
    %v9342 = vadd.f32 %v9164, %v9316
    %v9343 = vadd.f32 %v9165, %v9319
    %v9344 = vadd.f32 %v9166, %v9324
    %v9345 = vadd.f32 %v9167, %v9327
    %v9346 = vld [vmem:[%s8989 + $0x2] sm:$0xff]
    %v9347 = vld [vmem:[%s8989 + $0x12] sm:$0xff]
    %v9348 = vld [vmem:[%s8989 + $0x22] sm:$0xff]
    %v9349 = vld [vmem:[%s8989 + $0x32] sm:$0xff]
    %v9350 = vld [vmem:[%s8989 + $0x42] sm:$0xff]
    %v9351 = vld [vmem:[%s8989 + $0x52] sm:$0xff]
    %v9352 = vld [vmem:[%s8989 + $0x62] sm:$0xff]
    %v9353 = vld [vmem:[%s8989 + $0x72] sm:$0xff]
    %v9354 = vld [vmem:[%s8989 + $0xa2] sm:$0xff]
    %v9355 = vld [vmem:[%s8989 + $0xb2] sm:$0xff]
    %v9356 = vld [vmem:[%s8989 + $0xc2] sm:$0xff]
    %v9357 = vld [vmem:[%s8989 + $0xd2] sm:$0xff]
    %v9358 = vld [vmem:[%s8989 + $0xe2] sm:$0xff]
    %v9359 = vld [vmem:[%s8989 + $0xf2] sm:$0xff]
    %v9360 = vld [vmem:[%s8989 + $0x102] sm:$0xff]
    %v9361 = vld [vmem:[%s8989 + $0x112] sm:$0xff]
    %v9362 = vpack.c.bf16 %v9347, %v9346
    %v9363 = vpack.c.bf16 %v9349, %v9348
    %v9364 = vpack.c.bf16 %v9351, %v9350
    %v9365 = vpack.c.bf16 %v9353, %v9352
    %v9366 = vpack.c.bf16 %v9355, %v9354
    %v9367 = vpack.c.bf16 %v9357, %v9356
    %v9368 = vpack.c.bf16 %v9359, %v9358
    %v9369 = vpack.c.bf16 %v9361, %v9360
    %s9370 = scalar_lea.vmem %s5, 128
    %v9371 = vld [vmem:[%s9370] sm:$0xf]
    %v9372 = vld [vmem:[%s9370 + $0x4] sm:$0xf]
    %v9373 = vld [vmem:[%s9370 + $0x8] sm:$0xf]
    %v9374 = vld [vmem:[%s9370 + $0xc] sm:$0xf]
    %v9379 = vunpack.c.l.b16 %v9371
    %v9380 = vunpack.c.l.b16 %v9372
    %v9381 = vunpack.c.l.b16 %v9373
    %v9382 = vunpack.c.l.b16 %v9374
    %v9383 = vpack.c.b16 %v9380, %v9379
    %v9384 = vpack.c.b16 %v9382, %v9381
    %v9388 = vsel %vm148, %v9362, 0
    %v9391 = vsel %vm148, %v9363, 0
    %v9394 = vsel %vm148, %v9364, 0
    %v9397 = vsel %vm148, %v9365, 0
    %v9400 = vsel %vm148, %v9366, 0
    %v9403 = vsel %vm148, %v9367, 0
    %v9406 = vsel %vm148, %v9368, 0
    %v9409 = vsel %vm148, %v9369, 0
    %9411 = vmatprep.subr.bf16.mxu0 0
    %9412 = vmatpush1.bf16.msra.mxu0 %v9383
    %9413 = vmatprep.subr.bf16.mxu0 0
    %9414 = vmatpush1.bf16.msra.mxu0 %v9384
    %9415 = vmatprep.subr.bf16.mxu0 0
    %9416 = vmatpush1.bf16.msra.mxu0 0
    %9417 = vmatprep.subr.bf16.mxu0 0
    %9418 = vmatpush1.bf16.msra.mxu0 0
    %9419 = vmatprep.subr.bf16.mxu0 0
    %9420 = vmatpush1.bf16.msra.mxu0 0
    %9421 = vmatprep.subr.bf16.mxu0 0
    %9422 = vmatpush1.bf16.msra.mxu0 0
    %9423 = vmatprep.subr.bf16.mxu0 0
    %9424 = vmatpush1.bf16.msra.mxu0 0
    %9425 = vmatprep.subr.bf16.mxu0 0
    %9426 = vmatpush1.bf16.msra.mxu0 0
    %9427 = vmatprep.subr.bf16.mxu0 0
    %9428 = vmatpush1.bf16.msra.mxu0 0
    %9429 = vmatprep.subr.bf16.mxu0 0
    %9430 = vmatpush1.bf16.msra.mxu0 0
    %9431 = vmatprep.subr.bf16.mxu0 0
    %9432 = vmatpush1.bf16.msra.mxu0 0
    %9433 = vmatprep.subr.bf16.mxu0 0
    %9434 = vmatpush1.bf16.msra.mxu0 0
    %9435 = vmatprep.subr.bf16.mxu0 0
    %9436 = vmatpush1.bf16.msra.mxu0 0
    %9437 = vmatprep.subr.bf16.mxu0 0
    %9438 = vmatpush1.bf16.msra.mxu0 0
    %9439 = vmatprep.subr.bf16.mxu0 0
    %9440 = vmatpush1.bf16.msra.mxu0 0
    %9441 = vmatprep.subr.bf16.mxu0 0
    %9442 = vmatpush1.bf16.msra.mxu0 0
    %9443 = vmatprep.mubr.bf16.mxu0 0
    %9444 = vmatmul.mubr.bf16.gmra.mrb[0].mxu0 %v9388
    %v9445 = vpop.f32.mrb[0].mxu0
    %v9446 = vadd.f32 0.0, %v9445
    %v9447 = vpop.f32.mrb[0].mxu0
    %v9448 = vpop.f32.mrb[0].mxu0
    %v9449 = vadd.f32 0.0, %v9448
    %v9450 = vpop.f32.mrb[0].mxu0
    %9451 = vmatprep.mubr.bf16.mxu0 0
    %9452 = vmatmul.mubr.bf16.gmra.mrb[0].mxu0 %v9391
    %v9453 = vpop.f32.mrb[0].mxu0
    %v9454 = vadd.f32 0.0, %v9453
    %v9455 = vpop.f32.mrb[0].mxu0
    %v9456 = vpop.f32.mrb[0].mxu0
    %v9457 = vadd.f32 0.0, %v9456
    %v9458 = vpop.f32.mrb[0].mxu0
    %9459 = vmatprep.mubr.bf16.mxu0 0
    %9460 = vmatmul.mubr.bf16.gmra.mrb[0].mxu0 %v9394
    %v9461 = vpop.f32.mrb[0].mxu0
    %v9462 = vadd.f32 0.0, %v9461
    %v9463 = vpop.f32.mrb[0].mxu0
    %v9464 = vpop.f32.mrb[0].mxu0
    %v9465 = vadd.f32 0.0, %v9464
    %v9466 = vpop.f32.mrb[0].mxu0
    %9467 = vmatprep.mubr.bf16.mxu0 0
    %9468 = vmatmul.mubr.bf16.gmra.mrb[0].mxu0 %v9397
    %v9469 = vpop.f32.mrb[0].mxu0
    %v9470 = vadd.f32 0.0, %v9469
    %v9471 = vpop.f32.mrb[0].mxu0
    %v9472 = vpop.f32.mrb[0].mxu0
    %v9473 = vadd.f32 0.0, %v9472
    %v9474 = vpop.f32.mrb[0].mxu0
    %9475 = vmatprep.mubr.bf16.mxu0 0
    %9476 = vmatmul.mubr.bf16.gmra.mrb[0].mxu0 %v9400
    %v9477 = vpop.f32.mrb[0].mxu0
    %v9478 = vadd.f32 0.0, %v9477
    %v9479 = vpop.f32.mrb[0].mxu0
    %v9480 = vpop.f32.mrb[0].mxu0
    %v9481 = vadd.f32 0.0, %v9480
    %v9482 = vpop.f32.mrb[0].mxu0
    %9483 = vmatprep.mubr.bf16.mxu0 0
    %9484 = vmatmul.mubr.bf16.gmra.mrb[0].mxu0 %v9403
    %v9485 = vpop.f32.mrb[0].mxu0
    %v9486 = vadd.f32 0.0, %v9485
    %v9487 = vpop.f32.mrb[0].mxu0
    %v9488 = vpop.f32.mrb[0].mxu0
    %v9489 = vadd.f32 0.0, %v9488
    %v9490 = vpop.f32.mrb[0].mxu0
    %9491 = vmatprep.mubr.bf16.mxu0 0
    %9492 = vmatmul.mubr.bf16.gmra.mrb[0].mxu0 %v9406
    %v9493 = vpop.f32.mrb[0].mxu0
    %v9494 = vadd.f32 0.0, %v9493
    %v9495 = vpop.f32.mrb[0].mxu0
    %v9496 = vpop.f32.mrb[0].mxu0
    %v9497 = vadd.f32 0.0, %v9496
    %v9498 = vpop.f32.mrb[0].mxu0
    %9499 = vmatprep.mubr.bf16.mxu0 0
    %9500 = vmatmul.mubr.bf16.gmra.mrb[0].mxu0 %v9409
    %v9501 = vpop.f32.mrb[0].mxu0
    %v9502 = vadd.f32 0.0, %v9501
    %v9503 = vpop.f32.mrb[0].mxu0
    %v9504 = vpop.f32.mrb[0].mxu0
    %v9505 = vadd.f32 0.0, %v9504
    %v9506 = vpop.f32.mrb[0].mxu0
    %9507 = vdwg.mxu0
    %v9508 = vadd.f32 %v9330, %v9446
    %v9509 = vadd.f32 %v9331, %v9449
    %v9510 = vadd.f32 %v9332, %v9454
    %v9511 = vadd.f32 %v9333, %v9457
    %v9512 = vadd.f32 %v9334, %v9462
    %v9513 = vadd.f32 %v9335, %v9465
    %v9514 = vadd.f32 %v9336, %v9470
    %v9515 = vadd.f32 %v9337, %v9473
    %v9516 = vadd.f32 %v9338, %v9478
    %v9517 = vadd.f32 %v9339, %v9481
    %v9518 = vadd.f32 %v9340, %v9486
    %v9519 = vadd.f32 %v9341, %v9489
    %v9520 = vadd.f32 %v9342, %v9494
    %v9521 = vadd.f32 %v9343, %v9497
    %v9522 = vadd.f32 %v9344, %v9502
    %v9523 = vadd.f32 %v9345, %v9505
    %v9524 = vld [vmem:[%s12] sm:$0x1]
    %v9526 = vlaneseq
    %v9527 = vshrl.u32 %v9526, 7
    %v9528 = vsub.s32 0, %v9527
    %v9529 = vrot.slane %v9524, %v9528
    %v9531 = vadd.f32 %v9508, %v9529
    %v9532 = vadd.f32 %v9509, %v9529
    %v9533 = vadd.f32 %v9510, %v9529
    %v9534 = vadd.f32 %v9511, %v9529
    %v9535 = vadd.f32 %v9512, %v9529
    %v9536 = vadd.f32 %v9513, %v9529
    %v9537 = vadd.f32 %v9514, %v9529
    %v9538 = vadd.f32 %v9515, %v9529
    %v9539 = vadd.f32 %v9516, %v9529
    %v9540 = vadd.f32 %v9517, %v9529
    %v9541 = vadd.f32 %v9518, %v9529
    %v9542 = vadd.f32 %v9519, %v9529
    %v9543 = vadd.f32 %v9520, %v9529
    %v9544 = vadd.f32 %v9521, %v9529
    %v9545 = vadd.f32 %v9522, %v9529
    %v9546 = vadd.f32 %v9523, %v9529
    %v9547 = vmul.f32 %v9531, 64.0
    %v9548 = vmul.f32 %v9532, 64.0
    %v9549 = vmul.f32 %v9533, 64.0
    %v9550 = vmul.f32 %v9534, 64.0
    %v9551 = vmul.f32 %v9535, 64.0
    %v9552 = vmul.f32 %v9536, 64.0
    %v9553 = vmul.f32 %v9537, 64.0
    %v9554 = vmul.f32 %v9538, 64.0
    %v9555 = vmul.f32 %v9539, 64.0
    %v9556 = vmul.f32 %v9540, 64.0
    %v9557 = vmul.f32 %v9541, 64.0
    %v9558 = vmul.f32 %v9542, 64.0
    %v9559 = vmul.f32 %v9543, 64.0
    %v9560 = vmul.f32 %v9544, 64.0
    %v9561 = vmul.f32 %v9545, 64.0
    %v9562 = vmul.f32 %v9546, 64.0
    %vm9563 = vcmask 15360
    %v9564 = vsel %vm9563, %v9547, -inf
    %v9565 = vsel %vm9563, %v9548, -inf
    %v9566 = vsel %vm9563, %v9549, -inf
    %v9567 = vmax.f32 %v9564, %v9566
    %v9568 = vsel %vm9563, %v9550, -inf
    %v9569 = vmax.f32 %v9565, %v9568
    %v9570 = vsel %vm9563, %v9551, -inf
    %v9571 = vmax.f32 %v9567, %v9570
    %v9572 = vsel %vm9563, %v9552, -inf
    %v9573 = vmax.f32 %v9569, %v9572
    %v9574 = vsel %vm9563, %v9553, -inf
    %v9575 = vmax.f32 %v9571, %v9574
    %v9576 = vsel %vm9563, %v9554, -inf
    %v9577 = vmax.f32 %v9573, %v9576
    %v9578 = vmax.f32 %v9575, %v9577
    %v9579 = vrot.slane %v9578, 4
    %v9580 = vmax.f32 %v9578, %v9579
    %v9581 = vrot.slane %v9580, 2
    %v9582 = vmax.f32 %v9580, %v9581
    %v9583 = vrot.slane %v9582, 1
    %v9584 = vmax.f32 %v9582, %v9583
    %v9585 = vsel %vm9563, %v9555, -inf
    %v9586 = vsel %vm9563, %v9556, -inf
    %v9587 = vsel %vm9563, %v9557, -inf
    %v9588 = vmax.f32 %v9585, %v9587
    %v9589 = vsel %vm9563, %v9558, -inf
    %v9590 = vmax.f32 %v9586, %v9589
    %v9591 = vsel %vm9563, %v9559, -inf
    %v9592 = vmax.f32 %v9588, %v9591
    %v9593 = vsel %vm9563, %v9560, -inf
    %v9594 = vmax.f32 %v9590, %v9593
    %v9595 = vsel %vm9563, %v9561, -inf
    %v9596 = vmax.f32 %v9592, %v9595
    %v9597 = vsel %vm9563, %v9562, -inf
    %v9598 = vmax.f32 %v9594, %v9597
    %v9599 = vmax.f32 %v9596, %v9598
    %v9600 = vrot.slane %v9599, 4
    %v9601 = vmax.f32 %v9599, %v9600
    %v9602 = vrot.slane %v9601, 2
    %v9603 = vmax.f32 %v9601, %v9602
    %v9604 = vrot.slane %v9603, 1
    %v9605 = vmax.f32 %v9603, %v9604
    %v9606 = vsub.f32 %v9547, %v9584
    %v9607 = vsub.f32 %v9548, %v9584
    %v9608 = vsub.f32 %v9549, %v9584
    %v9609 = vsub.f32 %v9550, %v9584
    %v9610 = vsub.f32 %v9551, %v9584
    %v9611 = vsub.f32 %v9552, %v9584
    %v9612 = vsub.f32 %v9553, %v9584
    %v9613 = vsub.f32 %v9554, %v9584
    %v9614 = vsub.f32 %v9555, %v9605
    %v9615 = vsub.f32 %v9556, %v9605
    %v9616 = vsub.f32 %v9557, %v9605
    %v9617 = vsub.f32 %v9558, %v9605
    %v9618 = vsub.f32 %v9559, %v9605
    %v9619 = vsub.f32 %v9560, %v9605
    %v9620 = vsub.f32 %v9561, %v9605
    %v9621 = vsub.f32 %v9562, %v9605
    %v9622 = vmul.f32 %v9606, 1.442695
    %v9623 = vpow.pop %v9622
    %v9624 = vmul.f32 %v9607, 1.442695
    %v9625 = vpow.pop %v9624
    %v9626 = vmul.f32 %v9608, 1.442695
    %v9627 = vpow.pop %v9626
    %v9628 = vmul.f32 %v9609, 1.442695
    %v9629 = vpow.pop %v9628
    %v9630 = vmul.f32 %v9610, 1.442695
    %v9631 = vpow.pop %v9630
    %v9632 = vmul.f32 %v9611, 1.442695
    %v9633 = vpow.pop %v9632
    %v9634 = vmul.f32 %v9612, 1.442695
    %v9635 = vpow.pop %v9634
    %v9636 = vmul.f32 %v9613, 1.442695
    %v9637 = vpow.pop %v9636
    %v9638 = vmul.f32 %v9614, 1.442695
    %v9639 = vpow.pop %v9638
    %v9640 = vmul.f32 %v9615, 1.442695
    %v9641 = vpow.pop %v9640
    %v9642 = vmul.f32 %v9616, 1.442695
    %v9643 = vpow.pop %v9642
    %v9644 = vmul.f32 %v9617, 1.442695
    %v9645 = vpow.pop %v9644
    %v9646 = vmul.f32 %v9618, 1.442695
    %v9647 = vpow.pop %v9646
    %v9648 = vmul.f32 %v9619, 1.442695
    %v9649 = vpow.pop %v9648
    %v9650 = vmul.f32 %v9620, 1.442695
    %v9651 = vpow.pop %v9650
    %v9652 = vmul.f32 %v9621, 1.442695
    %v9653 = vpow.pop %v9652
    %v9654 = vsel %vm9563, %v9623, 0.0
    %v9655 = vsel %vm9563, %v9625, 0.0
    %v9656 = vadd.f32 %v9654, %v9655
    %v9657 = vsel %vm9563, %v9627, 0.0
    %v9658 = vadd.f32 %v9656, %v9657
    %v9659 = vsel %vm9563, %v9629, 0.0
    %v9660 = vadd.f32 %v9658, %v9659
    %v9661 = vsel %vm9563, %v9631, 0.0
    %v9662 = vadd.f32 %v9660, %v9661
    %v9663 = vsel %vm9563, %v9633, 0.0
    %v9664 = vadd.f32 %v9662, %v9663
    %v9665 = vsel %vm9563, %v9635, 0.0
    %v9666 = vadd.f32 %v9664, %v9665
    %v9667 = vsel %vm9563, %v9637, 0.0
    %v9668 = vadd.f32 %v9666, %v9667
    %v9669 = vrot.slane %v9668, 4
    %v9670 = vadd.f32 %v9668, %v9669
    %v9671 = vrot.slane %v9670, 2
    %v9672 = vadd.f32 %v9670, %v9671
    %v9673 = vrot.slane %v9672, 1
    %v9674 = vadd.f32 %v9672, %v9673
    %v9675 = vsel %vm9563, %v9639, 0.0
    %v9676 = vsel %vm9563, %v9641, 0.0
    %v9677 = vadd.f32 %v9675, %v9676
    %v9678 = vsel %vm9563, %v9643, 0.0
    %v9679 = vadd.f32 %v9677, %v9678
    %v9680 = vsel %vm9563, %v9645, 0.0
    %v9681 = vadd.f32 %v9679, %v9680
    %v9682 = vsel %vm9563, %v9647, 0.0
    %v9683 = vadd.f32 %v9681, %v9682
    %v9684 = vsel %vm9563, %v9649, 0.0
    %v9685 = vadd.f32 %v9683, %v9684
    %v9686 = vsel %vm9563, %v9651, 0.0
    %v9687 = vadd.f32 %v9685, %v9686
    %v9688 = vsel %vm9563, %v9653, 0.0
    %v9689 = vadd.f32 %v9687, %v9688
    %v9690 = vrot.slane %v9689, 4
    %v9691 = vadd.f32 %v9689, %v9690
    %v9692 = vrot.slane %v9691, 2
    %v9693 = vadd.f32 %v9691, %v9692
    %v9694 = vrot.slane %v9693, 1
    %v9695 = vadd.f32 %v9693, %v9694
    %v9696 = vrcp.pop %v9674
    %v9697 = vrcp.pop %v9695
    %v9698 = vmul.f32 %v9623, %v9696
    %v9699 = vmul.f32 %v9625, %v9696
    %v9700 = vmul.f32 %v9627, %v9696
    %v9701 = vmul.f32 %v9629, %v9696
    %v9702 = vmul.f32 %v9631, %v9696
    %v9703 = vmul.f32 %v9633, %v9696
    %v9704 = vmul.f32 %v9635, %v9696
    %v9705 = vmul.f32 %v9637, %v9696
    %v9706 = vmul.f32 %v9639, %v9697
    %v9707 = vmul.f32 %v9641, %v9697
    %v9708 = vmul.f32 %v9643, %v9697
    %v9709 = vmul.f32 %v9645, %v9697
    %v9710 = vmul.f32 %v9647, %v9697
    %v9711 = vmul.f32 %v9649, %v9697
    %v9712 = vmul.f32 %v9651, %v9697
    %v9713 = vmul.f32 %v9653, %v9697
    %v9714 = vld [vmem:[%s13] sm:$0xff]
    %v9715 = vld [vmem:[%s13 + $0x8] sm:$0xff]
    %v9716 = vld [vmem:[%s13 + $0x10] sm:$0xff]
    %v9717 = vld [vmem:[%s13 + $0x18] sm:$0xff]
    %v9718 = vld [vmem:[%s13 + $0x20] sm:$0xff]
    %v9719 = vld [vmem:[%s13 + $0x28] sm:$0xff]
    %v9720 = vld [vmem:[%s13 + $0x30] sm:$0xff]
    %v9721 = vld [vmem:[%s13 + $0x38] sm:$0xff]
    %v9722 = vmul.f32 %v9698, %v9714
    %v9723 = vmul.f32 %v9699, %v9715
    %v9724 = vmul.f32 %v9700, %v9716
    %v9725 = vmul.f32 %v9701, %v9717
    %v9726 = vmul.f32 %v9702, %v9718
    %v9727 = vmul.f32 %v9703, %v9719
    %v9728 = vmul.f32 %v9704, %v9720
    %v9729 = vmul.f32 %v9705, %v9721
    %v9730 = vmul.f32 %v9706, %v9714
    %v9731 = vmul.f32 %v9707, %v9715
    %v9732 = vmul.f32 %v9708, %v9716
    %v9733 = vmul.f32 %v9709, %v9717
    %v9734 = vmul.f32 %v9710, %v9718
    %v9735 = vmul.f32 %v9711, %v9719
    %v9736 = vmul.f32 %v9712, %v9720
    %v9737 = vmul.f32 %v9713, %v9721
    %v9738 = vsel %vm9563, %v9722, 0.0
    %v9739 = vsel %vm9563, %v9723, 0.0
    %v9740 = vadd.f32 %v9738, %v9739
    %v9741 = vsel %vm9563, %v9724, 0.0
    %v9742 = vadd.f32 %v9740, %v9741
    %v9743 = vsel %vm9563, %v9725, 0.0
    %v9744 = vadd.f32 %v9742, %v9743
    %v9745 = vsel %vm9563, %v9726, 0.0
    %v9746 = vadd.f32 %v9744, %v9745
    %v9747 = vsel %vm9563, %v9727, 0.0
    %v9748 = vadd.f32 %v9746, %v9747
    %v9749 = vsel %vm9563, %v9728, 0.0
    %v9750 = vadd.f32 %v9748, %v9749
    %v9751 = vsel %vm9563, %v9729, 0.0
    %v9752 = vadd.f32 %v9750, %v9751
    %v9753 = vrot.slane %v9752, 4
    %v9754 = vadd.f32 %v9752, %v9753
    %v9755 = vrot.slane %v9754, 2
    %v9756 = vadd.f32 %v9754, %v9755
    %v9757 = vrot.slane %v9756, 1
    %v9758 = vadd.f32 %v9756, %v9757
    %v9759 = vsel %vm9563, %v9730, 0.0
    %v9760 = vsel %vm9563, %v9731, 0.0
    %v9761 = vadd.f32 %v9759, %v9760
    %v9762 = vsel %vm9563, %v9732, 0.0
    %v9763 = vadd.f32 %v9761, %v9762
    %v9764 = vsel %vm9563, %v9733, 0.0
    %v9765 = vadd.f32 %v9763, %v9764
    %v9766 = vsel %vm9563, %v9734, 0.0
    %v9767 = vadd.f32 %v9765, %v9766
    %v9768 = vsel %vm9563, %v9735, 0.0
    %v9769 = vadd.f32 %v9767, %v9768
    %v9770 = vsel %vm9563, %v9736, 0.0
    %v9771 = vadd.f32 %v9769, %v9770
    %v9772 = vsel %vm9563, %v9737, 0.0
    %v9773 = vadd.f32 %v9771, %v9772
    %v9774 = vrot.slane %v9773, 4
    %v9775 = vadd.f32 %v9773, %v9774
    %v9776 = vrot.slane %v9775, 2
    %v9777 = vadd.f32 %v9775, %v9776
    %v9778 = vrot.slane %v9777, 1
    %v9779 = vadd.f32 %v9777, %v9778
    %v9780 = vld [vmem:[%s14] sm:$0xff]
    %v9781 = vld [vmem:[%s14 + $0x8] sm:$0xff]
    %v9782 = vld [vmem:[%s14 + $0x10] sm:$0xff]
    %v9783 = vld [vmem:[%s14 + $0x18] sm:$0xff]
    %v9784 = vld [vmem:[%s14 + $0x20] sm:$0xff]
    %v9785 = vld [vmem:[%s14 + $0x28] sm:$0xff]
    %v9786 = vld [vmem:[%s14 + $0x30] sm:$0xff]
    %v9787 = vld [vmem:[%s14 + $0x38] sm:$0xff]
    %v9788 = vmul.f32 %v9698, %v9780
    %v9789 = vmul.f32 %v9699, %v9781
    %v9790 = vmul.f32 %v9700, %v9782
    %v9791 = vmul.f32 %v9701, %v9783
    %v9792 = vmul.f32 %v9702, %v9784
    %v9793 = vmul.f32 %v9703, %v9785
    %v9794 = vmul.f32 %v9704, %v9786
    %v9795 = vmul.f32 %v9705, %v9787
    %v9796 = vmul.f32 %v9706, %v9780
    %v9797 = vmul.f32 %v9707, %v9781
    %v9798 = vmul.f32 %v9708, %v9782
    %v9799 = vmul.f32 %v9709, %v9783
    %v9800 = vmul.f32 %v9710, %v9784
    %v9801 = vmul.f32 %v9711, %v9785
    %v9802 = vmul.f32 %v9712, %v9786
    %v9803 = vmul.f32 %v9713, %v9787
    %v9804 = vsel %vm9563, %v9788, 0.0
    %v9805 = vsel %vm9563, %v9789, 0.0
    %v9806 = vadd.f32 %v9804, %v9805
    %v9807 = vsel %vm9563, %v9790, 0.0
    %v9808 = vadd.f32 %v9806, %v9807
    %v9809 = vsel %vm9563, %v9791, 0.0
    %v9810 = vadd.f32 %v9808, %v9809
    %v9811 = vsel %vm9563, %v9792, 0.0
    %v9812 = vadd.f32 %v9810, %v9811
    %v9813 = vsel %vm9563, %v9793, 0.0
    %v9814 = vadd.f32 %v9812, %v9813
    %v9815 = vsel %vm9563, %v9794, 0.0
    %v9816 = vadd.f32 %v9814, %v9815
    %v9817 = vsel %vm9563, %v9795, 0.0
    %v9818 = vadd.f32 %v9816, %v9817
    %v9819 = vrot.slane %v9818, 4
    %v9820 = vadd.f32 %v9818, %v9819
    %v9821 = vrot.slane %v9820, 2
    %v9822 = vadd.f32 %v9820, %v9821
    %v9823 = vrot.slane %v9822, 1
    %v9824 = vadd.f32 %v9822, %v9823
    %v9825 = vsel %vm9563, %v9796, 0.0
    %v9826 = vsel %vm9563, %v9797, 0.0
    %v9827 = vadd.f32 %v9825, %v9826
    %v9828 = vsel %vm9563, %v9798, 0.0
    %v9829 = vadd.f32 %v9827, %v9828
    %v9830 = vsel %vm9563, %v9799, 0.0
    %v9831 = vadd.f32 %v9829, %v9830
    %v9832 = vsel %vm9563, %v9800, 0.0
    %v9833 = vadd.f32 %v9831, %v9832
    %v9834 = vsel %vm9563, %v9801, 0.0
    %v9835 = vadd.f32 %v9833, %v9834
    %v9836 = vsel %vm9563, %v9802, 0.0
    %v9837 = vadd.f32 %v9835, %v9836
    %v9838 = vsel %vm9563, %v9803, 0.0
    %v9839 = vadd.f32 %v9837, %v9838
    %v9840 = vrot.slane %v9839, 4
    %v9841 = vadd.f32 %v9839, %v9840
    %v9842 = vrot.slane %v9841, 2
    %v9843 = vadd.f32 %v9841, %v9842
    %v9844 = vrot.slane %v9843, 1
    %v9845 = vadd.f32 %v9843, %v9844
    %v9846 = vmul.f32 %v9758, 146.14285
    %v9847 = vmul.f32 %v9779, 146.14285
    %vm9850 = vcmask 1041409
    %v9851 = vsel %vm9850, %v9847, %v9846
    %vm9853 = vcmask 9216
    %9854 = vst.msk [vmem:[%s15] sm:$0x3] %vm9853, %v9851
    %v9855 = vmul.f32 %v9824, 146.14285
    %v9856 = vmul.f32 %v9845, 146.14285
    %v9859 = vsel %vm9850, %v9856, %v9855
    %9861 = vst.msk [vmem:[%s16] sm:$0x3] %vm9853, %v9859
    // Predicated region
    $region66: #{point_gen_forward.1} parent=1 // pred_check
      _
    $region67: #{point_gen_forward.1} parent=1 // pred_check_branch
      %9863 = sbr.rel (0) target = $region69
    $region68: #{point_gen_forward.1} parent=1 // pred_region
      _
    $region69: #{point_gen_forward.1} parent=1 // pred_fallthru
      _
    // Predicated region
    $region70: #{point_gen_forward.1} parent=1 // pred_check
      _
    $region71: #{point_gen_forward.1} parent=1 // pred_check_branch
      %9865 = sbr.rel (0) target = $region73
    $region72: #{point_gen_forward.1} parent=1 // pred_region
      _
    $region73: #{point_gen_forward.1} parent=1 // pred_fallthru
      _
    // Predicated region
    $region74: #{point_gen_forward.1} parent=1 // pred_check
      _
    $region75: #{point_gen_forward.1} parent=1 // pred_check_branch
      %9867 = sbr.rel (0) target = $region77
    $region76: #{point_gen_forward.1} parent=1 // pred_region
      _
    $region77: #{point_gen_forward.1} parent=1 // pred_fallthru
      _
    // Predicated region
    $region78: #{point_gen_forward.1} parent=1 // pred_check
      _
    $region79: #{point_gen_forward.1} parent=1 // pred_check_branch
      %9869 = sbr.rel (0) target = $region81
    $region80: #{point_gen_forward.1} parent=1 // pred_region
      _
    $region81: #{point_gen_forward.1} parent=1 // pred_fallthru
      _
    %9870 = vsyncpa [#allocation6], 1

</llo_original>
